<compile_context>
chip_gen: v5e
topology: v5e:2x2
jax: 0.10.0
libtpu: 0.0.40
codegen_flags: <defaults>
</compile_context>

<pallas_src>
import math
import numpy as np

import jax
import jax.numpy as jnp
from jax.experimental import pallas as pl
from jax.experimental.pallas import tpu as pltpu

EMB_DIM = 32
VOCAB = (12, 10, 8, 6)        # (diag, proc, sym, med) vocab sizes
N_TABLE = 16                  # rows in visit_embedding_table
TOPK = 10
ATT_TAU = 20.0
GUMBEL_TAU = 0.3
LN_EPS = 1e-5
NUM_MAB_HEADS = 2
NUM_MHA_HEADS = 4

NUM_REL = 4
NUM_MED = VOCAB[3]                                   # 6
NPAIRS = 6
WIDE = NPAIRS * EMB_DIM                              # 192
HEAD_DIM = EMB_DIM // NUM_MAB_HEADS                  # 16
V_ALL = sum(VOCAB)                                   # 36
REL_OFFSETS = (0, VOCAB[0], VOCAB[0] + VOCAB[1], VOCAB[0] + VOCAB[1] + VOCAB[2])
GCN_VMAX = -(-max(VOCAB[0] + NUM_MED, VOCAB[1] + NUM_MED,
                  VOCAB[2] + NUM_MED, NUM_MED) // 8) * 8   # 24 (padded)
HOMO_NMAX = 8
# (X relation, Y relation) per MAB pair, matching mab1..mab6 of the original:
#   (diag,proc) (diag,med) (diag,sym) (proc,med) (proc,sym) (med,sym)
PAIR_SRC = ((0, 1), (0, 3), (0, 2), (1, 3), (1, 2), (3, 2))


# ---------------------------------------------------------------------------
# small helpers (usable both inside kernels and as jnp glue)
# ---------------------------------------------------------------------------
def _layernorm(x, g, b):
    mu = jnp.mean(x, axis=-1, keepdims=True)
    var = jnp.mean((x - mu) ** 2, axis=-1, keepdims=True)
    return (x - mu) * jax.lax.rsqrt(var + LN_EPS) * g + b


def _qkT(q, k):
    # q @ k.T without an explicit transpose (contract last dims)
    return jax.lax.dot_general(q, k, (((1,), (1,)), ((), ())),
                               preferred_element_type=jnp.float32)


def linear(x, w, b):
    return jnp.dot(x, w, preferred_element_type=jnp.float32) + b


def _vmem_specs(n):
    return [pl.BlockSpec(memory_space=pltpu.MemorySpace.VMEM) for _ in range(n)]


# ---------------------------------------------------------------------------
# the single fused Pallas backbone kernel
#   inputs : GCN adjacencies/weights, block-structured MAB/SAB weights,
#            homo-graph adjacencies/selection/weights, embedding table
#   outputs: medication [num_med, D]  and  per-visit embeddings [T, 4*D]
# ---------------------------------------------------------------------------
def _make_fused_kernel(group_meta, num_visits):
    T = num_visits
    index = {(m['visit'], m['rel']): g for g, m in enumerate(group_meta)}
    scale = 1.0 / math.sqrt(EMB_DIM)
    # TODO(synk): MAB/SAB softmax scale follows the Set-Transformer convention
    # (1/sqrt(emb_dim), not 1/sqrt(d_head)); source of MAB/SAB not provided.

    def kernel(adj_g_ref, gw1_ref, gb1_ref, gw2_ref, gb2_ref,
               mwq_ref, mbq_ref, mwkv_ref, mbkv_ref, mwo_ref, mbo_ref, mln_ref,
               swq_ref, sbq_ref, swkv_ref, sbkv_ref, swo_ref, sbo_ref, sln_ref,
               gavg_ref, mfw_ref, mfb_ref,
               hadj_ref, hsel_ref, emb_ref, hw_ref, hb_ref,
               med_ref, vis_ref):
        f32 = jnp.float32

        # ------------ 4 two-layer EHR GCNs (padded adjacencies hoisted) -------------
        # gcn input x is the identity matrix, so x @ W1 == W1.
        drug_parts = []
        for r in range(NUM_REL):
            adj = adj_g_ref[r]                                           # [Vmax, Vmax]
            h = jnp.maximum(
                jnp.dot(adj, gw1_ref[r], preferred_element_type=f32) + gb1_ref[r], 0.0)
            # TODO(synk): nn.Dropout(p=0.3) treated as eval-mode identity.
            s = jnp.dot(h, gw2_ref[r], preferred_element_type=f32)
            node = jnp.dot(adj, s, preferred_element_type=f32) + gb2_ref[r]
            drug_parts.append(node[:NUM_MED, :])
        gdrug = jnp.concatenate(drug_parts, axis=-1)                     # [num_med, 4*D]

        gavg = gavg_ref[...]                                             # [192, 192]

        def group_ln(x, g, b):
            # per 32-lane group layernorm via matmul with the group-average matrix
            mu = jnp.dot(x, gavg, preferred_element_type=f32)
            d = x - mu
            var = jnp.dot(d * d, gavg, preferred_element_type=f32)
            return d * jax.lax.rsqrt(var + LN_EPS) * g + b

        def pair_head_attention(q, k, v):
            outs = []
            for ph in range(NPAIRS * NUM_MAB_HEADS):
                sl = slice(ph * HEAD_DIM, (ph + 1) * HEAD_DIM)
                qh, kh, vh = q[:, sl], k[:, sl], v[:, sl]
                s = _qkT(qh, kh) * scale
                m = jnp.max(s, axis=-1, keepdims=True)
                e = jnp.exp(s - m)
                a = e * pl.reciprocal(jnp.sum(e, axis=-1, keepdims=True), approx=True)
                outs.append(qh + jnp.dot(a, vh, preferred_element_type=f32))
            return jnp.concatenate(outs, axis=-1)

        def wide_block(src, wq, bq, wkv, bkv, wo, bo, ln):
            # all 6 MAB (or SAB) blocks at once; pair selection is folded into wq/wkv
            q = jnp.dot(src, wq, preferred_element_type=f32) + bq        # [num_med, 192]
            kv = jnp.dot(src, wkv, preferred_element_type=f32) + bkv     # [num_med, 384]
            o = pair_head_attention(q, kv[:, :WIDE], kv[:, WIDE:])
            o = group_ln(o, ln[0:1, :], ln[1:2, :])
            o = o + jnp.maximum(jnp.dot(o, wo, preferred_element_type=f32) + bo, 0.0)
            return group_ln(o, ln[2:3, :], ln[3:4, :])

        o = wide_block(gdrug, mwq_ref[...], mbq_ref[...], mwkv_ref[...], mbkv_ref[...],
                       mwo_ref[...], mbo_ref[...], mln_ref[...])          # 6 MABs
        gl = wide_block(o, swq_ref[...], sbq_ref[...], swkv_ref[...], sbkv_ref[...],
                        swo_ref[...], sbo_ref[...], sln_ref[...])         # 6 SABs
        # gl is exactly the original torch.cat([...], dim=-1): [num_med, 6*D]
        med_ref[...] = jnp.dot(gl, mfw_ref[...], preferred_element_type=f32) + mfb_ref[...]

        # ------------ per-visit homo relation graph convolutions --------------------
        # TODO(synk): homo_relation_graph source not provided; a single
        # relu(adj @ (x @ W) + b) layer with per-visit node row-sum is assumed.
        # TODO(synk): nn.Dropout(p=0.5) on embeddings treated as eval-mode identity.
        x_all = jnp.dot(hsel_ref[...], emb_ref[...], preferred_element_type=f32)  # [G*Nmax, D]
        group_sums = []
        for g, meta in enumerate(group_meta):
            xg = x_all[g * HOMO_NMAX:(g + 1) * HOMO_NMAX, :]
            sg = jnp.dot(xg, hw_ref[g], preferred_element_type=f32)
            yg = jnp.maximum(
                jnp.dot(hadj_ref[g], sg, preferred_element_type=f32) + hb_ref[g], 0.0)
            group_sums.append(jnp.sum(yg[:meta['n'], :], axis=0, keepdims=True))   # [1, D]

        zero = jnp.zeros((1, EMB_DIM), f32)
        rows = []
        for t in range(T):
            blocks = []
            for rel in range(NUM_REL):            # diag | proc | sym | med slots
                key = (t, rel)
                blocks.append(group_sums[index[key]] if key in index else zero)
            rows.append(jnp.concatenate(blocks, axis=-1))                 # [1, 4*D]
        vis_ref[...] = jnp.concatenate(rows, axis=0)                      # [T, 4*D]

    return kernel


def _fused_backbone(kp, data):
    T = data['num_visits']
    kernel = _make_fused_kernel(data['group_meta'], T)
    return pl.pallas_call(
        kernel,
        out_shape=(jax.ShapeDtypeStruct((NUM_MED, EMB_DIM), jnp.float32),
                   jax.ShapeDtypeStruct((T, NUM_REL * EMB_DIM), jnp.float32)),
        in_specs=_vmem_specs(27),
        out_specs=(pl.BlockSpec(memory_space=pltpu.MemorySpace.VMEM),
                   pl.BlockSpec(memory_space=pltpu.MemorySpace.VMEM)),
    )(data['adj_gcn'], kp['gcn_w1'], kp['gcn_b1'], kp['gcn_w2'], kp['gcn_b2'],
      *kp['mab'], *kp['sab'],
      kp['grp_avg'], kp['med_fuse_w'], kp['med_fuse_b'],
      data['homo_adj'], data['homo_sel'], kp['emb_all'], kp['homo_w'], kp['homo_b'])


# ---------------------------------------------------------------------------
# deterministic parameter construction ("PyTorch-like" layout)
# ---------------------------------------------------------------------------
def init_params(key):
    D = EMB_DIM
    vd, vp, vs, vm = VOCAB
    keys = iter(jax.random.split(key, 256))

    def nrm(shape, scale=0.1):
        return (scale * jax.random.normal(next(keys), shape)).astype(jnp.float32)

    def lin(din, dout):
        return {'w': nrm((din, dout)), 'b': nrm((1, dout))}

    def mab():
        return {'wq': nrm((D, D)), 'bq': nrm((1, D)),
                'wk': nrm((D, D)), 'bk': nrm((1, D)),
                'wv': nrm((D, D)), 'bv': nrm((1, D)),
                'wo': nrm((D, D)), 'bo': nrm((1, D)),
                'g0': jnp.ones((1, D), jnp.float32), 'be0': jnp.zeros((1, D), jnp.float32),
                'g1': jnp.ones((1, D), jnp.float32), 'be1': jnp.zeros((1, D), jnp.float32)}

    def gcn(v):
        return {'w1': nrm((v, D)), 'b1': nrm((1, D)),
                'w2': nrm((D, D)), 'b2': nrm((1, D))}

    return {
        'emb': [nrm((vd, D)), nrm((vp, D)), nrm((vs, D)), nrm((vm, D))],
        'homo': [{'w': nrm((D, D)), 'b': nrm((1, D))} for _ in range(4)],
        'cross_att': {'wq': nrm((4 * D, 16 * D)), 'bq': nrm((1, 16 * D)),
                      'wk': nrm((4 * D, 16 * D)), 'bk': nrm((1, 16 * D)),
                      'wv': nrm((4 * D, 4 * D)), 'bv': nrm((1, 4 * D)),
                      'wo': nrm((4 * D, 4 * D)), 'bo': nrm((1, 4 * D))},
        'drug_output': lin(D, D),
        'drug_ln': {'g': jnp.ones((1, D), jnp.float32), 'b': jnp.zeros((1, D), jnp.float32)},
        'gcn_diag': gcn(vd + vm), 'gcn_proc': gcn(vp + vm),
        'gcn_sym': gcn(vs + vm), 'gcn_med': gcn(vm),
        'mab': [mab() for _ in range(6)],
        'sab': [mab() for _ in range(6)],
        'pat_fuse': lin(9 * D, D),
        'med_fuse': lin(6 * D, D),
        'fuse_weight': nrm((2, 1)),
        'recomb': lin(2 * vm, vm),
        'recomd': lin(9 * D, vm),
        'docter_weight': nrm((2, vm)),
        'mlp1': lin(4 * D, 1),
        'mlp2': lin(2, 1),
        'linear_layer': lin(4 * D, 4 * D),
        'review': {'high': jnp.array([0.8, 0.8, 0.8], jnp.float32),
                   'low': jnp.array([0.2, 0.2, 0.2], jnp.float32),
                   'minus_w': jnp.float32(0.01), 'plus_w': jnp.float32(0.01)},
    }


# ---------------------------------------------------------------------------
# one-time parameter re-layout (outside jit): block-structured / padded / fused
# ---------------------------------------------------------------------------
def fuse_params(params, data):
    D = EMB_DIM
    W = WIDE

    def fuse_stage(plist, in_blocks, x_rel, y_rel):
        in_dim = in_blocks * D
        wq = np.zeros((in_dim, W), np.float32)
        bq = np.zeros((1, W), np.float32)
        wkv = np.zeros((in_dim, 2 * W), np.float32)
        bkv = np.zeros((1, 2 * W), np.float32)
        wo = np.zeros((W, W), np.float32)
        bo = np.zeros((1, W), np.float32)
        ln = np.zeros((4, W), np.float32)
        for p, m in enumerate(plist):
            c = slice(p * D, (p + 1) * D)
            cv = slice(W + p * D, W + (p + 1) * D)
            xr = slice(x_rel[p] * D, (x_rel[p] + 1) * D)
            yr = slice(y_rel[p] * D, (y_rel[p] + 1) * D)
            wq[xr, c] = np.asarray(m['wq'])
            bq[:, c] = np.asarray(m['bq'])
            wkv[yr, c] = np.asarray(m['wk'])
            wkv[yr, cv] = np.asarray(m['wv'])
            bkv[:, c] = np.asarray(m['bk'])
            bkv[:, cv] = np.asarray(m['bv'])
            wo[c, c] = np.asarray(m['wo'])
            bo[:, c] = np.asarray(m['bo'])
            ln[0, c] = np.asarray(m['g0'])[0]
            ln[1, c] = np.asarray(m['be0'])[0]
            ln[2, c] = np.asarray(m['g1'])[0]
            ln[3, c] = np.asarray(m['be1'])[0]
        return tuple(jnp.asarray(a) for a in (wq, bq, wkv, bkv, wo, bo, ln))

    x_rel = [x for x, _ in PAIR_SRC]
    y_rel = [y for _, y in PAIR_SRC]
    mab = fuse_stage(params['mab'], NUM_REL, x_rel, y_rel)             # consumes [*, 4*D]
    sab = fuse_stage(params['sab'], NPAIRS, list(range(NPAIRS)), list(range(NPAIRS)))

    # padded, stacked GCN weights
    gcn_ps = [params['gcn_diag'], params['gcn_proc'], params['gcn_sym'], params['gcn_med']]
    gw1 = np.zeros((NUM_REL, GCN_VMAX, D), np.float32)
    for r, p in enumerate(gcn_ps):
        v = p['w1'].shape[0]
        gw1[r, :v, :] = np.asarray(p['w1'])
    gb1 = np.stack([np.asarray(p['b1']) for p in gcn_ps])
    gw2 = np.stack([np.asarray(p['w2']) for p in gcn_ps])
    gb2 = np.stack([np.asarray(p['b2']) for p in gcn_ps])

    # per-group homo weights (group -> relation mapping is static)
    hw = np.stack([np.asarray(params['homo'][m['rel']]['w']) for m in data['group_meta']])
    hb = np.stack([np.asarray(params['homo'][m['rel']]['b']) for m in data['group_meta']])

    emb_all = np.concatenate([np.asarray(e) for e in params['emb']], axis=0)    # [V_ALL, D]

    grp_avg = np.kron(np.eye(NPAIRS, dtype=np.float32),
                      np.full((D, D), 1.0 / D, dtype=np.float32))               # [192,192]

    ca = params['cross_att']
    cross = {'wq': ca['wq'], 'bq': ca['bq'],
             'wkv': jnp.concatenate([ca['wk'], ca['wv']], axis=1),
             'bkv': jnp.concatenate([ca['bk'], ca['bv']], axis=1),
             'wo': ca['wo'], 'bo': ca['bo']}

    kp = {
        'gcn_w1': jnp.asarray(gw1), 'gcn_b1': jnp.asarray(gb1),
        'gcn_w2': jnp.asarray(gw2), 'gcn_b2': jnp.asarray(gb2),
        'mab': mab, 'sab': sab,
        'grp_avg': jnp.asarray(grp_avg),
        'med_fuse_w': params['med_fuse']['w'], 'med_fuse_b': params['med_fuse']['b'],
        'homo_w': jnp.asarray(hw), 'homo_b': jnp.asarray(hb),
        'emb_all': jnp.asarray(emb_all),
        'emb_med': params['emb'][3],
        'cross_att': cross,
        'drug_output': params['drug_output'], 'drug_ln': params['drug_ln'],
        'pat_fuse': params['pat_fuse'],
        'fuse_weight': params['fuse_weight'],
        'recomb': params['recomb'], 'recomd': params['recomd'],
        'docter_weight': params['docter_weight'],
        'mlp1': params['mlp1'], 'mlp2': params['mlp2'],
        'linear_layer': params['linear_layer'],
        'review': params['review'],
    }
    return kp


# ---------------------------------------------------------------------------
# synthetic data (replaces causal_graph / EHR adjacencies / patient record)
# ---------------------------------------------------------------------------
def _row_normalize(mx):
    rowsum = np.asarray(mx.sum(axis=1), dtype=np.float64)
    r_inv = np.zeros_like(rowsum)
    nz = rowsum != 0
    r_inv[nz] = 1.0 / rowsum[nz]
    return (np.diagflat(r_inv) @ mx).astype(np.float32)


def _make_adj(rng, n):
    a = (rng.rand(n, n) > 0.6).astype(np.float32)
    a = np.maximum(a, a.T)
    np.fill_diagonal(a, 0.0)
    return a


def _visit_graph(rng, n):
    a = _make_adj(rng, n) + np.eye(n, dtype=np.float32)
    return _row_normalize(a)


def build_data():
    vd, vp, vs, vm = VOCAB
    D = EMB_DIM
    rng = np.random.RandomState(0)

    # each admission: (diag codes, proc codes, sym codes, med codes, visit id)
    patient = [
        ([0, 3, 5], [1, 2], [0, 4, 6], [1, 3], 2),
        ([1, 4], [0, 3, 5], [2, 5], [0, 2, 4], 7),
        ([2, 6, 7, 9], [4, 6], [1, 3, 7], [5], 11),
    ]
    T = len(patient)

    graphs = {}
    for adm_id, adm in enumerate(patient):
        graphs[(adm_id, 'Diag')] = _visit_graph(rng, len(adm[0]))
        graphs[(adm_id, 'Proc')] = _visit_graph(rng, len(adm[1]))
        graphs[(adm_id, 'Sym')] = _visit_graph(rng, len(adm[2]))
        graphs[(adm_id, 'Med')] = _visit_graph(rng, len(adm[3]))

    ehr_adj_md = _make_adj(rng, vd + vm)
    ehr_adj_mp = _make_adj(rng, vp + vm)
    ehr_adj_ms = _make_adj(rng, vs + vm)
    ehr_adj_mm = _make_adj(rng, vm)
    ddi = _make_adj(rng, vm)

    # padded, normalized GCN adjacencies (hoisted out of the forward)
    adj_gcn = np.zeros((NUM_REL, GCN_VMAX, GCN_VMAX), np.float32)
    for r, a in enumerate([ehr_adj_md, ehr_adj_mp, ehr_adj_ms, ehr_adj_mm]):
        v = a.shape[0]
        adj_gcn[r, :v, :v] = _row_normalize(a + np.eye(v, dtype=np.float32))

    medication_list = [sorted(int(i) for i in
                              rng.choice(vm, size=rng.randint(2, vm), replace=False))
                       for _ in range(N_TABLE)]
    med_multihot = np.zeros((N_TABLE, vm), np.float32)
    for i, meds in enumerate(medication_list):
        med_multihot[i, meds] = 1.0

    key = jax.random.PRNGKey(0)
    k_table, k_gumbel = jax.random.split(key)
    table = (0.1 * jax.random.normal(k_table, (N_TABLE, 4 * D))).astype(jnp.float32)
    table_np = np.asarray(table)

    last = patient[-1]
    last_vid = last[4]
    visit_table_excl = np.concatenate([table_np[:last_vid], table_np[last_vid + 1:]], axis=0)
    med_multihot_excl = np.concatenate([med_multihot[:last_vid], med_multihot[last_vid + 1:]],
                                       axis=0)

    # per-visit homo-graph groups (static structure; embedding gather as one-hot matmul)
    groups = []
    for adm_id, adm in enumerate(patient):
        groups.append((adm_id, 0, adm[0], graphs[(adm_id, 'Diag')]))
        groups.append((adm_id, 1, adm[1], graphs[(adm_id, 'Proc')]))
        groups.append((adm_id, 2, adm[2], graphs[(adm_id, 'Sym')]))
        if adm_id > 0:
            groups.append((adm_id, 3, patient[adm_id - 1][3], graphs[(adm_id - 1, 'Med')]))
    G = len(groups)
    homo_adj = np.zeros((G, HOMO_NMAX, HOMO_NMAX), np.float32)
    homo_sel = np.zeros((G * HOMO_NMAX, V_ALL), np.float32)
    group_meta = []
    for g, (visit, rel, codes, graph) in enumerate(groups):
        n = len(codes)
        homo_adj[g, :n, :n] = graph
        for i, c in enumerate(codes):
            homo_sel[g * HOMO_NMAX + i, REL_OFFSETS[rel] + c] = 1.0
        group_meta.append({'visit': visit, 'rel': rel, 'n': n})

    # causal-graph effects (replaces c1.get_effect); reduce over last-visit codes now
    eff_dm = rng.rand(vd, vm).astype(np.float32)
    eff_pm = rng.rand(vp, vm).astype(np.float32)
    eff_sm = rng.rand(vs, vm).astype(np.float32)
    max_cdm = np.maximum(eff_dm[last[0]].max(axis=0), 0.0)
    max_cpm = np.maximum(eff_pm[last[1]].max(axis=0), 0.0)
    max_csm = np.maximum(eff_sm[last[2]].max(axis=0), 0.0)

    # EHR co-occurrence bias (original reuses ehr_adj_med_diag for all three slices)
    ehr_bias = (ehr_adj_md[:vm, :vd].T[last[0]].sum(axis=0)
                + ehr_adj_md[:vm, :vp].T[last[1]].sum(axis=0)
                + ehr_adj_md[:vm, :vs].T[last[2]].sum(axis=0))[None, :].astype(np.float32)

    data = {
        'patient': patient,
        'num_visits': T,
        'group_meta': group_meta,
        'adj_gcn': jnp.asarray(adj_gcn),
        'homo_adj': jnp.asarray(homo_adj),
        'homo_sel': jnp.asarray(homo_sel),
        'visit_table_excl': jnp.asarray(visit_table_excl),
        'med_multihot_excl': jnp.asarray(med_multihot_excl),
        'max_cdm': jnp.asarray(max_cdm),
        'max_cpm': jnp.asarray(max_cpm),
        'max_csm': jnp.asarray(max_csm),
        'ehr_bias': jnp.asarray(ehr_bias),
        'ddi_adj': jnp.asarray(ddi),
    }
    return data, k_gumbel


# ---------------------------------------------------------------------------
# RaVSNet forward (fully jittable; one Pallas dispatch + tiny jnp head)
# ---------------------------------------------------------------------------
def ravsnet_forward(kp, data, gumbel_key):
    D = EMB_DIM
    T = data['num_visits']

    # ---- fused backbone: GCNs + 6x(MAB,SAB) + per-visit homo graph convs ----
    medication, visit_emb = _fused_backbone(kp, data)   # [num_med, D], [T, 4*D]

    # ---- gumbel gating over historical visits (tiny; plain jnp under jit) ----
    if T >= 2:
        input1 = linear(visit_emb, kp['mlp1']['w'], kp['mlp1']['b'])          # [T, 1]
        cur_query = jnp.tile(input1[-1:, :], (T, 1))
        concat_query = jnp.concatenate([input1, cur_query], axis=-1)
        concat_query = jax.nn.sigmoid(
            linear(concat_query, kp['mlp2']['w'], kp['mlp2']['b']))
        gumbel_input = jnp.concatenate([concat_query, 1.0 - concat_query], axis=-1)
        gnoise = -jnp.log(-jnp.log(
            jax.random.uniform(gumbel_key, gumbel_input.shape, minval=1e-10, maxval=1.0)))
        y = jax.nn.softmax((gumbel_input + gnoise) / GUMBEL_TAU, axis=-1)
        # TODO(synk): hard gumbel-softmax without the straight-through estimator
        # (forward value identical to PyTorch; gradients would differ).
        hard = jax.nn.one_hot(jnp.argmax(y, axis=-1), 2, dtype=jnp.float32)
        pre_gumbel = hard[:, 0]
        gumbel = jnp.concatenate([pre_gumbel[:-1], jnp.ones((1,), jnp.float32)])
        visit_emb = gumbel[:, None] * visit_emb

    # ---- target-aware cross-visit attention ----
    lq = linear(visit_emb[-1:, :], kp['linear_layer']['w'], kp['linear_layer']['b'])
    scores = jax.nn.softmax((_qkT(lq, visit_emb) / math.sqrt(4 * D)) / ATT_TAU, axis=-1)
    patient_representations = jnp.sum(visit_emb * scores.T, axis=0, keepdims=True)  # [1, 4D]

    # ---- retrieve similar visits (query row already removed at build time) ----
    visit_j = data['visit_table_excl']                                            # [N-1, 4D]
    na = jnp.maximum(jnp.linalg.norm(patient_representations, axis=1), 1e-8)
    nb = jnp.maximum(jnp.linalg.norm(visit_j, axis=1), 1e-8)
    similar_score = jnp.sum(patient_representations * visit_j, axis=1) / (na * nb)
    top_score, top_indices = jax.lax.top_k(similar_score, TOPK)
    sim_rows = visit_j[top_indices]                                               # [10, 4D]

    # ---- ScaledDotProductAttention cross-attention (pre-fused K|V weights) ----
    # TODO(synk): ScaledDotProductAttention source not provided; standard multi-head
    # (h=4, d_k=4*emb, d_v=emb) implementation assumed (unchanged from prior version).
    ca = kp['cross_att']
    d_k, d_v = 4 * D, D
    k_off = NUM_MHA_HEADS * d_k
    Q = linear(patient_representations, ca['wq'], ca['bq'])                       # [1, 16D]
    KV = linear(sim_rows, ca['wkv'], ca['bkv'])                                   # [10, 20D]
    heads = []
    for i in range(NUM_MHA_HEADS):
        qh = Q[:, i * d_k:(i + 1) * d_k]
        kh = KV[:, i * d_k:(i + 1) * d_k]
        vh = KV[:, k_off + i * d_v:k_off + (i + 1) * d_v]
        a = jax.nn.softmax(_qkT(qh, kh) / math.sqrt(d_k), axis=-1)
        heads.append(jnp.dot(a, vh, preferred_element_type=jnp.float32))
    sim_patient = linear(jnp.concatenate(heads, axis=-1), ca['wo'], ca['bo'])     # [1, 4D]
    patient_emb = jnp.concatenate([patient_representations, sim_patient], axis=-1)

    # ---- similar-patient medications via on-device multi-hot gather ----
    sim_med_rows = jnp.dot(data['med_multihot_excl'][top_indices], kp['emb_med'],
                           preferred_element_type=jnp.float32)                    # [10, D]
    sim_med = jnp.dot(top_score[None, :], sim_med_rows,
                      preferred_element_type=jnp.float32)                         # [1, D]
    sim_med = _layernorm(
        sim_med + linear(sim_med, kp['drug_output']['w'], kp['drug_output']['b']),
        kp['drug_ln']['g'], kp['drug_ln']['b'])
    patient_emb = jnp.concatenate([patient_emb, sim_med], axis=-1)                # [1, 9D]

    # ---- final recommendation head ----
    patient_fuse = linear(patient_emb, kp['pat_fuse']['w'], kp['pat_fuse']['b'])
    fuse_weight = kp['fuse_weight']
    docter_weight = kp['docter_weight']

    na = jnp.maximum(jnp.linalg.norm(patient_fuse, axis=1), 1e-8)
    nb = jnp.maximum(jnp.linalg.norm(medication, axis=1), 1e-8)
    similar = (jnp.sum(patient_fuse * medication, axis=1) / (na * nb))[None, :]

    docter_direct = linear(jnp.maximum(patient_emb, 0.0),
                           kp['recomd']['w'], kp['recomd']['b'])                  # [1, vm]
    recomb_in = jnp.concatenate([docter_direct * fuse_weight[0],
                                 similar * fuse_weight[1]], axis=1)
    docter_recomb = linear(jnp.maximum(recomb_in, 0.0),
                           kp['recomb']['w'], kp['recomb']['b'])
    result = docter_direct * docter_weight[0] + docter_recomb * docter_weight[1]

    # ---- CausaltyReview (effect maxima precomputed at build time) ----
    rv = kp['review']
    cond_low = ((data['max_cdm'] < rv['low'][0]) & (data['max_cpm'] < rv['low'][1])
                & (data['max_csm'] < rv['low'][2]))
    cond_high = ((data['max_cdm'] > rv['high'][0]) | (data['max_cpm'] > rv['high'][1])
                 | (data['max_csm'] > rv['high'][2]))
    delta = jnp.where(cond_low, -rv['minus_w'], jnp.where(cond_high, rv['plus_w'], 0.0))
    result = result + delta[None, :]

    # ---- EHR co-occurrence bias (precomputed) + DDI penalty ----
    result = result + jax.nn.sigmoid(data['ehr_bias'])
    p_neg = jax.nn.sigmoid(result)
    batch_neg = 0.0005 * jnp.sum((p_neg.T * p_neg) * data['ddi_adj'])

    return result, batch_neg, patient_representations


if __name__ == "__main__":
    data, gumbel_key = build_data()
    params = init_params(jax.random.PRNGKey(0))
    kparams = fuse_params(params, data)       # one-time weight re-layout, outside jit
    forward = jax.jit(lambda kp, k: ravsnet_forward(kp, data, k))
    result, batch_neg, patient_repr = forward(kparams, gumbel_key)
    jax.block_until_ready((result, batch_neg, patient_repr))
    assert result.shape == (1, VOCAB[3])
    assert patient_repr.shape == (1, 4 * EMB_DIM)
    print("KERNEL_OK")
</pallas_src>

<mosaic_0001>
module attributes {stable_mosaic.version = 11 : i64} {
  func.func @kernel(%arg0: memref<4x24x24xf32, #tpu.memory_space<vmem>>, %arg1: memref<4x24x32xf32, #tpu.memory_space<vmem>>, %arg2: memref<4x1x32xf32, #tpu.memory_space<vmem>>, %arg3: memref<4x32x32xf32, #tpu.memory_space<vmem>>, %arg4: memref<4x1x32xf32, #tpu.memory_space<vmem>>, %arg5: memref<128x192xf32, #tpu.memory_space<vmem>>, %arg6: memref<1x192xf32, #tpu.memory_space<vmem>>, %arg7: memref<128x384xf32, #tpu.memory_space<vmem>>, %arg8: memref<1x384xf32, #tpu.memory_space<vmem>>, %arg9: memref<192x192xf32, #tpu.memory_space<vmem>>, %arg10: memref<1x192xf32, #tpu.memory_space<vmem>>, %arg11: memref<4x192xf32, #tpu.memory_space<vmem>>, %arg12: memref<192x192xf32, #tpu.memory_space<vmem>>, %arg13: memref<1x192xf32, #tpu.memory_space<vmem>>, %arg14: memref<192x384xf32, #tpu.memory_space<vmem>>, %arg15: memref<1x384xf32, #tpu.memory_space<vmem>>, %arg16: memref<192x192xf32, #tpu.memory_space<vmem>>, %arg17: memref<1x192xf32, #tpu.memory_space<vmem>>, %arg18: memref<4x192xf32, #tpu.memory_space<vmem>>, %arg19: memref<192x192xf32, #tpu.memory_space<vmem>>, %arg20: memref<192x32xf32, #tpu.memory_space<vmem>>, %arg21: memref<1x32xf32, #tpu.memory_space<vmem>>, %arg22: memref<11x8x8xf32, #tpu.memory_space<vmem>>, %arg23: memref<88x36xf32, #tpu.memory_space<vmem>>, %arg24: memref<36x32xf32, #tpu.memory_space<vmem>>, %arg25: memref<11x32x32xf32, #tpu.memory_space<vmem>>, %arg26: memref<11x1x32xf32, #tpu.memory_space<vmem>>, %arg27: memref<6x32xf32, #tpu.memory_space<vmem>>, %arg28: memref<3x128xf32, #tpu.memory_space<vmem>>) attributes {dimension_semantics = [], scalar_prefetch = 0 : i64, scratch_operands = 0 : i64, tpu.core_type = #tpu.core_type<tc>} {
    %c0 = arith.constant 0 : index
    %c0_0 = arith.constant 0 : index
    %c0_1 = arith.constant 0 : index
    %0 = vector.load %arg0[%c0, %c0_0, %c0_1] : memref<4x24x24xf32, #tpu.memory_space<vmem>>, vector<1x24x24xf32>
    %1 = vector.shape_cast %0 : vector<1x24x24xf32> to vector<24x24xf32>
    %c0_2 = arith.constant 0 : index
    %c0_3 = arith.constant 0 : index
    %c0_4 = arith.constant 0 : index
    %2 = vector.load %arg1[%c0_2, %c0_3, %c0_4] : memref<4x24x32xf32, #tpu.memory_space<vmem>>, vector<1x24x32xf32>
    %3 = vector.shape_cast %2 : vector<1x24x32xf32> to vector<24x32xf32>
    %cst = arith.constant dense<0.000000e+00> : vector<24x32xf32>
    %4 = tpu.matmul %1, %3, %cst {dimension_numbers = #tpu.dot_dimension_numbers<[1], [0], [0], [1], [0, 0, 1, 1], [], []>} : vector<24x24xf32>, vector<24x32xf32>, vector<24x32xf32> -> vector<24x32xf32>
    %c0_5 = arith.constant 0 : index
    %c0_6 = arith.constant 0 : index
    %c0_7 = arith.constant 0 : index
    %5 = vector.load %arg2[%c0_5, %c0_6, %c0_7] : memref<4x1x32xf32, #tpu.memory_space<vmem>>, vector<1x1x32xf32>
    %6 = vector.shape_cast %5 : vector<1x1x32xf32> to vector<1x32xf32>
    %7 = vector.broadcast %6 : vector<1x32xf32> to vector<24x32xf32>
    %8 = arith.addf %4, %7 : vector<24x32xf32>
    %cst_8 = arith.constant 0.000000e+00 : f32
    %9 = vector.broadcast %cst_8 : f32 to vector<24x32xf32>
    %10 = arith.maximumf %8, %9 : vector<24x32xf32>
    %c0_9 = arith.constant 0 : index
    %c0_10 = arith.constant 0 : index
    %c0_11 = arith.constant 0 : index
    %11 = vector.load %arg3[%c0_9, %c0_10, %c0_11] : memref<4x32x32xf32, #tpu.memory_space<vmem>>, vector<1x32x32xf32>
    %12 = vector.shape_cast %11 : vector<1x32x32xf32> to vector<32x32xf32>
    %cst_12 = arith.constant dense<0.000000e+00> : vector<24x32xf32>
    %13 = tpu.matmul %10, %12, %cst_12 {dimension_numbers = #tpu.dot_dimension_numbers<[1], [0], [0], [1], [0, 0, 1, 1], [], []>} : vector<24x32xf32>, vector<32x32xf32>, vector<24x32xf32> -> vector<24x32xf32>
    %cst_13 = arith.constant dense<0.000000e+00> : vector<24x32xf32>
    %14 = tpu.matmul %1, %13, %cst_13 {dimension_numbers = #tpu.dot_dimension_numbers<[1], [0], [0], [1], [0, 0, 1, 1], [], []>} : vector<24x24xf32>, vector<24x32xf32>, vector<24x32xf32> -> vector<24x32xf32>
    %c0_14 = arith.constant 0 : index
    %c0_15 = arith.constant 0 : index
    %c0_16 = arith.constant 0 : index
    %15 = vector.load %arg4[%c0_14, %c0_15, %c0_16] : memref<4x1x32xf32, #tpu.memory_space<vmem>>, vector<1x1x32xf32>
    %16 = vector.shape_cast %15 : vector<1x1x32xf32> to vector<1x32xf32>
    %17 = vector.broadcast %16 : vector<1x32xf32> to vector<24x32xf32>
    %18 = arith.addf %14, %17 : vector<24x32xf32>
    %19 = vector.extract_strided_slice %18 {offsets = [0, 0], sizes = [6, 32], strides = [1, 1]} : vector<24x32xf32> to vector<6x32xf32>
    %c1 = arith.constant 1 : index
    %c0_17 = arith.constant 0 : index
    %c0_18 = arith.constant 0 : index
    %20 = vector.load %arg0[%c1, %c0_17, %c0_18] : memref<4x24x24xf32, #tpu.memory_space<vmem>>, vector<1x24x24xf32>
    %21 = vector.shape_cast %20 : vector<1x24x24xf32> to vector<24x24xf32>
    %c1_19 = arith.constant 1 : index
    %c0_20 = arith.constant 0 : index
    %c0_21 = arith.constant 0 : index
    %22 = vector.load %arg1[%c1_19, %c0_20, %c0_21] : memref<4x24x32xf32, #tpu.memory_space<vmem>>, vector<1x24x32xf32>
    %23 = vector.shape_cast %22 : vector<1x24x32xf32> to vector<24x32xf32>
    %cst_22 = arith.constant dense<0.000000e+00> : vector<24x32xf32>
    %24 = tpu.matmul %21, %23, %cst_22 {dimension_numbers = #tpu.dot_dimension_numbers<[1], [0], [0], [1], [0, 0, 1, 1], [], []>} : vector<24x24xf32>, vector<24x32xf32>, vector<24x32xf32> -> vector<24x32xf32>
    %c1_23 = arith.constant 1 : index
    %c0_24 = arith.constant 0 : index
    %c0_25 = arith.constant 0 : index
    %25 = vector.load %arg2[%c1_23, %c0_24, %c0_25] : memref<4x1x32xf32, #tpu.memory_space<vmem>>, vector<1x1x32xf32>
    %26 = vector.shape_cast %25 : vector<1x1x32xf32> to vector<1x32xf32>
    %27 = vector.broadcast %26 : vector<1x32xf32> to vector<24x32xf32>
    %28 = arith.addf %24, %27 : vector<24x32xf32>
    %cst_26 = arith.constant 0.000000e+00 : f32
    %29 = vector.broadcast %cst_26 : f32 to vector<24x32xf32>
    %30 = arith.maximumf %28, %29 : vector<24x32xf32>
    %c1_27 = arith.constant 1 : index
    %c0_28 = arith.constant 0 : index
    %c0_29 = arith.constant 0 : index
    %31 = vector.load %arg3[%c1_27, %c0_28, %c0_29] : memref<4x32x32xf32, #tpu.memory_space<vmem>>, vector<1x32x32xf32>
    %32 = vector.shape_cast %31 : vector<1x32x32xf32> to vector<32x32xf32>
    %cst_30 = arith.constant dense<0.000000e+00> : vector<24x32xf32>
    %33 = tpu.matmul %30, %32, %cst_30 {dimension_numbers = #tpu.dot_dimension_numbers<[1], [0], [0], [1], [0, 0, 1, 1], [], []>} : vector<24x32xf32>, vector<32x32xf32>, vector<24x32xf32> -> vector<24x32xf32>
    %cst_31 = arith.constant dense<0.000000e+00> : vector<24x32xf32>
    %34 = tpu.matmul %21, %33, %cst_31 {dimension_numbers = #tpu.dot_dimension_numbers<[1], [0], [0], [1], [0, 0, 1, 1], [], []>} : vector<24x24xf32>, vector<24x32xf32>, vector<24x32xf32> -> vector<24x32xf32>
    %c1_32 = arith.constant 1 : index
    %c0_33 = arith.constant 0 : index
    %c0_34 = arith.constant 0 : index
    %35 = vector.load %arg4[%c1_32, %c0_33, %c0_34] : memref<4x1x32xf32, #tpu.memory_space<vmem>>, vector<1x1x32xf32>
    %36 = vector.shape_cast %35 : vector<1x1x32xf32> to vector<1x32xf32>
    %37 = vector.broadcast %36 : vector<1x32xf32> to vector<24x32xf32>
    %38 = arith.addf %34, %37 : vector<24x32xf32>
    %39 = vector.extract_strided_slice %38 {offsets = [0, 0], sizes = [6, 32], strides = [1, 1]} : vector<24x32xf32> to vector<6x32xf32>
    %c2 = arith.constant 2 : index
    %c0_35 = arith.constant 0 : index
    %c0_36 = arith.constant 0 : index
    %40 = vector.load %arg0[%c2, %c0_35, %c0_36] : memref<4x24x24xf32, #tpu.memory_space<vmem>>, vector<1x24x24xf32>
    %41 = vector.shape_cast %40 : vector<1x24x24xf32> to vector<24x24xf32>
    %c2_37 = arith.constant 2 : index
    %c0_38 = arith.constant 0 : index
    %c0_39 = arith.constant 0 : index
    %42 = vector.load %arg1[%c2_37, %c0_38, %c0_39] : memref<4x24x32xf32, #tpu.memory_space<vmem>>, vector<1x24x32xf32>
    %43 = vector.shape_cast %42 : vector<1x24x32xf32> to vector<24x32xf32>
    %cst_40 = arith.constant dense<0.000000e+00> : vector<24x32xf32>
    %44 = tpu.matmul %41, %43, %cst_40 {dimension_numbers = #tpu.dot_dimension_numbers<[1], [0], [0], [1], [0, 0, 1, 1], [], []>} : vector<24x24xf32>, vector<24x32xf32>, vector<24x32xf32> -> vector<24x32xf32>
    %c2_41 = arith.constant 2 : index
    %c0_42 = arith.constant 0 : index
    %c0_43 = arith.constant 0 : index
    %45 = vector.load %arg2[%c2_41, %c0_42, %c0_43] : memref<4x1x32xf32, #tpu.memory_space<vmem>>, vector<1x1x32xf32>
    %46 = vector.shape_cast %45 : vector<1x1x32xf32> to vector<1x32xf32>
    %47 = vector.broadcast %46 : vector<1x32xf32> to vector<24x32xf32>
    %48 = arith.addf %44, %47 : vector<24x32xf32>
    %cst_44 = arith.constant 0.000000e+00 : f32
    %49 = vector.broadcast %cst_44 : f32 to vector<24x32xf32>
    %50 = arith.maximumf %48, %49 : vector<24x32xf32>
    %c2_45 = arith.constant 2 : index
    %c0_46 = arith.constant 0 : index
    %c0_47 = arith.constant 0 : index
    %51 = vector.load %arg3[%c2_45, %c0_46, %c0_47] : memref<4x32x32xf32, #tpu.memory_space<vmem>>, vector<1x32x32xf32>
    %52 = vector.shape_cast %51 : vector<1x32x32xf32> to vector<32x32xf32>
    %cst_48 = arith.constant dense<0.000000e+00> : vector<24x32xf32>
    %53 = tpu.matmul %50, %52, %cst_48 {dimension_numbers = #tpu.dot_dimension_numbers<[1], [0], [0], [1], [0, 0, 1, 1], [], []>} : vector<24x32xf32>, vector<32x32xf32>, vector<24x32xf32> -> vector<24x32xf32>
    %cst_49 = arith.constant dense<0.000000e+00> : vector<24x32xf32>
    %54 = tpu.matmul %41, %53, %cst_49 {dimension_numbers = #tpu.dot_dimension_numbers<[1], [0], [0], [1], [0, 0, 1, 1], [], []>} : vector<24x24xf32>, vector<24x32xf32>, vector<24x32xf32> -> vector<24x32xf32>
    %c2_50 = arith.constant 2 : index
    %c0_51 = arith.constant 0 : index
    %c0_52 = arith.constant 0 : index
    %55 = vector.load %arg4[%c2_50, %c0_51, %c0_52] : memref<4x1x32xf32, #tpu.memory_space<vmem>>, vector<1x1x32xf32>
    %56 = vector.shape_cast %55 : vector<1x1x32xf32> to vector<1x32xf32>
    %57 = vector.broadcast %56 : vector<1x32xf32> to vector<24x32xf32>
    %58 = arith.addf %54, %57 : vector<24x32xf32>
    %59 = vector.extract_strided_slice %58 {offsets = [0, 0], sizes = [6, 32], strides = [1, 1]} : vector<24x32xf32> to vector<6x32xf32>
    %c3 = arith.constant 3 : index
    %c0_53 = arith.constant 0 : index
    %c0_54 = arith.constant 0 : index
    %60 = vector.load %arg0[%c3, %c0_53, %c0_54] : memref<4x24x24xf32, #tpu.memory_space<vmem>>, vector<1x24x24xf32>
    %61 = vector.shape_cast %60 : vector<1x24x24xf32> to vector<24x24xf32>
    %c3_55 = arith.constant 3 : index
    %c0_56 = arith.constant 0 : index
    %c0_57 = arith.constant 0 : index
    %62 = vector.load %arg1[%c3_55, %c0_56, %c0_57] : memref<4x24x32xf32, #tpu.memory_space<vmem>>, vector<1x24x32xf32>
    %63 = vector.shape_cast %62 : vector<1x24x32xf32> to vector<24x32xf32>
    %cst_58 = arith.constant dense<0.000000e+00> : vector<24x32xf32>
    %64 = tpu.matmul %61, %63, %cst_58 {dimension_numbers = #tpu.dot_dimension_numbers<[1], [0], [0], [1], [0, 0, 1, 1], [], []>} : vector<24x24xf32>, vector<24x32xf32>, vector<24x32xf32> -> vector<24x32xf32>
    %c3_59 = arith.constant 3 : index
    %c0_60 = arith.constant 0 : index
    %c0_61 = arith.constant 0 : index
    %65 = vector.load %arg2[%c3_59, %c0_60, %c0_61] : memref<4x1x32xf32, #tpu.memory_space<vmem>>, vector<1x1x32xf32>
    %66 = vector.shape_cast %65 : vector<1x1x32xf32> to vector<1x32xf32>
    %67 = vector.broadcast %66 : vector<1x32xf32> to vector<24x32xf32>
    %68 = arith.addf %64, %67 : vector<24x32xf32>
    %cst_62 = arith.constant 0.000000e+00 : f32
    %69 = vector.broadcast %cst_62 : f32 to vector<24x32xf32>
    %70 = arith.maximumf %68, %69 : vector<24x32xf32>
    %c3_63 = arith.constant 3 : index
    %c0_64 = arith.constant 0 : index
    %c0_65 = arith.constant 0 : index
    %71 = vector.load %arg3[%c3_63, %c0_64, %c0_65] : memref<4x32x32xf32, #tpu.memory_space<vmem>>, vector<1x32x32xf32>
    %72 = vector.shape_cast %71 : vector<1x32x32xf32> to vector<32x32xf32>
    %cst_66 = arith.constant dense<0.000000e+00> : vector<24x32xf32>
    %73 = tpu.matmul %70, %72, %cst_66 {dimension_numbers = #tpu.dot_dimension_numbers<[1], [0], [0], [1], [0, 0, 1, 1], [], []>} : vector<24x32xf32>, vector<32x32xf32>, vector<24x32xf32> -> vector<24x32xf32>
    %cst_67 = arith.constant dense<0.000000e+00> : vector<24x32xf32>
    %74 = tpu.matmul %61, %73, %cst_67 {dimension_numbers = #tpu.dot_dimension_numbers<[1], [0], [0], [1], [0, 0, 1, 1], [], []>} : vector<24x24xf32>, vector<24x32xf32>, vector<24x32xf32> -> vector<24x32xf32>
    %c3_68 = arith.constant 3 : index
    %c0_69 = arith.constant 0 : index
    %c0_70 = arith.constant 0 : index
    %75 = vector.load %arg4[%c3_68, %c0_69, %c0_70] : memref<4x1x32xf32, #tpu.memory_space<vmem>>, vector<1x1x32xf32>
    %76 = vector.shape_cast %75 : vector<1x1x32xf32> to vector<1x32xf32>
    %77 = vector.broadcast %76 : vector<1x32xf32> to vector<24x32xf32>
    %78 = arith.addf %74, %77 : vector<24x32xf32>
    %79 = vector.extract_strided_slice %78 {offsets = [0, 0], sizes = [6, 32], strides = [1, 1]} : vector<24x32xf32> to vector<6x32xf32>
    %80 = tpu.concatenate %19, %39, %59, %79 in 1 : vector<6x32xf32>, vector<6x32xf32>, vector<6x32xf32>, vector<6x32xf32> -> vector<6x128xf32>
    %c0_71 = arith.constant 0 : index
    %c0_72 = arith.constant 0 : index
    %81 = vector.load %arg19[%c0_71, %c0_72] : memref<192x192xf32, #tpu.memory_space<vmem>>, vector<192x192xf32>
    %c0_73 = arith.constant 0 : index
    %c0_74 = arith.constant 0 : index
    %82 = vector.load %arg5[%c0_73, %c0_74] : memref<128x192xf32, #tpu.memory_space<vmem>>, vector<128x192xf32>
    %c0_75 = arith.constant 0 : index
    %c0_76 = arith.constant 0 : index
    %83 = vector.load %arg6[%c0_75, %c0_76] : memref<1x192xf32, #tpu.memory_space<vmem>>, vector<1x192xf32>
    %c0_77 = arith.constant 0 : index
    %c0_78 = arith.constant 0 : index
    %84 = vector.load %arg7[%c0_77, %c0_78] : memref<128x384xf32, #tpu.memory_space<vmem>>, vector<128x384xf32>
    %c0_79 = arith.constant 0 : index
    %c0_80 = arith.constant 0 : index
    %85 = vector.load %arg8[%c0_79, %c0_80] : memref<1x384xf32, #tpu.memory_space<vmem>>, vector<1x384xf32>
    %c0_81 = arith.constant 0 : index
    %c0_82 = arith.constant 0 : index
    %86 = vector.load %arg9[%c0_81, %c0_82] : memref<192x192xf32, #tpu.memory_space<vmem>>, vector<192x192xf32>
    %c0_83 = arith.constant 0 : index
    %c0_84 = arith.constant 0 : index
    %87 = vector.load %arg10[%c0_83, %c0_84] : memref<1x192xf32, #tpu.memory_space<vmem>>, vector<1x192xf32>
    %c0_85 = arith.constant 0 : index
    %c0_86 = arith.constant 0 : index
    %88 = vector.load %arg11[%c0_85, %c0_86] : memref<4x192xf32, #tpu.memory_space<vmem>>, vector<4x192xf32>
    %cst_87 = arith.constant dense<0.000000e+00> : vector<6x192xf32>
    %89 = tpu.matmul %80, %82, %cst_87 {dimension_numbers = #tpu.dot_dimension_numbers<[1], [0], [0], [1], [0, 0, 1, 1], [], []>} : vector<6x128xf32>, vector<128x192xf32>, vector<6x192xf32> -> vector<6x192xf32>
    %90 = vector.broadcast %83 : vector<1x192xf32> to vector<6x192xf32>
    %91 = arith.addf %89, %90 : vector<6x192xf32>
    %cst_88 = arith.constant dense<0.000000e+00> : vector<6x384xf32>
    %92 = tpu.matmul %80, %84, %cst_88 {dimension_numbers = #tpu.dot_dimension_numbers<[1], [0], [0], [1], [0, 0, 1, 1], [], []>} : vector<6x128xf32>, vector<128x384xf32>, vector<6x384xf32> -> vector<6x384xf32>
    %93 = vector.broadcast %85 : vector<1x384xf32> to vector<6x384xf32>
    %94 = arith.addf %92, %93 : vector<6x384xf32>
    %95 = vector.extract_strided_slice %94 {offsets = [0, 0], sizes = [6, 192], strides = [1, 1]} : vector<6x384xf32> to vector<6x192xf32>
    %96 = vector.extract_strided_slice %94 {offsets = [0, 192], sizes = [6, 192], strides = [1, 1]} : vector<6x384xf32> to vector<6x192xf32>
    %97 = vector.extract_strided_slice %91 {offsets = [0, 0], sizes = [6, 16], strides = [1, 1]} : vector<6x192xf32> to vector<6x16xf32>
    %98 = vector.extract_strided_slice %95 {offsets = [0, 0], sizes = [6, 16], strides = [1, 1]} : vector<6x192xf32> to vector<6x16xf32>
    %99 = vector.extract_strided_slice %96 {offsets = [0, 0], sizes = [6, 16], strides = [1, 1]} : vector<6x192xf32> to vector<6x16xf32>
    %cst_89 = arith.constant dense<0.000000e+00> : vector<6x6xf32>
    %100 = tpu.matmul %97, %98, %cst_89 {dimension_numbers = #tpu.dot_dimension_numbers<[1], [1], [0], [0], [0, 0, 1, 0], [], []>} : vector<6x16xf32>, vector<6x16xf32>, vector<6x6xf32> -> vector<6x6xf32>
    %cst_90 = arith.constant 0.176776692 : f32
    %101 = vector.broadcast %cst_90 : f32 to vector<6x6xf32>
    %102 = arith.mulf %100, %101 : vector<6x6xf32>
    %cst_91 = arith.constant dense<0xFF800000> : vector<6xf32>
    %103 = vector.multi_reduction <maximumf>, %102, %cst_91 [1] : vector<6x6xf32> to vector<6xf32>
    %104 = vector.shape_cast %103 : vector<6xf32> to vector<6x1xf32>
    %105 = vector.broadcast %104 : vector<6x1xf32> to vector<6x6xf32>
    %106 = arith.subf %102, %105 : vector<6x6xf32>
    %107 = math.exp %106 : vector<6x6xf32>
    %cst_92 = arith.constant dense<0.000000e+00> : vector<6xf32>
    %108 = vector.multi_reduction <add>, %107, %cst_92 [1] : vector<6x6xf32> to vector<6xf32>
    %109 = vector.shape_cast %108 : vector<6xf32> to vector<6x1xf32>
    %110 = tpu.reciprocal %109 {approx = true} : vector<6x1xf32> -> vector<6x1xf32>
    %111 = vector.broadcast %110 : vector<6x1xf32> to vector<6x6xf32>
    %112 = arith.mulf %107, %111 : vector<6x6xf32>
    %cst_93 = arith.constant dense<0.000000e+00> : vector<6x16xf32>
    %113 = tpu.matmul %112, %99, %cst_93 {dimension_numbers = #tpu.dot_dimension_numbers<[1], [0], [0], [1], [0, 0, 1, 1], [], []>} : vector<6x6xf32>, vector<6x16xf32>, vector<6x16xf32> -> vector<6x16xf32>
    %114 = arith.addf %97, %113 : vector<6x16xf32>
    %115 = vector.extract_strided_slice %91 {offsets = [0, 16], sizes = [6, 16], strides = [1, 1]} : vector<6x192xf32> to vector<6x16xf32>
    %116 = vector.extract_strided_slice %95 {offsets = [0, 16], sizes = [6, 16], strides = [1, 1]} : vector<6x192xf32> to vector<6x16xf32>
    %117 = vector.extract_strided_slice %96 {offsets = [0, 16], sizes = [6, 16], strides = [1, 1]} : vector<6x192xf32> to vector<6x16xf32>
    %cst_94 = arith.constant dense<0.000000e+00> : vector<6x6xf32>
    %118 = tpu.matmul %115, %116, %cst_94 {dimension_numbers = #tpu.dot_dimension_numbers<[1], [1], [0], [0], [0, 0, 1, 0], [], []>} : vector<6x16xf32>, vector<6x16xf32>, vector<6x6xf32> -> vector<6x6xf32>
    %cst_95 = arith.constant 0.176776692 : f32
    %119 = vector.broadcast %cst_95 : f32 to vector<6x6xf32>
    %120 = arith.mulf %118, %119 : vector<6x6xf32>
    %cst_96 = arith.constant dense<0xFF800000> : vector<6xf32>
    %121 = vector.multi_reduction <maximumf>, %120, %cst_96 [1] : vector<6x6xf32> to vector<6xf32>
    %122 = vector.shape_cast %121 : vector<6xf32> to vector<6x1xf32>
    %123 = vector.broadcast %122 : vector<6x1xf32> to vector<6x6xf32>
    %124 = arith.subf %120, %123 : vector<6x6xf32>
    %125 = math.exp %124 : vector<6x6xf32>
    %cst_97 = arith.constant dense<0.000000e+00> : vector<6xf32>
    %126 = vector.multi_reduction <add>, %125, %cst_97 [1] : vector<6x6xf32> to vector<6xf32>
    %127 = vector.shape_cast %126 : vector<6xf32> to vector<6x1xf32>
    %128 = tpu.reciprocal %127 {approx = true} : vector<6x1xf32> -> vector<6x1xf32>
    %129 = vector.broadcast %128 : vector<6x1xf32> to vector<6x6xf32>
    %130 = arith.mulf %125, %129 : vector<6x6xf32>
    %cst_98 = arith.constant dense<0.000000e+00> : vector<6x16xf32>
    %131 = tpu.matmul %130, %117, %cst_98 {dimension_numbers = #tpu.dot_dimension_numbers<[1], [0], [0], [1], [0, 0, 1, 1], [], []>} : vector<6x6xf32>, vector<6x16xf32>, vector<6x16xf32> -> vector<6x16xf32>
    %132 = arith.addf %115, %131 : vector<6x16xf32>
    %133 = vector.extract_strided_slice %91 {offsets = [0, 32], sizes = [6, 16], strides = [1, 1]} : vector<6x192xf32> to vector<6x16xf32>
    %134 = vector.extract_strided_slice %95 {offsets = [0, 32], sizes = [6, 16], strides = [1, 1]} : vector<6x192xf32> to vector<6x16xf32>
    %135 = vector.extract_strided_slice %96 {offsets = [0, 32], sizes = [6, 16], strides = [1, 1]} : vector<6x192xf32> to vector<6x16xf32>
    %cst_99 = arith.constant dense<0.000000e+00> : vector<6x6xf32>
    %136 = tpu.matmul %133, %134, %cst_99 {dimension_numbers = #tpu.dot_dimension_numbers<[1], [1], [0], [0], [0, 0, 1, 0], [], []>} : vector<6x16xf32>, vector<6x16xf32>, vector<6x6xf32> -> vector<6x6xf32>
    %cst_100 = arith.constant 0.176776692 : f32
    %137 = vector.broadcast %cst_100 : f32 to vector<6x6xf32>
    %138 = arith.mulf %136, %137 : vector<6x6xf32>
    %cst_101 = arith.constant dense<0xFF800000> : vector<6xf32>
    %139 = vector.multi_reduction <maximumf>, %138, %cst_101 [1] : vector<6x6xf32> to vector<6xf32>
    %140 = vector.shape_cast %139 : vector<6xf32> to vector<6x1xf32>
    %141 = vector.broadcast %140 : vector<6x1xf32> to vector<6x6xf32>
    %142 = arith.subf %138, %141 : vector<6x6xf32>
    %143 = math.exp %142 : vector<6x6xf32>
    %cst_102 = arith.constant dense<0.000000e+00> : vector<6xf32>
    %144 = vector.multi_reduction <add>, %143, %cst_102 [1] : vector<6x6xf32> to vector<6xf32>
    %145 = vector.shape_cast %144 : vector<6xf32> to vector<6x1xf32>
    %146 = tpu.reciprocal %145 {approx = true} : vector<6x1xf32> -> vector<6x1xf32>
    %147 = vector.broadcast %146 : vector<6x1xf32> to vector<6x6xf32>
    %148 = arith.mulf %143, %147 : vector<6x6xf32>
    %cst_103 = arith.constant dense<0.000000e+00> : vector<6x16xf32>
    %149 = tpu.matmul %148, %135, %cst_103 {dimension_numbers = #tpu.dot_dimension_numbers<[1], [0], [0], [1], [0, 0, 1, 1], [], []>} : vector<6x6xf32>, vector<6x16xf32>, vector<6x16xf32> -> vector<6x16xf32>
    %150 = arith.addf %133, %149 : vector<6x16xf32>
    %151 = vector.extract_strided_slice %91 {offsets = [0, 48], sizes = [6, 16], strides = [1, 1]} : vector<6x192xf32> to vector<6x16xf32>
    %152 = vector.extract_strided_slice %95 {offsets = [0, 48], sizes = [6, 16], strides = [1, 1]} : vector<6x192xf32> to vector<6x16xf32>
    %153 = vector.extract_strided_slice %96 {offsets = [0, 48], sizes = [6, 16], strides = [1, 1]} : vector<6x192xf32> to vector<6x16xf32>
    %cst_104 = arith.constant dense<0.000000e+00> : vector<6x6xf32>
    %154 = tpu.matmul %151, %152, %cst_104 {dimension_numbers = #tpu.dot_dimension_numbers<[1], [1], [0], [0], [0, 0, 1, 0], [], []>} : vector<6x16xf32>, vector<6x16xf32>, vector<6x6xf32> -> vector<6x6xf32>
    %cst_105 = arith.constant 0.176776692 : f32
    %155 = vector.broadcast %cst_105 : f32 to vector<6x6xf32>
    %156 = arith.mulf %154, %155 : vector<6x6xf32>
    %cst_106 = arith.constant dense<0xFF800000> : vector<6xf32>
    %157 = vector.multi_reduction <maximumf>, %156, %cst_106 [1] : vector<6x6xf32> to vector<6xf32>
    %158 = vector.shape_cast %157 : vector<6xf32> to vector<6x1xf32>
    %159 = vector.broadcast %158 : vector<6x1xf32> to vector<6x6xf32>
    %160 = arith.subf %156, %159 : vector<6x6xf32>
    %161 = math.exp %160 : vector<6x6xf32>
    %cst_107 = arith.constant dense<0.000000e+00> : vector<6xf32>
    %162 = vector.multi_reduction <add>, %161, %cst_107 [1] : vector<6x6xf32> to vector<6xf32>
    %163 = vector.shape_cast %162 : vector<6xf32> to vector<6x1xf32>
    %164 = tpu.reciprocal %163 {approx = true} : vector<6x1xf32> -> vector<6x1xf32>
    %165 = vector.broadcast %164 : vector<6x1xf32> to vector<6x6xf32>
    %166 = arith.mulf %161, %165 : vector<6x6xf32>
    %cst_108 = arith.constant dense<0.000000e+00> : vector<6x16xf32>
    %167 = tpu.matmul %166, %153, %cst_108 {dimension_numbers = #tpu.dot_dimension_numbers<[1], [0], [0], [1], [0, 0, 1, 1], [], []>} : vector<6x6xf32>, vector<6x16xf32>, vector<6x16xf32> -> vector<6x16xf32>
    %168 = arith.addf %151, %167 : vector<6x16xf32>
    %169 = vector.extract_strided_slice %91 {offsets = [0, 64], sizes = [6, 16], strides = [1, 1]} : vector<6x192xf32> to vector<6x16xf32>
    %170 = vector.extract_strided_slice %95 {offsets = [0, 64], sizes = [6, 16], strides = [1, 1]} : vector<6x192xf32> to vector<6x16xf32>
    %171 = vector.extract_strided_slice %96 {offsets = [0, 64], sizes = [6, 16], strides = [1, 1]} : vector<6x192xf32> to vector<6x16xf32>
    %cst_109 = arith.constant dense<0.000000e+00> : vector<6x6xf32>
    %172 = tpu.matmul %169, %170, %cst_109 {dimension_numbers = #tpu.dot_dimension_numbers<[1], [1], [0], [0], [0, 0, 1, 0], [], []>} : vector<6x16xf32>, vector<6x16xf32>, vector<6x6xf32> -> vector<6x6xf32>
    %cst_110 = arith.constant 0.176776692 : f32
    %173 = vector.broadcast %cst_110 : f32 to vector<6x6xf32>
    %174 = arith.mulf %172, %173 : vector<6x6xf32>
    %cst_111 = arith.constant dense<0xFF800000> : vector<6xf32>
    %175 = vector.multi_reduction <maximumf>, %174, %cst_111 [1] : vector<6x6xf32> to vector<6xf32>
    %176 = vector.shape_cast %175 : vector<6xf32> to vector<6x1xf32>
    %177 = vector.broadcast %176 : vector<6x1xf32> to vector<6x6xf32>
    %178 = arith.subf %174, %177 : vector<6x6xf32>
    %179 = math.exp %178 : vector<6x6xf32>
    %cst_112 = arith.constant dense<0.000000e+00> : vector<6xf32>
    %180 = vector.multi_reduction <add>, %179, %cst_112 [1] : vector<6x6xf32> to vector<6xf32>
    %181 = vector.shape_cast %180 : vector<6xf32> to vector<6x1xf32>
    %182 = tpu.reciprocal %181 {approx = true} : vector<6x1xf32> -> vector<6x1xf32>
    %183 = vector.broadcast %182 : vector<6x1xf32> to vector<6x6xf32>
    %184 = arith.mulf %179, %183 : vector<6x6xf32>
    %cst_113 = arith.constant dense<0.000000e+00> : vector<6x16xf32>
    %185 = tpu.matmul %184, %171, %cst_113 {dimension_numbers = #tpu.dot_dimension_numbers<[1], [0], [0], [1], [0, 0, 1, 1], [], []>} : vector<6x6xf32>, vector<6x16xf32>, vector<6x16xf32> -> vector<6x16xf32>
    %186 = arith.addf %169, %185 : vector<6x16xf32>
    %187 = vector.extract_strided_slice %91 {offsets = [0, 80], sizes = [6, 16], strides = [1, 1]} : vector<6x192xf32> to vector<6x16xf32>
    %188 = vector.extract_strided_slice %95 {offsets = [0, 80], sizes = [6, 16], strides = [1, 1]} : vector<6x192xf32> to vector<6x16xf32>
    %189 = vector.extract_strided_slice %96 {offsets = [0, 80], sizes = [6, 16], strides = [1, 1]} : vector<6x192xf32> to vector<6x16xf32>
    %cst_114 = arith.constant dense<0.000000e+00> : vector<6x6xf32>
    %190 = tpu.matmul %187, %188, %cst_114 {dimension_numbers = #tpu.dot_dimension_numbers<[1], [1], [0], [0], [0, 0, 1, 0], [], []>} : vector<6x16xf32>, vector<6x16xf32>, vector<6x6xf32> -> vector<6x6xf32>
    %cst_115 = arith.constant 0.176776692 : f32
    %191 = vector.broadcast %cst_115 : f32 to vector<6x6xf32>
    %192 = arith.mulf %190, %191 : vector<6x6xf32>
    %cst_116 = arith.constant dense<0xFF800000> : vector<6xf32>
    %193 = vector.multi_reduction <maximumf>, %192, %cst_116 [1] : vector<6x6xf32> to vector<6xf32>
    %194 = vector.shape_cast %193 : vector<6xf32> to vector<6x1xf32>
    %195 = vector.broadcast %194 : vector<6x1xf32> to vector<6x6xf32>
    %196 = arith.subf %192, %195 : vector<6x6xf32>
    %197 = math.exp %196 : vector<6x6xf32>
    %cst_117 = arith.constant dense<0.000000e+00> : vector<6xf32>
    %198 = vector.multi_reduction <add>, %197, %cst_117 [1] : vector<6x6xf32> to vector<6xf32>
    %199 = vector.shape_cast %198 : vector<6xf32> to vector<6x1xf32>
    %200 = tpu.reciprocal %199 {approx = true} : vector<6x1xf32> -> vector<6x1xf32>
    %201 = vector.broadcast %200 : vector<6x1xf32> to vector<6x6xf32>
    %202 = arith.mulf %197, %201 : vector<6x6xf32>
    %cst_118 = arith.constant dense<0.000000e+00> : vector<6x16xf32>
    %203 = tpu.matmul %202, %189, %cst_118 {dimension_numbers = #tpu.dot_dimension_numbers<[1], [0], [0], [1], [0, 0, 1, 1], [], []>} : vector<6x6xf32>, vector<6x16xf32>, vector<6x16xf32> -> vector<6x16xf32>
    %204 = arith.addf %187, %203 : vector<6x16xf32>
    %205 = vector.extract_strided_slice %91 {offsets = [0, 96], sizes = [6, 16], strides = [1, 1]} : vector<6x192xf32> to vector<6x16xf32>
    %206 = vector.extract_strided_slice %95 {offsets = [0, 96], sizes = [6, 16], strides = [1, 1]} : vector<6x192xf32> to vector<6x16xf32>
    %207 = vector.extract_strided_slice %96 {offsets = [0, 96], sizes = [6, 16], strides = [1, 1]} : vector<6x192xf32> to vector<6x16xf32>
    %cst_119 = arith.constant dense<0.000000e+00> : vector<6x6xf32>
    %208 = tpu.matmul %205, %206, %cst_119 {dimension_numbers = #tpu.dot_dimension_numbers<[1], [1], [0], [0], [0, 0, 1, 0], [], []>} : vector<6x16xf32>, vector<6x16xf32>, vector<6x6xf32> -> vector<6x6xf32>
    %cst_120 = arith.constant 0.176776692 : f32
    %209 = vector.broadcast %cst_120 : f32 to vector<6x6xf32>
    %210 = arith.mulf %208, %209 : vector<6x6xf32>
    %cst_121 = arith.constant dense<0xFF800000> : vector<6xf32>
    %211 = vector.multi_reduction <maximumf>, %210, %cst_121 [1] : vector<6x6xf32> to vector<6xf32>
    %212 = vector.shape_cast %211 : vector<6xf32> to vector<6x1xf32>
    %213 = vector.broadcast %212 : vector<6x1xf32> to vector<6x6xf32>
    %214 = arith.subf %210, %213 : vector<6x6xf32>
    %215 = math.exp %214 : vector<6x6xf32>
    %cst_122 = arith.constant dense<0.000000e+00> : vector<6xf32>
    %216 = vector.multi_reduction <add>, %215, %cst_122 [1] : vector<6x6xf32> to vector<6xf32>
    %217 = vector.shape_cast %216 : vector<6xf32> to vector<6x1xf32>
    %218 = tpu.reciprocal %217 {approx = true} : vector<6x1xf32> -> vector<6x1xf32>
    %219 = vector.broadcast %218 : vector<6x1xf32> to vector<6x6xf32>
    %220 = arith.mulf %215, %219 : vector<6x6xf32>
    %cst_123 = arith.constant dense<0.000000e+00> : vector<6x16xf32>
    %221 = tpu.matmul %220, %207, %cst_123 {dimension_numbers = #tpu.dot_dimension_numbers<[1], [0], [0], [1], [0, 0, 1, 1], [], []>} : vector<6x6xf32>, vector<6x16xf32>, vector<6x16xf32> -> vector<6x16xf32>
    %222 = arith.addf %205, %221 : vector<6x16xf32>
    %223 = vector.extract_strided_slice %91 {offsets = [0, 112], sizes = [6, 16], strides = [1, 1]} : vector<6x192xf32> to vector<6x16xf32>
    %224 = vector.extract_strided_slice %95 {offsets = [0, 112], sizes = [6, 16], strides = [1, 1]} : vector<6x192xf32> to vector<6x16xf32>
    %225 = vector.extract_strided_slice %96 {offsets = [0, 112], sizes = [6, 16], strides = [1, 1]} : vector<6x192xf32> to vector<6x16xf32>
    %cst_124 = arith.constant dense<0.000000e+00> : vector<6x6xf32>
    %226 = tpu.matmul %223, %224, %cst_124 {dimension_numbers = #tpu.dot_dimension_numbers<[1], [1], [0], [0], [0, 0, 1, 0], [], []>} : vector<6x16xf32>, vector<6x16xf32>, vector<6x6xf32> -> vector<6x6xf32>
    %cst_125 = arith.constant 0.176776692 : f32
    %227 = vector.broadcast %cst_125 : f32 to vector<6x6xf32>
    %228 = arith.mulf %226, %227 : vector<6x6xf32>
    %cst_126 = arith.constant dense<0xFF800000> : vector<6xf32>
    %229 = vector.multi_reduction <maximumf>, %228, %cst_126 [1] : vector<6x6xf32> to vector<6xf32>
    %230 = vector.shape_cast %229 : vector<6xf32> to vector<6x1xf32>
    %231 = vector.broadcast %230 : vector<6x1xf32> to vector<6x6xf32>
    %232 = arith.subf %228, %231 : vector<6x6xf32>
    %233 = math.exp %232 : vector<6x6xf32>
    %cst_127 = arith.constant dense<0.000000e+00> : vector<6xf32>
    %234 = vector.multi_reduction <add>, %233, %cst_127 [1] : vector<6x6xf32> to vector<6xf32>
    %235 = vector.shape_cast %234 : vector<6xf32> to vector<6x1xf32>
    %236 = tpu.reciprocal %235 {approx = true} : vector<6x1xf32> -> vector<6x1xf32>
    %237 = vector.broadcast %236 : vector<6x1xf32> to vector<6x6xf32>
    %238 = arith.mulf %233, %237 : vector<6x6xf32>
    %cst_128 = arith.constant dense<0.000000e+00> : vector<6x16xf32>
    %239 = tpu.matmul %238, %225, %cst_128 {dimension_numbers = #tpu.dot_dimension_numbers<[1], [0], [0], [1], [0, 0, 1, 1], [], []>} : vector<6x6xf32>, vector<6x16xf32>, vector<6x16xf32> -> vector<6x16xf32>
    %240 = arith.addf %223, %239 : vector<6x16xf32>
    %241 = vector.extract_strided_slice %91 {offsets = [0, 128], sizes = [6, 16], strides = [1, 1]} : vector<6x192xf32> to vector<6x16xf32>
    %242 = vector.extract_strided_slice %95 {offsets = [0, 128], sizes = [6, 16], strides = [1, 1]} : vector<6x192xf32> to vector<6x16xf32>
    %243 = vector.extract_strided_slice %96 {offsets = [0, 128], sizes = [6, 16], strides = [1, 1]} : vector<6x192xf32> to vector<6x16xf32>
    %cst_129 = arith.constant dense<0.000000e+00> : vector<6x6xf32>
    %244 = tpu.matmul %241, %242, %cst_129 {dimension_numbers = #tpu.dot_dimension_numbers<[1], [1], [0], [0], [0, 0, 1, 0], [], []>} : vector<6x16xf32>, vector<6x16xf32>, vector<6x6xf32> -> vector<6x6xf32>
    %cst_130 = arith.constant 0.176776692 : f32
    %245 = vector.broadcast %cst_130 : f32 to vector<6x6xf32>
    %246 = arith.mulf %244, %245 : vector<6x6xf32>
    %cst_131 = arith.constant dense<0xFF800000> : vector<6xf32>
    %247 = vector.multi_reduction <maximumf>, %246, %cst_131 [1] : vector<6x6xf32> to vector<6xf32>
    %248 = vector.shape_cast %247 : vector<6xf32> to vector<6x1xf32>
    %249 = vector.broadcast %248 : vector<6x1xf32> to vector<6x6xf32>
    %250 = arith.subf %246, %249 : vector<6x6xf32>
    %251 = math.exp %250 : vector<6x6xf32>
    %cst_132 = arith.constant dense<0.000000e+00> : vector<6xf32>
    %252 = vector.multi_reduction <add>, %251, %cst_132 [1] : vector<6x6xf32> to vector<6xf32>
    %253 = vector.shape_cast %252 : vector<6xf32> to vector<6x1xf32>
    %254 = tpu.reciprocal %253 {approx = true} : vector<6x1xf32> -> vector<6x1xf32>
    %255 = vector.broadcast %254 : vector<6x1xf32> to vector<6x6xf32>
    %256 = arith.mulf %251, %255 : vector<6x6xf32>
    %cst_133 = arith.constant dense<0.000000e+00> : vector<6x16xf32>
    %257 = tpu.matmul %256, %243, %cst_133 {dimension_numbers = #tpu.dot_dimension_numbers<[1], [0], [0], [1], [0, 0, 1, 1], [], []>} : vector<6x6xf32>, vector<6x16xf32>, vector<6x16xf32> -> vector<6x16xf32>
    %258 = arith.addf %241, %257 : vector<6x16xf32>
    %259 = vector.extract_strided_slice %91 {offsets = [0, 144], sizes = [6, 16], strides = [1, 1]} : vector<6x192xf32> to vector<6x16xf32>
    %260 = vector.extract_strided_slice %95 {offsets = [0, 144], sizes = [6, 16], strides = [1, 1]} : vector<6x192xf32> to vector<6x16xf32>
    %261 = vector.extract_strided_slice %96 {offsets = [0, 144], sizes = [6, 16], strides = [1, 1]} : vector<6x192xf32> to vector<6x16xf32>
    %cst_134 = arith.constant dense<0.000000e+00> : vector<6x6xf32>
    %262 = tpu.matmul %259, %260, %cst_134 {dimension_numbers = #tpu.dot_dimension_numbers<[1], [1], [0], [0], [0, 0, 1, 0], [], []>} : vector<6x16xf32>, vector<6x16xf32>, vector<6x6xf32> -> vector<6x6xf32>
    %cst_135 = arith.constant 0.176776692 : f32
    %263 = vector.broadcast %cst_135 : f32 to vector<6x6xf32>
    %264 = arith.mulf %262, %263 : vector<6x6xf32>
    %cst_136 = arith.constant dense<0xFF800000> : vector<6xf32>
    %265 = vector.multi_reduction <maximumf>, %264, %cst_136 [1] : vector<6x6xf32> to vector<6xf32>
    %266 = vector.shape_cast %265 : vector<6xf32> to vector<6x1xf32>
    %267 = vector.broadcast %266 : vector<6x1xf32> to vector<6x6xf32>
    %268 = arith.subf %264, %267 : vector<6x6xf32>
    %269 = math.exp %268 : vector<6x6xf32>
    %cst_137 = arith.constant dense<0.000000e+00> : vector<6xf32>
    %270 = vector.multi_reduction <add>, %269, %cst_137 [1] : vector<6x6xf32> to vector<6xf32>
    %271 = vector.shape_cast %270 : vector<6xf32> to vector<6x1xf32>
    %272 = tpu.reciprocal %271 {approx = true} : vector<6x1xf32> -> vector<6x1xf32>
    %273 = vector.broadcast %272 : vector<6x1xf32> to vector<6x6xf32>
    %274 = arith.mulf %269, %273 : vector<6x6xf32>
    %cst_138 = arith.constant dense<0.000000e+00> : vector<6x16xf32>
    %275 = tpu.matmul %274, %261, %cst_138 {dimension_numbers = #tpu.dot_dimension_numbers<[1], [0], [0], [1], [0, 0, 1, 1], [], []>} : vector<6x6xf32>, vector<6x16xf32>, vector<6x16xf32> -> vector<6x16xf32>
    %276 = arith.addf %259, %275 : vector<6x16xf32>
    %277 = vector.extract_strided_slice %91 {offsets = [0, 160], sizes = [6, 16], strides = [1, 1]} : vector<6x192xf32> to vector<6x16xf32>
    %278 = vector.extract_strided_slice %95 {offsets = [0, 160], sizes = [6, 16], strides = [1, 1]} : vector<6x192xf32> to vector<6x16xf32>
    %279 = vector.extract_strided_slice %96 {offsets = [0, 160], sizes = [6, 16], strides = [1, 1]} : vector<6x192xf32> to vector<6x16xf32>
    %cst_139 = arith.constant dense<0.000000e+00> : vector<6x6xf32>
    %280 = tpu.matmul %277, %278, %cst_139 {dimension_numbers = #tpu.dot_dimension_numbers<[1], [1], [0], [0], [0, 0, 1, 0], [], []>} : vector<6x16xf32>, vector<6x16xf32>, vector<6x6xf32> -> vector<6x6xf32>
    %cst_140 = arith.constant 0.176776692 : f32
    %281 = vector.broadcast %cst_140 : f32 to vector<6x6xf32>
    %282 = arith.mulf %280, %281 : vector<6x6xf32>
    %cst_141 = arith.constant dense<0xFF800000> : vector<6xf32>
    %283 = vector.multi_reduction <maximumf>, %282, %cst_141 [1] : vector<6x6xf32> to vector<6xf32>
    %284 = vector.shape_cast %283 : vector<6xf32> to vector<6x1xf32>
    %285 = vector.broadcast %284 : vector<6x1xf32> to vector<6x6xf32>
    %286 = arith.subf %282, %285 : vector<6x6xf32>
    %287 = math.exp %286 : vector<6x6xf32>
    %cst_142 = arith.constant dense<0.000000e+00> : vector<6xf32>
    %288 = vector.multi_reduction <add>, %287, %cst_142 [1] : vector<6x6xf32> to vector<6xf32>
    %289 = vector.shape_cast %288 : vector<6xf32> to vector<6x1xf32>
    %290 = tpu.reciprocal %289 {approx = true} : vector<6x1xf32> -> vector<6x1xf32>
    %291 = vector.broadcast %290 : vector<6x1xf32> to vector<6x6xf32>
    %292 = arith.mulf %287, %291 : vector<6x6xf32>
    %cst_143 = arith.constant dense<0.000000e+00> : vector<6x16xf32>
    %293 = tpu.matmul %292, %279, %cst_143 {dimension_numbers = #tpu.dot_dimension_numbers<[1], [0], [0], [1], [0, 0, 1, 1], [], []>} : vector<6x6xf32>, vector<6x16xf32>, vector<6x16xf32> -> vector<6x16xf32>
    %294 = arith.addf %277, %293 : vector<6x16xf32>
    %295 = vector.extract_strided_slice %91 {offsets = [0, 176], sizes = [6, 16], strides = [1, 1]} : vector<6x192xf32> to vector<6x16xf32>
    %296 = vector.extract_strided_slice %95 {offsets = [0, 176], sizes = [6, 16], strides = [1, 1]} : vector<6x192xf32> to vector<6x16xf32>
    %297 = vector.extract_strided_slice %96 {offsets = [0, 176], sizes = [6, 16], strides = [1, 1]} : vector<6x192xf32> to vector<6x16xf32>
    %cst_144 = arith.constant dense<0.000000e+00> : vector<6x6xf32>
    %298 = tpu.matmul %295, %296, %cst_144 {dimension_numbers = #tpu.dot_dimension_numbers<[1], [1], [0], [0], [0, 0, 1, 0], [], []>} : vector<6x16xf32>, vector<6x16xf32>, vector<6x6xf32> -> vector<6x6xf32>
    %cst_145 = arith.constant 0.176776692 : f32
    %299 = vector.broadcast %cst_145 : f32 to vector<6x6xf32>
    %300 = arith.mulf %298, %299 : vector<6x6xf32>
    %cst_146 = arith.constant dense<0xFF800000> : vector<6xf32>
    %301 = vector.multi_reduction <maximumf>, %300, %cst_146 [1] : vector<6x6xf32> to vector<6xf32>
    %302 = vector.shape_cast %301 : vector<6xf32> to vector<6x1xf32>
    %303 = vector.broadcast %302 : vector<6x1xf32> to vector<6x6xf32>
    %304 = arith.subf %300, %303 : vector<6x6xf32>
    %305 = math.exp %304 : vector<6x6xf32>
    %cst_147 = arith.constant dense<0.000000e+00> : vector<6xf32>
    %306 = vector.multi_reduction <add>, %305, %cst_147 [1] : vector<6x6xf32> to vector<6xf32>
    %307 = vector.shape_cast %306 : vector<6xf32> to vector<6x1xf32>
    %308 = tpu.reciprocal %307 {approx = true} : vector<6x1xf32> -> vector<6x1xf32>
    %309 = vector.broadcast %308 : vector<6x1xf32> to vector<6x6xf32>
    %310 = arith.mulf %305, %309 : vector<6x6xf32>
    %cst_148 = arith.constant dense<0.000000e+00> : vector<6x16xf32>
    %311 = tpu.matmul %310, %297, %cst_148 {dimension_numbers = #tpu.dot_dimension_numbers<[1], [0], [0], [1], [0, 0, 1, 1], [], []>} : vector<6x6xf32>, vector<6x16xf32>, vector<6x16xf32> -> vector<6x16xf32>
    %312 = arith.addf %295, %311 : vector<6x16xf32>
    %313 = tpu.concatenate %114, %132, %150, %168, %186, %204, %222, %240, %258, %276, %294, %312 in 1 : vector<6x16xf32>, vector<6x16xf32>, vector<6x16xf32>, vector<6x16xf32>, vector<6x16xf32>, vector<6x16xf32>, vector<6x16xf32>, vector<6x16xf32>, vector<6x16xf32>, vector<6x16xf32>, vector<6x16xf32>, vector<6x16xf32> -> vector<6x192xf32>
    %314 = vector.extract_strided_slice %88 {offsets = [0, 0], sizes = [1, 192], strides = [1, 1]} : vector<4x192xf32> to vector<1x192xf32>
    %315 = vector.extract_strided_slice %88 {offsets = [1, 0], sizes = [1, 192], strides = [1, 1]} : vector<4x192xf32> to vector<1x192xf32>
    %cst_149 = arith.constant dense<0.000000e+00> : vector<6x192xf32>
    %316 = tpu.matmul %313, %81, %cst_149 {dimension_numbers = #tpu.dot_dimension_numbers<[1], [0], [0], [1], [0, 0, 1, 1], [], []>} : vector<6x192xf32>, vector<192x192xf32>, vector<6x192xf32> -> vector<6x192xf32>
    %317 = arith.subf %313, %316 : vector<6x192xf32>
    %318 = arith.mulf %317, %317 : vector<6x192xf32>
    %cst_150 = arith.constant dense<0.000000e+00> : vector<6x192xf32>
    %319 = tpu.matmul %318, %81, %cst_150 {dimension_numbers = #tpu.dot_dimension_numbers<[1], [0], [0], [1], [0, 0, 1, 1], [], []>} : vector<6x192xf32>, vector<192x192xf32>, vector<6x192xf32> -> vector<6x192xf32>
    %cst_151 = arith.constant 9.99999974E-6 : f32
    %320 = vector.broadcast %cst_151 : f32 to vector<6x192xf32>
    %321 = arith.addf %319, %320 : vector<6x192xf32>
    %322 = math.rsqrt %321 : vector<6x192xf32>
    %323 = arith.mulf %317, %322 : vector<6x192xf32>
    %324 = vector.broadcast %314 : vector<1x192xf32> to vector<6x192xf32>
    %325 = arith.mulf %323, %324 : vector<6x192xf32>
    %326 = vector.broadcast %315 : vector<1x192xf32> to vector<6x192xf32>
    %327 = arith.addf %325, %326 : vector<6x192xf32>
    %cst_152 = arith.constant dense<0.000000e+00> : vector<6x192xf32>
    %328 = tpu.matmul %327, %86, %cst_152 {dimension_numbers = #tpu.dot_dimension_numbers<[1], [0], [0], [1], [0, 0, 1, 1], [], []>} : vector<6x192xf32>, vector<192x192xf32>, vector<6x192xf32> -> vector<6x192xf32>
    %329 = vector.broadcast %87 : vector<1x192xf32> to vector<6x192xf32>
    %330 = arith.addf %328, %329 : vector<6x192xf32>
    %cst_153 = arith.constant 0.000000e+00 : f32
    %331 = vector.broadcast %cst_153 : f32 to vector<6x192xf32>
    %332 = arith.maximumf %330, %331 : vector<6x192xf32>
    %333 = arith.addf %327, %332 : vector<6x192xf32>
    %334 = vector.extract_strided_slice %88 {offsets = [2, 0], sizes = [1, 192], strides = [1, 1]} : vector<4x192xf32> to vector<1x192xf32>
    %335 = vector.extract_strided_slice %88 {offsets = [3, 0], sizes = [1, 192], strides = [1, 1]} : vector<4x192xf32> to vector<1x192xf32>
    %cst_154 = arith.constant dense<0.000000e+00> : vector<6x192xf32>
    %336 = tpu.matmul %333, %81, %cst_154 {dimension_numbers = #tpu.dot_dimension_numbers<[1], [0], [0], [1], [0, 0, 1, 1], [], []>} : vector<6x192xf32>, vector<192x192xf32>, vector<6x192xf32> -> vector<6x192xf32>
    %337 = arith.subf %333, %336 : vector<6x192xf32>
    %338 = arith.mulf %337, %337 : vector<6x192xf32>
    %cst_155 = arith.constant dense<0.000000e+00> : vector<6x192xf32>
    %339 = tpu.matmul %338, %81, %cst_155 {dimension_numbers = #tpu.dot_dimension_numbers<[1], [0], [0], [1], [0, 0, 1, 1], [], []>} : vector<6x192xf32>, vector<192x192xf32>, vector<6x192xf32> -> vector<6x192xf32>
    %cst_156 = arith.constant 9.99999974E-6 : f32
    %340 = vector.broadcast %cst_156 : f32 to vector<6x192xf32>
    %341 = arith.addf %339, %340 : vector<6x192xf32>
    %342 = math.rsqrt %341 : vector<6x192xf32>
    %343 = arith.mulf %337, %342 : vector<6x192xf32>
    %344 = vector.broadcast %334 : vector<1x192xf32> to vector<6x192xf32>
    %345 = arith.mulf %343, %344 : vector<6x192xf32>
    %346 = vector.broadcast %335 : vector<1x192xf32> to vector<6x192xf32>
    %347 = arith.addf %345, %346 : vector<6x192xf32>
    %c0_157 = arith.constant 0 : index
    %c0_158 = arith.constant 0 : index
    %348 = vector.load %arg12[%c0_157, %c0_158] : memref<192x192xf32, #tpu.memory_space<vmem>>, vector<192x192xf32>
    %c0_159 = arith.constant 0 : index
    %c0_160 = arith.constant 0 : index
    %349 = vector.load %arg13[%c0_159, %c0_160] : memref<1x192xf32, #tpu.memory_space<vmem>>, vector<1x192xf32>
    %c0_161 = arith.constant 0 : index
    %c0_162 = arith.constant 0 : index
    %350 = vector.load %arg14[%c0_161, %c0_162] : memref<192x384xf32, #tpu.memory_space<vmem>>, vector<192x384xf32>
    %c0_163 = arith.constant 0 : index
    %c0_164 = arith.constant 0 : index
    %351 = vector.load %arg15[%c0_163, %c0_164] : memref<1x384xf32, #tpu.memory_space<vmem>>, vector<1x384xf32>
    %c0_165 = arith.constant 0 : index
    %c0_166 = arith.constant 0 : index
    %352 = vector.load %arg16[%c0_165, %c0_166] : memref<192x192xf32, #tpu.memory_space<vmem>>, vector<192x192xf32>
    %c0_167 = arith.constant 0 : index
    %c0_168 = arith.constant 0 : index
    %353 = vector.load %arg17[%c0_167, %c0_168] : memref<1x192xf32, #tpu.memory_space<vmem>>, vector<1x192xf32>
    %c0_169 = arith.constant 0 : index
    %c0_170 = arith.constant 0 : index
    %354 = vector.load %arg18[%c0_169, %c0_170] : memref<4x192xf32, #tpu.memory_space<vmem>>, vector<4x192xf32>
    %cst_171 = arith.constant dense<0.000000e+00> : vector<6x192xf32>
    %355 = tpu.matmul %347, %348, %cst_171 {dimension_numbers = #tpu.dot_dimension_numbers<[1], [0], [0], [1], [0, 0, 1, 1], [], []>} : vector<6x192xf32>, vector<192x192xf32>, vector<6x192xf32> -> vector<6x192xf32>
    %356 = vector.broadcast %349 : vector<1x192xf32> to vector<6x192xf32>
    %357 = arith.addf %355, %356 : vector<6x192xf32>
    %cst_172 = arith.constant dense<0.000000e+00> : vector<6x384xf32>
    %358 = tpu.matmul %347, %350, %cst_172 {dimension_numbers = #tpu.dot_dimension_numbers<[1], [0], [0], [1], [0, 0, 1, 1], [], []>} : vector<6x192xf32>, vector<192x384xf32>, vector<6x384xf32> -> vector<6x384xf32>
    %359 = vector.broadcast %351 : vector<1x384xf32> to vector<6x384xf32>
    %360 = arith.addf %358, %359 : vector<6x384xf32>
    %361 = vector.extract_strided_slice %360 {offsets = [0, 0], sizes = [6, 192], strides = [1, 1]} : vector<6x384xf32> to vector<6x192xf32>
    %362 = vector.extract_strided_slice %360 {offsets = [0, 192], sizes = [6, 192], strides = [1, 1]} : vector<6x384xf32> to vector<6x192xf32>
    %363 = vector.extract_strided_slice %357 {offsets = [0, 0], sizes = [6, 16], strides = [1, 1]} : vector<6x192xf32> to vector<6x16xf32>
    %364 = vector.extract_strided_slice %361 {offsets = [0, 0], sizes = [6, 16], strides = [1, 1]} : vector<6x192xf32> to vector<6x16xf32>
    %365 = vector.extract_strided_slice %362 {offsets = [0, 0], sizes = [6, 16], strides = [1, 1]} : vector<6x192xf32> to vector<6x16xf32>
    %cst_173 = arith.constant dense<0.000000e+00> : vector<6x6xf32>
    %366 = tpu.matmul %363, %364, %cst_173 {dimension_numbers = #tpu.dot_dimension_numbers<[1], [1], [0], [0], [0, 0, 1, 0], [], []>} : vector<6x16xf32>, vector<6x16xf32>, vector<6x6xf32> -> vector<6x6xf32>
    %cst_174 = arith.constant 0.176776692 : f32
    %367 = vector.broadcast %cst_174 : f32 to vector<6x6xf32>
    %368 = arith.mulf %366, %367 : vector<6x6xf32>
    %cst_175 = arith.constant dense<0xFF800000> : vector<6xf32>
    %369 = vector.multi_reduction <maximumf>, %368, %cst_175 [1] : vector<6x6xf32> to vector<6xf32>
    %370 = vector.shape_cast %369 : vector<6xf32> to vector<6x1xf32>
    %371 = vector.broadcast %370 : vector<6x1xf32> to vector<6x6xf32>
    %372 = arith.subf %368, %371 : vector<6x6xf32>
    %373 = math.exp %372 : vector<6x6xf32>
    %cst_176 = arith.constant dense<0.000000e+00> : vector<6xf32>
    %374 = vector.multi_reduction <add>, %373, %cst_176 [1] : vector<6x6xf32> to vector<6xf32>
    %375 = vector.shape_cast %374 : vector<6xf32> to vector<6x1xf32>
    %376 = tpu.reciprocal %375 {approx = true} : vector<6x1xf32> -> vector<6x1xf32>
    %377 = vector.broadcast %376 : vector<6x1xf32> to vector<6x6xf32>
    %378 = arith.mulf %373, %377 : vector<6x6xf32>
    %cst_177 = arith.constant dense<0.000000e+00> : vector<6x16xf32>
    %379 = tpu.matmul %378, %365, %cst_177 {dimension_numbers = #tpu.dot_dimension_numbers<[1], [0], [0], [1], [0, 0, 1, 1], [], []>} : vector<6x6xf32>, vector<6x16xf32>, vector<6x16xf32> -> vector<6x16xf32>
    %380 = arith.addf %363, %379 : vector<6x16xf32>
    %381 = vector.extract_strided_slice %357 {offsets = [0, 16], sizes = [6, 16], strides = [1, 1]} : vector<6x192xf32> to vector<6x16xf32>
    %382 = vector.extract_strided_slice %361 {offsets = [0, 16], sizes = [6, 16], strides = [1, 1]} : vector<6x192xf32> to vector<6x16xf32>
    %383 = vector.extract_strided_slice %362 {offsets = [0, 16], sizes = [6, 16], strides = [1, 1]} : vector<6x192xf32> to vector<6x16xf32>
    %cst_178 = arith.constant dense<0.000000e+00> : vector<6x6xf32>
    %384 = tpu.matmul %381, %382, %cst_178 {dimension_numbers = #tpu.dot_dimension_numbers<[1], [1], [0], [0], [0, 0, 1, 0], [], []>} : vector<6x16xf32>, vector<6x16xf32>, vector<6x6xf32> -> vector<6x6xf32>
    %cst_179 = arith.constant 0.176776692 : f32
    %385 = vector.broadcast %cst_179 : f32 to vector<6x6xf32>
    %386 = arith.mulf %384, %385 : vector<6x6xf32>
    %cst_180 = arith.constant dense<0xFF800000> : vector<6xf32>
    %387 = vector.multi_reduction <maximumf>, %386, %cst_180 [1] : vector<6x6xf32> to vector<6xf32>
    %388 = vector.shape_cast %387 : vector<6xf32> to vector<6x1xf32>
    %389 = vector.broadcast %388 : vector<6x1xf32> to vector<6x6xf32>
    %390 = arith.subf %386, %389 : vector<6x6xf32>
    %391 = math.exp %390 : vector<6x6xf32>
    %cst_181 = arith.constant dense<0.000000e+00> : vector<6xf32>
    %392 = vector.multi_reduction <add>, %391, %cst_181 [1] : vector<6x6xf32> to vector<6xf32>
    %393 = vector.shape_cast %392 : vector<6xf32> to vector<6x1xf32>
    %394 = tpu.reciprocal %393 {approx = true} : vector<6x1xf32> -> vector<6x1xf32>
    %395 = vector.broadcast %394 : vector<6x1xf32> to vector<6x6xf32>
    %396 = arith.mulf %391, %395 : vector<6x6xf32>
    %cst_182 = arith.constant dense<0.000000e+00> : vector<6x16xf32>
    %397 = tpu.matmul %396, %383, %cst_182 {dimension_numbers = #tpu.dot_dimension_numbers<[1], [0], [0], [1], [0, 0, 1, 1], [], []>} : vector<6x6xf32>, vector<6x16xf32>, vector<6x16xf32> -> vector<6x16xf32>
    %398 = arith.addf %381, %397 : vector<6x16xf32>
    %399 = vector.extract_strided_slice %357 {offsets = [0, 32], sizes = [6, 16], strides = [1, 1]} : vector<6x192xf32> to vector<6x16xf32>
    %400 = vector.extract_strided_slice %361 {offsets = [0, 32], sizes = [6, 16], strides = [1, 1]} : vector<6x192xf32> to vector<6x16xf32>
    %401 = vector.extract_strided_slice %362 {offsets = [0, 32], sizes = [6, 16], strides = [1, 1]} : vector<6x192xf32> to vector<6x16xf32>
    %cst_183 = arith.constant dense<0.000000e+00> : vector<6x6xf32>
    %402 = tpu.matmul %399, %400, %cst_183 {dimension_numbers = #tpu.dot_dimension_numbers<[1], [1], [0], [0], [0, 0, 1, 0], [], []>} : vector<6x16xf32>, vector<6x16xf32>, vector<6x6xf32> -> vector<6x6xf32>
    %cst_184 = arith.constant 0.176776692 : f32
    %403 = vector.broadcast %cst_184 : f32 to vector<6x6xf32>
    %404 = arith.mulf %402, %403 : vector<6x6xf32>
    %cst_185 = arith.constant dense<0xFF800000> : vector<6xf32>
    %405 = vector.multi_reduction <maximumf>, %404, %cst_185 [1] : vector<6x6xf32> to vector<6xf32>
    %406 = vector.shape_cast %405 : vector<6xf32> to vector<6x1xf32>
    %407 = vector.broadcast %406 : vector<6x1xf32> to vector<6x6xf32>
    %408 = arith.subf %404, %407 : vector<6x6xf32>
    %409 = math.exp %408 : vector<6x6xf32>
    %cst_186 = arith.constant dense<0.000000e+00> : vector<6xf32>
    %410 = vector.multi_reduction <add>, %409, %cst_186 [1] : vector<6x6xf32> to vector<6xf32>
    %411 = vector.shape_cast %410 : vector<6xf32> to vector<6x1xf32>
    %412 = tpu.reciprocal %411 {approx = true} : vector<6x1xf32> -> vector<6x1xf32>
    %413 = vector.broadcast %412 : vector<6x1xf32> to vector<6x6xf32>
    %414 = arith.mulf %409, %413 : vector<6x6xf32>
    %cst_187 = arith.constant dense<0.000000e+00> : vector<6x16xf32>
    %415 = tpu.matmul %414, %401, %cst_187 {dimension_numbers = #tpu.dot_dimension_numbers<[1], [0], [0], [1], [0, 0, 1, 1], [], []>} : vector<6x6xf32>, vector<6x16xf32>, vector<6x16xf32> -> vector<6x16xf32>
    %416 = arith.addf %399, %415 : vector<6x16xf32>
    %417 = vector.extract_strided_slice %357 {offsets = [0, 48], sizes = [6, 16], strides = [1, 1]} : vector<6x192xf32> to vector<6x16xf32>
    %418 = vector.extract_strided_slice %361 {offsets = [0, 48], sizes = [6, 16], strides = [1, 1]} : vector<6x192xf32> to vector<6x16xf32>
    %419 = vector.extract_strided_slice %362 {offsets = [0, 48], sizes = [6, 16], strides = [1, 1]} : vector<6x192xf32> to vector<6x16xf32>
    %cst_188 = arith.constant dense<0.000000e+00> : vector<6x6xf32>
    %420 = tpu.matmul %417, %418, %cst_188 {dimension_numbers = #tpu.dot_dimension_numbers<[1], [1], [0], [0], [0, 0, 1, 0], [], []>} : vector<6x16xf32>, vector<6x16xf32>, vector<6x6xf32> -> vector<6x6xf32>
    %cst_189 = arith.constant 0.176776692 : f32
    %421 = vector.broadcast %cst_189 : f32 to vector<6x6xf32>
    %422 = arith.mulf %420, %421 : vector<6x6xf32>
    %cst_190 = arith.constant dense<0xFF800000> : vector<6xf32>
    %423 = vector.multi_reduction <maximumf>, %422, %cst_190 [1] : vector<6x6xf32> to vector<6xf32>
    %424 = vector.shape_cast %423 : vector<6xf32> to vector<6x1xf32>
    %425 = vector.broadcast %424 : vector<6x1xf32> to vector<6x6xf32>
    %426 = arith.subf %422, %425 : vector<6x6xf32>
    %427 = math.exp %426 : vector<6x6xf32>
    %cst_191 = arith.constant dense<0.000000e+00> : vector<6xf32>
    %428 = vector.multi_reduction <add>, %427, %cst_191 [1] : vector<6x6xf32> to vector<6xf32>
    %429 = vector.shape_cast %428 : vector<6xf32> to vector<6x1xf32>
    %430 = tpu.reciprocal %429 {approx = true} : vector<6x1xf32> -> vector<6x1xf32>
    %431 = vector.broadcast %430 : vector<6x1xf32> to vector<6x6xf32>
    %432 = arith.mulf %427, %431 : vector<6x6xf32>
    %cst_192 = arith.constant dense<0.000000e+00> : vector<6x16xf32>
    %433 = tpu.matmul %432, %419, %cst_192 {dimension_numbers = #tpu.dot_dimension_numbers<[1], [0], [0], [1], [0, 0, 1, 1], [], []>} : vector<6x6xf32>, vector<6x16xf32>, vector<6x16xf32> -> vector<6x16xf32>
    %434 = arith.addf %417, %433 : vector<6x16xf32>
    %435 = vector.extract_strided_slice %357 {offsets = [0, 64], sizes = [6, 16], strides = [1, 1]} : vector<6x192xf32> to vector<6x16xf32>
    %436 = vector.extract_strided_slice %361 {offsets = [0, 64], sizes = [6, 16], strides = [1, 1]} : vector<6x192xf32> to vector<6x16xf32>
    %437 = vector.extract_strided_slice %362 {offsets = [0, 64], sizes = [6, 16], strides = [1, 1]} : vector<6x192xf32> to vector<6x16xf32>
    %cst_193 = arith.constant dense<0.000000e+00> : vector<6x6xf32>
    %438 = tpu.matmul %435, %436, %cst_193 {dimension_numbers = #tpu.dot_dimension_numbers<[1], [1], [0], [0], [0, 0, 1, 0], [], []>} : vector<6x16xf32>, vector<6x16xf32>, vector<6x6xf32> -> vector<6x6xf32>
    %cst_194 = arith.constant 0.176776692 : f32
    %439 = vector.broadcast %cst_194 : f32 to vector<6x6xf32>
    %440 = arith.mulf %438, %439 : vector<6x6xf32>
    %cst_195 = arith.constant dense<0xFF800000> : vector<6xf32>
    %441 = vector.multi_reduction <maximumf>, %440, %cst_195 [1] : vector<6x6xf32> to vector<6xf32>
    %442 = vector.shape_cast %441 : vector<6xf32> to vector<6x1xf32>
    %443 = vector.broadcast %442 : vector<6x1xf32> to vector<6x6xf32>
    %444 = arith.subf %440, %443 : vector<6x6xf32>
    %445 = math.exp %444 : vector<6x6xf32>
    %cst_196 = arith.constant dense<0.000000e+00> : vector<6xf32>
    %446 = vector.multi_reduction <add>, %445, %cst_196 [1] : vector<6x6xf32> to vector<6xf32>
    %447 = vector.shape_cast %446 : vector<6xf32> to vector<6x1xf32>
    %448 = tpu.reciprocal %447 {approx = true} : vector<6x1xf32> -> vector<6x1xf32>
    %449 = vector.broadcast %448 : vector<6x1xf32> to vector<6x6xf32>
    %450 = arith.mulf %445, %449 : vector<6x6xf32>
    %cst_197 = arith.constant dense<0.000000e+00> : vector<6x16xf32>
    %451 = tpu.matmul %450, %437, %cst_197 {dimension_numbers = #tpu.dot_dimension_numbers<[1], [0], [0], [1], [0, 0, 1, 1], [], []>} : vector<6x6xf32>, vector<6x16xf32>, vector<6x16xf32> -> vector<6x16xf32>
    %452 = arith.addf %435, %451 : vector<6x16xf32>
    %453 = vector.extract_strided_slice %357 {offsets = [0, 80], sizes = [6, 16], strides = [1, 1]} : vector<6x192xf32> to vector<6x16xf32>
    %454 = vector.extract_strided_slice %361 {offsets = [0, 80], sizes = [6, 16], strides = [1, 1]} : vector<6x192xf32> to vector<6x16xf32>
    %455 = vector.extract_strided_slice %362 {offsets = [0, 80], sizes = [6, 16], strides = [1, 1]} : vector<6x192xf32> to vector<6x16xf32>
    %cst_198 = arith.constant dense<0.000000e+00> : vector<6x6xf32>
    %456 = tpu.matmul %453, %454, %cst_198 {dimension_numbers = #tpu.dot_dimension_numbers<[1], [1], [0], [0], [0, 0, 1, 0], [], []>} : vector<6x16xf32>, vector<6x16xf32>, vector<6x6xf32> -> vector<6x6xf32>
    %cst_199 = arith.constant 0.176776692 : f32
    %457 = vector.broadcast %cst_199 : f32 to vector<6x6xf32>
    %458 = arith.mulf %456, %457 : vector<6x6xf32>
    %cst_200 = arith.constant dense<0xFF800000> : vector<6xf32>
    %459 = vector.multi_reduction <maximumf>, %458, %cst_200 [1] : vector<6x6xf32> to vector<6xf32>
    %460 = vector.shape_cast %459 : vector<6xf32> to vector<6x1xf32>
    %461 = vector.broadcast %460 : vector<6x1xf32> to vector<6x6xf32>
    %462 = arith.subf %458, %461 : vector<6x6xf32>
    %463 = math.exp %462 : vector<6x6xf32>
    %cst_201 = arith.constant dense<0.000000e+00> : vector<6xf32>
    %464 = vector.multi_reduction <add>, %463, %cst_201 [1] : vector<6x6xf32> to vector<6xf32>
    %465 = vector.shape_cast %464 : vector<6xf32> to vector<6x1xf32>
    %466 = tpu.reciprocal %465 {approx = true} : vector<6x1xf32> -> vector<6x1xf32>
    %467 = vector.broadcast %466 : vector<6x1xf32> to vector<6x6xf32>
    %468 = arith.mulf %463, %467 : vector<6x6xf32>
    %cst_202 = arith.constant dense<0.000000e+00> : vector<6x16xf32>
    %469 = tpu.matmul %468, %455, %cst_202 {dimension_numbers = #tpu.dot_dimension_numbers<[1], [0], [0], [1], [0, 0, 1, 1], [], []>} : vector<6x6xf32>, vector<6x16xf32>, vector<6x16xf32> -> vector<6x16xf32>
    %470 = arith.addf %453, %469 : vector<6x16xf32>
    %471 = vector.extract_strided_slice %357 {offsets = [0, 96], sizes = [6, 16], strides = [1, 1]} : vector<6x192xf32> to vector<6x16xf32>
    %472 = vector.extract_strided_slice %361 {offsets = [0, 96], sizes = [6, 16], strides = [1, 1]} : vector<6x192xf32> to vector<6x16xf32>
    %473 = vector.extract_strided_slice %362 {offsets = [0, 96], sizes = [6, 16], strides = [1, 1]} : vector<6x192xf32> to vector<6x16xf32>
    %cst_203 = arith.constant dense<0.000000e+00> : vector<6x6xf32>
    %474 = tpu.matmul %471, %472, %cst_203 {dimension_numbers = #tpu.dot_dimension_numbers<[1], [1], [0], [0], [0, 0, 1, 0], [], []>} : vector<6x16xf32>, vector<6x16xf32>, vector<6x6xf32> -> vector<6x6xf32>
    %cst_204 = arith.constant 0.176776692 : f32
    %475 = vector.broadcast %cst_204 : f32 to vector<6x6xf32>
    %476 = arith.mulf %474, %475 : vector<6x6xf32>
    %cst_205 = arith.constant dense<0xFF800000> : vector<6xf32>
    %477 = vector.multi_reduction <maximumf>, %476, %cst_205 [1] : vector<6x6xf32> to vector<6xf32>
    %478 = vector.shape_cast %477 : vector<6xf32> to vector<6x1xf32>
    %479 = vector.broadcast %478 : vector<6x1xf32> to vector<6x6xf32>
    %480 = arith.subf %476, %479 : vector<6x6xf32>
    %481 = math.exp %480 : vector<6x6xf32>
    %cst_206 = arith.constant dense<0.000000e+00> : vector<6xf32>
    %482 = vector.multi_reduction <add>, %481, %cst_206 [1] : vector<6x6xf32> to vector<6xf32>
    %483 = vector.shape_cast %482 : vector<6xf32> to vector<6x1xf32>
    %484 = tpu.reciprocal %483 {approx = true} : vector<6x1xf32> -> vector<6x1xf32>
    %485 = vector.broadcast %484 : vector<6x1xf32> to vector<6x6xf32>
    %486 = arith.mulf %481, %485 : vector<6x6xf32>
    %cst_207 = arith.constant dense<0.000000e+00> : vector<6x16xf32>
    %487 = tpu.matmul %486, %473, %cst_207 {dimension_numbers = #tpu.dot_dimension_numbers<[1], [0], [0], [1], [0, 0, 1, 1], [], []>} : vector<6x6xf32>, vector<6x16xf32>, vector<6x16xf32> -> vector<6x16xf32>
    %488 = arith.addf %471, %487 : vector<6x16xf32>
    %489 = vector.extract_strided_slice %357 {offsets = [0, 112], sizes = [6, 16], strides = [1, 1]} : vector<6x192xf32> to vector<6x16xf32>
    %490 = vector.extract_strided_slice %361 {offsets = [0, 112], sizes = [6, 16], strides = [1, 1]} : vector<6x192xf32> to vector<6x16xf32>
    %491 = vector.extract_strided_slice %362 {offsets = [0, 112], sizes = [6, 16], strides = [1, 1]} : vector<6x192xf32> to vector<6x16xf32>
    %cst_208 = arith.constant dense<0.000000e+00> : vector<6x6xf32>
    %492 = tpu.matmul %489, %490, %cst_208 {dimension_numbers = #tpu.dot_dimension_numbers<[1], [1], [0], [0], [0, 0, 1, 0], [], []>} : vector<6x16xf32>, vector<6x16xf32>, vector<6x6xf32> -> vector<6x6xf32>
    %cst_209 = arith.constant 0.176776692 : f32
    %493 = vector.broadcast %cst_209 : f32 to vector<6x6xf32>
    %494 = arith.mulf %492, %493 : vector<6x6xf32>
    %cst_210 = arith.constant dense<0xFF800000> : vector<6xf32>
    %495 = vector.multi_reduction <maximumf>, %494, %cst_210 [1] : vector<6x6xf32> to vector<6xf32>
    %496 = vector.shape_cast %495 : vector<6xf32> to vector<6x1xf32>
    %497 = vector.broadcast %496 : vector<6x1xf32> to vector<6x6xf32>
    %498 = arith.subf %494, %497 : vector<6x6xf32>
    %499 = math.exp %498 : vector<6x6xf32>
    %cst_211 = arith.constant dense<0.000000e+00> : vector<6xf32>
    %500 = vector.multi_reduction <add>, %499, %cst_211 [1] : vector<6x6xf32> to vector<6xf32>
    %501 = vector.shape_cast %500 : vector<6xf32> to vector<6x1xf32>
    %502 = tpu.reciprocal %501 {approx = true} : vector<6x1xf32> -> vector<6x1xf32>
    %503 = vector.broadcast %502 : vector<6x1xf32> to vector<6x6xf32>
    %504 = arith.mulf %499, %503 : vector<6x6xf32>
    %cst_212 = arith.constant dense<0.000000e+00> : vector<6x16xf32>
    %505 = tpu.matmul %504, %491, %cst_212 {dimension_numbers = #tpu.dot_dimension_numbers<[1], [0], [0], [1], [0, 0, 1, 1], [], []>} : vector<6x6xf32>, vector<6x16xf32>, vector<6x16xf32> -> vector<6x16xf32>
    %506 = arith.addf %489, %505 : vector<6x16xf32>
    %507 = vector.extract_strided_slice %357 {offsets = [0, 128], sizes = [6, 16], strides = [1, 1]} : vector<6x192xf32> to vector<6x16xf32>
    %508 = vector.extract_strided_slice %361 {offsets = [0, 128], sizes = [6, 16], strides = [1, 1]} : vector<6x192xf32> to vector<6x16xf32>
    %509 = vector.extract_strided_slice %362 {offsets = [0, 128], sizes = [6, 16], strides = [1, 1]} : vector<6x192xf32> to vector<6x16xf32>
    %cst_213 = arith.constant dense<0.000000e+00> : vector<6x6xf32>
    %510 = tpu.matmul %507, %508, %cst_213 {dimension_numbers = #tpu.dot_dimension_numbers<[1], [1], [0], [0], [0, 0, 1, 0], [], []>} : vector<6x16xf32>, vector<6x16xf32>, vector<6x6xf32> -> vector<6x6xf32>
    %cst_214 = arith.constant 0.176776692 : f32
    %511 = vector.broadcast %cst_214 : f32 to vector<6x6xf32>
    %512 = arith.mulf %510, %511 : vector<6x6xf32>
    %cst_215 = arith.constant dense<0xFF800000> : vector<6xf32>
    %513 = vector.multi_reduction <maximumf>, %512, %cst_215 [1] : vector<6x6xf32> to vector<6xf32>
    %514 = vector.shape_cast %513 : vector<6xf32> to vector<6x1xf32>
    %515 = vector.broadcast %514 : vector<6x1xf32> to vector<6x6xf32>
    %516 = arith.subf %512, %515 : vector<6x6xf32>
    %517 = math.exp %516 : vector<6x6xf32>
    %cst_216 = arith.constant dense<0.000000e+00> : vector<6xf32>
    %518 = vector.multi_reduction <add>, %517, %cst_216 [1] : vector<6x6xf32> to vector<6xf32>
    %519 = vector.shape_cast %518 : vector<6xf32> to vector<6x1xf32>
    %520 = tpu.reciprocal %519 {approx = true} : vector<6x1xf32> -> vector<6x1xf32>
    %521 = vector.broadcast %520 : vector<6x1xf32> to vector<6x6xf32>
    %522 = arith.mulf %517, %521 : vector<6x6xf32>
    %cst_217 = arith.constant dense<0.000000e+00> : vector<6x16xf32>
    %523 = tpu.matmul %522, %509, %cst_217 {dimension_numbers = #tpu.dot_dimension_numbers<[1], [0], [0], [1], [0, 0, 1, 1], [], []>} : vector<6x6xf32>, vector<6x16xf32>, vector<6x16xf32> -> vector<6x16xf32>
    %524 = arith.addf %507, %523 : vector<6x16xf32>
    %525 = vector.extract_strided_slice %357 {offsets = [0, 144], sizes = [6, 16], strides = [1, 1]} : vector<6x192xf32> to vector<6x16xf32>
    %526 = vector.extract_strided_slice %361 {offsets = [0, 144], sizes = [6, 16], strides = [1, 1]} : vector<6x192xf32> to vector<6x16xf32>
    %527 = vector.extract_strided_slice %362 {offsets = [0, 144], sizes = [6, 16], strides = [1, 1]} : vector<6x192xf32> to vector<6x16xf32>
    %cst_218 = arith.constant dense<0.000000e+00> : vector<6x6xf32>
    %528 = tpu.matmul %525, %526, %cst_218 {dimension_numbers = #tpu.dot_dimension_numbers<[1], [1], [0], [0], [0, 0, 1, 0], [], []>} : vector<6x16xf32>, vector<6x16xf32>, vector<6x6xf32> -> vector<6x6xf32>
    %cst_219 = arith.constant 0.176776692 : f32
    %529 = vector.broadcast %cst_219 : f32 to vector<6x6xf32>
    %530 = arith.mulf %528, %529 : vector<6x6xf32>
    %cst_220 = arith.constant dense<0xFF800000> : vector<6xf32>
    %531 = vector.multi_reduction <maximumf>, %530, %cst_220 [1] : vector<6x6xf32> to vector<6xf32>
    %532 = vector.shape_cast %531 : vector<6xf32> to vector<6x1xf32>
    %533 = vector.broadcast %532 : vector<6x1xf32> to vector<6x6xf32>
    %534 = arith.subf %530, %533 : vector<6x6xf32>
    %535 = math.exp %534 : vector<6x6xf32>
    %cst_221 = arith.constant dense<0.000000e+00> : vector<6xf32>
    %536 = vector.multi_reduction <add>, %535, %cst_221 [1] : vector<6x6xf32> to vector<6xf32>
    %537 = vector.shape_cast %536 : vector<6xf32> to vector<6x1xf32>
    %538 = tpu.reciprocal %537 {approx = true} : vector<6x1xf32> -> vector<6x1xf32>
    %539 = vector.broadcast %538 : vector<6x1xf32> to vector<6x6xf32>
    %540 = arith.mulf %535, %539 : vector<6x6xf32>
    %cst_222 = arith.constant dense<0.000000e+00> : vector<6x16xf32>
    %541 = tpu.matmul %540, %527, %cst_222 {dimension_numbers = #tpu.dot_dimension_numbers<[1], [0], [0], [1], [0, 0, 1, 1], [], []>} : vector<6x6xf32>, vector<6x16xf32>, vector<6x16xf32> -> vector<6x16xf32>
    %542 = arith.addf %525, %541 : vector<6x16xf32>
    %543 = vector.extract_strided_slice %357 {offsets = [0, 160], sizes = [6, 16], strides = [1, 1]} : vector<6x192xf32> to vector<6x16xf32>
    %544 = vector.extract_strided_slice %361 {offsets = [0, 160], sizes = [6, 16], strides = [1, 1]} : vector<6x192xf32> to vector<6x16xf32>
    %545 = vector.extract_strided_slice %362 {offsets = [0, 160], sizes = [6, 16], strides = [1, 1]} : vector<6x192xf32> to vector<6x16xf32>
    %cst_223 = arith.constant dense<0.000000e+00> : vector<6x6xf32>
    %546 = tpu.matmul %543, %544, %cst_223 {dimension_numbers = #tpu.dot_dimension_numbers<[1], [1], [0], [0], [0, 0, 1, 0], [], []>} : vector<6x16xf32>, vector<6x16xf32>, vector<6x6xf32> -> vector<6x6xf32>
    %cst_224 = arith.constant 0.176776692 : f32
    %547 = vector.broadcast %cst_224 : f32 to vector<6x6xf32>
    %548 = arith.mulf %546, %547 : vector<6x6xf32>
    %cst_225 = arith.constant dense<0xFF800000> : vector<6xf32>
    %549 = vector.multi_reduction <maximumf>, %548, %cst_225 [1] : vector<6x6xf32> to vector<6xf32>
    %550 = vector.shape_cast %549 : vector<6xf32> to vector<6x1xf32>
    %551 = vector.broadcast %550 : vector<6x1xf32> to vector<6x6xf32>
    %552 = arith.subf %548, %551 : vector<6x6xf32>
    %553 = math.exp %552 : vector<6x6xf32>
    %cst_226 = arith.constant dense<0.000000e+00> : vector<6xf32>
    %554 = vector.multi_reduction <add>, %553, %cst_226 [1] : vector<6x6xf32> to vector<6xf32>
    %555 = vector.shape_cast %554 : vector<6xf32> to vector<6x1xf32>
    %556 = tpu.reciprocal %555 {approx = true} : vector<6x1xf32> -> vector<6x1xf32>
    %557 = vector.broadcast %556 : vector<6x1xf32> to vector<6x6xf32>
    %558 = arith.mulf %553, %557 : vector<6x6xf32>
    %cst_227 = arith.constant dense<0.000000e+00> : vector<6x16xf32>
    %559 = tpu.matmul %558, %545, %cst_227 {dimension_numbers = #tpu.dot_dimension_numbers<[1], [0], [0], [1], [0, 0, 1, 1], [], []>} : vector<6x6xf32>, vector<6x16xf32>, vector<6x16xf32> -> vector<6x16xf32>
    %560 = arith.addf %543, %559 : vector<6x16xf32>
    %561 = vector.extract_strided_slice %357 {offsets = [0, 176], sizes = [6, 16], strides = [1, 1]} : vector<6x192xf32> to vector<6x16xf32>
    %562 = vector.extract_strided_slice %361 {offsets = [0, 176], sizes = [6, 16], strides = [1, 1]} : vector<6x192xf32> to vector<6x16xf32>
    %563 = vector.extract_strided_slice %362 {offsets = [0, 176], sizes = [6, 16], strides = [1, 1]} : vector<6x192xf32> to vector<6x16xf32>
    %cst_228 = arith.constant dense<0.000000e+00> : vector<6x6xf32>
    %564 = tpu.matmul %561, %562, %cst_228 {dimension_numbers = #tpu.dot_dimension_numbers<[1], [1], [0], [0], [0, 0, 1, 0], [], []>} : vector<6x16xf32>, vector<6x16xf32>, vector<6x6xf32> -> vector<6x6xf32>
    %cst_229 = arith.constant 0.176776692 : f32
    %565 = vector.broadcast %cst_229 : f32 to vector<6x6xf32>
    %566 = arith.mulf %564, %565 : vector<6x6xf32>
    %cst_230 = arith.constant dense<0xFF800000> : vector<6xf32>
    %567 = vector.multi_reduction <maximumf>, %566, %cst_230 [1] : vector<6x6xf32> to vector<6xf32>
    %568 = vector.shape_cast %567 : vector<6xf32> to vector<6x1xf32>
    %569 = vector.broadcast %568 : vector<6x1xf32> to vector<6x6xf32>
    %570 = arith.subf %566, %569 : vector<6x6xf32>
    %571 = math.exp %570 : vector<6x6xf32>
    %cst_231 = arith.constant dense<0.000000e+00> : vector<6xf32>
    %572 = vector.multi_reduction <add>, %571, %cst_231 [1] : vector<6x6xf32> to vector<6xf32>
    %573 = vector.shape_cast %572 : vector<6xf32> to vector<6x1xf32>
    %574 = tpu.reciprocal %573 {approx = true} : vector<6x1xf32> -> vector<6x1xf32>
    %575 = vector.broadcast %574 : vector<6x1xf32> to vector<6x6xf32>
    %576 = arith.mulf %571, %575 : vector<6x6xf32>
    %cst_232 = arith.constant dense<0.000000e+00> : vector<6x16xf32>
    %577 = tpu.matmul %576, %563, %cst_232 {dimension_numbers = #tpu.dot_dimension_numbers<[1], [0], [0], [1], [0, 0, 1, 1], [], []>} : vector<6x6xf32>, vector<6x16xf32>, vector<6x16xf32> -> vector<6x16xf32>
    %578 = arith.addf %561, %577 : vector<6x16xf32>
    %579 = tpu.concatenate %380, %398, %416, %434, %452, %470, %488, %506, %524, %542, %560, %578 in 1 : vector<6x16xf32>, vector<6x16xf32>, vector<6x16xf32>, vector<6x16xf32>, vector<6x16xf32>, vector<6x16xf32>, vector<6x16xf32>, vector<6x16xf32>, vector<6x16xf32>, vector<6x16xf32>, vector<6x16xf32>, vector<6x16xf32> -> vector<6x192xf32>
    %580 = vector.extract_strided_slice %354 {offsets = [0, 0], sizes = [1, 192], strides = [1, 1]} : vector<4x192xf32> to vector<1x192xf32>
    %581 = vector.extract_strided_slice %354 {offsets = [1, 0], sizes = [1, 192], strides = [1, 1]} : vector<4x192xf32> to vector<1x192xf32>
    %cst_233 = arith.constant dense<0.000000e+00> : vector<6x192xf32>
    %582 = tpu.matmul %579, %81, %cst_233 {dimension_numbers = #tpu.dot_dimension_numbers<[1], [0], [0], [1], [0, 0, 1, 1], [], []>} : vector<6x192xf32>, vector<192x192xf32>, vector<6x192xf32> -> vector<6x192xf32>
    %583 = arith.subf %579, %582 : vector<6x192xf32>
    %584 = arith.mulf %583, %583 : vector<6x192xf32>
    %cst_234 = arith.constant dense<0.000000e+00> : vector<6x192xf32>
    %585 = tpu.matmul %584, %81, %cst_234 {dimension_numbers = #tpu.dot_dimension_numbers<[1], [0], [0], [1], [0, 0, 1, 1], [], []>} : vector<6x192xf32>, vector<192x192xf32>, vector<6x192xf32> -> vector<6x192xf32>
    %cst_235 = arith.constant 9.99999974E-6 : f32
    %586 = vector.broadcast %cst_235 : f32 to vector<6x192xf32>
    %587 = arith.addf %585, %586 : vector<6x192xf32>
    %588 = math.rsqrt %587 : vector<6x192xf32>
    %589 = arith.mulf %583, %588 : vector<6x192xf32>
    %590 = vector.broadcast %580 : vector<1x192xf32> to vector<6x192xf32>
    %591 = arith.mulf %589, %590 : vector<6x192xf32>
    %592 = vector.broadcast %581 : vector<1x192xf32> to vector<6x192xf32>
    %593 = arith.addf %591, %592 : vector<6x192xf32>
    %cst_236 = arith.constant dense<0.000000e+00> : vector<6x192xf32>
    %594 = tpu.matmul %593, %352, %cst_236 {dimension_numbers = #tpu.dot_dimension_numbers<[1], [0], [0], [1], [0, 0, 1, 1], [], []>} : vector<6x192xf32>, vector<192x192xf32>, vector<6x192xf32> -> vector<6x192xf32>
    %595 = vector.broadcast %353 : vector<1x192xf32> to vector<6x192xf32>
    %596 = arith.addf %594, %595 : vector<6x192xf32>
    %cst_237 = arith.constant 0.000000e+00 : f32
    %597 = vector.broadcast %cst_237 : f32 to vector<6x192xf32>
    %598 = arith.maximumf %596, %597 : vector<6x192xf32>
    %599 = arith.addf %593, %598 : vector<6x192xf32>
    %600 = vector.extract_strided_slice %354 {offsets = [2, 0], sizes = [1, 192], strides = [1, 1]} : vector<4x192xf32> to vector<1x192xf32>
    %601 = vector.extract_strided_slice %354 {offsets = [3, 0], sizes = [1, 192], strides = [1, 1]} : vector<4x192xf32> to vector<1x192xf32>
    %cst_238 = arith.constant dense<0.000000e+00> : vector<6x192xf32>
    %602 = tpu.matmul %599, %81, %cst_238 {dimension_numbers = #tpu.dot_dimension_numbers<[1], [0], [0], [1], [0, 0, 1, 1], [], []>} : vector<6x192xf32>, vector<192x192xf32>, vector<6x192xf32> -> vector<6x192xf32>
    %603 = arith.subf %599, %602 : vector<6x192xf32>
    %604 = arith.mulf %603, %603 : vector<6x192xf32>
    %cst_239 = arith.constant dense<0.000000e+00> : vector<6x192xf32>
    %605 = tpu.matmul %604, %81, %cst_239 {dimension_numbers = #tpu.dot_dimension_numbers<[1], [0], [0], [1], [0, 0, 1, 1], [], []>} : vector<6x192xf32>, vector<192x192xf32>, vector<6x192xf32> -> vector<6x192xf32>
    %cst_240 = arith.constant 9.99999974E-6 : f32
    %606 = vector.broadcast %cst_240 : f32 to vector<6x192xf32>
    %607 = arith.addf %605, %606 : vector<6x192xf32>
    %608 = math.rsqrt %607 : vector<6x192xf32>
    %609 = arith.mulf %603, %608 : vector<6x192xf32>
    %610 = vector.broadcast %600 : vector<1x192xf32> to vector<6x192xf32>
    %611 = arith.mulf %609, %610 : vector<6x192xf32>
    %612 = vector.broadcast %601 : vector<1x192xf32> to vector<6x192xf32>
    %613 = arith.addf %611, %612 : vector<6x192xf32>
    %c0_241 = arith.constant 0 : index
    %c0_242 = arith.constant 0 : index
    %614 = vector.load %arg20[%c0_241, %c0_242] : memref<192x32xf32, #tpu.memory_space<vmem>>, vector<192x32xf32>
    %cst_243 = arith.constant dense<0.000000e+00> : vector<6x32xf32>
    %615 = tpu.matmul %613, %614, %cst_243 {dimension_numbers = #tpu.dot_dimension_numbers<[1], [0], [0], [1], [0, 0, 1, 1], [], []>} : vector<6x192xf32>, vector<192x32xf32>, vector<6x32xf32> -> vector<6x32xf32>
    %c0_244 = arith.constant 0 : index
    %c0_245 = arith.constant 0 : index
    %616 = vector.load %arg21[%c0_244, %c0_245] : memref<1x32xf32, #tpu.memory_space<vmem>>, vector<1x32xf32>
    %617 = vector.broadcast %616 : vector<1x32xf32> to vector<6x32xf32>
    %618 = arith.addf %615, %617 : vector<6x32xf32>
    %c0_246 = arith.constant 0 : index
    %c0_247 = arith.constant 0 : index
    %619 = vector.load %arg27[%c0_246, %c0_247] : memref<6x32xf32, #tpu.memory_space<vmem>>, vector<6x32xf32>
    tpu.vector_store %arg27[%c0_246, %c0_247], %618 {strides = array<i32>} : memref<6x32xf32, #tpu.memory_space<vmem>>, vector<6x32xf32>,
    %c0_248 = arith.constant 0 : index
    %c0_249 = arith.constant 0 : index
    %620 = vector.load %arg23[%c0_248, %c0_249] : memref<88x36xf32, #tpu.memory_space<vmem>>, vector<88x36xf32>
    %c0_250 = arith.constant 0 : index
    %c0_251 = arith.constant 0 : index
    %621 = vector.load %arg24[%c0_250, %c0_251] : memref<36x32xf32, #tpu.memory_space<vmem>>, vector<36x32xf32>
    %cst_252 = arith.constant dense<0.000000e+00> : vector<88x32xf32>
    %622 = tpu.matmul %620, %621, %cst_252 {dimension_numbers = #tpu.dot_dimension_numbers<[1], [0], [0], [1], [0, 0, 1, 1], [], []>} : vector<88x36xf32>, vector<36x32xf32>, vector<88x32xf32> -> vector<88x32xf32>
    %623 = vector.extract_strided_slice %622 {offsets = [0, 0], sizes = [8, 32], strides = [1, 1]} : vector<88x32xf32> to vector<8x32xf32>
    %c0_253 = arith.constant 0 : index
    %c0_254 = arith.constant 0 : index
    %c0_255 = arith.constant 0 : index
    %624 = vector.load %arg25[%c0_253, %c0_254, %c0_255] : memref<11x32x32xf32, #tpu.memory_space<vmem>>, vector<1x32x32xf32>
    %625 = vector.shape_cast %624 : vector<1x32x32xf32> to vector<32x32xf32>
    %cst_256 = arith.constant dense<0.000000e+00> : vector<8x32xf32>
    %626 = tpu.matmul %623, %625, %cst_256 {dimension_numbers = #tpu.dot_dimension_numbers<[1], [0], [0], [1], [0, 0, 1, 1], [], []>} : vector<8x32xf32>, vector<32x32xf32>, vector<8x32xf32> -> vector<8x32xf32>
    %c0_257 = arith.constant 0 : index
    %c0_258 = arith.constant 0 : index
    %c0_259 = arith.constant 0 : index
    %627 = vector.load %arg22[%c0_257, %c0_258, %c0_259] : memref<11x8x8xf32, #tpu.memory_space<vmem>>, vector<1x8x8xf32>
    %628 = vector.shape_cast %627 : vector<1x8x8xf32> to vector<8x8xf32>
    %cst_260 = arith.constant dense<0.000000e+00> : vector<8x32xf32>
    %629 = tpu.matmul %628, %626, %cst_260 {dimension_numbers = #tpu.dot_dimension_numbers<[1], [0], [0], [1], [0, 0, 1, 1], [], []>} : vector<8x8xf32>, vector<8x32xf32>, vector<8x32xf32> -> vector<8x32xf32>
    %c0_261 = arith.constant 0 : index
    %c0_262 = arith.constant 0 : index
    %c0_263 = arith.constant 0 : index
    %630 = vector.load %arg26[%c0_261, %c0_262, %c0_263] : memref<11x1x32xf32, #tpu.memory_space<vmem>>, vector<1x1x32xf32>
    %631 = vector.shape_cast %630 : vector<1x1x32xf32> to vector<1x32xf32>
    %632 = vector.broadcast %631 : vector<1x32xf32> to vector<8x32xf32>
    %633 = arith.addf %629, %632 : vector<8x32xf32>
    %cst_264 = arith.constant 0.000000e+00 : f32
    %634 = vector.broadcast %cst_264 : f32 to vector<8x32xf32>
    %635 = arith.maximumf %633, %634 : vector<8x32xf32>
    %636 = vector.extract_strided_slice %635 {offsets = [0, 0], sizes = [3, 32], strides = [1, 1]} : vector<8x32xf32> to vector<3x32xf32>
    %cst_265 = arith.constant dense<0.000000e+00> : vector<32xf32>
    %637 = vector.multi_reduction <add>, %636, %cst_265 [0] : vector<3x32xf32> to vector<32xf32>
    %638 = vector.shape_cast %637 : vector<32xf32> to vector<1x32xf32>
    %639 = vector.extract_strided_slice %622 {offsets = [8, 0], sizes = [8, 32], strides = [1, 1]} : vector<88x32xf32> to vector<8x32xf32>
    %c1_266 = arith.constant 1 : index
    %c0_267 = arith.constant 0 : index
    %c0_268 = arith.constant 0 : index
    %640 = vector.load %arg25[%c1_266, %c0_267, %c0_268] : memref<11x32x32xf32, #tpu.memory_space<vmem>>, vector<1x32x32xf32>
    %641 = vector.shape_cast %640 : vector<1x32x32xf32> to vector<32x32xf32>
    %cst_269 = arith.constant dense<0.000000e+00> : vector<8x32xf32>
    %642 = tpu.matmul %639, %641, %cst_269 {dimension_numbers = #tpu.dot_dimension_numbers<[1], [0], [0], [1], [0, 0, 1, 1], [], []>} : vector<8x32xf32>, vector<32x32xf32>, vector<8x32xf32> -> vector<8x32xf32>
    %c1_270 = arith.constant 1 : index
    %c0_271 = arith.constant 0 : index
    %c0_272 = arith.constant 0 : index
    %643 = vector.load %arg22[%c1_270, %c0_271, %c0_272] : memref<11x8x8xf32, #tpu.memory_space<vmem>>, vector<1x8x8xf32>
    %644 = vector.shape_cast %643 : vector<1x8x8xf32> to vector<8x8xf32>
    %cst_273 = arith.constant dense<0.000000e+00> : vector<8x32xf32>
    %645 = tpu.matmul %644, %642, %cst_273 {dimension_numbers = #tpu.dot_dimension_numbers<[1], [0], [0], [1], [0, 0, 1, 1], [], []>} : vector<8x8xf32>, vector<8x32xf32>, vector<8x32xf32> -> vector<8x32xf32>
    %c1_274 = arith.constant 1 : index
    %c0_275 = arith.constant 0 : index
    %c0_276 = arith.constant 0 : index
    %646 = vector.load %arg26[%c1_274, %c0_275, %c0_276] : memref<11x1x32xf32, #tpu.memory_space<vmem>>, vector<1x1x32xf32>
    %647 = vector.shape_cast %646 : vector<1x1x32xf32> to vector<1x32xf32>
    %648 = vector.broadcast %647 : vector<1x32xf32> to vector<8x32xf32>
    %649 = arith.addf %645, %648 : vector<8x32xf32>
    %cst_277 = arith.constant 0.000000e+00 : f32
    %650 = vector.broadcast %cst_277 : f32 to vector<8x32xf32>
    %651 = arith.maximumf %649, %650 : vector<8x32xf32>
    %652 = vector.extract_strided_slice %651 {offsets = [0, 0], sizes = [2, 32], strides = [1, 1]} : vector<8x32xf32> to vector<2x32xf32>
    %cst_278 = arith.constant dense<0.000000e+00> : vector<32xf32>
    %653 = vector.multi_reduction <add>, %652, %cst_278 [0] : vector<2x32xf32> to vector<32xf32>
    %654 = vector.shape_cast %653 : vector<32xf32> to vector<1x32xf32>
    %655 = vector.extract_strided_slice %622 {offsets = [16, 0], sizes = [8, 32], strides = [1, 1]} : vector<88x32xf32> to vector<8x32xf32>
    %c2_279 = arith.constant 2 : index
    %c0_280 = arith.constant 0 : index
    %c0_281 = arith.constant 0 : index
    %656 = vector.load %arg25[%c2_279, %c0_280, %c0_281] : memref<11x32x32xf32, #tpu.memory_space<vmem>>, vector<1x32x32xf32>
    %657 = vector.shape_cast %656 : vector<1x32x32xf32> to vector<32x32xf32>
    %cst_282 = arith.constant dense<0.000000e+00> : vector<8x32xf32>
    %658 = tpu.matmul %655, %657, %cst_282 {dimension_numbers = #tpu.dot_dimension_numbers<[1], [0], [0], [1], [0, 0, 1, 1], [], []>} : vector<8x32xf32>, vector<32x32xf32>, vector<8x32xf32> -> vector<8x32xf32>
    %c2_283 = arith.constant 2 : index
    %c0_284 = arith.constant 0 : index
    %c0_285 = arith.constant 0 : index
    %659 = vector.load %arg22[%c2_283, %c0_284, %c0_285] : memref<11x8x8xf32, #tpu.memory_space<vmem>>, vector<1x8x8xf32>
    %660 = vector.shape_cast %659 : vector<1x8x8xf32> to vector<8x8xf32>
    %cst_286 = arith.constant dense<0.000000e+00> : vector<8x32xf32>
    %661 = tpu.matmul %660, %658, %cst_286 {dimension_numbers = #tpu.dot_dimension_numbers<[1], [0], [0], [1], [0, 0, 1, 1], [], []>} : vector<8x8xf32>, vector<8x32xf32>, vector<8x32xf32> -> vector<8x32xf32>
    %c2_287 = arith.constant 2 : index
    %c0_288 = arith.constant 0 : index
    %c0_289 = arith.constant 0 : index
    %662 = vector.load %arg26[%c2_287, %c0_288, %c0_289] : memref<11x1x32xf32, #tpu.memory_space<vmem>>, vector<1x1x32xf32>
    %663 = vector.shape_cast %662 : vector<1x1x32xf32> to vector<1x32xf32>
    %664 = vector.broadcast %663 : vector<1x32xf32> to vector<8x32xf32>
    %665 = arith.addf %661, %664 : vector<8x32xf32>
    %cst_290 = arith.constant 0.000000e+00 : f32
    %666 = vector.broadcast %cst_290 : f32 to vector<8x32xf32>
    %667 = arith.maximumf %665, %666 : vector<8x32xf32>
    %668 = vector.extract_strided_slice %667 {offsets = [0, 0], sizes = [3, 32], strides = [1, 1]} : vector<8x32xf32> to vector<3x32xf32>
    %cst_291 = arith.constant dense<0.000000e+00> : vector<32xf32>
    %669 = vector.multi_reduction <add>, %668, %cst_291 [0] : vector<3x32xf32> to vector<32xf32>
    %670 = vector.shape_cast %669 : vector<32xf32> to vector<1x32xf32>
    %671 = vector.extract_strided_slice %622 {offsets = [24, 0], sizes = [8, 32], strides = [1, 1]} : vector<88x32xf32> to vector<8x32xf32>
    %c3_292 = arith.constant 3 : index
    %c0_293 = arith.constant 0 : index
    %c0_294 = arith.constant 0 : index
    %672 = vector.load %arg25[%c3_292, %c0_293, %c0_294] : memref<11x32x32xf32, #tpu.memory_space<vmem>>, vector<1x32x32xf32>
    %673 = vector.shape_cast %672 : vector<1x32x32xf32> to vector<32x32xf32>
    %cst_295 = arith.constant dense<0.000000e+00> : vector<8x32xf32>
    %674 = tpu.matmul %671, %673, %cst_295 {dimension_numbers = #tpu.dot_dimension_numbers<[1], [0], [0], [1], [0, 0, 1, 1], [], []>} : vector<8x32xf32>, vector<32x32xf32>, vector<8x32xf32> -> vector<8x32xf32>
    %c3_296 = arith.constant 3 : index
    %c0_297 = arith.constant 0 : index
    %c0_298 = arith.constant 0 : index
    %675 = vector.load %arg22[%c3_296, %c0_297, %c0_298] : memref<11x8x8xf32, #tpu.memory_space<vmem>>, vector<1x8x8xf32>
    %676 = vector.shape_cast %675 : vector<1x8x8xf32> to vector<8x8xf32>
    %cst_299 = arith.constant dense<0.000000e+00> : vector<8x32xf32>
    %677 = tpu.matmul %676, %674, %cst_299 {dimension_numbers = #tpu.dot_dimension_numbers<[1], [0], [0], [1], [0, 0, 1, 1], [], []>} : vector<8x8xf32>, vector<8x32xf32>, vector<8x32xf32> -> vector<8x32xf32>
    %c3_300 = arith.constant 3 : index
    %c0_301 = arith.constant 0 : index
    %c0_302 = arith.constant 0 : index
    %678 = vector.load %arg26[%c3_300, %c0_301, %c0_302] : memref<11x1x32xf32, #tpu.memory_space<vmem>>, vector<1x1x32xf32>
    %679 = vector.shape_cast %678 : vector<1x1x32xf32> to vector<1x32xf32>
    %680 = vector.broadcast %679 : vector<1x32xf32> to vector<8x32xf32>
    %681 = arith.addf %677, %680 : vector<8x32xf32>
    %cst_303 = arith.constant 0.000000e+00 : f32
    %682 = vector.broadcast %cst_303 : f32 to vector<8x32xf32>
    %683 = arith.maximumf %681, %682 : vector<8x32xf32>
    %684 = vector.extract_strided_slice %683 {offsets = [0, 0], sizes = [2, 32], strides = [1, 1]} : vector<8x32xf32> to vector<2x32xf32>
    %cst_304 = arith.constant dense<0.000000e+00> : vector<32xf32>
    %685 = vector.multi_reduction <add>, %684, %cst_304 [0] : vector<2x32xf32> to vector<32xf32>
    %686 = vector.shape_cast %685 : vector<32xf32> to vector<1x32xf32>
    %687 = vector.extract_strided_slice %622 {offsets = [32, 0], sizes = [8, 32], strides = [1, 1]} : vector<88x32xf32> to vector<8x32xf32>
    %c4 = arith.constant 4 : index
    %c0_305 = arith.constant 0 : index
    %c0_306 = arith.constant 0 : index
    %688 = vector.load %arg25[%c4, %c0_305, %c0_306] : memref<11x32x32xf32, #tpu.memory_space<vmem>>, vector<1x32x32xf32>
    %689 = vector.shape_cast %688 : vector<1x32x32xf32> to vector<32x32xf32>
    %cst_307 = arith.constant dense<0.000000e+00> : vector<8x32xf32>
    %690 = tpu.matmul %687, %689, %cst_307 {dimension_numbers = #tpu.dot_dimension_numbers<[1], [0], [0], [1], [0, 0, 1, 1], [], []>} : vector<8x32xf32>, vector<32x32xf32>, vector<8x32xf32> -> vector<8x32xf32>
    %c4_308 = arith.constant 4 : index
    %c0_309 = arith.constant 0 : index
    %c0_310 = arith.constant 0 : index
    %691 = vector.load %arg22[%c4_308, %c0_309, %c0_310] : memref<11x8x8xf32, #tpu.memory_space<vmem>>, vector<1x8x8xf32>
    %692 = vector.shape_cast %691 : vector<1x8x8xf32> to vector<8x8xf32>
    %cst_311 = arith.constant dense<0.000000e+00> : vector<8x32xf32>
    %693 = tpu.matmul %692, %690, %cst_311 {dimension_numbers = #tpu.dot_dimension_numbers<[1], [0], [0], [1], [0, 0, 1, 1], [], []>} : vector<8x8xf32>, vector<8x32xf32>, vector<8x32xf32> -> vector<8x32xf32>
    %c4_312 = arith.constant 4 : index
    %c0_313 = arith.constant 0 : index
    %c0_314 = arith.constant 0 : index
    %694 = vector.load %arg26[%c4_312, %c0_313, %c0_314] : memref<11x1x32xf32, #tpu.memory_space<vmem>>, vector<1x1x32xf32>
    %695 = vector.shape_cast %694 : vector<1x1x32xf32> to vector<1x32xf32>
    %696 = vector.broadcast %695 : vector<1x32xf32> to vector<8x32xf32>
    %697 = arith.addf %693, %696 : vector<8x32xf32>
    %cst_315 = arith.constant 0.000000e+00 : f32
    %698 = vector.broadcast %cst_315 : f32 to vector<8x32xf32>
    %699 = arith.maximumf %697, %698 : vector<8x32xf32>
    %700 = vector.extract_strided_slice %699 {offsets = [0, 0], sizes = [3, 32], strides = [1, 1]} : vector<8x32xf32> to vector<3x32xf32>
    %cst_316 = arith.constant dense<0.000000e+00> : vector<32xf32>
    %701 = vector.multi_reduction <add>, %700, %cst_316 [0] : vector<3x32xf32> to vector<32xf32>
    %702 = vector.shape_cast %701 : vector<32xf32> to vector<1x32xf32>
    %703 = vector.extract_strided_slice %622 {offsets = [40, 0], sizes = [8, 32], strides = [1, 1]} : vector<88x32xf32> to vector<8x32xf32>
    %c5 = arith.constant 5 : index
    %c0_317 = arith.constant 0 : index
    %c0_318 = arith.constant 0 : index
    %704 = vector.load %arg25[%c5, %c0_317, %c0_318] : memref<11x32x32xf32, #tpu.memory_space<vmem>>, vector<1x32x32xf32>
    %705 = vector.shape_cast %704 : vector<1x32x32xf32> to vector<32x32xf32>
    %cst_319 = arith.constant dense<0.000000e+00> : vector<8x32xf32>
    %706 = tpu.matmul %703, %705, %cst_319 {dimension_numbers = #tpu.dot_dimension_numbers<[1], [0], [0], [1], [0, 0, 1, 1], [], []>} : vector<8x32xf32>, vector<32x32xf32>, vector<8x32xf32> -> vector<8x32xf32>
    %c5_320 = arith.constant 5 : index
    %c0_321 = arith.constant 0 : index
    %c0_322 = arith.constant 0 : index
    %707 = vector.load %arg22[%c5_320, %c0_321, %c0_322] : memref<11x8x8xf32, #tpu.memory_space<vmem>>, vector<1x8x8xf32>
    %708 = vector.shape_cast %707 : vector<1x8x8xf32> to vector<8x8xf32>
    %cst_323 = arith.constant dense<0.000000e+00> : vector<8x32xf32>
    %709 = tpu.matmul %708, %706, %cst_323 {dimension_numbers = #tpu.dot_dimension_numbers<[1], [0], [0], [1], [0, 0, 1, 1], [], []>} : vector<8x8xf32>, vector<8x32xf32>, vector<8x32xf32> -> vector<8x32xf32>
    %c5_324 = arith.constant 5 : index
    %c0_325 = arith.constant 0 : index
    %c0_326 = arith.constant 0 : index
    %710 = vector.load %arg26[%c5_324, %c0_325, %c0_326] : memref<11x1x32xf32, #tpu.memory_space<vmem>>, vector<1x1x32xf32>
    %711 = vector.shape_cast %710 : vector<1x1x32xf32> to vector<1x32xf32>
    %712 = vector.broadcast %711 : vector<1x32xf32> to vector<8x32xf32>
    %713 = arith.addf %709, %712 : vector<8x32xf32>
    %cst_327 = arith.constant 0.000000e+00 : f32
    %714 = vector.broadcast %cst_327 : f32 to vector<8x32xf32>
    %715 = arith.maximumf %713, %714 : vector<8x32xf32>
    %716 = vector.extract_strided_slice %715 {offsets = [0, 0], sizes = [2, 32], strides = [1, 1]} : vector<8x32xf32> to vector<2x32xf32>
    %cst_328 = arith.constant dense<0.000000e+00> : vector<32xf32>
    %717 = vector.multi_reduction <add>, %716, %cst_328 [0] : vector<2x32xf32> to vector<32xf32>
    %718 = vector.shape_cast %717 : vector<32xf32> to vector<1x32xf32>
    %719 = vector.extract_strided_slice %622 {offsets = [48, 0], sizes = [8, 32], strides = [1, 1]} : vector<88x32xf32> to vector<8x32xf32>
    %c6 = arith.constant 6 : index
    %c0_329 = arith.constant 0 : index
    %c0_330 = arith.constant 0 : index
    %720 = vector.load %arg25[%c6, %c0_329, %c0_330] : memref<11x32x32xf32, #tpu.memory_space<vmem>>, vector<1x32x32xf32>
    %721 = vector.shape_cast %720 : vector<1x32x32xf32> to vector<32x32xf32>
    %cst_331 = arith.constant dense<0.000000e+00> : vector<8x32xf32>
    %722 = tpu.matmul %719, %721, %cst_331 {dimension_numbers = #tpu.dot_dimension_numbers<[1], [0], [0], [1], [0, 0, 1, 1], [], []>} : vector<8x32xf32>, vector<32x32xf32>, vector<8x32xf32> -> vector<8x32xf32>
    %c6_332 = arith.constant 6 : index
    %c0_333 = arith.constant 0 : index
    %c0_334 = arith.constant 0 : index
    %723 = vector.load %arg22[%c6_332, %c0_333, %c0_334] : memref<11x8x8xf32, #tpu.memory_space<vmem>>, vector<1x8x8xf32>
    %724 = vector.shape_cast %723 : vector<1x8x8xf32> to vector<8x8xf32>
    %cst_335 = arith.constant dense<0.000000e+00> : vector<8x32xf32>
    %725 = tpu.matmul %724, %722, %cst_335 {dimension_numbers = #tpu.dot_dimension_numbers<[1], [0], [0], [1], [0, 0, 1, 1], [], []>} : vector<8x8xf32>, vector<8x32xf32>, vector<8x32xf32> -> vector<8x32xf32>
    %c6_336 = arith.constant 6 : index
    %c0_337 = arith.constant 0 : index
    %c0_338 = arith.constant 0 : index
    %726 = vector.load %arg26[%c6_336, %c0_337, %c0_338] : memref<11x1x32xf32, #tpu.memory_space<vmem>>, vector<1x1x32xf32>
    %727 = vector.shape_cast %726 : vector<1x1x32xf32> to vector<1x32xf32>
    %728 = vector.broadcast %727 : vector<1x32xf32> to vector<8x32xf32>
    %729 = arith.addf %725, %728 : vector<8x32xf32>
    %cst_339 = arith.constant 0.000000e+00 : f32
    %730 = vector.broadcast %cst_339 : f32 to vector<8x32xf32>
    %731 = arith.maximumf %729, %730 : vector<8x32xf32>
    %732 = vector.extract_strided_slice %731 {offsets = [0, 0], sizes = [2, 32], strides = [1, 1]} : vector<8x32xf32> to vector<2x32xf32>
    %cst_340 = arith.constant dense<0.000000e+00> : vector<32xf32>
    %733 = vector.multi_reduction <add>, %732, %cst_340 [0] : vector<2x32xf32> to vector<32xf32>
    %734 = vector.shape_cast %733 : vector<32xf32> to vector<1x32xf32>
    %735 = vector.extract_strided_slice %622 {offsets = [56, 0], sizes = [8, 32], strides = [1, 1]} : vector<88x32xf32> to vector<8x32xf32>
    %c7 = arith.constant 7 : index
    %c0_341 = arith.constant 0 : index
    %c0_342 = arith.constant 0 : index
    %736 = vector.load %arg25[%c7, %c0_341, %c0_342] : memref<11x32x32xf32, #tpu.memory_space<vmem>>, vector<1x32x32xf32>
    %737 = vector.shape_cast %736 : vector<1x32x32xf32> to vector<32x32xf32>
    %cst_343 = arith.constant dense<0.000000e+00> : vector<8x32xf32>
    %738 = tpu.matmul %735, %737, %cst_343 {dimension_numbers = #tpu.dot_dimension_numbers<[1], [0], [0], [1], [0, 0, 1, 1], [], []>} : vector<8x32xf32>, vector<32x32xf32>, vector<8x32xf32> -> vector<8x32xf32>
    %c7_344 = arith.constant 7 : index
    %c0_345 = arith.constant 0 : index
    %c0_346 = arith.constant 0 : index
    %739 = vector.load %arg22[%c7_344, %c0_345, %c0_346] : memref<11x8x8xf32, #tpu.memory_space<vmem>>, vector<1x8x8xf32>
    %740 = vector.shape_cast %739 : vector<1x8x8xf32> to vector<8x8xf32>
    %cst_347 = arith.constant dense<0.000000e+00> : vector<8x32xf32>
    %741 = tpu.matmul %740, %738, %cst_347 {dimension_numbers = #tpu.dot_dimension_numbers<[1], [0], [0], [1], [0, 0, 1, 1], [], []>} : vector<8x8xf32>, vector<8x32xf32>, vector<8x32xf32> -> vector<8x32xf32>
    %c7_348 = arith.constant 7 : index
    %c0_349 = arith.constant 0 : index
    %c0_350 = arith.constant 0 : index
    %742 = vector.load %arg26[%c7_348, %c0_349, %c0_350] : memref<11x1x32xf32, #tpu.memory_space<vmem>>, vector<1x1x32xf32>
    %743 = vector.shape_cast %742 : vector<1x1x32xf32> to vector<1x32xf32>
    %744 = vector.broadcast %743 : vector<1x32xf32> to vector<8x32xf32>
    %745 = arith.addf %741, %744 : vector<8x32xf32>
    %cst_351 = arith.constant 0.000000e+00 : f32
    %746 = vector.broadcast %cst_351 : f32 to vector<8x32xf32>
    %747 = arith.maximumf %745, %746 : vector<8x32xf32>
    %748 = vector.extract_strided_slice %747 {offsets = [0, 0], sizes = [4, 32], strides = [1, 1]} : vector<8x32xf32> to vector<4x32xf32>
    %cst_352 = arith.constant dense<0.000000e+00> : vector<32xf32>
    %749 = vector.multi_reduction <add>, %748, %cst_352 [0] : vector<4x32xf32> to vector<32xf32>
    %750 = vector.shape_cast %749 : vector<32xf32> to vector<1x32xf32>
    %751 = vector.extract_strided_slice %622 {offsets = [64, 0], sizes = [8, 32], strides = [1, 1]} : vector<88x32xf32> to vector<8x32xf32>
    %c8 = arith.constant 8 : index
    %c0_353 = arith.constant 0 : index
    %c0_354 = arith.constant 0 : index
    %752 = vector.load %arg25[%c8, %c0_353, %c0_354] : memref<11x32x32xf32, #tpu.memory_space<vmem>>, vector<1x32x32xf32>
    %753 = vector.shape_cast %752 : vector<1x32x32xf32> to vector<32x32xf32>
    %cst_355 = arith.constant dense<0.000000e+00> : vector<8x32xf32>
    %754 = tpu.matmul %751, %753, %cst_355 {dimension_numbers = #tpu.dot_dimension_numbers<[1], [0], [0], [1], [0, 0, 1, 1], [], []>} : vector<8x32xf32>, vector<32x32xf32>, vector<8x32xf32> -> vector<8x32xf32>
    %c8_356 = arith.constant 8 : index
    %c0_357 = arith.constant 0 : index
    %c0_358 = arith.constant 0 : index
    %755 = vector.load %arg22[%c8_356, %c0_357, %c0_358] : memref<11x8x8xf32, #tpu.memory_space<vmem>>, vector<1x8x8xf32>
    %756 = vector.shape_cast %755 : vector<1x8x8xf32> to vector<8x8xf32>
    %cst_359 = arith.constant dense<0.000000e+00> : vector<8x32xf32>
    %757 = tpu.matmul %756, %754, %cst_359 {dimension_numbers = #tpu.dot_dimension_numbers<[1], [0], [0], [1], [0, 0, 1, 1], [], []>} : vector<8x8xf32>, vector<8x32xf32>, vector<8x32xf32> -> vector<8x32xf32>
    %c8_360 = arith.constant 8 : index
    %c0_361 = arith.constant 0 : index
    %c0_362 = arith.constant 0 : index
    %758 = vector.load %arg26[%c8_360, %c0_361, %c0_362] : memref<11x1x32xf32, #tpu.memory_space<vmem>>, vector<1x1x32xf32>
    %759 = vector.shape_cast %758 : vector<1x1x32xf32> to vector<1x32xf32>
    %760 = vector.broadcast %759 : vector<1x32xf32> to vector<8x32xf32>
    %761 = arith.addf %757, %760 : vector<8x32xf32>
    %cst_363 = arith.constant 0.000000e+00 : f32
    %762 = vector.broadcast %cst_363 : f32 to vector<8x32xf32>
    %763 = arith.maximumf %761, %762 : vector<8x32xf32>
    %764 = vector.extract_strided_slice %763 {offsets = [0, 0], sizes = [2, 32], strides = [1, 1]} : vector<8x32xf32> to vector<2x32xf32>
    %cst_364 = arith.constant dense<0.000000e+00> : vector<32xf32>
    %765 = vector.multi_reduction <add>, %764, %cst_364 [0] : vector<2x32xf32> to vector<32xf32>
    %766 = vector.shape_cast %765 : vector<32xf32> to vector<1x32xf32>
    %767 = vector.extract_strided_slice %622 {offsets = [72, 0], sizes = [8, 32], strides = [1, 1]} : vector<88x32xf32> to vector<8x32xf32>
    %c9 = arith.constant 9 : index
    %c0_365 = arith.constant 0 : index
    %c0_366 = arith.constant 0 : index
    %768 = vector.load %arg25[%c9, %c0_365, %c0_366] : memref<11x32x32xf32, #tpu.memory_space<vmem>>, vector<1x32x32xf32>
    %769 = vector.shape_cast %768 : vector<1x32x32xf32> to vector<32x32xf32>
    %cst_367 = arith.constant dense<0.000000e+00> : vector<8x32xf32>
    %770 = tpu.matmul %767, %769, %cst_367 {dimension_numbers = #tpu.dot_dimension_numbers<[1], [0], [0], [1], [0, 0, 1, 1], [], []>} : vector<8x32xf32>, vector<32x32xf32>, vector<8x32xf32> -> vector<8x32xf32>
    %c9_368 = arith.constant 9 : index
    %c0_369 = arith.constant 0 : index
    %c0_370 = arith.constant 0 : index
    %771 = vector.load %arg22[%c9_368, %c0_369, %c0_370] : memref<11x8x8xf32, #tpu.memory_space<vmem>>, vector<1x8x8xf32>
    %772 = vector.shape_cast %771 : vector<1x8x8xf32> to vector<8x8xf32>
    %cst_371 = arith.constant dense<0.000000e+00> : vector<8x32xf32>
    %773 = tpu.matmul %772, %770, %cst_371 {dimension_numbers = #tpu.dot_dimension_numbers<[1], [0], [0], [1], [0, 0, 1, 1], [], []>} : vector<8x8xf32>, vector<8x32xf32>, vector<8x32xf32> -> vector<8x32xf32>
    %c9_372 = arith.constant 9 : index
    %c0_373 = arith.constant 0 : index
    %c0_374 = arith.constant 0 : index
    %774 = vector.load %arg26[%c9_372, %c0_373, %c0_374] : memref<11x1x32xf32, #tpu.memory_space<vmem>>, vector<1x1x32xf32>
    %775 = vector.shape_cast %774 : vector<1x1x32xf32> to vector<1x32xf32>
    %776 = vector.broadcast %775 : vector<1x32xf32> to vector<8x32xf32>
    %777 = arith.addf %773, %776 : vector<8x32xf32>
    %cst_375 = arith.constant 0.000000e+00 : f32
    %778 = vector.broadcast %cst_375 : f32 to vector<8x32xf32>
    %779 = arith.maximumf %777, %778 : vector<8x32xf32>
    %780 = vector.extract_strided_slice %779 {offsets = [0, 0], sizes = [3, 32], strides = [1, 1]} : vector<8x32xf32> to vector<3x32xf32>
    %cst_376 = arith.constant dense<0.000000e+00> : vector<32xf32>
    %781 = vector.multi_reduction <add>, %780, %cst_376 [0] : vector<3x32xf32> to vector<32xf32>
    %782 = vector.shape_cast %781 : vector<32xf32> to vector<1x32xf32>
    %783 = vector.extract_strided_slice %622 {offsets = [80, 0], sizes = [8, 32], strides = [1, 1]} : vector<88x32xf32> to vector<8x32xf32>
    %c10 = arith.constant 10 : index
    %c0_377 = arith.constant 0 : index
    %c0_378 = arith.constant 0 : index
    %784 = vector.load %arg25[%c10, %c0_377, %c0_378] : memref<11x32x32xf32, #tpu.memory_space<vmem>>, vector<1x32x32xf32>
    %785 = vector.shape_cast %784 : vector<1x32x32xf32> to vector<32x32xf32>
    %cst_379 = arith.constant dense<0.000000e+00> : vector<8x32xf32>
    %786 = tpu.matmul %783, %785, %cst_379 {dimension_numbers = #tpu.dot_dimension_numbers<[1], [0], [0], [1], [0, 0, 1, 1], [], []>} : vector<8x32xf32>, vector<32x32xf32>, vector<8x32xf32> -> vector<8x32xf32>
    %c10_380 = arith.constant 10 : index
    %c0_381 = arith.constant 0 : index
    %c0_382 = arith.constant 0 : index
    %787 = vector.load %arg22[%c10_380, %c0_381, %c0_382] : memref<11x8x8xf32, #tpu.memory_space<vmem>>, vector<1x8x8xf32>
    %788 = vector.shape_cast %787 : vector<1x8x8xf32> to vector<8x8xf32>
    %cst_383 = arith.constant dense<0.000000e+00> : vector<8x32xf32>
    %789 = tpu.matmul %788, %786, %cst_383 {dimension_numbers = #tpu.dot_dimension_numbers<[1], [0], [0], [1], [0, 0, 1, 1], [], []>} : vector<8x8xf32>, vector<8x32xf32>, vector<8x32xf32> -> vector<8x32xf32>
    %c10_384 = arith.constant 10 : index
    %c0_385 = arith.constant 0 : index
    %c0_386 = arith.constant 0 : index
    %790 = vector.load %arg26[%c10_384, %c0_385, %c0_386] : memref<11x1x32xf32, #tpu.memory_space<vmem>>, vector<1x1x32xf32>
    %791 = vector.shape_cast %790 : vector<1x1x32xf32> to vector<1x32xf32>
    %792 = vector.broadcast %791 : vector<1x32xf32> to vector<8x32xf32>
    %793 = arith.addf %789, %792 : vector<8x32xf32>
    %cst_387 = arith.constant 0.000000e+00 : f32
    %794 = vector.broadcast %cst_387 : f32 to vector<8x32xf32>
    %795 = arith.maximumf %793, %794 : vector<8x32xf32>
    %796 = vector.extract_strided_slice %795 {offsets = [0, 0], sizes = [3, 32], strides = [1, 1]} : vector<8x32xf32> to vector<3x32xf32>
    %cst_388 = arith.constant dense<0.000000e+00> : vector<32xf32>
    %797 = vector.multi_reduction <add>, %796, %cst_388 [0] : vector<3x32xf32> to vector<32xf32>
    %798 = vector.shape_cast %797 : vector<32xf32> to vector<1x32xf32>
    %cst_389 = arith.constant 0.000000e+00 : f32
    %799 = vector.broadcast %cst_389 : f32 to vector<1x32xf32>
    %800 = tpu.concatenate %638, %654, %670, %799 in 1 : vector<1x32xf32>, vector<1x32xf32>, vector<1x32xf32>, vector<1x32xf32> -> vector<1x128xf32>
    %801 = tpu.concatenate %686, %702, %718, %734 in 1 : vector<1x32xf32>, vector<1x32xf32>, vector<1x32xf32>, vector<1x32xf32> -> vector<1x128xf32>
    %802 = tpu.concatenate %750, %766, %782, %798 in 1 : vector<1x32xf32>, vector<1x32xf32>, vector<1x32xf32>, vector<1x32xf32> -> vector<1x128xf32>
    %803 = tpu.concatenate %800, %801, %802 in 0 : vector<1x128xf32>, vector<1x128xf32>, vector<1x128xf32> -> vector<3x128xf32>
    %c0_390 = arith.constant 0 : index
    %c0_391 = arith.constant 0 : index
    %804 = vector.load %arg28[%c0_390, %c0_391] : memref<3x128xf32, #tpu.memory_space<vmem>>, vector<3x128xf32>
    tpu.vector_store %arg28[%c0_390, %c0_391], %803 {strides = array<i32>} : memref<3x128xf32, #tpu.memory_space<vmem>>, vector<3x128xf32>,
    return
  }
}

</mosaic_0001>

<llo_original>
// kernel: _lambda_.1
$region0: #{_lambda_.1}
  #allocation0 [shape = 'u32[]', space=smem, size = 0x4, offset = 0x4, fixed_abs, tag = 'smem constant byte address 0x4 - core index']
  #allocation1 [shape = 'u32[72,128]{1,0:T(1,128)}', space=vmem, size = 0x9000, scoped, tag = 'internal scratch']
  %s0 = inlined_call_operand.hbm [shape: f32[4,24,24], index: 0, kind: input, shape index: {}]
  %s1 = inlined_call_operand.hbm [shape: f32[4,24,32], index: 1, kind: input, shape index: {}]
  %s2 = inlined_call_operand.vmem [shape: f32[4,1,32], index: 2, kind: input, shape index: {}]
  %s3 = inlined_call_operand.hbm [shape: f32[4,32,32], index: 3, kind: input, shape index: {}]
  %s4 = inlined_call_operand.vmem [shape: f32[4,1,32], index: 4, kind: input, shape index: {}]
  %s5 = inlined_call_operand.vmem [shape: f32[128,192], index: 5, kind: input, shape index: {}]
  %s6 = inlined_call_operand.hbm [shape: f32[1,192], index: 6, kind: input, shape index: {}]
  %s7 = inlined_call_operand.hbm [shape: f32[128,384], index: 7, kind: input, shape index: {}]
  %s8 = inlined_call_operand.hbm [shape: f32[1,384], index: 8, kind: input, shape index: {}]
  %s9 = inlined_call_operand.hbm [shape: f32[192,192], index: 9, kind: input, shape index: {}]
  %s10 = inlined_call_operand.hbm [shape: f32[1,192], index: 10, kind: input, shape index: {}]
  %s11 = inlined_call_operand.vmem [shape: f32[4,192], index: 11, kind: input, shape index: {}]
  %s12 = inlined_call_operand.hbm [shape: f32[192,192], index: 12, kind: input, shape index: {}]
  %s13 = inlined_call_operand.hbm [shape: f32[1,192], index: 13, kind: input, shape index: {}]
  %s14 = inlined_call_operand.vmem [shape: f32[192,384], index: 14, kind: input, shape index: {}]
  %s15 = inlined_call_operand.hbm [shape: f32[1,384], index: 15, kind: input, shape index: {}]
  %s16 = inlined_call_operand.hbm [shape: f32[192,192], index: 16, kind: input, shape index: {}]
  %s17 = inlined_call_operand.hbm [shape: f32[1,192], index: 17, kind: input, shape index: {}]
  %s18 = inlined_call_operand.vmem [shape: f32[4,192], index: 18, kind: input, shape index: {}]
  %s19 = inlined_call_operand.hbm [shape: f32[192,192], index: 19, kind: input, shape index: {}]
  %s20 = inlined_call_operand.vmem [shape: f32[192,32], index: 20, kind: input, shape index: {}]
  %s21 = inlined_call_operand.hbm [shape: f32[1,32], index: 21, kind: input, shape index: {}]
  %s22 = inlined_call_operand.vmem [shape: f32[11,8,8], index: 22, kind: input, shape index: {}]
  %s23 = inlined_call_operand.hbm [shape: f32[88,36], index: 23, kind: input, shape index: {}]
  %s24 = inlined_call_operand.vmem [shape: f32[36,32], index: 24, kind: input, shape index: {}]
  %s25 = inlined_call_operand.hbm [shape: f32[11,32,32], index: 25, kind: input, shape index: {}]
  %s26 = inlined_call_operand.vmem [shape: f32[11,1,32], index: 26, kind: input, shape index: {}]
  %s27 = inlined_call_operand.vmem [shape: f32[6,32], index: 27, kind: output, shape index: {0}]
  %s28 = inlined_call_operand.vmem [shape: f32[3,128], index: 28, kind: output, shape index: {1}]
  %29 = xla_tuple %s27, %s28
  %s30 = sld [smem:[#allocation0]]
  $region194: #{_lambda_.1} parent=0
    _
  %s32 = ssub.s32 1, %s30
  %s33 = scalar_select 0, %s32, %s30
  $region1: #{_lambda_.1} parent=0
    #allocation2 [shape = 'u8[49152]{0}', space=vmem, size = 0xc000, scoped, tag = 'input window, operand 0, single buffered']
    #allocation3 [shape = 's32[1]{0}', space=sflag, size = 0x4, scoped, tag = 'scoped memory for _lambda_.1']
    #allocation4 [shape = 'u8[49152]{0}', space=vmem, size = 0xc000, scoped, tag = 'input window, operand 1, single buffered']
    #allocation5 [shape = 's32[1]{0}', space=sflag, size = 0x4, scoped, tag = 'scoped memory for _lambda_.1']
    #allocation6 [shape = 'u8[65536]{0}', space=vmem, size = 0x10000, scoped, tag = 'input window, operand 3, single buffered']
    #allocation7 [shape = 'u8[1024]{0}', space=vmem, size = 0x400, scoped, tag = 'input window, operand 6, single buffered']
    #allocation8 [shape = 's32[1]{0}', space=sflag, size = 0x4, scoped, tag = 'scoped memory for _lambda_.1']
    #allocation9 [shape = 'u8[196608]{0}', space=vmem, size = 0x30000, scoped, tag = 'input window, operand 7, single buffered']
    #allocation10 [shape = 'u8[1536]{0}', space=vmem, size = 0x800, scoped, tag = 'input window, operand 8, single buffered']
    #allocation11 [shape = 's32[1]{0}', space=sflag, size = 0x4, scoped, tag = 'scoped memory for _lambda_.1']
    #allocation12 [shape = 'u8[196608]{0}', space=vmem, size = 0x30000, scoped, tag = 'input window, operand 9, single buffered']
    #allocation13 [shape = 'u8[1024]{0}', space=vmem, size = 0x400, scoped, tag = 'input window, operand 10, single buffered']
    #allocation14 [shape = 's32[1]{0}', space=sflag, size = 0x4, scoped, tag = 'scoped memory for _lambda_.1']
    #allocation15 [shape = 'u8[196608]{0}', space=vmem, size = 0x30000, scoped, tag = 'input window, operand 12, single buffered']
    #allocation16 [shape = 'u8[1024]{0}', space=vmem, size = 0x400, scoped, tag = 'input window, operand 13, single buffered']
    #allocation17 [shape = 's32[1]{0}', space=sflag, size = 0x4, scoped, tag = 'scoped memory for _lambda_.1']
    #allocation18 [shape = 'u8[1536]{0}', space=vmem, size = 0x800, scoped, tag = 'input window, operand 15, single buffered']
    #allocation19 [shape = 'u8[196608]{0}', space=vmem, size = 0x30000, scoped, tag = 'input window, operand 16, single buffered']
    #allocation20 [shape = 's32[1]{0}', space=sflag, size = 0x4, scoped, tag = 'scoped memory for _lambda_.1']
    #allocation21 [shape = 'u8[1024]{0}', space=vmem, size = 0x400, scoped, tag = 'input window, operand 17, single buffered']
    #allocation22 [shape = 'u8[196608]{0}', space=vmem, size = 0x30000, scoped, tag = 'input window, operand 19, single buffered']
    #allocation23 [shape = 's32[1]{0}', space=sflag, size = 0x4, scoped, tag = 'scoped memory for _lambda_.1']
    #allocation24 [shape = 'u8[512]{0}', space=vmem, size = 0x400, scoped, tag = 'input window, operand 21, single buffered']
    #allocation25 [shape = 'u8[45056]{0}', space=vmem, size = 0xb000, scoped, tag = 'input window, operand 23, single buffered']
    #allocation26 [shape = 's32[1]{0}', space=sflag, size = 0x4, scoped, tag = 'scoped memory for _lambda_.1']
    #allocation27 [shape = 'u8[180224]{0}', space=vmem, size = 0x2c000, scoped, tag = 'input window, operand 25, single buffered']
    %34 = vsyncpa [#allocation3], 0
    %35 = vsyncpa [#allocation5], 0
    %36 = vsyncpa [#allocation8], 0
    %37 = vsyncpa [#allocation11], 0
    %38 = vsyncpa [#allocation14], 0
    %39 = vsyncpa [#allocation17], 0
    %40 = vsyncpa [#allocation20], 0
    %41 = vsyncpa [#allocation23], 0
    %42 = vsyncpa [#allocation26], 0
    // Predicated region
    $region2: #{_lambda_.1} parent=1 // pred_check
      _
    $region3: #{_lambda_.1} parent=1 // pred_check_branch
      %44 = sbr.rel (0) target = $region5
    $region4: #{_lambda_.1} parent=1 // pred_region
      %46 = vsyncadd [#allocation3], 0
      %s47 = sshll.u32 %s0, 4
      %s48 = int_to_ptr.hbm [resolvable:$true] %s47
      %s49 = sshll.u32 [#allocation2], 4
      %s50 = int_to_ptr.vmem [resolvable:$true] %s49
      %55 = dma.hbm_to_vmem [thread:$0]  %s48, 1536, %s50, [#allocation3], 128, 128, 8
    $region5: #{_lambda_.1} parent=1 // pred_fallthru
      _
    // Predicated region
    $region6: #{_lambda_.1} parent=1 // pred_check
      _
    $region7: #{_lambda_.1} parent=1 // pred_check_branch
      %57 = sbr.rel (0) target = $region9
    $region8: #{_lambda_.1} parent=1 // pred_region
      %59 = vsyncadd [#allocation5], 0
      %s60 = sshll.u32 %s1, 4
      %s61 = int_to_ptr.hbm [resolvable:$true] %s60
      %s62 = sshll.u32 [#allocation4], 4
      %s63 = int_to_ptr.vmem [resolvable:$true] %s62
      %68 = dma.hbm_to_vmem [thread:$0]  %s61, 1536, %s63, [#allocation5], 128, 128, 8
    $region9: #{_lambda_.1} parent=1 // pred_fallthru
      _
    // Predicated region
    $region10: #{_lambda_.1} parent=1 // pred_check
      _
    $region11: #{_lambda_.1} parent=1 // pred_check_branch
      %70 = sbr.rel (0) target = $region13
    $region12: #{_lambda_.1} parent=1 // pred_region
      _
    $region13: #{_lambda_.1} parent=1 // pred_fallthru
      _
    // Predicated region
    $region14: #{_lambda_.1} parent=1 // pred_check
      _
    $region15: #{_lambda_.1} parent=1 // pred_check_branch
      %72 = sbr.rel (0) target = $region17
    $region16: #{_lambda_.1} parent=1 // pred_region
      %74 = vsyncadd [#allocation5], 0
      %s75 = sshll.u32 %s3, 4
      %s76 = int_to_ptr.hbm [resolvable:$true] %s75
      %s77 = sshll.u32 [#allocation6], 4
      %s78 = int_to_ptr.vmem [resolvable:$true] %s77
      %83 = dma.hbm_to_vmem [thread:$0]  %s76, 2048, %s78, [#allocation5], 128, 128, 8
    $region17: #{_lambda_.1} parent=1 // pred_fallthru
      _
    // Predicated region
    $region18: #{_lambda_.1} parent=1 // pred_check
      _
    $region19: #{_lambda_.1} parent=1 // pred_check_branch
      %85 = sbr.rel (0) target = $region21
    $region20: #{_lambda_.1} parent=1 // pred_region
      _
    $region21: #{_lambda_.1} parent=1 // pred_fallthru
      _
    // Predicated region
    $region22: #{_lambda_.1} parent=1 // pred_check
      _
    $region23: #{_lambda_.1} parent=1 // pred_check_branch
      %87 = sbr.rel (0) target = $region25
    $region24: #{_lambda_.1} parent=1 // pred_region
      _
    $region25: #{_lambda_.1} parent=1 // pred_fallthru
      _
    // Predicated region
    $region26: #{_lambda_.1} parent=1 // pred_check
      _
    $region27: #{_lambda_.1} parent=1 // pred_check_branch
      %89 = sbr.rel (0) target = $region29
    $region28: #{_lambda_.1} parent=1 // pred_region
      %91 = vsyncadd [#allocation8], 0
      %s93 = sshll.u32 %s6, 4
      %s94 = int_to_ptr.hbm [resolvable:$true] %s93
      %s95 = sshll.u32 [#allocation7], 4
      %s96 = int_to_ptr.vmem [resolvable:$true] %s95
      %98 = dma.hbm_to_vmem [thread:$0]  %s94, 32, %s96, [#allocation8]
    $region29: #{_lambda_.1} parent=1 // pred_fallthru
      _
    // Predicated region
    $region30: #{_lambda_.1} parent=1 // pred_check
      _
    $region31: #{_lambda_.1} parent=1 // pred_check_branch
      %100 = sbr.rel (0) target = $region33
    $region32: #{_lambda_.1} parent=1 // pred_region
      %102 = vsyncadd [#allocation8], 0
      %s103 = sshll.u32 %s7, 4
      %s104 = int_to_ptr.hbm [resolvable:$true] %s103
      %s105 = sshll.u32 [#allocation9], 4
      %s106 = int_to_ptr.vmem [resolvable:$true] %s105
      %111 = dma.hbm_to_vmem [thread:$0]  %s104, 6144, %s106, [#allocation8], 384, 384, 24
    $region33: #{_lambda_.1} parent=1 // pred_fallthru
      _
    // Predicated region
    $region34: #{_lambda_.1} parent=1 // pred_check
      _
    $region35: #{_lambda_.1} parent=1 // pred_check_branch
      %113 = sbr.rel (0) target = $region37
    $region36: #{_lambda_.1} parent=1 // pred_region
      %115 = vsyncadd [#allocation11], 0
      %s117 = sshll.u32 %s8, 4
      %s118 = int_to_ptr.hbm [resolvable:$true] %s117
      %s119 = sshll.u32 [#allocation10], 4
      %s120 = int_to_ptr.vmem [resolvable:$true] %s119
      %122 = dma.hbm_to_vmem [thread:$0]  %s118, 48, %s120, [#allocation11]
    $region37: #{_lambda_.1} parent=1 // pred_fallthru
      _
    // Predicated region
    $region38: #{_lambda_.1} parent=1 // pred_check
      _
    $region39: #{_lambda_.1} parent=1 // pred_check_branch
      %124 = sbr.rel (0) target = $region41
    $region40: #{_lambda_.1} parent=1 // pred_region
      %126 = vsyncadd [#allocation11], 0
      %s127 = sshll.u32 %s9, 4
      %s128 = int_to_ptr.hbm [resolvable:$true] %s127
      %s129 = sshll.u32 [#allocation12], 4
      %s130 = int_to_ptr.vmem [resolvable:$true] %s129
      %135 = dma.hbm_to_vmem [thread:$0]  %s128, 6144, %s130, [#allocation11], 256, 256, 16
    $region41: #{_lambda_.1} parent=1 // pred_fallthru
      _
    // Predicated region
    $region42: #{_lambda_.1} parent=1 // pred_check
      _
    $region43: #{_lambda_.1} parent=1 // pred_check_branch
      %137 = sbr.rel (0) target = $region45
    $region44: #{_lambda_.1} parent=1 // pred_region
      %139 = vsyncadd [#allocation14], 0
      %s141 = sshll.u32 %s10, 4
      %s142 = int_to_ptr.hbm [resolvable:$true] %s141
      %s143 = sshll.u32 [#allocation13], 4
      %s144 = int_to_ptr.vmem [resolvable:$true] %s143
      %146 = dma.hbm_to_vmem [thread:$0]  %s142, 32, %s144, [#allocation14]
    $region45: #{_lambda_.1} parent=1 // pred_fallthru
      _
    // Predicated region
    $region46: #{_lambda_.1} parent=1 // pred_check
      _
    $region47: #{_lambda_.1} parent=1 // pred_check_branch
      %148 = sbr.rel (0) target = $region49
    $region48: #{_lambda_.1} parent=1 // pred_region
      _
    $region49: #{_lambda_.1} parent=1 // pred_fallthru
      _
    // Predicated region
    $region50: #{_lambda_.1} parent=1 // pred_check
      _
    $region51: #{_lambda_.1} parent=1 // pred_check_branch
      %150 = sbr.rel (0) target = $region53
    $region52: #{_lambda_.1} parent=1 // pred_region
      %152 = vsyncadd [#allocation14], 0
      %s153 = sshll.u32 %s12, 4
      %s154 = int_to_ptr.hbm [resolvable:$true] %s153
      %s155 = sshll.u32 [#allocation15], 4
      %s156 = int_to_ptr.vmem [resolvable:$true] %s155
      %161 = dma.hbm_to_vmem [thread:$0]  %s154, 6144, %s156, [#allocation14], 256, 256, 16
    $region53: #{_lambda_.1} parent=1 // pred_fallthru
      _
    // Predicated region
    $region54: #{_lambda_.1} parent=1 // pred_check
      _
    $region55: #{_lambda_.1} parent=1 // pred_check_branch
      %163 = sbr.rel (0) target = $region57
    $region56: #{_lambda_.1} parent=1 // pred_region
      %165 = vsyncadd [#allocation17], 0
      %s167 = sshll.u32 %s13, 4
      %s168 = int_to_ptr.hbm [resolvable:$true] %s167
      %s169 = sshll.u32 [#allocation16], 4
      %s170 = int_to_ptr.vmem [resolvable:$true] %s169
      %172 = dma.hbm_to_vmem [thread:$0]  %s168, 32, %s170, [#allocation17]
    $region57: #{_lambda_.1} parent=1 // pred_fallthru
      _
    // Predicated region
    $region58: #{_lambda_.1} parent=1 // pred_check
      _
    $region59: #{_lambda_.1} parent=1 // pred_check_branch
      %174 = sbr.rel (0) target = $region61
    $region60: #{_lambda_.1} parent=1 // pred_region
      _
    $region61: #{_lambda_.1} parent=1 // pred_fallthru
      _
    // Predicated region
    $region62: #{_lambda_.1} parent=1 // pred_check
      _
    $region63: #{_lambda_.1} parent=1 // pred_check_branch
      %176 = sbr.rel (0) target = $region65
    $region64: #{_lambda_.1} parent=1 // pred_region
      %178 = vsyncadd [#allocation17], 0
      %s180 = sshll.u32 %s15, 4
      %s181 = int_to_ptr.hbm [resolvable:$true] %s180
      %s182 = sshll.u32 [#allocation18], 4
      %s183 = int_to_ptr.vmem [resolvable:$true] %s182
      %185 = dma.hbm_to_vmem [thread:$0]  %s181, 48, %s183, [#allocation17]
    $region65: #{_lambda_.1} parent=1 // pred_fallthru
      _
    // Predicated region
    $region66: #{_lambda_.1} parent=1 // pred_check
      _
    $region67: #{_lambda_.1} parent=1 // pred_check_branch
      %187 = sbr.rel (0) target = $region69
    $region68: #{_lambda_.1} parent=1 // pred_region
      %189 = vsyncadd [#allocation20], 0
      %s190 = sshll.u32 %s16, 4
      %s191 = int_to_ptr.hbm [resolvable:$true] %s190
      %s192 = sshll.u32 [#allocation19], 4
      %s193 = int_to_ptr.vmem [resolvable:$true] %s192
      %198 = dma.hbm_to_vmem [thread:$0]  %s191, 6144, %s193, [#allocation20], 256, 256, 16
    $region69: #{_lambda_.1} parent=1 // pred_fallthru
      _
    // Predicated region
    $region70: #{_lambda_.1} parent=1 // pred_check
      _
    $region71: #{_lambda_.1} parent=1 // pred_check_branch
      %200 = sbr.rel (0) target = $region73
    $region72: #{_lambda_.1} parent=1 // pred_region
      %202 = vsyncadd [#allocation20], 0
      %s204 = sshll.u32 %s17, 4
      %s205 = int_to_ptr.hbm [resolvable:$true] %s204
      %s206 = sshll.u32 [#allocation21], 4
      %s207 = int_to_ptr.vmem [resolvable:$true] %s206
      %209 = dma.hbm_to_vmem [thread:$0]  %s205, 32, %s207, [#allocation20]
    $region73: #{_lambda_.1} parent=1 // pred_fallthru
      _
    // Predicated region
    $region74: #{_lambda_.1} parent=1 // pred_check
      _
    $region75: #{_lambda_.1} parent=1 // pred_check_branch
      %211 = sbr.rel (0) target = $region77
    $region76: #{_lambda_.1} parent=1 // pred_region
      _
    $region77: #{_lambda_.1} parent=1 // pred_fallthru
      _
    // Predicated region
    $region78: #{_lambda_.1} parent=1 // pred_check
      _
    $region79: #{_lambda_.1} parent=1 // pred_check_branch
      %213 = sbr.rel (0) target = $region81
    $region80: #{_lambda_.1} parent=1 // pred_region
      %215 = vsyncadd [#allocation23], 0
      %s216 = sshll.u32 %s19, 4
      %s217 = int_to_ptr.hbm [resolvable:$true] %s216
      %s218 = sshll.u32 [#allocation22], 4
      %s219 = int_to_ptr.vmem [resolvable:$true] %s218
      %224 = dma.hbm_to_vmem [thread:$0]  %s217, 6144, %s219, [#allocation23], 256, 256, 16
    $region81: #{_lambda_.1} parent=1 // pred_fallthru
      _
    // Predicated region
    $region82: #{_lambda_.1} parent=1 // pred_check
      _
    $region83: #{_lambda_.1} parent=1 // pred_check_branch
      %226 = sbr.rel (0) target = $region85
    $region84: #{_lambda_.1} parent=1 // pred_region
      _
    $region85: #{_lambda_.1} parent=1 // pred_fallthru
      _
    // Predicated region
    $region86: #{_lambda_.1} parent=1 // pred_check
      _
    $region87: #{_lambda_.1} parent=1 // pred_check_branch
      %228 = sbr.rel (0) target = $region89
    $region88: #{_lambda_.1} parent=1 // pred_region
      %230 = vsyncadd [#allocation23], 0
      %s232 = sshll.u32 %s21, 4
      %s233 = int_to_ptr.hbm [resolvable:$true] %s232
      %s234 = sshll.u32 [#allocation24], 4
      %s235 = int_to_ptr.vmem [resolvable:$true] %s234
      %237 = dma.hbm_to_vmem [thread:$0]  %s233, 16, %s235, [#allocation23]
    $region89: #{_lambda_.1} parent=1 // pred_fallthru
      _
    // Predicated region
    $region90: #{_lambda_.1} parent=1 // pred_check
      _
    $region91: #{_lambda_.1} parent=1 // pred_check_branch
      %239 = sbr.rel (0) target = $region93
    $region92: #{_lambda_.1} parent=1 // pred_region
      _
    $region93: #{_lambda_.1} parent=1 // pred_fallthru
      _
    // Predicated region
    $region94: #{_lambda_.1} parent=1 // pred_check
      _
    $region95: #{_lambda_.1} parent=1 // pred_check_branch
      %241 = sbr.rel (0) target = $region97
    $region96: #{_lambda_.1} parent=1 // pred_region
      %243 = vsyncadd [#allocation26], 0
      %s244 = sshll.u32 %s23, 4
      %s245 = int_to_ptr.hbm [resolvable:$true] %s244
      %s246 = sshll.u32 [#allocation25], 4
      %s247 = int_to_ptr.vmem [resolvable:$true] %s246
      %252 = dma.hbm_to_vmem [thread:$0]  %s245, 1408, %s247, [#allocation26], 128, 128, 8
    $region97: #{_lambda_.1} parent=1 // pred_fallthru
      _
    // Predicated region
    $region98: #{_lambda_.1} parent=1 // pred_check
      _
    $region99: #{_lambda_.1} parent=1 // pred_check_branch
      %254 = sbr.rel (0) target = $region101
    $region100: #{_lambda_.1} parent=1 // pred_region
      _
    $region101: #{_lambda_.1} parent=1 // pred_fallthru
      _
    // Predicated region
    $region102: #{_lambda_.1} parent=1 // pred_check
      _
    $region103: #{_lambda_.1} parent=1 // pred_check_branch
      %256 = sbr.rel (0) target = $region105
    $region104: #{_lambda_.1} parent=1 // pred_region
      %258 = vsyncadd [#allocation26], 0
      %s259 = sshll.u32 %s25, 4
      %s260 = int_to_ptr.hbm [resolvable:$true] %s259
      %s261 = sshll.u32 [#allocation27], 4
      %s262 = int_to_ptr.vmem [resolvable:$true] %s261
      %267 = dma.hbm_to_vmem [thread:$0]  %s260, 5632, %s262, [#allocation26], 128, 128, 8
    $region105: #{_lambda_.1} parent=1 // pred_fallthru
      _
    // Predicated region
    $region106: #{_lambda_.1} parent=1 // pred_check
      _
    $region107: #{_lambda_.1} parent=1 // pred_check_branch
      %269 = sbr.rel (0) target = $region109
    $region108: #{_lambda_.1} parent=1 // pred_region
      _
    $region109: #{_lambda_.1} parent=1 // pred_fallthru
      _
    // Predicated region
    $region110: #{_lambda_.1} parent=1 // pred_check
      _
    $region111: #{_lambda_.1} parent=1 // pred_check_branch
      %271 = sbr.rel (0) target = $region113
    $region112: #{_lambda_.1} parent=1 // pred_region
      %273 = dma.done [#allocation3], 1536
    $region113: #{_lambda_.1} parent=1 // pred_fallthru
      _
    // Predicated region
    $region114: #{_lambda_.1} parent=1 // pred_check
      _
    $region115: #{_lambda_.1} parent=1 // pred_check_branch
      %275 = sbr.rel (0) target = $region117
    $region116: #{_lambda_.1} parent=1 // pred_region
      %277 = dma.done [#allocation5], 1536
    $region117: #{_lambda_.1} parent=1 // pred_fallthru
      _
    // Predicated region
    $region118: #{_lambda_.1} parent=1 // pred_check
      _
    $region119: #{_lambda_.1} parent=1 // pred_check_branch
      %279 = sbr.rel (0) target = $region121
    $region120: #{_lambda_.1} parent=1 // pred_region
      %281 = dma.done [#allocation5], 2048
    $region121: #{_lambda_.1} parent=1 // pred_fallthru
      _
    // Predicated region
    $region122: #{_lambda_.1} parent=1 // pred_check
      _
    $region123: #{_lambda_.1} parent=1 // pred_check_branch
      %283 = sbr.rel (0) target = $region125
    $region124: #{_lambda_.1} parent=1 // pred_region
      %285 = dma.done [#allocation8], 32
    $region125: #{_lambda_.1} parent=1 // pred_fallthru
      _
    // Predicated region
    $region126: #{_lambda_.1} parent=1 // pred_check
      _
    $region127: #{_lambda_.1} parent=1 // pred_check_branch
      %287 = sbr.rel (0) target = $region129
    $region128: #{_lambda_.1} parent=1 // pred_region
      %289 = dma.done [#allocation8], 6144
    $region129: #{_lambda_.1} parent=1 // pred_fallthru
      _
    // Predicated region
    $region130: #{_lambda_.1} parent=1 // pred_check
      _
    $region131: #{_lambda_.1} parent=1 // pred_check_branch
      %291 = sbr.rel (0) target = $region133
    $region132: #{_lambda_.1} parent=1 // pred_region
      %293 = dma.done [#allocation11], 48
    $region133: #{_lambda_.1} parent=1 // pred_fallthru
      _
    // Predicated region
    $region134: #{_lambda_.1} parent=1 // pred_check
      _
    $region135: #{_lambda_.1} parent=1 // pred_check_branch
      %295 = sbr.rel (0) target = $region137
    $region136: #{_lambda_.1} parent=1 // pred_region
      %297 = dma.done [#allocation11], 6144
    $region137: #{_lambda_.1} parent=1 // pred_fallthru
      _
    // Predicated region
    $region138: #{_lambda_.1} parent=1 // pred_check
      _
    $region139: #{_lambda_.1} parent=1 // pred_check_branch
      %299 = sbr.rel (0) target = $region141
    $region140: #{_lambda_.1} parent=1 // pred_region
      %301 = dma.done [#allocation14], 32
    $region141: #{_lambda_.1} parent=1 // pred_fallthru
      _
    // Predicated region
    $region142: #{_lambda_.1} parent=1 // pred_check
      _
    $region143: #{_lambda_.1} parent=1 // pred_check_branch
      %303 = sbr.rel (0) target = $region145
    $region144: #{_lambda_.1} parent=1 // pred_region
      %305 = dma.done [#allocation14], 6144
    $region145: #{_lambda_.1} parent=1 // pred_fallthru
      _
    // Predicated region
    $region146: #{_lambda_.1} parent=1 // pred_check
      _
    $region147: #{_lambda_.1} parent=1 // pred_check_branch
      %307 = sbr.rel (0) target = $region149
    $region148: #{_lambda_.1} parent=1 // pred_region
      %309 = dma.done [#allocation17], 32
    $region149: #{_lambda_.1} parent=1 // pred_fallthru
      _
    // Predicated region
    $region150: #{_lambda_.1} parent=1 // pred_check
      _
    $region151: #{_lambda_.1} parent=1 // pred_check_branch
      %311 = sbr.rel (0) target = $region153
    $region152: #{_lambda_.1} parent=1 // pred_region
      %313 = dma.done [#allocation17], 48
    $region153: #{_lambda_.1} parent=1 // pred_fallthru
      _
    // Predicated region
    $region154: #{_lambda_.1} parent=1 // pred_check
      _
    $region155: #{_lambda_.1} parent=1 // pred_check_branch
      %315 = sbr.rel (0) target = $region157
    $region156: #{_lambda_.1} parent=1 // pred_region
      %317 = dma.done [#allocation20], 6144
    $region157: #{_lambda_.1} parent=1 // pred_fallthru
      _
    // Predicated region
    $region158: #{_lambda_.1} parent=1 // pred_check
      _
    $region159: #{_lambda_.1} parent=1 // pred_check_branch
      %319 = sbr.rel (0) target = $region161
    $region160: #{_lambda_.1} parent=1 // pred_region
      %321 = dma.done [#allocation20], 32
    $region161: #{_lambda_.1} parent=1 // pred_fallthru
      _
    // Predicated region
    $region162: #{_lambda_.1} parent=1 // pred_check
      _
    $region163: #{_lambda_.1} parent=1 // pred_check_branch
      %323 = sbr.rel (0) target = $region165
    $region164: #{_lambda_.1} parent=1 // pred_region
      %325 = dma.done [#allocation23], 6144
    $region165: #{_lambda_.1} parent=1 // pred_fallthru
      _
    // Predicated region
    $region166: #{_lambda_.1} parent=1 // pred_check
      _
    $region167: #{_lambda_.1} parent=1 // pred_check_branch
      %327 = sbr.rel (0) target = $region169
    $region168: #{_lambda_.1} parent=1 // pred_region
      %329 = dma.done [#allocation23], 16
    $region169: #{_lambda_.1} parent=1 // pred_fallthru
      _
    // Predicated region
    $region170: #{_lambda_.1} parent=1 // pred_check
      _
    $region171: #{_lambda_.1} parent=1 // pred_check_branch
      %331 = sbr.rel (0) target = $region173
    $region172: #{_lambda_.1} parent=1 // pred_region
      %333 = dma.done [#allocation26], 1408
    $region173: #{_lambda_.1} parent=1 // pred_fallthru
      _
    // Predicated region
    $region174: #{_lambda_.1} parent=1 // pred_check
      _
    $region175: #{_lambda_.1} parent=1 // pred_check_branch
      %335 = sbr.rel (0) target = $region177
    $region176: #{_lambda_.1} parent=1 // pred_region
      %337 = dma.done [#allocation26], 5632
    $region177: #{_lambda_.1} parent=1 // pred_fallthru
      _
    %v338 = vld [vmem:[#allocation2] sm:$0xff]
    %v339 = vld [vmem:[#allocation2 + $0x8] sm:$0xff]
    %v340 = vld [vmem:[#allocation2 + $0x10] sm:$0xff]
    %v341 = vld [vmem:[#allocation4] sm:$0xff]
    %v342 = vld [vmem:[#allocation4 + $0x8] sm:$0xff]
    %v343 = vld [vmem:[#allocation4 + $0x10] sm:$0xff]
    %v344 = vld [vmem:[%s2] sm:$0x1]
    %v346 = vperm.slane %v344, 0
    %vm348 = vcmask 195584
    %v350 = vsel %vm348, %v338, 0
    %v353 = vsel %vm348, %v339, 0
    %v356 = vsel %vm348, %v340, 0
    %358 = vmatpush.msra.mxu0 0.0
    %359 = vmatpush.msra.mxu0 0.0
    %360 = vmatpush.msra.mxu0 0.0
    %361 = vmatpush.msra.mxu0 0.0
    %362 = vmatpush.msra.mxu0 0.0
    %363 = vmatpush.msra.mxu0 0.0
    %364 = vmatpush.msra.mxu0 0.0
    %365 = vmatpush.msra.mxu0 0.0
    %366 = vmatpush.msra.mxu0 0.0
    %367 = vmatpush.msra.mxu0 0.0
    %368 = vmatpush.msra.mxu0 0.0
    %369 = vmatpush.msra.mxu0 0.0
    %370 = vmatpush.msra.mxu0 0.0
    %371 = vmatpush.msra.mxu0 %v343
    %372 = vmatpush.msra.mxu0 %v342
    %373 = vmatpush.msra.mxu0 %v341
    %374 = vmatmul.f32.gmra.mxu0 %v350
    %v375 = vpop.f32.mrf.mxu0
    %v376 = vadd.f32 %v346, %v375
    %377 = vmatmul.f32.gmra.mxu0 %v353
    %v378 = vpop.f32.mrf.mxu0
    %v379 = vadd.f32 %v346, %v378
    %380 = vmatmul.f32.gmra.mxu0 %v356
    %v381 = vpop.f32.mrf.mxu0
    %v382 = vadd.f32 %v346, %v381
    %383 = vdwg.mxu0
    %v384 = vmax.f32 %v376, 0.0
    %v385 = vmax.f32 %v379, 0.0
    %v386 = vmax.f32 %v382, 0.0
    %v387 = vld [vmem:[#allocation6] sm:$0xff]
    %v388 = vld [vmem:[#allocation6 + $0x8] sm:$0xff]
    %v389 = vld [vmem:[#allocation6 + $0x10] sm:$0xff]
    %v390 = vld [vmem:[#allocation6 + $0x18] sm:$0xff]
    %vm391 = vcmask 261120
    %v393 = vsel %vm391, %v384, 0
    %v396 = vsel %vm391, %v385, 0
    %v399 = vsel %vm391, %v386, 0
    %401 = vmatpush.msra.mxu0 0.0
    %402 = vmatpush.msra.mxu0 0.0
    %403 = vmatpush.msra.mxu0 0.0
    %404 = vmatpush.msra.mxu0 0.0
    %405 = vmatpush.msra.mxu0 0.0
    %406 = vmatpush.msra.mxu0 0.0
    %407 = vmatpush.msra.mxu0 0.0
    %408 = vmatpush.msra.mxu0 0.0
    %409 = vmatpush.msra.mxu0 0.0
    %410 = vmatpush.msra.mxu0 0.0
    %411 = vmatpush.msra.mxu0 0.0
    %412 = vmatpush.msra.mxu0 0.0
    %413 = vmatpush.msra.mxu0 %v390
    %414 = vmatpush.msra.mxu0 %v389
    %415 = vmatpush.msra.mxu0 %v388
    %416 = vmatpush.msra.mxu0 %v387
    %417 = vmatmul.f32.gmra.mxu0 %v393
    %v418 = vpop.f32.mrf.mxu0
    %v419 = vadd.f32 0.0, %v418
    %420 = vmatmul.f32.gmra.mxu0 %v396
    %v421 = vpop.f32.mrf.mxu0
    %v422 = vadd.f32 0.0, %v421
    %423 = vmatmul.f32.gmra.mxu0 %v399
    %v424 = vpop.f32.mrf.mxu0
    %v425 = vadd.f32 0.0, %v424
    %426 = vdwg.mxu0
    %v427 = vld [vmem:[%s4] sm:$0x1]
    %v429 = vperm.slane %v427, 0
    %431 = vmatpush.msra.mxu0 0.0
    %432 = vmatpush.msra.mxu0 0.0
    %433 = vmatpush.msra.mxu0 0.0
    %434 = vmatpush.msra.mxu0 0.0
    %435 = vmatpush.msra.mxu0 0.0
    %436 = vmatpush.msra.mxu0 0.0
    %437 = vmatpush.msra.mxu0 0.0
    %438 = vmatpush.msra.mxu0 0.0
    %439 = vmatpush.msra.mxu0 0.0
    %440 = vmatpush.msra.mxu0 0.0
    %441 = vmatpush.msra.mxu0 0.0
    %442 = vmatpush.msra.mxu0 0.0
    %443 = vmatpush.msra.mxu0 0.0
    %444 = vmatpush.msra.mxu0 %v425
    %445 = vmatpush.msra.mxu0 %v422
    %446 = vmatpush.msra.mxu0 %v419
    %447 = vmatmul.f32.gmra.mxu0 %v350
    %v448 = vpop.f32.mrf.mxu0
    %v449 = vadd.f32 %v429, %v448
    %450 = vmatmul.f32.gmra.mxu0 %v353
    %v451 = vpop.f32.mrf.mxu0
    %452 = vmatmul.f32.gmra.mxu0 %v356
    %v453 = vpop.f32.mrf.mxu0
    %454 = vdwg.mxu0
    %s455 = scalar_lea.vmem [#allocation2], 24
    %v456 = vld [vmem:[%s455] sm:$0xff]
    %v457 = vld [vmem:[%s455 + $0x8] sm:$0xff]
    %v458 = vld [vmem:[%s455 + $0x10] sm:$0xff]
    %s459 = scalar_lea.vmem [#allocation4], 24
    %v460 = vld [vmem:[%s459] sm:$0xff]
    %v461 = vld [vmem:[%s459 + $0x8] sm:$0xff]
    %v462 = vld [vmem:[%s459 + $0x10] sm:$0xff]
    %s463 = scalar_lea.vmem %s2, 1
    %v464 = vld [vmem:[%s463] sm:$0x1]
    %v466 = vperm.slane %v464, 0
    %v469 = vsel %vm348, %v456, 0
    %v472 = vsel %vm348, %v457, 0
    %v475 = vsel %vm348, %v458, 0
    %477 = vmatpush.msra.mxu0 0.0
    %478 = vmatpush.msra.mxu0 0.0
    %479 = vmatpush.msra.mxu0 0.0
    %480 = vmatpush.msra.mxu0 0.0
    %481 = vmatpush.msra.mxu0 0.0
    %482 = vmatpush.msra.mxu0 0.0
    %483 = vmatpush.msra.mxu0 0.0
    %484 = vmatpush.msra.mxu0 0.0
    %485 = vmatpush.msra.mxu0 0.0
    %486 = vmatpush.msra.mxu0 0.0
    %487 = vmatpush.msra.mxu0 0.0
    %488 = vmatpush.msra.mxu0 0.0
    %489 = vmatpush.msra.mxu0 0.0
    %490 = vmatpush.msra.mxu0 %v462
    %491 = vmatpush.msra.mxu0 %v461
    %492 = vmatpush.msra.mxu0 %v460
    %493 = vmatmul.f32.gmra.mxu0 %v469
    %v494 = vpop.f32.mrf.mxu0
    %v495 = vadd.f32 %v466, %v494
    %496 = vmatmul.f32.gmra.mxu0 %v472
    %v497 = vpop.f32.mrf.mxu0
    %v498 = vadd.f32 %v466, %v497
    %499 = vmatmul.f32.gmra.mxu0 %v475
    %v500 = vpop.f32.mrf.mxu0
    %v501 = vadd.f32 %v466, %v500
    %502 = vdwg.mxu0
    %v503 = vmax.f32 %v495, 0.0
    %v504 = vmax.f32 %v498, 0.0
    %v505 = vmax.f32 %v501, 0.0
    %s506 = scalar_lea.vmem [#allocation6], 32
    %v507 = vld [vmem:[%s506] sm:$0xff]
    %v508 = vld [vmem:[%s506 + $0x8] sm:$0xff]
    %v509 = vld [vmem:[%s506 + $0x10] sm:$0xff]
    %v510 = vld [vmem:[%s506 + $0x18] sm:$0xff]
    %v512 = vsel %vm391, %v503, 0
    %v515 = vsel %vm391, %v504, 0
    %v518 = vsel %vm391, %v505, 0
    %520 = vmatpush.msra.mxu0 0.0
    %521 = vmatpush.msra.mxu0 0.0
    %522 = vmatpush.msra.mxu0 0.0
    %523 = vmatpush.msra.mxu0 0.0
    %524 = vmatpush.msra.mxu0 0.0
    %525 = vmatpush.msra.mxu0 0.0
    %526 = vmatpush.msra.mxu0 0.0
    %527 = vmatpush.msra.mxu0 0.0
    %528 = vmatpush.msra.mxu0 0.0
    %529 = vmatpush.msra.mxu0 0.0
    %530 = vmatpush.msra.mxu0 0.0
    %531 = vmatpush.msra.mxu0 0.0
    %532 = vmatpush.msra.mxu0 %v510
    %533 = vmatpush.msra.mxu0 %v509
    %534 = vmatpush.msra.mxu0 %v508
    %535 = vmatpush.msra.mxu0 %v507
    %536 = vmatmul.f32.gmra.mxu0 %v512
    %v537 = vpop.f32.mrf.mxu0
    %v538 = vadd.f32 0.0, %v537
    %539 = vmatmul.f32.gmra.mxu0 %v515
    %v540 = vpop.f32.mrf.mxu0
    %v541 = vadd.f32 0.0, %v540
    %542 = vmatmul.f32.gmra.mxu0 %v518
    %v543 = vpop.f32.mrf.mxu0
    %v544 = vadd.f32 0.0, %v543
    %545 = vdwg.mxu0
    %s546 = scalar_lea.vmem %s4, 1
    %v547 = vld [vmem:[%s546] sm:$0x1]
    %v549 = vperm.slane %v547, 0
    %551 = vmatpush.msra.mxu0 0.0
    %552 = vmatpush.msra.mxu0 0.0
    %553 = vmatpush.msra.mxu0 0.0
    %554 = vmatpush.msra.mxu0 0.0
    %555 = vmatpush.msra.mxu0 0.0
    %556 = vmatpush.msra.mxu0 0.0
    %557 = vmatpush.msra.mxu0 0.0
    %558 = vmatpush.msra.mxu0 0.0
    %559 = vmatpush.msra.mxu0 0.0
    %560 = vmatpush.msra.mxu0 0.0
    %561 = vmatpush.msra.mxu0 0.0
    %562 = vmatpush.msra.mxu0 0.0
    %563 = vmatpush.msra.mxu0 0.0
    %564 = vmatpush.msra.mxu0 %v544
    %565 = vmatpush.msra.mxu0 %v541
    %566 = vmatpush.msra.mxu0 %v538
    %567 = vmatmul.f32.gmra.mxu0 %v469
    %v568 = vpop.f32.mrf.mxu0
    %v569 = vadd.f32 %v549, %v568
    %570 = vmatmul.f32.gmra.mxu0 %v472
    %v571 = vpop.f32.mrf.mxu0
    %572 = vmatmul.f32.gmra.mxu0 %v475
    %v573 = vpop.f32.mrf.mxu0
    %574 = vdwg.mxu0
    %s575 = scalar_lea.vmem [#allocation2], 48
    %v576 = vld [vmem:[%s575] sm:$0xff]
    %v577 = vld [vmem:[%s575 + $0x8] sm:$0xff]
    %v578 = vld [vmem:[%s575 + $0x10] sm:$0xff]
    %s579 = scalar_lea.vmem [#allocation4], 48
    %v580 = vld [vmem:[%s579] sm:$0xff]
    %v581 = vld [vmem:[%s579 + $0x8] sm:$0xff]
    %v582 = vld [vmem:[%s579 + $0x10] sm:$0xff]
    %s583 = scalar_lea.vmem %s2, 2
    %v584 = vld [vmem:[%s583] sm:$0x1]
    %v586 = vperm.slane %v584, 0
    %v589 = vsel %vm348, %v576, 0
    %v592 = vsel %vm348, %v577, 0
    %v595 = vsel %vm348, %v578, 0
    %597 = vmatpush.msra.mxu0 0.0
    %598 = vmatpush.msra.mxu0 0.0
    %599 = vmatpush.msra.mxu0 0.0
    %600 = vmatpush.msra.mxu0 0.0
    %601 = vmatpush.msra.mxu0 0.0
    %602 = vmatpush.msra.mxu0 0.0
    %603 = vmatpush.msra.mxu0 0.0
    %604 = vmatpush.msra.mxu0 0.0
    %605 = vmatpush.msra.mxu0 0.0
    %606 = vmatpush.msra.mxu0 0.0
    %607 = vmatpush.msra.mxu0 0.0
    %608 = vmatpush.msra.mxu0 0.0
    %609 = vmatpush.msra.mxu0 0.0
    %610 = vmatpush.msra.mxu0 %v582
    %611 = vmatpush.msra.mxu0 %v581
    %612 = vmatpush.msra.mxu0 %v580
    %613 = vmatmul.f32.gmra.mxu0 %v589
    %v614 = vpop.f32.mrf.mxu0
    %v615 = vadd.f32 %v586, %v614
    %616 = vmatmul.f32.gmra.mxu0 %v592
    %v617 = vpop.f32.mrf.mxu0
    %v618 = vadd.f32 %v586, %v617
    %619 = vmatmul.f32.gmra.mxu0 %v595
    %v620 = vpop.f32.mrf.mxu0
    %v621 = vadd.f32 %v586, %v620
    %622 = vdwg.mxu0
    %v623 = vmax.f32 %v615, 0.0
    %v624 = vmax.f32 %v618, 0.0
    %v625 = vmax.f32 %v621, 0.0
    %s626 = scalar_lea.vmem [#allocation6], 64
    %v627 = vld [vmem:[%s626] sm:$0xff]
    %v628 = vld [vmem:[%s626 + $0x8] sm:$0xff]
    %v629 = vld [vmem:[%s626 + $0x10] sm:$0xff]
    %v630 = vld [vmem:[%s626 + $0x18] sm:$0xff]
    %v632 = vsel %vm391, %v623, 0
    %v635 = vsel %vm391, %v624, 0
    %v638 = vsel %vm391, %v625, 0
    %640 = vmatpush.msra.mxu0 0.0
    %641 = vmatpush.msra.mxu0 0.0
    %642 = vmatpush.msra.mxu0 0.0
    %643 = vmatpush.msra.mxu0 0.0
    %644 = vmatpush.msra.mxu0 0.0
    %645 = vmatpush.msra.mxu0 0.0
    %646 = vmatpush.msra.mxu0 0.0
    %647 = vmatpush.msra.mxu0 0.0
    %648 = vmatpush.msra.mxu0 0.0
    %649 = vmatpush.msra.mxu0 0.0
    %650 = vmatpush.msra.mxu0 0.0
    %651 = vmatpush.msra.mxu0 0.0
    %652 = vmatpush.msra.mxu0 %v630
    %653 = vmatpush.msra.mxu0 %v629
    %654 = vmatpush.msra.mxu0 %v628
    %655 = vmatpush.msra.mxu0 %v627
    %656 = vmatmul.f32.gmra.mxu0 %v632
    %v657 = vpop.f32.mrf.mxu0
    %v658 = vadd.f32 0.0, %v657
    %659 = vmatmul.f32.gmra.mxu0 %v635
    %v660 = vpop.f32.mrf.mxu0
    %v661 = vadd.f32 0.0, %v660
    %662 = vmatmul.f32.gmra.mxu0 %v638
    %v663 = vpop.f32.mrf.mxu0
    %v664 = vadd.f32 0.0, %v663
    %665 = vdwg.mxu0
    %s666 = scalar_lea.vmem %s4, 2
    %v667 = vld [vmem:[%s666] sm:$0x1]
    %v669 = vperm.slane %v667, 0
    %671 = vmatpush.msra.mxu0 0.0
    %672 = vmatpush.msra.mxu0 0.0
    %673 = vmatpush.msra.mxu0 0.0
    %674 = vmatpush.msra.mxu0 0.0
    %675 = vmatpush.msra.mxu0 0.0
    %676 = vmatpush.msra.mxu0 0.0
    %677 = vmatpush.msra.mxu0 0.0
    %678 = vmatpush.msra.mxu0 0.0
    %679 = vmatpush.msra.mxu0 0.0
    %680 = vmatpush.msra.mxu0 0.0
    %681 = vmatpush.msra.mxu0 0.0
    %682 = vmatpush.msra.mxu0 0.0
    %683 = vmatpush.msra.mxu0 0.0
    %684 = vmatpush.msra.mxu0 %v664
    %685 = vmatpush.msra.mxu0 %v661
    %686 = vmatpush.msra.mxu0 %v658
    %687 = vmatmul.f32.gmra.mxu0 %v589
    %v688 = vpop.f32.mrf.mxu0
    %v689 = vadd.f32 %v669, %v688
    %690 = vmatmul.f32.gmra.mxu0 %v592
    %v691 = vpop.f32.mrf.mxu0
    %692 = vmatmul.f32.gmra.mxu0 %v595
    %v693 = vpop.f32.mrf.mxu0
    %694 = vdwg.mxu0
    %s695 = scalar_lea.vmem [#allocation2], 72
    %v696 = vld [vmem:[%s695] sm:$0xff]
    %v697 = vld [vmem:[%s695 + $0x8] sm:$0xff]
    %v698 = vld [vmem:[%s695 + $0x10] sm:$0xff]
    %s699 = scalar_lea.vmem [#allocation4], 72
    %v700 = vld [vmem:[%s699] sm:$0xff]
    %v701 = vld [vmem:[%s699 + $0x8] sm:$0xff]
    %v702 = vld [vmem:[%s699 + $0x10] sm:$0xff]
    %s703 = scalar_lea.vmem %s2, 3
    %v704 = vld [vmem:[%s703] sm:$0x1]
    %v706 = vperm.slane %v704, 0
    %v709 = vsel %vm348, %v696, 0
    %v712 = vsel %vm348, %v697, 0
    %v715 = vsel %vm348, %v698, 0
    %717 = vmatpush.msra.mxu0 0.0
    %718 = vmatpush.msra.mxu0 0.0
    %719 = vmatpush.msra.mxu0 0.0
    %720 = vmatpush.msra.mxu0 0.0
    %721 = vmatpush.msra.mxu0 0.0
    %722 = vmatpush.msra.mxu0 0.0
    %723 = vmatpush.msra.mxu0 0.0
    %724 = vmatpush.msra.mxu0 0.0
    %725 = vmatpush.msra.mxu0 0.0
    %726 = vmatpush.msra.mxu0 0.0
    %727 = vmatpush.msra.mxu0 0.0
    %728 = vmatpush.msra.mxu0 0.0
    %729 = vmatpush.msra.mxu0 0.0
    %730 = vmatpush.msra.mxu0 %v702
    %731 = vmatpush.msra.mxu0 %v701
    %732 = vmatpush.msra.mxu0 %v700
    %733 = vmatmul.f32.gmra.mxu0 %v709
    %v734 = vpop.f32.mrf.mxu0
    %v735 = vadd.f32 %v706, %v734
    %736 = vmatmul.f32.gmra.mxu0 %v712
    %v737 = vpop.f32.mrf.mxu0
    %v738 = vadd.f32 %v706, %v737
    %739 = vmatmul.f32.gmra.mxu0 %v715
    %v740 = vpop.f32.mrf.mxu0
    %v741 = vadd.f32 %v706, %v740
    %742 = vdwg.mxu0
    %v743 = vmax.f32 %v735, 0.0
    %v744 = vmax.f32 %v738, 0.0
    %v745 = vmax.f32 %v741, 0.0
    %s746 = scalar_lea.vmem [#allocation6], 96
    %v747 = vld [vmem:[%s746] sm:$0xff]
    %v748 = vld [vmem:[%s746 + $0x8] sm:$0xff]
    %v749 = vld [vmem:[%s746 + $0x10] sm:$0xff]
    %v750 = vld [vmem:[%s746 + $0x18] sm:$0xff]
    %v752 = vsel %vm391, %v743, 0
    %v755 = vsel %vm391, %v744, 0
    %v758 = vsel %vm391, %v745, 0
    %760 = vmatpush.msra.mxu0 0.0
    %761 = vmatpush.msra.mxu0 0.0
    %762 = vmatpush.msra.mxu0 0.0
    %763 = vmatpush.msra.mxu0 0.0
    %764 = vmatpush.msra.mxu0 0.0
    %765 = vmatpush.msra.mxu0 0.0
    %766 = vmatpush.msra.mxu0 0.0
    %767 = vmatpush.msra.mxu0 0.0
    %768 = vmatpush.msra.mxu0 0.0
    %769 = vmatpush.msra.mxu0 0.0
    %770 = vmatpush.msra.mxu0 0.0
    %771 = vmatpush.msra.mxu0 0.0
    %772 = vmatpush.msra.mxu0 %v750
    %773 = vmatpush.msra.mxu0 %v749
    %774 = vmatpush.msra.mxu0 %v748
    %775 = vmatpush.msra.mxu0 %v747
    %776 = vmatmul.f32.gmra.mxu0 %v752
    %v777 = vpop.f32.mrf.mxu0
    %v778 = vadd.f32 0.0, %v777
    %779 = vmatmul.f32.gmra.mxu0 %v755
    %v780 = vpop.f32.mrf.mxu0
    %v781 = vadd.f32 0.0, %v780
    %782 = vmatmul.f32.gmra.mxu0 %v758
    %v783 = vpop.f32.mrf.mxu0
    %v784 = vadd.f32 0.0, %v783
    %785 = vdwg.mxu0
    %s786 = scalar_lea.vmem %s4, 3
    %v787 = vld [vmem:[%s786] sm:$0x1]
    %v789 = vperm.slane %v787, 0
    %791 = vmatpush.msra.mxu0 0.0
    %792 = vmatpush.msra.mxu0 0.0
    %793 = vmatpush.msra.mxu0 0.0
    %794 = vmatpush.msra.mxu0 0.0
    %795 = vmatpush.msra.mxu0 0.0
    %796 = vmatpush.msra.mxu0 0.0
    %797 = vmatpush.msra.mxu0 0.0
    %798 = vmatpush.msra.mxu0 0.0
    %799 = vmatpush.msra.mxu0 0.0
    %800 = vmatpush.msra.mxu0 0.0
    %801 = vmatpush.msra.mxu0 0.0
    %802 = vmatpush.msra.mxu0 0.0
    %803 = vmatpush.msra.mxu0 0.0
    %804 = vmatpush.msra.mxu0 %v784
    %805 = vmatpush.msra.mxu0 %v781
    %806 = vmatpush.msra.mxu0 %v778
    %807 = vmatmul.f32.gmra.mxu0 %v709
    %v808 = vpop.f32.mrf.mxu0
    %v809 = vadd.f32 %v789, %v808
    %810 = vmatmul.f32.gmra.mxu0 %v712
    %v811 = vpop.f32.mrf.mxu0
    %812 = vmatmul.f32.gmra.mxu0 %v715
    %v813 = vpop.f32.mrf.mxu0
    %814 = vdwg.mxu0
    %816 = vrot.lane.b32.xlu0 %v569, 32
    %v817 = vpop.permute.xlu0 %816
    %820 = vrot.lane.b32.xlu0 %v689, 64
    %v821 = vpop.permute.xlu0 %820
    %824 = vrot.lane.b32.xlu0 %v809, 96
    %v825 = vpop.permute.xlu0 %824
    %v827 = vsel %vm391, %v449, %v817
    %vm828 = vcmask 523264
    %v829 = vsel %vm828, %v827, %v821
    %vm830 = vcmask 785408
    %v831 = vsel %vm830, %v829, %v825
    %v832 = vld [vmem:[#allocation22] sm:$0xff]
    %v833 = vld [vmem:[#allocation22 + $0x8] sm:$0xff]
    %v834 = vld [vmem:[#allocation22 + $0x10] sm:$0xff]
    %v835 = vld [vmem:[#allocation22 + $0x18] sm:$0xff]
    %v836 = vld [vmem:[#allocation22 + $0x20] sm:$0xff]
    %v837 = vld [vmem:[#allocation22 + $0x28] sm:$0xff]
    %v838 = vld [vmem:[#allocation22 + $0x30] sm:$0xff]
    %v839 = vld [vmem:[#allocation22 + $0x38] sm:$0xff]
    %v840 = vld [vmem:[#allocation22 + $0x40] sm:$0xff]
    %v841 = vld [vmem:[#allocation22 + $0x48] sm:$0xff]
    %v842 = vld [vmem:[#allocation22 + $0x50] sm:$0xff]
    %v843 = vld [vmem:[#allocation22 + $0x58] sm:$0xff]
    %v844 = vld [vmem:[#allocation22 + $0x60] sm:$0xff]
    %v845 = vld [vmem:[#allocation22 + $0x68] sm:$0xff]
    %v846 = vld [vmem:[#allocation22 + $0x70] sm:$0xff]
    %v847 = vld [vmem:[#allocation22 + $0x78] sm:$0xff]
    %v848 = vld [vmem:[#allocation22 + $0x80] sm:$0xff]
    %v849 = vld [vmem:[#allocation22 + $0x88] sm:$0xff]
    %v850 = vld [vmem:[#allocation22 + $0x90] sm:$0xff]
    %v851 = vld [vmem:[#allocation22 + $0x98] sm:$0xff]
    %v852 = vld [vmem:[#allocation22 + $0xa0] sm:$0xff]
    %v853 = vld [vmem:[#allocation22 + $0xa8] sm:$0xff]
    %v854 = vld [vmem:[#allocation22 + $0xb0] sm:$0xff]
    %v855 = vld [vmem:[#allocation22 + $0xb8] sm:$0xff]
    %v856 = vld [vmem:[#allocation22 + $0xc0] sm:$0xff]
    %v857 = vld [vmem:[#allocation22 + $0xc8] sm:$0xff]
    %v858 = vld [vmem:[#allocation22 + $0xd0] sm:$0xff]
    %v859 = vld [vmem:[#allocation22 + $0xd8] sm:$0xff]
    %v860 = vld [vmem:[#allocation22 + $0xe0] sm:$0xff]
    %v861 = vld [vmem:[#allocation22 + $0xe8] sm:$0xff]
    %v862 = vld [vmem:[#allocation22 + $0xf0] sm:$0xff]
    %v863 = vld [vmem:[#allocation22 + $0xf8] sm:$0xff]
    %v864 = vld [vmem:[#allocation22 + $0x100] sm:$0xff]
    %v865 = vld [vmem:[#allocation22 + $0x108] sm:$0xff]
    %v866 = vld [vmem:[#allocation22 + $0x110] sm:$0xff]
    %v867 = vld [vmem:[#allocation22 + $0x118] sm:$0xff]
    %v868 = vld [vmem:[#allocation22 + $0x120] sm:$0xff]
    %v869 = vld [vmem:[#allocation22 + $0x128] sm:$0xff]
    %v870 = vld [vmem:[#allocation22 + $0x130] sm:$0xff]
    %v871 = vld [vmem:[#allocation22 + $0x138] sm:$0xff]
    %v872 = vld [vmem:[#allocation22 + $0x140] sm:$0xff]
    %v873 = vld [vmem:[#allocation22 + $0x148] sm:$0xff]
    %v874 = vld [vmem:[#allocation22 + $0x150] sm:$0xff]
    %v875 = vld [vmem:[#allocation22 + $0x158] sm:$0xff]
    %v876 = vld [vmem:[#allocation22 + $0x160] sm:$0xff]
    %v877 = vld [vmem:[#allocation22 + $0x168] sm:$0xff]
    %v878 = vld [vmem:[#allocation22 + $0x170] sm:$0xff]
    %v879 = vld [vmem:[#allocation22 + $0x178] sm:$0xff]
    %v880 = vld [vmem:[%s5] sm:$0xff]
    %v881 = vld [vmem:[%s5 + $0x8] sm:$0xff]
    %v882 = vld [vmem:[%s5 + $0x10] sm:$0xff]
    %v883 = vld [vmem:[%s5 + $0x18] sm:$0xff]
    %v884 = vld [vmem:[%s5 + $0x20] sm:$0xff]
    %v885 = vld [vmem:[%s5 + $0x28] sm:$0xff]
    %v886 = vld [vmem:[%s5 + $0x30] sm:$0xff]
    %v887 = vld [vmem:[%s5 + $0x38] sm:$0xff]
    %v888 = vld [vmem:[%s5 + $0x40] sm:$0xff]
    %v889 = vld [vmem:[%s5 + $0x48] sm:$0xff]
    %v890 = vld [vmem:[%s5 + $0x50] sm:$0xff]
    %v891 = vld [vmem:[%s5 + $0x58] sm:$0xff]
    %v892 = vld [vmem:[%s5 + $0x60] sm:$0xff]
    %v893 = vld [vmem:[%s5 + $0x68] sm:$0xff]
    %v894 = vld [vmem:[%s5 + $0x70] sm:$0xff]
    %v895 = vld [vmem:[%s5 + $0x78] sm:$0xff]
    %v896 = vld [vmem:[%s5 + $0x80] sm:$0xff]
    %v897 = vld [vmem:[%s5 + $0x88] sm:$0xff]
    %v898 = vld [vmem:[%s5 + $0x90] sm:$0xff]
    %v899 = vld [vmem:[%s5 + $0x98] sm:$0xff]
    %v900 = vld [vmem:[%s5 + $0xa0] sm:$0xff]
    %v901 = vld [vmem:[%s5 + $0xa8] sm:$0xff]
    %v902 = vld [vmem:[%s5 + $0xb0] sm:$0xff]
    %v903 = vld [vmem:[%s5 + $0xb8] sm:$0xff]
    %v904 = vld [vmem:[%s5 + $0xc0] sm:$0xff]
    %v905 = vld [vmem:[%s5 + $0xc8] sm:$0xff]
    %v906 = vld [vmem:[%s5 + $0xd0] sm:$0xff]
    %v907 = vld [vmem:[%s5 + $0xd8] sm:$0xff]
    %v908 = vld [vmem:[%s5 + $0xe0] sm:$0xff]
    %v909 = vld [vmem:[%s5 + $0xe8] sm:$0xff]
    %v910 = vld [vmem:[%s5 + $0xf0] sm:$0xff]
    %v911 = vld [vmem:[%s5 + $0xf8] sm:$0xff]
    %v912 = vld [vmem:[#allocation7] sm:$0x3]
    %v913 = vld [vmem:[#allocation9] sm:$0xff]
    %v914 = vld [vmem:[#allocation9 + $0x8] sm:$0xff]
    %v915 = vld [vmem:[#allocation9 + $0x10] sm:$0xff]
    %v916 = vld [vmem:[#allocation9 + $0x18] sm:$0xff]
    %v917 = vld [vmem:[#allocation9 + $0x20] sm:$0xff]
    %v918 = vld [vmem:[#allocation9 + $0x28] sm:$0xff]
    %v919 = vld [vmem:[#allocation9 + $0x30] sm:$0xff]
    %v920 = vld [vmem:[#allocation9 + $0x38] sm:$0xff]
    %v921 = vld [vmem:[#allocation9 + $0x40] sm:$0xff]
    %v922 = vld [vmem:[#allocation9 + $0x48] sm:$0xff]
    %v923 = vld [vmem:[#allocation9 + $0x50] sm:$0xff]
    %v924 = vld [vmem:[#allocation9 + $0x58] sm:$0xff]
    %v925 = vld [vmem:[#allocation9 + $0x60] sm:$0xff]
    %v926 = vld [vmem:[#allocation9 + $0x68] sm:$0xff]
    %v927 = vld [vmem:[#allocation9 + $0x70] sm:$0xff]
    %v928 = vld [vmem:[#allocation9 + $0x78] sm:$0xff]
    %v929 = vld [vmem:[#allocation9 + $0x80] sm:$0xff]
    %v930 = vld [vmem:[#allocation9 + $0x88] sm:$0xff]
    %v931 = vld [vmem:[#allocation9 + $0x90] sm:$0xff]
    %v932 = vld [vmem:[#allocation9 + $0x98] sm:$0xff]
    %v933 = vld [vmem:[#allocation9 + $0xa0] sm:$0xff]
    %v934 = vld [vmem:[#allocation9 + $0xa8] sm:$0xff]
    %v935 = vld [vmem:[#allocation9 + $0xb0] sm:$0xff]
    %v936 = vld [vmem:[#allocation9 + $0xb8] sm:$0xff]
    %v937 = vld [vmem:[#allocation9 + $0xc0] sm:$0xff]
    %v938 = vld [vmem:[#allocation9 + $0xc8] sm:$0xff]
    %v939 = vld [vmem:[#allocation9 + $0xd0] sm:$0xff]
    %v940 = vld [vmem:[#allocation9 + $0xd8] sm:$0xff]
    %v941 = vld [vmem:[#allocation9 + $0xe0] sm:$0xff]
    %v942 = vld [vmem:[#allocation9 + $0xe8] sm:$0xff]
    %v943 = vld [vmem:[#allocation9 + $0xf0] sm:$0xff]
    %v944 = vld [vmem:[#allocation9 + $0xf8] sm:$0xff]
    %v945 = vld [vmem:[#allocation9 + $0x100] sm:$0xff]
    %v946 = vld [vmem:[#allocation9 + $0x108] sm:$0xff]
    %v947 = vld [vmem:[#allocation9 + $0x110] sm:$0xff]
    %v948 = vld [vmem:[#allocation9 + $0x118] sm:$0xff]
    %v949 = vld [vmem:[#allocation9 + $0x120] sm:$0xff]
    %v950 = vld [vmem:[#allocation9 + $0x128] sm:$0xff]
    %v951 = vld [vmem:[#allocation9 + $0x130] sm:$0xff]
    %v952 = vld [vmem:[#allocation9 + $0x138] sm:$0xff]
    %v953 = vld [vmem:[#allocation9 + $0x140] sm:$0xff]
    %v954 = vld [vmem:[#allocation9 + $0x148] sm:$0xff]
    %v955 = vld [vmem:[#allocation9 + $0x150] sm:$0xff]
    %v956 = vld [vmem:[#allocation9 + $0x158] sm:$0xff]
    %v957 = vld [vmem:[#allocation9 + $0x160] sm:$0xff]
    %v958 = vld [vmem:[#allocation9 + $0x168] sm:$0xff]
    %v959 = vld [vmem:[#allocation9 + $0x170] sm:$0xff]
    %v960 = vld [vmem:[#allocation9 + $0x178] sm:$0xff]
    %v961 = vld [vmem:[#allocation10] sm:$0x7]
    %v962 = vld [vmem:[#allocation12] sm:$0xff]
    %v963 = vld [vmem:[#allocation12 + $0x8] sm:$0xff]
    %v964 = vld [vmem:[#allocation12 + $0x10] sm:$0xff]
    %v965 = vld [vmem:[#allocation12 + $0x18] sm:$0xff]
    %v966 = vld [vmem:[#allocation12 + $0x20] sm:$0xff]
    %v967 = vld [vmem:[#allocation12 + $0x28] sm:$0xff]
    %v968 = vld [vmem:[#allocation12 + $0x30] sm:$0xff]
    %v969 = vld [vmem:[#allocation12 + $0x38] sm:$0xff]
    %v970 = vld [vmem:[#allocation12 + $0x40] sm:$0xff]
    %v971 = vld [vmem:[#allocation12 + $0x48] sm:$0xff]
    %v972 = vld [vmem:[#allocation12 + $0x50] sm:$0xff]
    %v973 = vld [vmem:[#allocation12 + $0x58] sm:$0xff]
    %v974 = vld [vmem:[#allocation12 + $0x60] sm:$0xff]
    %v975 = vld [vmem:[#allocation12 + $0x68] sm:$0xff]
    %v976 = vld [vmem:[#allocation12 + $0x70] sm:$0xff]
    %v977 = vld [vmem:[#allocation12 + $0x78] sm:$0xff]
    %v978 = vld [vmem:[#allocation12 + $0x80] sm:$0xff]
    %v979 = vld [vmem:[#allocation12 + $0x88] sm:$0xff]
    %v980 = vld [vmem:[#allocation12 + $0x90] sm:$0xff]
    %v981 = vld [vmem:[#allocation12 + $0x98] sm:$0xff]
    %v982 = vld [vmem:[#allocation12 + $0xa0] sm:$0xff]
    %v983 = vld [vmem:[#allocation12 + $0xa8] sm:$0xff]
    %v984 = vld [vmem:[#allocation12 + $0xb0] sm:$0xff]
    %v985 = vld [vmem:[#allocation12 + $0xb8] sm:$0xff]
    %v986 = vld [vmem:[#allocation12 + $0xc0] sm:$0xff]
    %v987 = vld [vmem:[#allocation12 + $0xc8] sm:$0xff]
    %v988 = vld [vmem:[#allocation12 + $0xd0] sm:$0xff]
    %v989 = vld [vmem:[#allocation12 + $0xd8] sm:$0xff]
    %v990 = vld [vmem:[#allocation12 + $0xe0] sm:$0xff]
    %v991 = vld [vmem:[#allocation12 + $0xe8] sm:$0xff]
    %v992 = vld [vmem:[#allocation12 + $0xf0] sm:$0xff]
    %v993 = vld [vmem:[#allocation12 + $0xf8] sm:$0xff]
    %v994 = vld [vmem:[#allocation12 + $0x100] sm:$0xff]
    %v995 = vld [vmem:[#allocation12 + $0x108] sm:$0xff]
    %v996 = vld [vmem:[#allocation12 + $0x110] sm:$0xff]
    %v997 = vld [vmem:[#allocation12 + $0x118] sm:$0xff]
    %v998 = vld [vmem:[#allocation12 + $0x120] sm:$0xff]
    %v999 = vld [vmem:[#allocation12 + $0x128] sm:$0xff]
    %v1000 = vld [vmem:[#allocation12 + $0x130] sm:$0xff]
    %v1001 = vld [vmem:[#allocation12 + $0x138] sm:$0xff]
    %v1002 = vld [vmem:[#allocation12 + $0x140] sm:$0xff]
    %v1003 = vld [vmem:[#allocation12 + $0x148] sm:$0xff]
    %v1004 = vld [vmem:[#allocation12 + $0x150] sm:$0xff]
    %v1005 = vld [vmem:[#allocation12 + $0x158] sm:$0xff]
    %v1006 = vld [vmem:[#allocation12 + $0x160] sm:$0xff]
    %v1007 = vld [vmem:[#allocation12 + $0x168] sm:$0xff]
    %v1008 = vld [vmem:[#allocation12 + $0x170] sm:$0xff]
    %v1009 = vld [vmem:[#allocation12 + $0x178] sm:$0xff]
    %v1010 = vld [vmem:[#allocation13] sm:$0x3]
    %v1011 = vld [vmem:[%s11] sm:$0xff]
    %v1013 = vperm.slane %v912, 0
    %v1014 = vperm.slane %v912, 1
    %1017 = vmatpush.msra.mxu0 %v910
    %1018 = vmatpush.msra.mxu0 %v908
    %1019 = vmatpush.msra.mxu0 %v906
    %1020 = vmatpush.msra.mxu0 %v904
    %1021 = vmatpush.msra.mxu0 %v902
    %1022 = vmatpush.msra.mxu0 %v900
    %1023 = vmatpush.msra.mxu0 %v898
    %1024 = vmatpush.msra.mxu0 %v896
    %1025 = vmatpush.msra.mxu0 %v894
    %1026 = vmatpush.msra.mxu0 %v892
    %1027 = vmatpush.msra.mxu0 %v890
    %1028 = vmatpush.msra.mxu0 %v888
    %1029 = vmatpush.msra.mxu0 %v886
    %1030 = vmatpush.msra.mxu0 %v884
    %1031 = vmatpush.msra.mxu0 %v882
    %1032 = vmatpush.msra.mxu0 %v880
    %1033 = vmatmul.f32.gmra.mxu0 %v831
    %v1034 = vpop.f32.mrf.mxu0
    %v1035 = vadd.f32 %v1013, %v1034
    %1036 = vdwg.mxu0
    %1037 = vmatpush.msra.mxu0 %v911
    %1038 = vmatpush.msra.mxu0 %v909
    %1039 = vmatpush.msra.mxu0 %v907
    %1040 = vmatpush.msra.mxu0 %v905
    %1041 = vmatpush.msra.mxu0 %v903
    %1042 = vmatpush.msra.mxu0 %v901
    %1043 = vmatpush.msra.mxu0 %v899
    %1044 = vmatpush.msra.mxu0 %v897
    %1045 = vmatpush.msra.mxu0 %v895
    %1046 = vmatpush.msra.mxu0 %v893
    %1047 = vmatpush.msra.mxu0 %v891
    %1048 = vmatpush.msra.mxu0 %v889
    %1049 = vmatpush.msra.mxu0 %v887
    %1050 = vmatpush.msra.mxu0 %v885
    %1051 = vmatpush.msra.mxu0 %v883
    %1052 = vmatpush.msra.mxu0 %v881
    %1053 = vmatmul.f32.gmra.mxu0 %v831
    %v1054 = vpop.f32.mrf.mxu0
    %v1055 = vadd.f32 %v1014, %v1054
    %1056 = vdwg.mxu0
    %v1058 = vperm.slane %v961, 0
    %v1059 = vperm.slane %v961, 1
    %v1060 = vperm.slane %v961, 2
    %1064 = vmatpush.msra.mxu0 %v958
    %1065 = vmatpush.msra.mxu0 %v955
    %1066 = vmatpush.msra.mxu0 %v952
    %1067 = vmatpush.msra.mxu0 %v949
    %1068 = vmatpush.msra.mxu0 %v946
    %1069 = vmatpush.msra.mxu0 %v943
    %1070 = vmatpush.msra.mxu0 %v940
    %1071 = vmatpush.msra.mxu0 %v937
    %1072 = vmatpush.msra.mxu0 %v934
    %1073 = vmatpush.msra.mxu0 %v931
    %1074 = vmatpush.msra.mxu0 %v928
    %1075 = vmatpush.msra.mxu0 %v925
    %1076 = vmatpush.msra.mxu0 %v922
    %1077 = vmatpush.msra.mxu0 %v919
    %1078 = vmatpush.msra.mxu0 %v916
    %1079 = vmatpush.msra.mxu0 %v913
    %1080 = vmatmul.f32.gmra.mxu0 %v831
    %v1081 = vpop.f32.mrf.mxu0
    %v1082 = vadd.f32 %v1058, %v1081
    %1083 = vdwg.mxu0
    %1084 = vmatpush.msra.mxu0 %v959
    %1085 = vmatpush.msra.mxu0 %v956
    %1086 = vmatpush.msra.mxu0 %v953
    %1087 = vmatpush.msra.mxu0 %v950
    %1088 = vmatpush.msra.mxu0 %v947
    %1089 = vmatpush.msra.mxu0 %v944
    %1090 = vmatpush.msra.mxu0 %v941
    %1091 = vmatpush.msra.mxu0 %v938
    %1092 = vmatpush.msra.mxu0 %v935
    %1093 = vmatpush.msra.mxu0 %v932
    %1094 = vmatpush.msra.mxu0 %v929
    %1095 = vmatpush.msra.mxu0 %v926
    %1096 = vmatpush.msra.mxu0 %v923
    %1097 = vmatpush.msra.mxu0 %v920
    %1098 = vmatpush.msra.mxu0 %v917
    %1099 = vmatpush.msra.mxu0 %v914
    %1100 = vmatmul.f32.gmra.mxu0 %v831
    %v1101 = vpop.f32.mrf.mxu0
    %v1102 = vadd.f32 %v1059, %v1101
    %1103 = vdwg.mxu0
    %1104 = vmatpush.msra.mxu0 %v960
    %1105 = vmatpush.msra.mxu0 %v957
    %1106 = vmatpush.msra.mxu0 %v954
    %1107 = vmatpush.msra.mxu0 %v951
    %1108 = vmatpush.msra.mxu0 %v948
    %1109 = vmatpush.msra.mxu0 %v945
    %1110 = vmatpush.msra.mxu0 %v942
    %1111 = vmatpush.msra.mxu0 %v939
    %1112 = vmatpush.msra.mxu0 %v936
    %1113 = vmatpush.msra.mxu0 %v933
    %1114 = vmatpush.msra.mxu0 %v930
    %1115 = vmatpush.msra.mxu0 %v927
    %1116 = vmatpush.msra.mxu0 %v924
    %1117 = vmatpush.msra.mxu0 %v921
    %1118 = vmatpush.msra.mxu0 %v918
    %1119 = vmatpush.msra.mxu0 %v915
    %1120 = vmatmul.f32.gmra.mxu0 %v831
    %v1121 = vpop.f32.mrf.mxu0
    %v1122 = vadd.f32 %v1060, %v1121
    %1123 = vdwg.mxu0
    %vm1124 = vcmask 130048
    %v1126 = vsel %vm1124, %v1035, 0
    %v1129 = vsel %vm1124, %v1082, 0
    %1131 = vmatpush.xpose.msra.mxu0 0.0
    %1132 = vmatpush.xpose.msra.mxu0 0.0
    %1133 = vmatpush.xpose.msra.mxu0 0.0
    %1134 = vmatpush.xpose.msra.mxu0 0.0
    %1135 = vmatpush.xpose.msra.mxu0 0.0
    %1136 = vmatpush.xpose.msra.mxu0 0.0
    %1137 = vmatpush.xpose.msra.mxu0 0.0
    %1138 = vmatpush.xpose.msra.mxu0 0.0
    %1139 = vmatpush.xpose.msra.mxu0 0.0
    %1140 = vmatpush.xpose.msra.mxu0 0.0
    %1141 = vmatpush.xpose.msra.mxu0 0.0
    %1142 = vmatpush.xpose.msra.mxu0 0.0
    %1143 = vmatpush.xpose.msra.mxu0 0.0
    %1144 = vmatpush.xpose.msra.mxu0 0.0
    %1145 = vmatpush.xpose.msra.mxu0 0.0
    %1146 = vmatpush.xpose.msra.mxu0 %v1129
    %1147 = vmatmul.f32.gmra.mxu0 %v1126
    %v1148 = vpop.f32.mrf.mxu0
    %v1149 = vadd.f32 0.0, %v1148
    %1150 = vdwg.mxu0
    %v1151 = vmul.f32 %v1149, 0.17677669
    %vm1152 = vcmask 46080
    %v1153 = vsel %vm1152, %v1151, -inf
    %1154 = vmax.xlane.f32.xlu0 %v1153
    %v1155 = vpop.xlane.xlu0 %1154
    %v1156 = vsub.f32 %v1151, %v1155
    %v1157 = vmul.f32 %v1156, 1.442695
    %v1158 = vpow.pop %v1157
    %v1159 = vsel %vm1152, %v1158, 0.0
    %1160 = vadd.xlane.f32.xlu0 %v1159
    %v1161 = vpop.xlane.xlu0 %1160
    %v1162 = vrcp.pop %v1161
    %v1163 = vmul.f32 %v1158, %v1162
    %1165 = vrot.lane.b32.xlu0 %v1102, 64
    %v1166 = vpop.permute.xlu0 %1165
    %vm1167 = vcmask 48128
    %v1169 = vsel %vm1167, %v1163, 0
    %vm1171 = vcmask 1045504
    %v1172 = vsel %vm1171, %v1166, 0
    %1174 = vmatpush.msra.mxu0 0.0
    %1175 = vmatpush.msra.mxu0 0.0
    %1176 = vmatpush.msra.mxu0 0.0
    %1177 = vmatpush.msra.mxu0 0.0
    %1178 = vmatpush.msra.mxu0 0.0
    %1179 = vmatpush.msra.mxu0 0.0
    %1180 = vmatpush.msra.mxu0 0.0
    %1181 = vmatpush.msra.mxu0 0.0
    %1182 = vmatpush.msra.mxu0 0.0
    %1183 = vmatpush.msra.mxu0 0.0
    %1184 = vmatpush.msra.mxu0 0.0
    %1185 = vmatpush.msra.mxu0 0.0
    %1186 = vmatpush.msra.mxu0 0.0
    %1187 = vmatpush.msra.mxu0 0.0
    %1188 = vmatpush.msra.mxu0 0.0
    %1189 = vmatpush.msra.mxu0 %v1172
    %1190 = vmatmul.f32.gmra.mxu0 %v1169
    %v1191 = vpop.f32.mrf.mxu0
    %v1192 = vadd.f32 0.0, %v1191
    %1193 = vdwg.mxu0
    %v1194 = vadd.f32 %v1035, %v1192
    %1195 = vrot.lane.b32.xlu0 %v1035, 112
    %v1196 = vpop.permute.xlu0 %1195
    %1197 = vrot.lane.b32.xlu0 %v1082, 112
    %v1198 = vpop.permute.xlu0 %1197
    %v1199 = vsel %vm1124, %v1196, 0
    %v1201 = vsel %vm1124, %v1198, 0
    %1203 = vmatpush.xpose.msra.mxu0 0.0
    %1204 = vmatpush.xpose.msra.mxu0 0.0
    %1205 = vmatpush.xpose.msra.mxu0 0.0
    %1206 = vmatpush.xpose.msra.mxu0 0.0
    %1207 = vmatpush.xpose.msra.mxu0 0.0
    %1208 = vmatpush.xpose.msra.mxu0 0.0
    %1209 = vmatpush.xpose.msra.mxu0 0.0
    %1210 = vmatpush.xpose.msra.mxu0 0.0
    %1211 = vmatpush.xpose.msra.mxu0 0.0
    %1212 = vmatpush.xpose.msra.mxu0 0.0
    %1213 = vmatpush.xpose.msra.mxu0 0.0
    %1214 = vmatpush.xpose.msra.mxu0 0.0
    %1215 = vmatpush.xpose.msra.mxu0 0.0
    %1216 = vmatpush.xpose.msra.mxu0 0.0
    %1217 = vmatpush.xpose.msra.mxu0 0.0
    %1218 = vmatpush.xpose.msra.mxu0 %v1201
    %1219 = vmatmul.f32.gmra.mxu0 %v1199
    %v1220 = vpop.f32.mrf.mxu0
    %v1221 = vadd.f32 0.0, %v1220
    %1222 = vdwg.mxu0
    %v1223 = vmul.f32 %v1221, 0.17677669
    %v1224 = vsel %vm1152, %v1223, -inf
    %1225 = vmax.xlane.f32.xlu0 %v1224
    %v1226 = vpop.xlane.xlu0 %1225
    %v1227 = vsub.f32 %v1223, %v1226
    %v1228 = vmul.f32 %v1227, 1.442695
    %v1229 = vpow.pop %v1228
    %v1230 = vsel %vm1152, %v1229, 0.0
    %1231 = vadd.xlane.f32.xlu0 %v1230
    %v1232 = vpop.xlane.xlu0 %1231
    %v1233 = vrcp.pop %v1232
    %v1234 = vmul.f32 %v1229, %v1233
    %1235 = vrot.lane.b32.xlu0 %v1102, 48
    %v1236 = vpop.permute.xlu0 %1235
    %v1238 = vsel %vm1167, %v1234, 0
    %v1240 = vsel %vm1171, %v1236, 0
    %1242 = vmatpush.msra.mxu0 0.0
    %1243 = vmatpush.msra.mxu0 0.0
    %1244 = vmatpush.msra.mxu0 0.0
    %1245 = vmatpush.msra.mxu0 0.0
    %1246 = vmatpush.msra.mxu0 0.0
    %1247 = vmatpush.msra.mxu0 0.0
    %1248 = vmatpush.msra.mxu0 0.0
    %1249 = vmatpush.msra.mxu0 0.0
    %1250 = vmatpush.msra.mxu0 0.0
    %1251 = vmatpush.msra.mxu0 0.0
    %1252 = vmatpush.msra.mxu0 0.0
    %1253 = vmatpush.msra.mxu0 0.0
    %1254 = vmatpush.msra.mxu0 0.0
    %1255 = vmatpush.msra.mxu0 0.0
    %1256 = vmatpush.msra.mxu0 0.0
    %1257 = vmatpush.msra.mxu0 %v1240
    %1258 = vmatmul.f32.gmra.mxu0 %v1238
    %v1259 = vpop.f32.mrf.mxu0
    %v1260 = vadd.f32 0.0, %v1259
    %1261 = vdwg.mxu0
    %1263 = vrot.lane.b32.xlu0 %v1260, 16
    %v1264 = vpop.permute.xlu0 %1263
    %v1266 = vadd.f32 %v1035, %v1264
    %1267 = vrot.lane.b32.xlu0 %v1035, 96
    %v1268 = vpop.permute.xlu0 %1267
    %1269 = vrot.lane.b32.xlu0 %v1082, 96
    %v1270 = vpop.permute.xlu0 %1269
    %v1271 = vsel %vm1124, %v1268, 0
    %v1273 = vsel %vm1124, %v1270, 0
    %1275 = vmatpush.xpose.msra.mxu0 0.0
    %1276 = vmatpush.xpose.msra.mxu0 0.0
    %1277 = vmatpush.xpose.msra.mxu0 0.0
    %1278 = vmatpush.xpose.msra.mxu0 0.0
    %1279 = vmatpush.xpose.msra.mxu0 0.0
    %1280 = vmatpush.xpose.msra.mxu0 0.0
    %1281 = vmatpush.xpose.msra.mxu0 0.0
    %1282 = vmatpush.xpose.msra.mxu0 0.0
    %1283 = vmatpush.xpose.msra.mxu0 0.0
    %1284 = vmatpush.xpose.msra.mxu0 0.0
    %1285 = vmatpush.xpose.msra.mxu0 0.0
    %1286 = vmatpush.xpose.msra.mxu0 0.0
    %1287 = vmatpush.xpose.msra.mxu0 0.0
    %1288 = vmatpush.xpose.msra.mxu0 0.0
    %1289 = vmatpush.xpose.msra.mxu0 0.0
    %1290 = vmatpush.xpose.msra.mxu0 %v1273
    %1291 = vmatmul.f32.gmra.mxu0 %v1271
    %v1292 = vpop.f32.mrf.mxu0
    %v1293 = vadd.f32 0.0, %v1292
    %1294 = vdwg.mxu0
    %v1295 = vmul.f32 %v1293, 0.17677669
    %v1296 = vsel %vm1152, %v1295, -inf
    %1297 = vmax.xlane.f32.xlu0 %v1296
    %v1298 = vpop.xlane.xlu0 %1297
    %v1299 = vsub.f32 %v1295, %v1298
    %v1300 = vmul.f32 %v1299, 1.442695
    %v1301 = vpow.pop %v1300
    %v1302 = vsel %vm1152, %v1301, 0.0
    %1303 = vadd.xlane.f32.xlu0 %v1302
    %v1304 = vpop.xlane.xlu0 %1303
    %v1305 = vrcp.pop %v1304
    %v1306 = vmul.f32 %v1301, %v1305
    %1307 = vrot.lane.b32.xlu0 %v1102, 32
    %v1308 = vpop.permute.xlu0 %1307
    %v1310 = vsel %vm1167, %v1306, 0
    %v1312 = vsel %vm1171, %v1308, 0
    %1314 = vmatpush.msra.mxu0 0.0
    %1315 = vmatpush.msra.mxu0 0.0
    %1316 = vmatpush.msra.mxu0 0.0
    %1317 = vmatpush.msra.mxu0 0.0
    %1318 = vmatpush.msra.mxu0 0.0
    %1319 = vmatpush.msra.mxu0 0.0
    %1320 = vmatpush.msra.mxu0 0.0
    %1321 = vmatpush.msra.mxu0 0.0
    %1322 = vmatpush.msra.mxu0 0.0
    %1323 = vmatpush.msra.mxu0 0.0
    %1324 = vmatpush.msra.mxu0 0.0
    %1325 = vmatpush.msra.mxu0 0.0
    %1326 = vmatpush.msra.mxu0 0.0
    %1327 = vmatpush.msra.mxu0 0.0
    %1328 = vmatpush.msra.mxu0 0.0
    %1329 = vmatpush.msra.mxu0 %v1312
    %1330 = vmatmul.f32.gmra.mxu0 %v1310
    %v1331 = vpop.f32.mrf.mxu0
    %v1332 = vadd.f32 0.0, %v1331
    %1333 = vdwg.mxu0
    %1335 = vrot.lane.b32.xlu0 %v1332, 32
    %v1336 = vpop.permute.xlu0 %1335
    %v1338 = vadd.f32 %v1035, %v1336
    %1339 = vrot.lane.b32.xlu0 %v1035, 80
    %v1340 = vpop.permute.xlu0 %1339
    %1341 = vrot.lane.b32.xlu0 %v1082, 80
    %v1342 = vpop.permute.xlu0 %1341
    %v1343 = vsel %vm1124, %v1340, 0
    %v1345 = vsel %vm1124, %v1342, 0
    %1347 = vmatpush.xpose.msra.mxu0 0.0
    %1348 = vmatpush.xpose.msra.mxu0 0.0
    %1349 = vmatpush.xpose.msra.mxu0 0.0
    %1350 = vmatpush.xpose.msra.mxu0 0.0
    %1351 = vmatpush.xpose.msra.mxu0 0.0
    %1352 = vmatpush.xpose.msra.mxu0 0.0
    %1353 = vmatpush.xpose.msra.mxu0 0.0
    %1354 = vmatpush.xpose.msra.mxu0 0.0
    %1355 = vmatpush.xpose.msra.mxu0 0.0
    %1356 = vmatpush.xpose.msra.mxu0 0.0
    %1357 = vmatpush.xpose.msra.mxu0 0.0
    %1358 = vmatpush.xpose.msra.mxu0 0.0
    %1359 = vmatpush.xpose.msra.mxu0 0.0
    %1360 = vmatpush.xpose.msra.mxu0 0.0
    %1361 = vmatpush.xpose.msra.mxu0 0.0
    %1362 = vmatpush.xpose.msra.mxu0 %v1345
    %1363 = vmatmul.f32.gmra.mxu0 %v1343
    %v1364 = vpop.f32.mrf.mxu0
    %v1365 = vadd.f32 0.0, %v1364
    %1366 = vdwg.mxu0
    %v1367 = vmul.f32 %v1365, 0.17677669
    %v1368 = vsel %vm1152, %v1367, -inf
    %1369 = vmax.xlane.f32.xlu0 %v1368
    %v1370 = vpop.xlane.xlu0 %1369
    %v1371 = vsub.f32 %v1367, %v1370
    %v1372 = vmul.f32 %v1371, 1.442695
    %v1373 = vpow.pop %v1372
    %v1374 = vsel %vm1152, %v1373, 0.0
    %1375 = vadd.xlane.f32.xlu0 %v1374
    %v1376 = vpop.xlane.xlu0 %1375
    %v1377 = vrcp.pop %v1376
    %v1378 = vmul.f32 %v1373, %v1377
    %1379 = vrot.lane.b32.xlu0 %v1102, 16
    %v1380 = vpop.permute.xlu0 %1379
    %v1382 = vsel %vm1167, %v1378, 0
    %v1384 = vsel %vm1171, %v1380, 0
    %1386 = vmatpush.msra.mxu0 0.0
    %1387 = vmatpush.msra.mxu0 0.0
    %1388 = vmatpush.msra.mxu0 0.0
    %1389 = vmatpush.msra.mxu0 0.0
    %1390 = vmatpush.msra.mxu0 0.0
    %1391 = vmatpush.msra.mxu0 0.0
    %1392 = vmatpush.msra.mxu0 0.0
    %1393 = vmatpush.msra.mxu0 0.0
    %1394 = vmatpush.msra.mxu0 0.0
    %1395 = vmatpush.msra.mxu0 0.0
    %1396 = vmatpush.msra.mxu0 0.0
    %1397 = vmatpush.msra.mxu0 0.0
    %1398 = vmatpush.msra.mxu0 0.0
    %1399 = vmatpush.msra.mxu0 0.0
    %1400 = vmatpush.msra.mxu0 0.0
    %1401 = vmatpush.msra.mxu0 %v1384
    %1402 = vmatmul.f32.gmra.mxu0 %v1382
    %v1403 = vpop.f32.mrf.mxu0
    %v1404 = vadd.f32 0.0, %v1403
    %1405 = vdwg.mxu0
    %1407 = vrot.lane.b32.xlu0 %v1404, 48
    %v1408 = vpop.permute.xlu0 %1407
    %v1410 = vadd.f32 %v1035, %v1408
    %1411 = vrot.lane.b32.xlu0 %v1035, 64
    %v1412 = vpop.permute.xlu0 %1411
    %1413 = vrot.lane.b32.xlu0 %v1082, 64
    %v1414 = vpop.permute.xlu0 %1413
    %v1415 = vsel %vm1124, %v1412, 0
    %v1417 = vsel %vm1124, %v1414, 0
    %1419 = vmatpush.xpose.msra.mxu0 0.0
    %1420 = vmatpush.xpose.msra.mxu0 0.0
    %1421 = vmatpush.xpose.msra.mxu0 0.0
    %1422 = vmatpush.xpose.msra.mxu0 0.0
    %1423 = vmatpush.xpose.msra.mxu0 0.0
    %1424 = vmatpush.xpose.msra.mxu0 0.0
    %1425 = vmatpush.xpose.msra.mxu0 0.0
    %1426 = vmatpush.xpose.msra.mxu0 0.0
    %1427 = vmatpush.xpose.msra.mxu0 0.0
    %1428 = vmatpush.xpose.msra.mxu0 0.0
    %1429 = vmatpush.xpose.msra.mxu0 0.0
    %1430 = vmatpush.xpose.msra.mxu0 0.0
    %1431 = vmatpush.xpose.msra.mxu0 0.0
    %1432 = vmatpush.xpose.msra.mxu0 0.0
    %1433 = vmatpush.xpose.msra.mxu0 0.0
    %1434 = vmatpush.xpose.msra.mxu0 %v1417
    %1435 = vmatmul.f32.gmra.mxu0 %v1415
    %v1436 = vpop.f32.mrf.mxu0
    %v1437 = vadd.f32 0.0, %v1436
    %1438 = vdwg.mxu0
    %v1439 = vmul.f32 %v1437, 0.17677669
    %v1440 = vsel %vm1152, %v1439, -inf
    %1441 = vmax.xlane.f32.xlu0 %v1440
    %v1442 = vpop.xlane.xlu0 %1441
    %v1443 = vsub.f32 %v1439, %v1442
    %v1444 = vmul.f32 %v1443, 1.442695
    %v1445 = vpow.pop %v1444
    %v1446 = vsel %vm1152, %v1445, 0.0
    %1447 = vadd.xlane.f32.xlu0 %v1446
    %v1448 = vpop.xlane.xlu0 %1447
    %v1449 = vrcp.pop %v1448
    %v1450 = vmul.f32 %v1445, %v1449
    %v1452 = vsel %vm1167, %v1450, 0
    %v1455 = vsel %vm1171, %v1122, 0
    %1457 = vmatpush.msra.mxu0 0.0
    %1458 = vmatpush.msra.mxu0 0.0
    %1459 = vmatpush.msra.mxu0 0.0
    %1460 = vmatpush.msra.mxu0 0.0
    %1461 = vmatpush.msra.mxu0 0.0
    %1462 = vmatpush.msra.mxu0 0.0
    %1463 = vmatpush.msra.mxu0 0.0
    %1464 = vmatpush.msra.mxu0 0.0
    %1465 = vmatpush.msra.mxu0 0.0
    %1466 = vmatpush.msra.mxu0 0.0
    %1467 = vmatpush.msra.mxu0 0.0
    %1468 = vmatpush.msra.mxu0 0.0
    %1469 = vmatpush.msra.mxu0 0.0
    %1470 = vmatpush.msra.mxu0 0.0
    %1471 = vmatpush.msra.mxu0 0.0
    %1472 = vmatpush.msra.mxu0 %v1455
    %1473 = vmatmul.f32.gmra.mxu0 %v1452
    %v1474 = vpop.f32.mrf.mxu0
    %v1475 = vadd.f32 0.0, %v1474
    %1476 = vdwg.mxu0
    %1478 = vrot.lane.b32.xlu0 %v1475, 64
    %v1479 = vpop.permute.xlu0 %1478
    %v1481 = vadd.f32 %v1035, %v1479
    %1482 = vrot.lane.b32.xlu0 %v1035, 48
    %v1483 = vpop.permute.xlu0 %1482
    %1484 = vrot.lane.b32.xlu0 %v1082, 48
    %v1485 = vpop.permute.xlu0 %1484
    %v1486 = vsel %vm1124, %v1483, 0
    %v1488 = vsel %vm1124, %v1485, 0
    %1490 = vmatpush.xpose.msra.mxu0 0.0
    %1491 = vmatpush.xpose.msra.mxu0 0.0
    %1492 = vmatpush.xpose.msra.mxu0 0.0
    %1493 = vmatpush.xpose.msra.mxu0 0.0
    %1494 = vmatpush.xpose.msra.mxu0 0.0
    %1495 = vmatpush.xpose.msra.mxu0 0.0
    %1496 = vmatpush.xpose.msra.mxu0 0.0
    %1497 = vmatpush.xpose.msra.mxu0 0.0
    %1498 = vmatpush.xpose.msra.mxu0 0.0
    %1499 = vmatpush.xpose.msra.mxu0 0.0
    %1500 = vmatpush.xpose.msra.mxu0 0.0
    %1501 = vmatpush.xpose.msra.mxu0 0.0
    %1502 = vmatpush.xpose.msra.mxu0 0.0
    %1503 = vmatpush.xpose.msra.mxu0 0.0
    %1504 = vmatpush.xpose.msra.mxu0 0.0
    %1505 = vmatpush.xpose.msra.mxu0 %v1488
    %1506 = vmatmul.f32.gmra.mxu0 %v1486
    %v1507 = vpop.f32.mrf.mxu0
    %v1508 = vadd.f32 0.0, %v1507
    %1509 = vdwg.mxu0
    %v1510 = vmul.f32 %v1508, 0.17677669
    %v1511 = vsel %vm1152, %v1510, -inf
    %1512 = vmax.xlane.f32.xlu0 %v1511
    %v1513 = vpop.xlane.xlu0 %1512
    %v1514 = vsub.f32 %v1510, %v1513
    %v1515 = vmul.f32 %v1514, 1.442695
    %v1516 = vpow.pop %v1515
    %v1517 = vsel %vm1152, %v1516, 0.0
    %1518 = vadd.xlane.f32.xlu0 %v1517
    %v1519 = vpop.xlane.xlu0 %1518
    %v1520 = vrcp.pop %v1519
    %v1521 = vmul.f32 %v1516, %v1520
    %1522 = vrot.lane.b32.xlu0 %v1122, 112
    %v1523 = vpop.permute.xlu0 %1522
    %v1525 = vsel %vm1167, %v1521, 0
    %v1527 = vsel %vm1171, %v1523, 0
    %1529 = vmatpush.msra.mxu0 0.0
    %1530 = vmatpush.msra.mxu0 0.0
    %1531 = vmatpush.msra.mxu0 0.0
    %1532 = vmatpush.msra.mxu0 0.0
    %1533 = vmatpush.msra.mxu0 0.0
    %1534 = vmatpush.msra.mxu0 0.0
    %1535 = vmatpush.msra.mxu0 0.0
    %1536 = vmatpush.msra.mxu0 0.0
    %1537 = vmatpush.msra.mxu0 0.0
    %1538 = vmatpush.msra.mxu0 0.0
    %1539 = vmatpush.msra.mxu0 0.0
    %1540 = vmatpush.msra.mxu0 0.0
    %1541 = vmatpush.msra.mxu0 0.0
    %1542 = vmatpush.msra.mxu0 0.0
    %1543 = vmatpush.msra.mxu0 0.0
    %1544 = vmatpush.msra.mxu0 %v1527
    %1545 = vmatmul.f32.gmra.mxu0 %v1525
    %v1546 = vpop.f32.mrf.mxu0
    %v1547 = vadd.f32 0.0, %v1546
    %1548 = vdwg.mxu0
    %1550 = vrot.lane.b32.xlu0 %v1547, 80
    %v1551 = vpop.permute.xlu0 %1550
    %v1553 = vadd.f32 %v1035, %v1551
    %1554 = vrot.lane.b32.xlu0 %v1035, 32
    %v1555 = vpop.permute.xlu0 %1554
    %1556 = vrot.lane.b32.xlu0 %v1082, 32
    %v1557 = vpop.permute.xlu0 %1556
    %v1558 = vsel %vm1124, %v1555, 0
    %v1560 = vsel %vm1124, %v1557, 0
    %1562 = vmatpush.xpose.msra.mxu0 0.0
    %1563 = vmatpush.xpose.msra.mxu0 0.0
    %1564 = vmatpush.xpose.msra.mxu0 0.0
    %1565 = vmatpush.xpose.msra.mxu0 0.0
    %1566 = vmatpush.xpose.msra.mxu0 0.0
    %1567 = vmatpush.xpose.msra.mxu0 0.0
    %1568 = vmatpush.xpose.msra.mxu0 0.0
    %1569 = vmatpush.xpose.msra.mxu0 0.0
    %1570 = vmatpush.xpose.msra.mxu0 0.0
    %1571 = vmatpush.xpose.msra.mxu0 0.0
    %1572 = vmatpush.xpose.msra.mxu0 0.0
    %1573 = vmatpush.xpose.msra.mxu0 0.0
    %1574 = vmatpush.xpose.msra.mxu0 0.0
    %1575 = vmatpush.xpose.msra.mxu0 0.0
    %1576 = vmatpush.xpose.msra.mxu0 0.0
    %1577 = vmatpush.xpose.msra.mxu0 %v1560
    %1578 = vmatmul.f32.gmra.mxu0 %v1558
    %v1579 = vpop.f32.mrf.mxu0
    %v1580 = vadd.f32 0.0, %v1579
    %1581 = vdwg.mxu0
    %v1582 = vmul.f32 %v1580, 0.17677669
    %v1583 = vsel %vm1152, %v1582, -inf
    %1584 = vmax.xlane.f32.xlu0 %v1583
    %v1585 = vpop.xlane.xlu0 %1584
    %v1586 = vsub.f32 %v1582, %v1585
    %v1587 = vmul.f32 %v1586, 1.442695
    %v1588 = vpow.pop %v1587
    %v1589 = vsel %vm1152, %v1588, 0.0
    %1590 = vadd.xlane.f32.xlu0 %v1589
    %v1591 = vpop.xlane.xlu0 %1590
    %v1592 = vrcp.pop %v1591
    %v1593 = vmul.f32 %v1588, %v1592
    %1594 = vrot.lane.b32.xlu0 %v1122, 96
    %v1595 = vpop.permute.xlu0 %1594
    %v1597 = vsel %vm1167, %v1593, 0
    %v1599 = vsel %vm1171, %v1595, 0
    %1601 = vmatpush.msra.mxu0 0.0
    %1602 = vmatpush.msra.mxu0 0.0
    %1603 = vmatpush.msra.mxu0 0.0
    %1604 = vmatpush.msra.mxu0 0.0
    %1605 = vmatpush.msra.mxu0 0.0
    %1606 = vmatpush.msra.mxu0 0.0
    %1607 = vmatpush.msra.mxu0 0.0
    %1608 = vmatpush.msra.mxu0 0.0
    %1609 = vmatpush.msra.mxu0 0.0
    %1610 = vmatpush.msra.mxu0 0.0
    %1611 = vmatpush.msra.mxu0 0.0
    %1612 = vmatpush.msra.mxu0 0.0
    %1613 = vmatpush.msra.mxu0 0.0
    %1614 = vmatpush.msra.mxu0 0.0
    %1615 = vmatpush.msra.mxu0 0.0
    %1616 = vmatpush.msra.mxu0 %v1599
    %1617 = vmatmul.f32.gmra.mxu0 %v1597
    %v1618 = vpop.f32.mrf.mxu0
    %v1619 = vadd.f32 0.0, %v1618
    %1620 = vdwg.mxu0
    %1622 = vrot.lane.b32.xlu0 %v1619, 96
    %v1623 = vpop.permute.xlu0 %1622
    %v1625 = vadd.f32 %v1035, %v1623
    %1626 = vrot.lane.b32.xlu0 %v1035, 16
    %v1627 = vpop.permute.xlu0 %1626
    %1628 = vrot.lane.b32.xlu0 %v1082, 16
    %v1629 = vpop.permute.xlu0 %1628
    %v1630 = vsel %vm1124, %v1627, 0
    %v1632 = vsel %vm1124, %v1629, 0
    %1634 = vmatpush.xpose.msra.mxu0 0.0
    %1635 = vmatpush.xpose.msra.mxu0 0.0
    %1636 = vmatpush.xpose.msra.mxu0 0.0
    %1637 = vmatpush.xpose.msra.mxu0 0.0
    %1638 = vmatpush.xpose.msra.mxu0 0.0
    %1639 = vmatpush.xpose.msra.mxu0 0.0
    %1640 = vmatpush.xpose.msra.mxu0 0.0
    %1641 = vmatpush.xpose.msra.mxu0 0.0
    %1642 = vmatpush.xpose.msra.mxu0 0.0
    %1643 = vmatpush.xpose.msra.mxu0 0.0
    %1644 = vmatpush.xpose.msra.mxu0 0.0
    %1645 = vmatpush.xpose.msra.mxu0 0.0
    %1646 = vmatpush.xpose.msra.mxu0 0.0
    %1647 = vmatpush.xpose.msra.mxu0 0.0
    %1648 = vmatpush.xpose.msra.mxu0 0.0
    %1649 = vmatpush.xpose.msra.mxu0 %v1632
    %1650 = vmatmul.f32.gmra.mxu0 %v1630
    %v1651 = vpop.f32.mrf.mxu0
    %v1652 = vadd.f32 0.0, %v1651
    %1653 = vdwg.mxu0
    %v1654 = vmul.f32 %v1652, 0.17677669
    %v1655 = vsel %vm1152, %v1654, -inf
    %1656 = vmax.xlane.f32.xlu0 %v1655
    %v1657 = vpop.xlane.xlu0 %1656
    %v1658 = vsub.f32 %v1654, %v1657
    %v1659 = vmul.f32 %v1658, 1.442695
    %v1660 = vpow.pop %v1659
    %v1661 = vsel %vm1152, %v1660, 0.0
    %1662 = vadd.xlane.f32.xlu0 %v1661
    %v1663 = vpop.xlane.xlu0 %1662
    %v1664 = vrcp.pop %v1663
    %v1665 = vmul.f32 %v1660, %v1664
    %1666 = vrot.lane.b32.xlu0 %v1122, 80
    %v1667 = vpop.permute.xlu0 %1666
    %v1669 = vsel %vm1167, %v1665, 0
    %v1671 = vsel %vm1171, %v1667, 0
    %1673 = vmatpush.msra.mxu0 0.0
    %1674 = vmatpush.msra.mxu0 0.0
    %1675 = vmatpush.msra.mxu0 0.0
    %1676 = vmatpush.msra.mxu0 0.0
    %1677 = vmatpush.msra.mxu0 0.0
    %1678 = vmatpush.msra.mxu0 0.0
    %1679 = vmatpush.msra.mxu0 0.0
    %1680 = vmatpush.msra.mxu0 0.0
    %1681 = vmatpush.msra.mxu0 0.0
    %1682 = vmatpush.msra.mxu0 0.0
    %1683 = vmatpush.msra.mxu0 0.0
    %1684 = vmatpush.msra.mxu0 0.0
    %1685 = vmatpush.msra.mxu0 0.0
    %1686 = vmatpush.msra.mxu0 0.0
    %1687 = vmatpush.msra.mxu0 0.0
    %1688 = vmatpush.msra.mxu0 %v1671
    %1689 = vmatmul.f32.gmra.mxu0 %v1669
    %v1690 = vpop.f32.mrf.mxu0
    %v1691 = vadd.f32 0.0, %v1690
    %1692 = vdwg.mxu0
    %1694 = vrot.lane.b32.xlu0 %v1691, 112
    %v1695 = vpop.permute.xlu0 %1694
    %v1697 = vadd.f32 %v1035, %v1695
    %v1699 = vsel %vm1124, %v1055, 0
    %v1701 = vsel %vm1124, %v1102, 0
    %1703 = vmatpush.xpose.msra.mxu0 0.0
    %1704 = vmatpush.xpose.msra.mxu0 0.0
    %1705 = vmatpush.xpose.msra.mxu0 0.0
    %1706 = vmatpush.xpose.msra.mxu0 0.0
    %1707 = vmatpush.xpose.msra.mxu0 0.0
    %1708 = vmatpush.xpose.msra.mxu0 0.0
    %1709 = vmatpush.xpose.msra.mxu0 0.0
    %1710 = vmatpush.xpose.msra.mxu0 0.0
    %1711 = vmatpush.xpose.msra.mxu0 0.0
    %1712 = vmatpush.xpose.msra.mxu0 0.0
    %1713 = vmatpush.xpose.msra.mxu0 0.0
    %1714 = vmatpush.xpose.msra.mxu0 0.0
    %1715 = vmatpush.xpose.msra.mxu0 0.0
    %1716 = vmatpush.xpose.msra.mxu0 0.0
    %1717 = vmatpush.xpose.msra.mxu0 0.0
    %1718 = vmatpush.xpose.msra.mxu0 %v1701
    %1719 = vmatmul.f32.gmra.mxu0 %v1699
    %v1720 = vpop.f32.mrf.mxu0
    %v1721 = vadd.f32 0.0, %v1720
    %1722 = vdwg.mxu0
    %v1723 = vmul.f32 %v1721, 0.17677669
    %v1724 = vsel %vm1152, %v1723, -inf
    %1725 = vmax.xlane.f32.xlu0 %v1724
    %v1726 = vpop.xlane.xlu0 %1725
    %v1727 = vsub.f32 %v1723, %v1726
    %v1728 = vmul.f32 %v1727, 1.442695
    %v1729 = vpow.pop %v1728
    %v1730 = vsel %vm1152, %v1729, 0.0
    %1731 = vadd.xlane.f32.xlu0 %v1730
    %v1732 = vpop.xlane.xlu0 %1731
    %v1733 = vrcp.pop %v1732
    %v1734 = vmul.f32 %v1729, %v1733
    %1735 = vrot.lane.b32.xlu0 %v1122, 64
    %v1736 = vpop.permute.xlu0 %1735
    %v1738 = vsel %vm1167, %v1734, 0
    %v1740 = vsel %vm1171, %v1736, 0
    %1742 = vmatpush.msra.mxu0 0.0
    %1743 = vmatpush.msra.mxu0 0.0
    %1744 = vmatpush.msra.mxu0 0.0
    %1745 = vmatpush.msra.mxu0 0.0
    %1746 = vmatpush.msra.mxu0 0.0
    %1747 = vmatpush.msra.mxu0 0.0
    %1748 = vmatpush.msra.mxu0 0.0
    %1749 = vmatpush.msra.mxu0 0.0
    %1750 = vmatpush.msra.mxu0 0.0
    %1751 = vmatpush.msra.mxu0 0.0
    %1752 = vmatpush.msra.mxu0 0.0
    %1753 = vmatpush.msra.mxu0 0.0
    %1754 = vmatpush.msra.mxu0 0.0
    %1755 = vmatpush.msra.mxu0 0.0
    %1756 = vmatpush.msra.mxu0 0.0
    %1757 = vmatpush.msra.mxu0 %v1740
    %1758 = vmatmul.f32.gmra.mxu0 %v1738
    %v1759 = vpop.f32.mrf.mxu0
    %v1760 = vadd.f32 0.0, %v1759
    %1761 = vdwg.mxu0
    %v1762 = vadd.f32 %v1055, %v1760
    %1763 = vrot.lane.b32.xlu0 %v1055, 112
    %v1764 = vpop.permute.xlu0 %1763
    %1765 = vrot.lane.b32.xlu0 %v1102, 112
    %v1766 = vpop.permute.xlu0 %1765
    %v1767 = vsel %vm1124, %v1764, 0
    %v1769 = vsel %vm1124, %v1766, 0
    %1771 = vmatpush.xpose.msra.mxu0 0.0
    %1772 = vmatpush.xpose.msra.mxu0 0.0
    %1773 = vmatpush.xpose.msra.mxu0 0.0
    %1774 = vmatpush.xpose.msra.mxu0 0.0
    %1775 = vmatpush.xpose.msra.mxu0 0.0
    %1776 = vmatpush.xpose.msra.mxu0 0.0
    %1777 = vmatpush.xpose.msra.mxu0 0.0
    %1778 = vmatpush.xpose.msra.mxu0 0.0
    %1779 = vmatpush.xpose.msra.mxu0 0.0
    %1780 = vmatpush.xpose.msra.mxu0 0.0
    %1781 = vmatpush.xpose.msra.mxu0 0.0
    %1782 = vmatpush.xpose.msra.mxu0 0.0
    %1783 = vmatpush.xpose.msra.mxu0 0.0
    %1784 = vmatpush.xpose.msra.mxu0 0.0
    %1785 = vmatpush.xpose.msra.mxu0 0.0
    %1786 = vmatpush.xpose.msra.mxu0 %v1769
    %1787 = vmatmul.f32.gmra.mxu0 %v1767
    %v1788 = vpop.f32.mrf.mxu0
    %v1789 = vadd.f32 0.0, %v1788
    %1790 = vdwg.mxu0
    %v1791 = vmul.f32 %v1789, 0.17677669
    %v1792 = vsel %vm1152, %v1791, -inf
    %1793 = vmax.xlane.f32.xlu0 %v1792
    %v1794 = vpop.xlane.xlu0 %1793
    %v1795 = vsub.f32 %v1791, %v1794
    %v1796 = vmul.f32 %v1795, 1.442695
    %v1797 = vpow.pop %v1796
    %v1798 = vsel %vm1152, %v1797, 0.0
    %1799 = vadd.xlane.f32.xlu0 %v1798
    %v1800 = vpop.xlane.xlu0 %1799
    %v1801 = vrcp.pop %v1800
    %v1802 = vmul.f32 %v1797, %v1801
    %1803 = vrot.lane.b32.xlu0 %v1122, 48
    %v1804 = vpop.permute.xlu0 %1803
    %v1806 = vsel %vm1167, %v1802, 0
    %v1808 = vsel %vm1171, %v1804, 0
    %1810 = vmatpush.msra.mxu0 0.0
    %1811 = vmatpush.msra.mxu0 0.0
    %1812 = vmatpush.msra.mxu0 0.0
    %1813 = vmatpush.msra.mxu0 0.0
    %1814 = vmatpush.msra.mxu0 0.0
    %1815 = vmatpush.msra.mxu0 0.0
    %1816 = vmatpush.msra.mxu0 0.0
    %1817 = vmatpush.msra.mxu0 0.0
    %1818 = vmatpush.msra.mxu0 0.0
    %1819 = vmatpush.msra.mxu0 0.0
    %1820 = vmatpush.msra.mxu0 0.0
    %1821 = vmatpush.msra.mxu0 0.0
    %1822 = vmatpush.msra.mxu0 0.0
    %1823 = vmatpush.msra.mxu0 0.0
    %1824 = vmatpush.msra.mxu0 0.0
    %1825 = vmatpush.msra.mxu0 %v1808
    %1826 = vmatmul.f32.gmra.mxu0 %v1806
    %v1827 = vpop.f32.mrf.mxu0
    %v1828 = vadd.f32 0.0, %v1827
    %1829 = vdwg.mxu0
    %1831 = vrot.lane.b32.xlu0 %v1828, 16
    %v1832 = vpop.permute.xlu0 %1831
    %v1834 = vadd.f32 %v1055, %v1832
    %1835 = vrot.lane.b32.xlu0 %v1055, 96
    %v1836 = vpop.permute.xlu0 %1835
    %1837 = vrot.lane.b32.xlu0 %v1102, 96
    %v1838 = vpop.permute.xlu0 %1837
    %v1839 = vsel %vm1124, %v1836, 0
    %v1841 = vsel %vm1124, %v1838, 0
    %1843 = vmatpush.xpose.msra.mxu0 0.0
    %1844 = vmatpush.xpose.msra.mxu0 0.0
    %1845 = vmatpush.xpose.msra.mxu0 0.0
    %1846 = vmatpush.xpose.msra.mxu0 0.0
    %1847 = vmatpush.xpose.msra.mxu0 0.0
    %1848 = vmatpush.xpose.msra.mxu0 0.0
    %1849 = vmatpush.xpose.msra.mxu0 0.0
    %1850 = vmatpush.xpose.msra.mxu0 0.0
    %1851 = vmatpush.xpose.msra.mxu0 0.0
    %1852 = vmatpush.xpose.msra.mxu0 0.0
    %1853 = vmatpush.xpose.msra.mxu0 0.0
    %1854 = vmatpush.xpose.msra.mxu0 0.0
    %1855 = vmatpush.xpose.msra.mxu0 0.0
    %1856 = vmatpush.xpose.msra.mxu0 0.0
    %1857 = vmatpush.xpose.msra.mxu0 0.0
    %1858 = vmatpush.xpose.msra.mxu0 %v1841
    %1859 = vmatmul.f32.gmra.mxu0 %v1839
    %v1860 = vpop.f32.mrf.mxu0
    %v1861 = vadd.f32 0.0, %v1860
    %1862 = vdwg.mxu0
    %v1863 = vmul.f32 %v1861, 0.17677669
    %v1864 = vsel %vm1152, %v1863, -inf
    %1865 = vmax.xlane.f32.xlu0 %v1864
    %v1866 = vpop.xlane.xlu0 %1865
    %v1867 = vsub.f32 %v1863, %v1866
    %v1868 = vmul.f32 %v1867, 1.442695
    %v1869 = vpow.pop %v1868
    %v1870 = vsel %vm1152, %v1869, 0.0
    %1871 = vadd.xlane.f32.xlu0 %v1870
    %v1872 = vpop.xlane.xlu0 %1871
    %v1873 = vrcp.pop %v1872
    %v1874 = vmul.f32 %v1869, %v1873
    %1875 = vrot.lane.b32.xlu0 %v1122, 32
    %v1876 = vpop.permute.xlu0 %1875
    %v1878 = vsel %vm1167, %v1874, 0
    %v1880 = vsel %vm1171, %v1876, 0
    %1882 = vmatpush.msra.mxu0 0.0
    %1883 = vmatpush.msra.mxu0 0.0
    %1884 = vmatpush.msra.mxu0 0.0
    %1885 = vmatpush.msra.mxu0 0.0
    %1886 = vmatpush.msra.mxu0 0.0
    %1887 = vmatpush.msra.mxu0 0.0
    %1888 = vmatpush.msra.mxu0 0.0
    %1889 = vmatpush.msra.mxu0 0.0
    %1890 = vmatpush.msra.mxu0 0.0
    %1891 = vmatpush.msra.mxu0 0.0
    %1892 = vmatpush.msra.mxu0 0.0
    %1893 = vmatpush.msra.mxu0 0.0
    %1894 = vmatpush.msra.mxu0 0.0
    %1895 = vmatpush.msra.mxu0 0.0
    %1896 = vmatpush.msra.mxu0 0.0
    %1897 = vmatpush.msra.mxu0 %v1880
    %1898 = vmatmul.f32.gmra.mxu0 %v1878
    %v1899 = vpop.f32.mrf.mxu0
    %v1900 = vadd.f32 0.0, %v1899
    %1901 = vdwg.mxu0
    %1903 = vrot.lane.b32.xlu0 %v1900, 32
    %v1904 = vpop.permute.xlu0 %1903
    %v1906 = vadd.f32 %v1055, %v1904
    %1907 = vrot.lane.b32.xlu0 %v1055, 80
    %v1908 = vpop.permute.xlu0 %1907
    %1909 = vrot.lane.b32.xlu0 %v1102, 80
    %v1910 = vpop.permute.xlu0 %1909
    %v1911 = vsel %vm1124, %v1908, 0
    %v1913 = vsel %vm1124, %v1910, 0
    %1915 = vmatpush.xpose.msra.mxu0 0.0
    %1916 = vmatpush.xpose.msra.mxu0 0.0
    %1917 = vmatpush.xpose.msra.mxu0 0.0
    %1918 = vmatpush.xpose.msra.mxu0 0.0
    %1919 = vmatpush.xpose.msra.mxu0 0.0
    %1920 = vmatpush.xpose.msra.mxu0 0.0
    %1921 = vmatpush.xpose.msra.mxu0 0.0
    %1922 = vmatpush.xpose.msra.mxu0 0.0
    %1923 = vmatpush.xpose.msra.mxu0 0.0
    %1924 = vmatpush.xpose.msra.mxu0 0.0
    %1925 = vmatpush.xpose.msra.mxu0 0.0
    %1926 = vmatpush.xpose.msra.mxu0 0.0
    %1927 = vmatpush.xpose.msra.mxu0 0.0
    %1928 = vmatpush.xpose.msra.mxu0 0.0
    %1929 = vmatpush.xpose.msra.mxu0 0.0
    %1930 = vmatpush.xpose.msra.mxu0 %v1913
    %1931 = vmatmul.f32.gmra.mxu0 %v1911
    %v1932 = vpop.f32.mrf.mxu0
    %v1933 = vadd.f32 0.0, %v1932
    %1934 = vdwg.mxu0
    %v1935 = vmul.f32 %v1933, 0.17677669
    %v1936 = vsel %vm1152, %v1935, -inf
    %1937 = vmax.xlane.f32.xlu0 %v1936
    %v1938 = vpop.xlane.xlu0 %1937
    %v1939 = vsub.f32 %v1935, %v1938
    %v1940 = vmul.f32 %v1939, 1.442695
    %v1941 = vpow.pop %v1940
    %v1942 = vsel %vm1152, %v1941, 0.0
    %1943 = vadd.xlane.f32.xlu0 %v1942
    %v1944 = vpop.xlane.xlu0 %1943
    %v1945 = vrcp.pop %v1944
    %v1946 = vmul.f32 %v1941, %v1945
    %1947 = vrot.lane.b32.xlu0 %v1122, 16
    %v1948 = vpop.permute.xlu0 %1947
    %v1950 = vsel %vm1167, %v1946, 0
    %v1952 = vsel %vm1171, %v1948, 0
    %1954 = vmatpush.msra.mxu0 0.0
    %1955 = vmatpush.msra.mxu0 0.0
    %1956 = vmatpush.msra.mxu0 0.0
    %1957 = vmatpush.msra.mxu0 0.0
    %1958 = vmatpush.msra.mxu0 0.0
    %1959 = vmatpush.msra.mxu0 0.0
    %1960 = vmatpush.msra.mxu0 0.0
    %1961 = vmatpush.msra.mxu0 0.0
    %1962 = vmatpush.msra.mxu0 0.0
    %1963 = vmatpush.msra.mxu0 0.0
    %1964 = vmatpush.msra.mxu0 0.0
    %1965 = vmatpush.msra.mxu0 0.0
    %1966 = vmatpush.msra.mxu0 0.0
    %1967 = vmatpush.msra.mxu0 0.0
    %1968 = vmatpush.msra.mxu0 0.0
    %1969 = vmatpush.msra.mxu0 %v1952
    %1970 = vmatmul.f32.gmra.mxu0 %v1950
    %v1971 = vpop.f32.mrf.mxu0
    %v1972 = vadd.f32 0.0, %v1971
    %1973 = vdwg.mxu0
    %1975 = vrot.lane.b32.xlu0 %v1972, 48
    %v1976 = vpop.permute.xlu0 %1975
    %v1978 = vadd.f32 %v1055, %v1976
    %v1979 = vsel %vm1124, %v1194, %v1266
    %v1980 = vsel %vm391, %v1979, %v1338
    %vm1981 = vcmask 392192
    %v1982 = vsel %vm1981, %v1980, %v1410
    %v1983 = vsel %vm828, %v1982, %v1481
    %vm1984 = vcmask 654336
    %v1985 = vsel %vm1984, %v1983, %v1553
    %v1986 = vsel %vm830, %v1985, %v1625
    %vm1987 = vcmask 916480
    %v1988 = vsel %vm1987, %v1986, %v1697
    %v1989 = vsel %vm1124, %v1762, %v1834
    %v1990 = vsel %vm391, %v1989, %v1906
    %v1991 = vsel %vm1981, %v1990, %v1978
    %v1993 = vsel %vm828, %v1991, 0
    %1995 = vmatpush.msra.mxu0 %v862
    %1996 = vmatpush.msra.mxu0 %v860
    %1997 = vmatpush.msra.mxu0 %v858
    %1998 = vmatpush.msra.mxu0 %v856
    %1999 = vmatpush.msra.mxu0 %v854
    %2000 = vmatpush.msra.mxu0 %v852
    %2001 = vmatpush.msra.mxu0 %v850
    %2002 = vmatpush.msra.mxu0 %v848
    %2003 = vmatpush.msra.mxu0 %v846
    %2004 = vmatpush.msra.mxu0 %v844
    %2005 = vmatpush.msra.mxu0 %v842
    %2006 = vmatpush.msra.mxu0 %v840
    %2007 = vmatpush.msra.mxu0 %v838
    %2008 = vmatpush.msra.mxu0 %v836
    %2009 = vmatpush.msra.mxu0 %v834
    %2010 = vmatpush.msra.mxu0 %v832
    %2011 = vmatmul.f32.gmra.mxu0 %v1988
    %v2012 = vpop.f32.mrf.mxu0
    %v2013 = vadd.f32 0.0, %v2012
    %2014 = vdwg.mxu0
    %2015 = vmatpush.msra.mxu0 0.0
    %2016 = vmatpush.msra.mxu0 0.0
    %2017 = vmatpush.msra.mxu0 0.0
    %2018 = vmatpush.msra.mxu0 0.0
    %2019 = vmatpush.msra.mxu0 0.0
    %2020 = vmatpush.msra.mxu0 0.0
    %2021 = vmatpush.msra.mxu0 0.0
    %2022 = vmatpush.msra.mxu0 0.0
    %2023 = vmatpush.msra.mxu0 %v878
    %2024 = vmatpush.msra.mxu0 %v876
    %2025 = vmatpush.msra.mxu0 %v874
    %2026 = vmatpush.msra.mxu0 %v872
    %2027 = vmatpush.msra.mxu0 %v870
    %2028 = vmatpush.msra.mxu0 %v868
    %2029 = vmatpush.msra.mxu0 %v866
    %2030 = vmatpush.msra.mxu0 %v864
    %2031 = vmatmul.f32.gmra.mxu0 %v1993
    %v2032 = vpop.f32.mrf.mxu0
    %v2033 = vadd.f32 %v2013, %v2032
    %2034 = vdwg.mxu0
    %2035 = vmatpush.msra.mxu0 %v863
    %2036 = vmatpush.msra.mxu0 %v861
    %2037 = vmatpush.msra.mxu0 %v859
    %2038 = vmatpush.msra.mxu0 %v857
    %2039 = vmatpush.msra.mxu0 %v855
    %2040 = vmatpush.msra.mxu0 %v853
    %2041 = vmatpush.msra.mxu0 %v851
    %2042 = vmatpush.msra.mxu0 %v849
    %2043 = vmatpush.msra.mxu0 %v847
    %2044 = vmatpush.msra.mxu0 %v845
    %2045 = vmatpush.msra.mxu0 %v843
    %2046 = vmatpush.msra.mxu0 %v841
    %2047 = vmatpush.msra.mxu0 %v839
    %2048 = vmatpush.msra.mxu0 %v837
    %2049 = vmatpush.msra.mxu0 %v835
    %2050 = vmatpush.msra.mxu0 %v833
    %2051 = vmatmul.f32.gmra.mxu0 %v1988
    %v2052 = vpop.f32.mrf.mxu0
    %v2053 = vadd.f32 0.0, %v2052
    %2054 = vdwg.mxu0
    %2055 = vmatpush.msra.mxu0 0.0
    %2056 = vmatpush.msra.mxu0 0.0
    %2057 = vmatpush.msra.mxu0 0.0
    %2058 = vmatpush.msra.mxu0 0.0
    %2059 = vmatpush.msra.mxu0 0.0
    %2060 = vmatpush.msra.mxu0 0.0
    %2061 = vmatpush.msra.mxu0 0.0
    %2062 = vmatpush.msra.mxu0 0.0
    %2063 = vmatpush.msra.mxu0 %v879
    %2064 = vmatpush.msra.mxu0 %v877
    %2065 = vmatpush.msra.mxu0 %v875
    %2066 = vmatpush.msra.mxu0 %v873
    %2067 = vmatpush.msra.mxu0 %v871
    %2068 = vmatpush.msra.mxu0 %v869
    %2069 = vmatpush.msra.mxu0 %v867
    %2070 = vmatpush.msra.mxu0 %v865
    %2071 = vmatmul.f32.gmra.mxu0 %v1993
    %v2072 = vpop.f32.mrf.mxu0
    %v2073 = vadd.f32 %v2053, %v2072
    %2074 = vdwg.mxu0
    %v2075 = vsub.f32 %v1988, %v2033
    %v2076 = vsub.f32 %v1991, %v2073
    %v2077 = vmul.f32 %v2075, %v2075
    %v2078 = vmul.f32 %v2076, %v2076
    %v2080 = vsel %vm828, %v2078, 0
    %2082 = vmatpush.msra.mxu0 %v862
    %2083 = vmatpush.msra.mxu0 %v860
    %2084 = vmatpush.msra.mxu0 %v858
    %2085 = vmatpush.msra.mxu0 %v856
    %2086 = vmatpush.msra.mxu0 %v854
    %2087 = vmatpush.msra.mxu0 %v852
    %2088 = vmatpush.msra.mxu0 %v850
    %2089 = vmatpush.msra.mxu0 %v848
    %2090 = vmatpush.msra.mxu0 %v846
    %2091 = vmatpush.msra.mxu0 %v844
    %2092 = vmatpush.msra.mxu0 %v842
    %2093 = vmatpush.msra.mxu0 %v840
    %2094 = vmatpush.msra.mxu0 %v838
    %2095 = vmatpush.msra.mxu0 %v836
    %2096 = vmatpush.msra.mxu0 %v834
    %2097 = vmatpush.msra.mxu0 %v832
    %2098 = vmatmul.f32.gmra.mxu0 %v2077
    %v2099 = vpop.f32.mrf.mxu0
    %v2100 = vadd.f32 1e-05, %v2099
    %2101 = vdwg.mxu0
    %2102 = vmatpush.msra.mxu0 0.0
    %2103 = vmatpush.msra.mxu0 0.0
    %2104 = vmatpush.msra.mxu0 0.0
    %2105 = vmatpush.msra.mxu0 0.0
    %2106 = vmatpush.msra.mxu0 0.0
    %2107 = vmatpush.msra.mxu0 0.0
    %2108 = vmatpush.msra.mxu0 0.0
    %2109 = vmatpush.msra.mxu0 0.0
    %2110 = vmatpush.msra.mxu0 %v878
    %2111 = vmatpush.msra.mxu0 %v876
    %2112 = vmatpush.msra.mxu0 %v874
    %2113 = vmatpush.msra.mxu0 %v872
    %2114 = vmatpush.msra.mxu0 %v870
    %2115 = vmatpush.msra.mxu0 %v868
    %2116 = vmatpush.msra.mxu0 %v866
    %2117 = vmatpush.msra.mxu0 %v864
    %2118 = vmatmul.f32.gmra.mxu0 %v2080
    %v2119 = vpop.f32.mrf.mxu0
    %v2120 = vadd.f32 %v2100, %v2119
    %2121 = vdwg.mxu0
    %2122 = vmatpush.msra.mxu0 %v863
    %2123 = vmatpush.msra.mxu0 %v861
    %2124 = vmatpush.msra.mxu0 %v859
    %2125 = vmatpush.msra.mxu0 %v857
    %2126 = vmatpush.msra.mxu0 %v855
    %2127 = vmatpush.msra.mxu0 %v853
    %2128 = vmatpush.msra.mxu0 %v851
    %2129 = vmatpush.msra.mxu0 %v849
    %2130 = vmatpush.msra.mxu0 %v847
    %2131 = vmatpush.msra.mxu0 %v845
    %2132 = vmatpush.msra.mxu0 %v843
    %2133 = vmatpush.msra.mxu0 %v841
    %2134 = vmatpush.msra.mxu0 %v839
    %2135 = vmatpush.msra.mxu0 %v837
    %2136 = vmatpush.msra.mxu0 %v835
    %2137 = vmatpush.msra.mxu0 %v833
    %2138 = vmatmul.f32.gmra.mxu0 %v2077
    %v2139 = vpop.f32.mrf.mxu0
    %v2140 = vadd.f32 1e-05, %v2139
    %2141 = vdwg.mxu0
    %2142 = vmatpush.msra.mxu0 0.0
    %2143 = vmatpush.msra.mxu0 0.0
    %2144 = vmatpush.msra.mxu0 0.0
    %2145 = vmatpush.msra.mxu0 0.0
    %2146 = vmatpush.msra.mxu0 0.0
    %2147 = vmatpush.msra.mxu0 0.0
    %2148 = vmatpush.msra.mxu0 0.0
    %2149 = vmatpush.msra.mxu0 0.0
    %2150 = vmatpush.msra.mxu0 %v879
    %2151 = vmatpush.msra.mxu0 %v877
    %2152 = vmatpush.msra.mxu0 %v875
    %2153 = vmatpush.msra.mxu0 %v873
    %2154 = vmatpush.msra.mxu0 %v871
    %2155 = vmatpush.msra.mxu0 %v869
    %2156 = vmatpush.msra.mxu0 %v867
    %2157 = vmatpush.msra.mxu0 %v865
    %2158 = vmatmul.f32.gmra.mxu0 %v2080
    %v2159 = vpop.f32.mrf.mxu0
    %v2160 = vadd.f32 %v2140, %v2159
    %2161 = vdwg.mxu0
    %v2162 = vrsqrt.pop %v2120
    %v2163 = vmul.f32 %v2162, %v2120
    %v2164 = vmul.f32 %v2163, %v2162
    %v2165 = vmul.f32 0.5, %v2164
    %v2166 = vsub.f32 1.5, %v2165
    %v2167 = vmul.f32 %v2162, %v2166
    %vm2168 = vweird.f32 %v2120
    %vm2169 = vweird.f32 %v2162
    %vm2170 = vmor %vm2168, %vm2169
    %v2171 = vsel %vm2170, %v2162, %v2167
    %v2172 = vrsqrt.pop %v2160
    %v2173 = vmul.f32 %v2172, %v2160
    %v2174 = vmul.f32 %v2173, %v2172
    %v2175 = vmul.f32 0.5, %v2174
    %v2176 = vsub.f32 1.5, %v2175
    %v2177 = vmul.f32 %v2172, %v2176
    %vm2178 = vweird.f32 %v2160
    %vm2179 = vweird.f32 %v2172
    %vm2180 = vmor %vm2178, %vm2179
    %v2181 = vsel %vm2180, %v2172, %v2177
    %v2182 = vmul.f32 %v2075, %v2171
    %v2183 = vmul.f32 %v2076, %v2181
    %v2185 = vperm.slane %v1011, 0
    %v2186 = vperm.slane %v1011, 4
    %v2189 = vperm.slane %v2185, 0
    %v2190 = vperm.slane %v2186, 0
    %v2191 = vmul.f32 %v2182, %v2189
    %v2192 = vmul.f32 %v2183, %v2190
    %v2193 = vperm.slane %v1011, 1
    %v2194 = vperm.slane %v1011, 5
    %v2197 = vperm.slane %v2193, 1
    %v2198 = vperm.slane %v2194, 1
    %v2199 = vadd.f32 %v2191, %v2197
    %v2200 = vadd.f32 %v2192, %v2198
    %v2202 = vperm.slane %v1010, 0
    %v2203 = vperm.slane %v1010, 1
    %v2207 = vsel %vm828, %v2200, 0
    %2209 = vmatpush.msra.mxu0 %v992
    %2210 = vmatpush.msra.mxu0 %v990
    %2211 = vmatpush.msra.mxu0 %v988
    %2212 = vmatpush.msra.mxu0 %v986
    %2213 = vmatpush.msra.mxu0 %v984
    %2214 = vmatpush.msra.mxu0 %v982
    %2215 = vmatpush.msra.mxu0 %v980
    %2216 = vmatpush.msra.mxu0 %v978
    %2217 = vmatpush.msra.mxu0 %v976
    %2218 = vmatpush.msra.mxu0 %v974
    %2219 = vmatpush.msra.mxu0 %v972
    %2220 = vmatpush.msra.mxu0 %v970
    %2221 = vmatpush.msra.mxu0 %v968
    %2222 = vmatpush.msra.mxu0 %v966
    %2223 = vmatpush.msra.mxu0 %v964
    %2224 = vmatpush.msra.mxu0 %v962
    %2225 = vmatmul.f32.gmra.mxu0 %v2199
    %v2226 = vpop.f32.mrf.mxu0
    %v2227 = vadd.f32 %v2202, %v2226
    %2228 = vdwg.mxu0
    %2229 = vmatpush.msra.mxu0 0.0
    %2230 = vmatpush.msra.mxu0 0.0
    %2231 = vmatpush.msra.mxu0 0.0
    %2232 = vmatpush.msra.mxu0 0.0
    %2233 = vmatpush.msra.mxu0 0.0
    %2234 = vmatpush.msra.mxu0 0.0
    %2235 = vmatpush.msra.mxu0 0.0
    %2236 = vmatpush.msra.mxu0 0.0
    %2237 = vmatpush.msra.mxu0 %v1008
    %2238 = vmatpush.msra.mxu0 %v1006
    %2239 = vmatpush.msra.mxu0 %v1004
    %2240 = vmatpush.msra.mxu0 %v1002
    %2241 = vmatpush.msra.mxu0 %v1000
    %2242 = vmatpush.msra.mxu0 %v998
    %2243 = vmatpush.msra.mxu0 %v996
    %2244 = vmatpush.msra.mxu0 %v994
    %2245 = vmatmul.f32.gmra.mxu0 %v2207
    %v2246 = vpop.f32.mrf.mxu0
    %v2247 = vadd.f32 %v2227, %v2246
    %2248 = vdwg.mxu0
    %2249 = vmatpush.msra.mxu0 %v993
    %2250 = vmatpush.msra.mxu0 %v991
    %2251 = vmatpush.msra.mxu0 %v989
    %2252 = vmatpush.msra.mxu0 %v987
    %2253 = vmatpush.msra.mxu0 %v985
    %2254 = vmatpush.msra.mxu0 %v983
    %2255 = vmatpush.msra.mxu0 %v981
    %2256 = vmatpush.msra.mxu0 %v979
    %2257 = vmatpush.msra.mxu0 %v977
    %2258 = vmatpush.msra.mxu0 %v975
    %2259 = vmatpush.msra.mxu0 %v973
    %2260 = vmatpush.msra.mxu0 %v971
    %2261 = vmatpush.msra.mxu0 %v969
    %2262 = vmatpush.msra.mxu0 %v967
    %2263 = vmatpush.msra.mxu0 %v965
    %2264 = vmatpush.msra.mxu0 %v963
    %2265 = vmatmul.f32.gmra.mxu0 %v2199
    %v2266 = vpop.f32.mrf.mxu0
    %v2267 = vadd.f32 %v2203, %v2266
    %2268 = vdwg.mxu0
    %2269 = vmatpush.msra.mxu0 0.0
    %2270 = vmatpush.msra.mxu0 0.0
    %2271 = vmatpush.msra.mxu0 0.0
    %2272 = vmatpush.msra.mxu0 0.0
    %2273 = vmatpush.msra.mxu0 0.0
    %2274 = vmatpush.msra.mxu0 0.0
    %2275 = vmatpush.msra.mxu0 0.0
    %2276 = vmatpush.msra.mxu0 0.0
    %2277 = vmatpush.msra.mxu0 %v1009
    %2278 = vmatpush.msra.mxu0 %v1007
    %2279 = vmatpush.msra.mxu0 %v1005
    %2280 = vmatpush.msra.mxu0 %v1003
    %2281 = vmatpush.msra.mxu0 %v1001
    %2282 = vmatpush.msra.mxu0 %v999
    %2283 = vmatpush.msra.mxu0 %v997
    %2284 = vmatpush.msra.mxu0 %v995
    %2285 = vmatmul.f32.gmra.mxu0 %v2207
    %v2286 = vpop.f32.mrf.mxu0
    %v2287 = vadd.f32 %v2267, %v2286
    %2288 = vdwg.mxu0
    %v2289 = vmax.f32 %v2247, 0.0
    %v2290 = vmax.f32 %v2287, 0.0
    %v2291 = vadd.f32 %v2199, %v2289
    %v2292 = vadd.f32 %v2200, %v2290
    %v2294 = vsel %vm828, %v2292, 0
    %2296 = vmatpush.msra.mxu0 %v862
    %2297 = vmatpush.msra.mxu0 %v860
    %2298 = vmatpush.msra.mxu0 %v858
    %2299 = vmatpush.msra.mxu0 %v856
    %2300 = vmatpush.msra.mxu0 %v854
    %2301 = vmatpush.msra.mxu0 %v852
    %2302 = vmatpush.msra.mxu0 %v850
    %2303 = vmatpush.msra.mxu0 %v848
    %2304 = vmatpush.msra.mxu0 %v846
    %2305 = vmatpush.msra.mxu0 %v844
    %2306 = vmatpush.msra.mxu0 %v842
    %2307 = vmatpush.msra.mxu0 %v840
    %2308 = vmatpush.msra.mxu0 %v838
    %2309 = vmatpush.msra.mxu0 %v836
    %2310 = vmatpush.msra.mxu0 %v834
    %2311 = vmatpush.msra.mxu0 %v832
    %2312 = vmatmul.f32.gmra.mxu0 %v2291
    %v2313 = vpop.f32.mrf.mxu0
    %v2314 = vadd.f32 0.0, %v2313
    %2315 = vdwg.mxu0
    %2316 = vmatpush.msra.mxu0 0.0
    %2317 = vmatpush.msra.mxu0 0.0
    %2318 = vmatpush.msra.mxu0 0.0
    %2319 = vmatpush.msra.mxu0 0.0
    %2320 = vmatpush.msra.mxu0 0.0
    %2321 = vmatpush.msra.mxu0 0.0
    %2322 = vmatpush.msra.mxu0 0.0
    %2323 = vmatpush.msra.mxu0 0.0
    %2324 = vmatpush.msra.mxu0 %v878
    %2325 = vmatpush.msra.mxu0 %v876
    %2326 = vmatpush.msra.mxu0 %v874
    %2327 = vmatpush.msra.mxu0 %v872
    %2328 = vmatpush.msra.mxu0 %v870
    %2329 = vmatpush.msra.mxu0 %v868
    %2330 = vmatpush.msra.mxu0 %v866
    %2331 = vmatpush.msra.mxu0 %v864
    %2332 = vmatmul.f32.gmra.mxu0 %v2294
    %v2333 = vpop.f32.mrf.mxu0
    %v2334 = vadd.f32 %v2314, %v2333
    %2335 = vdwg.mxu0
    %2336 = vmatpush.msra.mxu0 %v863
    %2337 = vmatpush.msra.mxu0 %v861
    %2338 = vmatpush.msra.mxu0 %v859
    %2339 = vmatpush.msra.mxu0 %v857
    %2340 = vmatpush.msra.mxu0 %v855
    %2341 = vmatpush.msra.mxu0 %v853
    %2342 = vmatpush.msra.mxu0 %v851
    %2343 = vmatpush.msra.mxu0 %v849
    %2344 = vmatpush.msra.mxu0 %v847
    %2345 = vmatpush.msra.mxu0 %v845
    %2346 = vmatpush.msra.mxu0 %v843
    %2347 = vmatpush.msra.mxu0 %v841
    %2348 = vmatpush.msra.mxu0 %v839
    %2349 = vmatpush.msra.mxu0 %v837
    %2350 = vmatpush.msra.mxu0 %v835
    %2351 = vmatpush.msra.mxu0 %v833
    %2352 = vmatmul.f32.gmra.mxu0 %v2291
    %v2353 = vpop.f32.mrf.mxu0
    %v2354 = vadd.f32 0.0, %v2353
    %2355 = vdwg.mxu0
    %2356 = vmatpush.msra.mxu0 0.0
    %2357 = vmatpush.msra.mxu0 0.0
    %2358 = vmatpush.msra.mxu0 0.0
    %2359 = vmatpush.msra.mxu0 0.0
    %2360 = vmatpush.msra.mxu0 0.0
    %2361 = vmatpush.msra.mxu0 0.0
    %2362 = vmatpush.msra.mxu0 0.0
    %2363 = vmatpush.msra.mxu0 0.0
    %2364 = vmatpush.msra.mxu0 %v879
    %2365 = vmatpush.msra.mxu0 %v877
    %2366 = vmatpush.msra.mxu0 %v875
    %2367 = vmatpush.msra.mxu0 %v873
    %2368 = vmatpush.msra.mxu0 %v871
    %2369 = vmatpush.msra.mxu0 %v869
    %2370 = vmatpush.msra.mxu0 %v867
    %2371 = vmatpush.msra.mxu0 %v865
    %2372 = vmatmul.f32.gmra.mxu0 %v2294
    %v2373 = vpop.f32.mrf.mxu0
    %v2374 = vadd.f32 %v2354, %v2373
    %2375 = vdwg.mxu0
    %v2376 = vsub.f32 %v2291, %v2334
    %v2377 = vsub.f32 %v2292, %v2374
    %v2378 = vmul.f32 %v2376, %v2376
    %v2379 = vmul.f32 %v2377, %v2377
    %v2381 = vsel %vm828, %v2379, 0
    %2383 = vmatpush.msra.mxu0 %v862
    %2384 = vmatpush.msra.mxu0 %v860
    %2385 = vmatpush.msra.mxu0 %v858
    %2386 = vmatpush.msra.mxu0 %v856
    %2387 = vmatpush.msra.mxu0 %v854
    %2388 = vmatpush.msra.mxu0 %v852
    %2389 = vmatpush.msra.mxu0 %v850
    %2390 = vmatpush.msra.mxu0 %v848
    %2391 = vmatpush.msra.mxu0 %v846
    %2392 = vmatpush.msra.mxu0 %v844
    %2393 = vmatpush.msra.mxu0 %v842
    %2394 = vmatpush.msra.mxu0 %v840
    %2395 = vmatpush.msra.mxu0 %v838
    %2396 = vmatpush.msra.mxu0 %v836
    %2397 = vmatpush.msra.mxu0 %v834
    %2398 = vmatpush.msra.mxu0 %v832
    %2399 = vmatmul.f32.gmra.mxu0 %v2378
    %v2400 = vpop.f32.mrf.mxu0
    %v2401 = vadd.f32 1e-05, %v2400
    %2402 = vdwg.mxu0
    %2403 = vmatpush.msra.mxu0 0.0
    %2404 = vmatpush.msra.mxu0 0.0
    %2405 = vmatpush.msra.mxu0 0.0
    %2406 = vmatpush.msra.mxu0 0.0
    %2407 = vmatpush.msra.mxu0 0.0
    %2408 = vmatpush.msra.mxu0 0.0
    %2409 = vmatpush.msra.mxu0 0.0
    %2410 = vmatpush.msra.mxu0 0.0
    %2411 = vmatpush.msra.mxu0 %v878
    %2412 = vmatpush.msra.mxu0 %v876
    %2413 = vmatpush.msra.mxu0 %v874
    %2414 = vmatpush.msra.mxu0 %v872
    %2415 = vmatpush.msra.mxu0 %v870
    %2416 = vmatpush.msra.mxu0 %v868
    %2417 = vmatpush.msra.mxu0 %v866
    %2418 = vmatpush.msra.mxu0 %v864
    %2419 = vmatmul.f32.gmra.mxu0 %v2381
    %v2420 = vpop.f32.mrf.mxu0
    %v2421 = vadd.f32 %v2401, %v2420
    %2422 = vdwg.mxu0
    %2423 = vmatpush.msra.mxu0 %v863
    %2424 = vmatpush.msra.mxu0 %v861
    %2425 = vmatpush.msra.mxu0 %v859
    %2426 = vmatpush.msra.mxu0 %v857
    %2427 = vmatpush.msra.mxu0 %v855
    %2428 = vmatpush.msra.mxu0 %v853
    %2429 = vmatpush.msra.mxu0 %v851
    %2430 = vmatpush.msra.mxu0 %v849
    %2431 = vmatpush.msra.mxu0 %v847
    %2432 = vmatpush.msra.mxu0 %v845
    %2433 = vmatpush.msra.mxu0 %v843
    %2434 = vmatpush.msra.mxu0 %v841
    %2435 = vmatpush.msra.mxu0 %v839
    %2436 = vmatpush.msra.mxu0 %v837
    %2437 = vmatpush.msra.mxu0 %v835
    %2438 = vmatpush.msra.mxu0 %v833
    %2439 = vmatmul.f32.gmra.mxu0 %v2378
    %v2440 = vpop.f32.mrf.mxu0
    %v2441 = vadd.f32 1e-05, %v2440
    %2442 = vdwg.mxu0
    %2443 = vmatpush.msra.mxu0 0.0
    %2444 = vmatpush.msra.mxu0 0.0
    %2445 = vmatpush.msra.mxu0 0.0
    %2446 = vmatpush.msra.mxu0 0.0
    %2447 = vmatpush.msra.mxu0 0.0
    %2448 = vmatpush.msra.mxu0 0.0
    %2449 = vmatpush.msra.mxu0 0.0
    %2450 = vmatpush.msra.mxu0 0.0
    %2451 = vmatpush.msra.mxu0 %v879
    %2452 = vmatpush.msra.mxu0 %v877
    %2453 = vmatpush.msra.mxu0 %v875
    %2454 = vmatpush.msra.mxu0 %v873
    %2455 = vmatpush.msra.mxu0 %v871
    %2456 = vmatpush.msra.mxu0 %v869
    %2457 = vmatpush.msra.mxu0 %v867
    %2458 = vmatpush.msra.mxu0 %v865
    %2459 = vmatmul.f32.gmra.mxu0 %v2381
    %v2460 = vpop.f32.mrf.mxu0
    %v2461 = vadd.f32 %v2441, %v2460
    %2462 = vdwg.mxu0
    %v2463 = vrsqrt.pop %v2421
    %v2464 = vmul.f32 %v2463, %v2421
    %v2465 = vmul.f32 %v2464, %v2463
    %v2466 = vmul.f32 0.5, %v2465
    %v2467 = vsub.f32 1.5, %v2466
    %v2468 = vmul.f32 %v2463, %v2467
    %vm2469 = vweird.f32 %v2421
    %vm2470 = vweird.f32 %v2463
    %vm2471 = vmor %vm2469, %vm2470
    %v2472 = vsel %vm2471, %v2463, %v2468
    %v2473 = vrsqrt.pop %v2461
    %v2474 = vmul.f32 %v2473, %v2461
    %v2475 = vmul.f32 %v2474, %v2473
    %v2476 = vmul.f32 0.5, %v2475
    %v2477 = vsub.f32 1.5, %v2476
    %v2478 = vmul.f32 %v2473, %v2477
    %vm2479 = vweird.f32 %v2461
    %vm2480 = vweird.f32 %v2473
    %vm2481 = vmor %vm2479, %vm2480
    %v2482 = vsel %vm2481, %v2473, %v2478
    %v2483 = vmul.f32 %v2376, %v2472
    %v2484 = vmul.f32 %v2377, %v2482
    %v2485 = vperm.slane %v1011, 2
    %v2486 = vperm.slane %v1011, 6
    %v2489 = vperm.slane %v2485, 2
    %v2490 = vperm.slane %v2486, 2
    %v2491 = vmul.f32 %v2483, %v2489
    %v2492 = vmul.f32 %v2484, %v2490
    %v2493 = vperm.slane %v1011, 3
    %v2494 = vperm.slane %v1011, 7
    %v2497 = vperm.slane %v2493, 3
    %v2498 = vperm.slane %v2494, 3
    %v2499 = vadd.f32 %v2491, %v2497
    %v2500 = vadd.f32 %v2492, %v2498
    %v2501 = vld [vmem:[#allocation15] sm:$0xff]
    %v2502 = vld [vmem:[#allocation15 + $0x8] sm:$0xff]
    %v2503 = vld [vmem:[#allocation15 + $0x10] sm:$0xff]
    %v2504 = vld [vmem:[#allocation15 + $0x18] sm:$0xff]
    %v2505 = vld [vmem:[#allocation15 + $0x20] sm:$0xff]
    %v2506 = vld [vmem:[#allocation15 + $0x28] sm:$0xff]
    %v2507 = vld [vmem:[#allocation15 + $0x30] sm:$0xff]
    %v2508 = vld [vmem:[#allocation15 + $0x38] sm:$0xff]
    %v2509 = vld [vmem:[#allocation15 + $0x40] sm:$0xff]
    %v2510 = vld [vmem:[#allocation15 + $0x48] sm:$0xff]
    %v2511 = vld [vmem:[#allocation15 + $0x50] sm:$0xff]
    %v2512 = vld [vmem:[#allocation15 + $0x58] sm:$0xff]
    %v2513 = vld [vmem:[#allocation15 + $0x60] sm:$0xff]
    %v2514 = vld [vmem:[#allocation15 + $0x68] sm:$0xff]
    %v2515 = vld [vmem:[#allocation15 + $0x70] sm:$0xff]
    %v2516 = vld [vmem:[#allocation15 + $0x78] sm:$0xff]
    %v2517 = vld [vmem:[#allocation15 + $0x80] sm:$0xff]
    %v2518 = vld [vmem:[#allocation15 + $0x88] sm:$0xff]
    %v2519 = vld [vmem:[#allocation15 + $0x90] sm:$0xff]
    %v2520 = vld [vmem:[#allocation15 + $0x98] sm:$0xff]
    %v2521 = vld [vmem:[#allocation15 + $0xa0] sm:$0xff]
    %v2522 = vld [vmem:[#allocation15 + $0xa8] sm:$0xff]
    %v2523 = vld [vmem:[#allocation15 + $0xb0] sm:$0xff]
    %v2524 = vld [vmem:[#allocation15 + $0xb8] sm:$0xff]
    %v2525 = vld [vmem:[#allocation15 + $0xc0] sm:$0xff]
    %v2526 = vld [vmem:[#allocation15 + $0xc8] sm:$0xff]
    %v2527 = vld [vmem:[#allocation15 + $0xd0] sm:$0xff]
    %v2528 = vld [vmem:[#allocation15 + $0xd8] sm:$0xff]
    %v2529 = vld [vmem:[#allocation15 + $0xe0] sm:$0xff]
    %v2530 = vld [vmem:[#allocation15 + $0xe8] sm:$0xff]
    %v2531 = vld [vmem:[#allocation15 + $0xf0] sm:$0xff]
    %v2532 = vld [vmem:[#allocation15 + $0xf8] sm:$0xff]
    %v2533 = vld [vmem:[#allocation15 + $0x100] sm:$0xff]
    %v2534 = vld [vmem:[#allocation15 + $0x108] sm:$0xff]
    %v2535 = vld [vmem:[#allocation15 + $0x110] sm:$0xff]
    %v2536 = vld [vmem:[#allocation15 + $0x118] sm:$0xff]
    %v2537 = vld [vmem:[#allocation15 + $0x120] sm:$0xff]
    %v2538 = vld [vmem:[#allocation15 + $0x128] sm:$0xff]
    %v2539 = vld [vmem:[#allocation15 + $0x130] sm:$0xff]
    %v2540 = vld [vmem:[#allocation15 + $0x138] sm:$0xff]
    %v2541 = vld [vmem:[#allocation15 + $0x140] sm:$0xff]
    %v2542 = vld [vmem:[#allocation15 + $0x148] sm:$0xff]
    %v2543 = vld [vmem:[#allocation15 + $0x150] sm:$0xff]
    %v2544 = vld [vmem:[#allocation15 + $0x158] sm:$0xff]
    %v2545 = vld [vmem:[#allocation15 + $0x160] sm:$0xff]
    %v2546 = vld [vmem:[#allocation15 + $0x168] sm:$0xff]
    %v2547 = vld [vmem:[#allocation15 + $0x170] sm:$0xff]
    %v2548 = vld [vmem:[#allocation15 + $0x178] sm:$0xff]
    %v2549 = vld [vmem:[#allocation16] sm:$0x3]
    %v2550 = vld [vmem:[%s14] sm:$0xff]
    %v2551 = vld [vmem:[%s14 + $0x8] sm:$0xff]
    %v2552 = vld [vmem:[%s14 + $0x10] sm:$0xff]
    %v2553 = vld [vmem:[%s14 + $0x18] sm:$0xff]
    %v2554 = vld [vmem:[%s14 + $0x20] sm:$0xff]
    %v2555 = vld [vmem:[%s14 + $0x28] sm:$0xff]
    %v2556 = vld [vmem:[%s14 + $0x30] sm:$0xff]
    %v2557 = vld [vmem:[%s14 + $0x38] sm:$0xff]
    %v2558 = vld [vmem:[%s14 + $0x40] sm:$0xff]
    %v2559 = vld [vmem:[%s14 + $0x48] sm:$0xff]
    %v2560 = vld [vmem:[%s14 + $0x50] sm:$0xff]
    %v2561 = vld [vmem:[%s14 + $0x58] sm:$0xff]
    %v2562 = vld [vmem:[%s14 + $0x60] sm:$0xff]
    %v2563 = vld [vmem:[%s14 + $0x68] sm:$0xff]
    %v2564 = vld [vmem:[%s14 + $0x70] sm:$0xff]
    %v2565 = vld [vmem:[%s14 + $0x78] sm:$0xff]
    %v2566 = vld [vmem:[%s14 + $0x80] sm:$0xff]
    %v2567 = vld [vmem:[%s14 + $0x88] sm:$0xff]
    %v2568 = vld [vmem:[%s14 + $0x90] sm:$0xff]
    %v2569 = vld [vmem:[%s14 + $0x98] sm:$0xff]
    %v2570 = vld [vmem:[%s14 + $0xa0] sm:$0xff]
    %v2571 = vld [vmem:[%s14 + $0xa8] sm:$0xff]
    %v2572 = vld [vmem:[%s14 + $0xb0] sm:$0xff]
    %v2573 = vld [vmem:[%s14 + $0xb8] sm:$0xff]
    %v2574 = vld [vmem:[%s14 + $0xc0] sm:$0xff]
    %v2575 = vld [vmem:[%s14 + $0xc8] sm:$0xff]
    %v2576 = vld [vmem:[%s14 + $0xd0] sm:$0xff]
    %v2577 = vld [vmem:[%s14 + $0xd8] sm:$0xff]
    %v2578 = vld [vmem:[%s14 + $0xe0] sm:$0xff]
    %v2579 = vld [vmem:[%s14 + $0xe8] sm:$0xff]
    %v2580 = vld [vmem:[%s14 + $0xf0] sm:$0xff]
    %v2581 = vld [vmem:[%s14 + $0xf8] sm:$0xff]
    %v2582 = vld [vmem:[%s14 + $0x100] sm:$0xff]
    %v2583 = vld [vmem:[%s14 + $0x108] sm:$0xff]
    %v2584 = vld [vmem:[%s14 + $0x110] sm:$0xff]
    %v2585 = vld [vmem:[%s14 + $0x118] sm:$0xff]
    %v2586 = vld [vmem:[%s14 + $0x120] sm:$0xff]
    %v2587 = vld [vmem:[%s14 + $0x128] sm:$0xff]
    %v2588 = vld [vmem:[%s14 + $0x130] sm:$0xff]
    %v2589 = vld [vmem:[%s14 + $0x138] sm:$0xff]
    %v2590 = vld [vmem:[%s14 + $0x140] sm:$0xff]
    %v2591 = vld [vmem:[%s14 + $0x148] sm:$0xff]
    %v2592 = vld [vmem:[%s14 + $0x150] sm:$0xff]
    %v2593 = vld [vmem:[%s14 + $0x158] sm:$0xff]
    %v2594 = vld [vmem:[%s14 + $0x160] sm:$0xff]
    %v2595 = vld [vmem:[%s14 + $0x168] sm:$0xff]
    %v2596 = vld [vmem:[%s14 + $0x170] sm:$0xff]
    %v2597 = vld [vmem:[%s14 + $0x178] sm:$0xff]
    %v2598 = vld [vmem:[%s14 + $0x180] sm:$0xff]
    %v2599 = vld [vmem:[%s14 + $0x188] sm:$0xff]
    %v2600 = vld [vmem:[%s14 + $0x190] sm:$0xff]
    %v2601 = vld [vmem:[%s14 + $0x198] sm:$0xff]
    %v2602 = vld [vmem:[%s14 + $0x1a0] sm:$0xff]
    %v2603 = vld [vmem:[%s14 + $0x1a8] sm:$0xff]
    %v2604 = vld [vmem:[%s14 + $0x1b0] sm:$0xff]
    %v2605 = vld [vmem:[%s14 + $0x1b8] sm:$0xff]
    %v2606 = vld [vmem:[%s14 + $0x1c0] sm:$0xff]
    %v2607 = vld [vmem:[%s14 + $0x1c8] sm:$0xff]
    %v2608 = vld [vmem:[%s14 + $0x1d0] sm:$0xff]
    %v2609 = vld [vmem:[%s14 + $0x1d8] sm:$0xff]
    %v2610 = vld [vmem:[%s14 + $0x1e0] sm:$0xff]
    %v2611 = vld [vmem:[%s14 + $0x1e8] sm:$0xff]
    %v2612 = vld [vmem:[%s14 + $0x1f0] sm:$0xff]
    %v2613 = vld [vmem:[%s14 + $0x1f8] sm:$0xff]
    %v2614 = vld [vmem:[%s14 + $0x200] sm:$0xff]
    %v2615 = vld [vmem:[%s14 + $0x208] sm:$0xff]
    %v2616 = vld [vmem:[%s14 + $0x210] sm:$0xff]
    %v2617 = vld [vmem:[%s14 + $0x218] sm:$0xff]
    %v2618 = vld [vmem:[%s14 + $0x220] sm:$0xff]
    %v2619 = vld [vmem:[%s14 + $0x228] sm:$0xff]
    %v2620 = vld [vmem:[%s14 + $0x230] sm:$0xff]
    %v2621 = vld [vmem:[%s14 + $0x238] sm:$0xff]
    %v2622 = vld [vmem:[#allocation18] sm:$0x7]
    %v2623 = vld [vmem:[#allocation19] sm:$0xff]
    %v2624 = vld [vmem:[#allocation19 + $0x8] sm:$0xff]
    %v2625 = vld [vmem:[#allocation19 + $0x10] sm:$0xff]
    %v2626 = vld [vmem:[#allocation19 + $0x18] sm:$0xff]
    %v2627 = vld [vmem:[#allocation19 + $0x20] sm:$0xff]
    %v2628 = vld [vmem:[#allocation19 + $0x28] sm:$0xff]
    %v2629 = vld [vmem:[#allocation19 + $0x30] sm:$0xff]
    %v2630 = vld [vmem:[#allocation19 + $0x38] sm:$0xff]
    %v2631 = vld [vmem:[#allocation19 + $0x40] sm:$0xff]
    %v2632 = vld [vmem:[#allocation19 + $0x48] sm:$0xff]
    %v2633 = vld [vmem:[#allocation19 + $0x50] sm:$0xff]
    %v2634 = vld [vmem:[#allocation19 + $0x58] sm:$0xff]
    %v2635 = vld [vmem:[#allocation19 + $0x60] sm:$0xff]
    %v2636 = vld [vmem:[#allocation19 + $0x68] sm:$0xff]
    %v2637 = vld [vmem:[#allocation19 + $0x70] sm:$0xff]
    %v2638 = vld [vmem:[#allocation19 + $0x78] sm:$0xff]
    %v2639 = vld [vmem:[#allocation19 + $0x80] sm:$0xff]
    %v2640 = vld [vmem:[#allocation19 + $0x88] sm:$0xff]
    %v2641 = vld [vmem:[#allocation19 + $0x90] sm:$0xff]
    %v2642 = vld [vmem:[#allocation19 + $0x98] sm:$0xff]
    %v2643 = vld [vmem:[#allocation19 + $0xa0] sm:$0xff]
    %v2644 = vld [vmem:[#allocation19 + $0xa8] sm:$0xff]
    %v2645 = vld [vmem:[#allocation19 + $0xb0] sm:$0xff]
    %v2646 = vld [vmem:[#allocation19 + $0xb8] sm:$0xff]
    %v2647 = vld [vmem:[#allocation19 + $0xc0] sm:$0xff]
    %v2648 = vld [vmem:[#allocation19 + $0xc8] sm:$0xff]
    %v2649 = vld [vmem:[#allocation19 + $0xd0] sm:$0xff]
    %v2650 = vld [vmem:[#allocation19 + $0xd8] sm:$0xff]
    %v2651 = vld [vmem:[#allocation19 + $0xe0] sm:$0xff]
    %v2652 = vld [vmem:[#allocation19 + $0xe8] sm:$0xff]
    %v2653 = vld [vmem:[#allocation19 + $0xf0] sm:$0xff]
    %v2654 = vld [vmem:[#allocation19 + $0xf8] sm:$0xff]
    %v2655 = vld [vmem:[#allocation19 + $0x100] sm:$0xff]
    %v2656 = vld [vmem:[#allocation19 + $0x108] sm:$0xff]
    %v2657 = vld [vmem:[#allocation19 + $0x110] sm:$0xff]
    %v2658 = vld [vmem:[#allocation19 + $0x118] sm:$0xff]
    %v2659 = vld [vmem:[#allocation19 + $0x120] sm:$0xff]
    %v2660 = vld [vmem:[#allocation19 + $0x128] sm:$0xff]
    %v2661 = vld [vmem:[#allocation19 + $0x130] sm:$0xff]
    %v2662 = vld [vmem:[#allocation19 + $0x138] sm:$0xff]
    %v2663 = vld [vmem:[#allocation19 + $0x140] sm:$0xff]
    %v2664 = vld [vmem:[#allocation19 + $0x148] sm:$0xff]
    %v2665 = vld [vmem:[#allocation19 + $0x150] sm:$0xff]
    %v2666 = vld [vmem:[#allocation19 + $0x158] sm:$0xff]
    %v2667 = vld [vmem:[#allocation19 + $0x160] sm:$0xff]
    %v2668 = vld [vmem:[#allocation19 + $0x168] sm:$0xff]
    %v2669 = vld [vmem:[#allocation19 + $0x170] sm:$0xff]
    %v2670 = vld [vmem:[#allocation19 + $0x178] sm:$0xff]
    %v2671 = vld [vmem:[#allocation21] sm:$0x3]
    %v2672 = vld [vmem:[%s18] sm:$0xff]
    %v2674 = vperm.slane %v2549, 0
    %v2675 = vperm.slane %v2549, 1
    %v2679 = vsel %vm828, %v2500, 0
    %2681 = vmatpush.msra.mxu0 %v2531
    %2682 = vmatpush.msra.mxu0 %v2529
    %2683 = vmatpush.msra.mxu0 %v2527
    %2684 = vmatpush.msra.mxu0 %v2525
    %2685 = vmatpush.msra.mxu0 %v2523
    %2686 = vmatpush.msra.mxu0 %v2521
    %2687 = vmatpush.msra.mxu0 %v2519
    %2688 = vmatpush.msra.mxu0 %v2517
    %2689 = vmatpush.msra.mxu0 %v2515
    %2690 = vmatpush.msra.mxu0 %v2513
    %2691 = vmatpush.msra.mxu0 %v2511
    %2692 = vmatpush.msra.mxu0 %v2509
    %2693 = vmatpush.msra.mxu0 %v2507
    %2694 = vmatpush.msra.mxu0 %v2505
    %2695 = vmatpush.msra.mxu0 %v2503
    %2696 = vmatpush.msra.mxu0 %v2501
    %2697 = vmatmul.f32.gmra.mxu0 %v2499
    %v2698 = vpop.f32.mrf.mxu0
    %v2699 = vadd.f32 %v2674, %v2698
    %2700 = vdwg.mxu0
    %2701 = vmatpush.msra.mxu0 0.0
    %2702 = vmatpush.msra.mxu0 0.0
    %2703 = vmatpush.msra.mxu0 0.0
    %2704 = vmatpush.msra.mxu0 0.0
    %2705 = vmatpush.msra.mxu0 0.0
    %2706 = vmatpush.msra.mxu0 0.0
    %2707 = vmatpush.msra.mxu0 0.0
    %2708 = vmatpush.msra.mxu0 0.0
    %2709 = vmatpush.msra.mxu0 %v2547
    %2710 = vmatpush.msra.mxu0 %v2545
    %2711 = vmatpush.msra.mxu0 %v2543
    %2712 = vmatpush.msra.mxu0 %v2541
    %2713 = vmatpush.msra.mxu0 %v2539
    %2714 = vmatpush.msra.mxu0 %v2537
    %2715 = vmatpush.msra.mxu0 %v2535
    %2716 = vmatpush.msra.mxu0 %v2533
    %2717 = vmatmul.f32.gmra.mxu0 %v2679
    %v2718 = vpop.f32.mrf.mxu0
    %v2719 = vadd.f32 %v2699, %v2718
    %2720 = vdwg.mxu0
    %2721 = vmatpush.msra.mxu0 %v2532
    %2722 = vmatpush.msra.mxu0 %v2530
    %2723 = vmatpush.msra.mxu0 %v2528
    %2724 = vmatpush.msra.mxu0 %v2526
    %2725 = vmatpush.msra.mxu0 %v2524
    %2726 = vmatpush.msra.mxu0 %v2522
    %2727 = vmatpush.msra.mxu0 %v2520
    %2728 = vmatpush.msra.mxu0 %v2518
    %2729 = vmatpush.msra.mxu0 %v2516
    %2730 = vmatpush.msra.mxu0 %v2514
    %2731 = vmatpush.msra.mxu0 %v2512
    %2732 = vmatpush.msra.mxu0 %v2510
    %2733 = vmatpush.msra.mxu0 %v2508
    %2734 = vmatpush.msra.mxu0 %v2506
    %2735 = vmatpush.msra.mxu0 %v2504
    %2736 = vmatpush.msra.mxu0 %v2502
    %2737 = vmatmul.f32.gmra.mxu0 %v2499
    %v2738 = vpop.f32.mrf.mxu0
    %v2739 = vadd.f32 %v2675, %v2738
    %2740 = vdwg.mxu0
    %2741 = vmatpush.msra.mxu0 0.0
    %2742 = vmatpush.msra.mxu0 0.0
    %2743 = vmatpush.msra.mxu0 0.0
    %2744 = vmatpush.msra.mxu0 0.0
    %2745 = vmatpush.msra.mxu0 0.0
    %2746 = vmatpush.msra.mxu0 0.0
    %2747 = vmatpush.msra.mxu0 0.0
    %2748 = vmatpush.msra.mxu0 0.0
    %2749 = vmatpush.msra.mxu0 %v2548
    %2750 = vmatpush.msra.mxu0 %v2546
    %2751 = vmatpush.msra.mxu0 %v2544
    %2752 = vmatpush.msra.mxu0 %v2542
    %2753 = vmatpush.msra.mxu0 %v2540
    %2754 = vmatpush.msra.mxu0 %v2538
    %2755 = vmatpush.msra.mxu0 %v2536
    %2756 = vmatpush.msra.mxu0 %v2534
    %2757 = vmatmul.f32.gmra.mxu0 %v2679
    %v2758 = vpop.f32.mrf.mxu0
    %v2759 = vadd.f32 %v2739, %v2758
    %2760 = vdwg.mxu0
    %v2762 = vperm.slane %v2622, 0
    %v2763 = vperm.slane %v2622, 1
    %v2764 = vperm.slane %v2622, 2
    %2768 = vmatpush.msra.mxu0 %v2595
    %2769 = vmatpush.msra.mxu0 %v2592
    %2770 = vmatpush.msra.mxu0 %v2589
    %2771 = vmatpush.msra.mxu0 %v2586
    %2772 = vmatpush.msra.mxu0 %v2583
    %2773 = vmatpush.msra.mxu0 %v2580
    %2774 = vmatpush.msra.mxu0 %v2577
    %2775 = vmatpush.msra.mxu0 %v2574
    %2776 = vmatpush.msra.mxu0 %v2571
    %2777 = vmatpush.msra.mxu0 %v2568
    %2778 = vmatpush.msra.mxu0 %v2565
    %2779 = vmatpush.msra.mxu0 %v2562
    %2780 = vmatpush.msra.mxu0 %v2559
    %2781 = vmatpush.msra.mxu0 %v2556
    %2782 = vmatpush.msra.mxu0 %v2553
    %2783 = vmatpush.msra.mxu0 %v2550
    %2784 = vmatmul.f32.gmra.mxu0 %v2499
    %v2785 = vpop.f32.mrf.mxu0
    %v2786 = vadd.f32 %v2762, %v2785
    %2787 = vdwg.mxu0
    %2788 = vmatpush.msra.mxu0 0.0
    %2789 = vmatpush.msra.mxu0 0.0
    %2790 = vmatpush.msra.mxu0 0.0
    %2791 = vmatpush.msra.mxu0 0.0
    %2792 = vmatpush.msra.mxu0 0.0
    %2793 = vmatpush.msra.mxu0 0.0
    %2794 = vmatpush.msra.mxu0 0.0
    %2795 = vmatpush.msra.mxu0 0.0
    %2796 = vmatpush.msra.mxu0 %v2619
    %2797 = vmatpush.msra.mxu0 %v2616
    %2798 = vmatpush.msra.mxu0 %v2613
    %2799 = vmatpush.msra.mxu0 %v2610
    %2800 = vmatpush.msra.mxu0 %v2607
    %2801 = vmatpush.msra.mxu0 %v2604
    %2802 = vmatpush.msra.mxu0 %v2601
    %2803 = vmatpush.msra.mxu0 %v2598
    %2804 = vmatmul.f32.gmra.mxu0 %v2679
    %v2805 = vpop.f32.mrf.mxu0
    %v2806 = vadd.f32 %v2786, %v2805
    %2807 = vdwg.mxu0
    %2808 = vmatpush.msra.mxu0 %v2596
    %2809 = vmatpush.msra.mxu0 %v2593
    %2810 = vmatpush.msra.mxu0 %v2590
    %2811 = vmatpush.msra.mxu0 %v2587
    %2812 = vmatpush.msra.mxu0 %v2584
    %2813 = vmatpush.msra.mxu0 %v2581
    %2814 = vmatpush.msra.mxu0 %v2578
    %2815 = vmatpush.msra.mxu0 %v2575
    %2816 = vmatpush.msra.mxu0 %v2572
    %2817 = vmatpush.msra.mxu0 %v2569
    %2818 = vmatpush.msra.mxu0 %v2566
    %2819 = vmatpush.msra.mxu0 %v2563
    %2820 = vmatpush.msra.mxu0 %v2560
    %2821 = vmatpush.msra.mxu0 %v2557
    %2822 = vmatpush.msra.mxu0 %v2554
    %2823 = vmatpush.msra.mxu0 %v2551
    %2824 = vmatmul.f32.gmra.mxu0 %v2499
    %v2825 = vpop.f32.mrf.mxu0
    %v2826 = vadd.f32 %v2763, %v2825
    %2827 = vdwg.mxu0
    %2828 = vmatpush.msra.mxu0 0.0
    %2829 = vmatpush.msra.mxu0 0.0
    %2830 = vmatpush.msra.mxu0 0.0
    %2831 = vmatpush.msra.mxu0 0.0
    %2832 = vmatpush.msra.mxu0 0.0
    %2833 = vmatpush.msra.mxu0 0.0
    %2834 = vmatpush.msra.mxu0 0.0
    %2835 = vmatpush.msra.mxu0 0.0
    %2836 = vmatpush.msra.mxu0 %v2620
    %2837 = vmatpush.msra.mxu0 %v2617
    %2838 = vmatpush.msra.mxu0 %v2614
    %2839 = vmatpush.msra.mxu0 %v2611
    %2840 = vmatpush.msra.mxu0 %v2608
    %2841 = vmatpush.msra.mxu0 %v2605
    %2842 = vmatpush.msra.mxu0 %v2602
    %2843 = vmatpush.msra.mxu0 %v2599
    %2844 = vmatmul.f32.gmra.mxu0 %v2679
    %v2845 = vpop.f32.mrf.mxu0
    %v2846 = vadd.f32 %v2826, %v2845
    %2847 = vdwg.mxu0
    %2848 = vmatpush.msra.mxu0 %v2597
    %2849 = vmatpush.msra.mxu0 %v2594
    %2850 = vmatpush.msra.mxu0 %v2591
    %2851 = vmatpush.msra.mxu0 %v2588
    %2852 = vmatpush.msra.mxu0 %v2585
    %2853 = vmatpush.msra.mxu0 %v2582
    %2854 = vmatpush.msra.mxu0 %v2579
    %2855 = vmatpush.msra.mxu0 %v2576
    %2856 = vmatpush.msra.mxu0 %v2573
    %2857 = vmatpush.msra.mxu0 %v2570
    %2858 = vmatpush.msra.mxu0 %v2567
    %2859 = vmatpush.msra.mxu0 %v2564
    %2860 = vmatpush.msra.mxu0 %v2561
    %2861 = vmatpush.msra.mxu0 %v2558
    %2862 = vmatpush.msra.mxu0 %v2555
    %2863 = vmatpush.msra.mxu0 %v2552
    %2864 = vmatmul.f32.gmra.mxu0 %v2499
    %v2865 = vpop.f32.mrf.mxu0
    %v2866 = vadd.f32 %v2764, %v2865
    %2867 = vdwg.mxu0
    %2868 = vmatpush.msra.mxu0 0.0
    %2869 = vmatpush.msra.mxu0 0.0
    %2870 = vmatpush.msra.mxu0 0.0
    %2871 = vmatpush.msra.mxu0 0.0
    %2872 = vmatpush.msra.mxu0 0.0
    %2873 = vmatpush.msra.mxu0 0.0
    %2874 = vmatpush.msra.mxu0 0.0
    %2875 = vmatpush.msra.mxu0 0.0
    %2876 = vmatpush.msra.mxu0 %v2621
    %2877 = vmatpush.msra.mxu0 %v2618
    %2878 = vmatpush.msra.mxu0 %v2615
    %2879 = vmatpush.msra.mxu0 %v2612
    %2880 = vmatpush.msra.mxu0 %v2609
    %2881 = vmatpush.msra.mxu0 %v2606
    %2882 = vmatpush.msra.mxu0 %v2603
    %2883 = vmatpush.msra.mxu0 %v2600
    %2884 = vmatmul.f32.gmra.mxu0 %v2679
    %v2885 = vpop.f32.mrf.mxu0
    %v2886 = vadd.f32 %v2866, %v2885
    %2887 = vdwg.mxu0
    %v2889 = vsel %vm1124, %v2719, 0
    %v2892 = vsel %vm1124, %v2806, 0
    %2894 = vmatpush.xpose.msra.mxu0 0.0
    %2895 = vmatpush.xpose.msra.mxu0 0.0
    %2896 = vmatpush.xpose.msra.mxu0 0.0
    %2897 = vmatpush.xpose.msra.mxu0 0.0
    %2898 = vmatpush.xpose.msra.mxu0 0.0
    %2899 = vmatpush.xpose.msra.mxu0 0.0
    %2900 = vmatpush.xpose.msra.mxu0 0.0
    %2901 = vmatpush.xpose.msra.mxu0 0.0
    %2902 = vmatpush.xpose.msra.mxu0 0.0
    %2903 = vmatpush.xpose.msra.mxu0 0.0
    %2904 = vmatpush.xpose.msra.mxu0 0.0
    %2905 = vmatpush.xpose.msra.mxu0 0.0
    %2906 = vmatpush.xpose.msra.mxu0 0.0
    %2907 = vmatpush.xpose.msra.mxu0 0.0
    %2908 = vmatpush.xpose.msra.mxu0 0.0
    %2909 = vmatpush.xpose.msra.mxu0 %v2892
    %2910 = vmatmul.f32.gmra.mxu0 %v2889
    %v2911 = vpop.f32.mrf.mxu0
    %v2912 = vadd.f32 0.0, %v2911
    %2913 = vdwg.mxu0
    %v2914 = vmul.f32 %v2912, 0.17677669
    %v2915 = vsel %vm1152, %v2914, -inf
    %2916 = vmax.xlane.f32.xlu0 %v2915
    %v2917 = vpop.xlane.xlu0 %2916
    %v2918 = vsub.f32 %v2914, %v2917
    %v2919 = vmul.f32 %v2918, 1.442695
    %v2920 = vpow.pop %v2919
    %v2921 = vsel %vm1152, %v2920, 0.0
    %2922 = vadd.xlane.f32.xlu0 %v2921
    %v2923 = vpop.xlane.xlu0 %2922
    %v2924 = vrcp.pop %v2923
    %v2925 = vmul.f32 %v2920, %v2924
    %2927 = vrot.lane.b32.xlu0 %v2846, 64
    %v2928 = vpop.permute.xlu0 %2927
    %v2930 = vsel %vm1167, %v2925, 0
    %v2932 = vsel %vm1171, %v2928, 0
    %2934 = vmatpush.msra.mxu0 0.0
    %2935 = vmatpush.msra.mxu0 0.0
    %2936 = vmatpush.msra.mxu0 0.0
    %2937 = vmatpush.msra.mxu0 0.0
    %2938 = vmatpush.msra.mxu0 0.0
    %2939 = vmatpush.msra.mxu0 0.0
    %2940 = vmatpush.msra.mxu0 0.0
    %2941 = vmatpush.msra.mxu0 0.0
    %2942 = vmatpush.msra.mxu0 0.0
    %2943 = vmatpush.msra.mxu0 0.0
    %2944 = vmatpush.msra.mxu0 0.0
    %2945 = vmatpush.msra.mxu0 0.0
    %2946 = vmatpush.msra.mxu0 0.0
    %2947 = vmatpush.msra.mxu0 0.0
    %2948 = vmatpush.msra.mxu0 0.0
    %2949 = vmatpush.msra.mxu0 %v2932
    %2950 = vmatmul.f32.gmra.mxu0 %v2930
    %v2951 = vpop.f32.mrf.mxu0
    %v2952 = vadd.f32 0.0, %v2951
    %2953 = vdwg.mxu0
    %v2954 = vadd.f32 %v2719, %v2952
    %2955 = vrot.lane.b32.xlu0 %v2719, 112
    %v2956 = vpop.permute.xlu0 %2955
    %2957 = vrot.lane.b32.xlu0 %v2806, 112
    %v2958 = vpop.permute.xlu0 %2957
    %v2959 = vsel %vm1124, %v2956, 0
    %v2961 = vsel %vm1124, %v2958, 0
    %2963 = vmatpush.xpose.msra.mxu0 0.0
    %2964 = vmatpush.xpose.msra.mxu0 0.0
    %2965 = vmatpush.xpose.msra.mxu0 0.0
    %2966 = vmatpush.xpose.msra.mxu0 0.0
    %2967 = vmatpush.xpose.msra.mxu0 0.0
    %2968 = vmatpush.xpose.msra.mxu0 0.0
    %2969 = vmatpush.xpose.msra.mxu0 0.0
    %2970 = vmatpush.xpose.msra.mxu0 0.0
    %2971 = vmatpush.xpose.msra.mxu0 0.0
    %2972 = vmatpush.xpose.msra.mxu0 0.0
    %2973 = vmatpush.xpose.msra.mxu0 0.0
    %2974 = vmatpush.xpose.msra.mxu0 0.0
    %2975 = vmatpush.xpose.msra.mxu0 0.0
    %2976 = vmatpush.xpose.msra.mxu0 0.0
    %2977 = vmatpush.xpose.msra.mxu0 0.0
    %2978 = vmatpush.xpose.msra.mxu0 %v2961
    %2979 = vmatmul.f32.gmra.mxu0 %v2959
    %v2980 = vpop.f32.mrf.mxu0
    %v2981 = vadd.f32 0.0, %v2980
    %2982 = vdwg.mxu0
    %v2983 = vmul.f32 %v2981, 0.17677669
    %v2984 = vsel %vm1152, %v2983, -inf
    %2985 = vmax.xlane.f32.xlu0 %v2984
    %v2986 = vpop.xlane.xlu0 %2985
    %v2987 = vsub.f32 %v2983, %v2986
    %v2988 = vmul.f32 %v2987, 1.442695
    %v2989 = vpow.pop %v2988
    %v2990 = vsel %vm1152, %v2989, 0.0
    %2991 = vadd.xlane.f32.xlu0 %v2990
    %v2992 = vpop.xlane.xlu0 %2991
    %v2993 = vrcp.pop %v2992
    %v2994 = vmul.f32 %v2989, %v2993
    %2995 = vrot.lane.b32.xlu0 %v2846, 48
    %v2996 = vpop.permute.xlu0 %2995
    %v2998 = vsel %vm1167, %v2994, 0
    %v3000 = vsel %vm1171, %v2996, 0
    %3002 = vmatpush.msra.mxu0 0.0
    %3003 = vmatpush.msra.mxu0 0.0
    %3004 = vmatpush.msra.mxu0 0.0
    %3005 = vmatpush.msra.mxu0 0.0
    %3006 = vmatpush.msra.mxu0 0.0
    %3007 = vmatpush.msra.mxu0 0.0
    %3008 = vmatpush.msra.mxu0 0.0
    %3009 = vmatpush.msra.mxu0 0.0
    %3010 = vmatpush.msra.mxu0 0.0
    %3011 = vmatpush.msra.mxu0 0.0
    %3012 = vmatpush.msra.mxu0 0.0
    %3013 = vmatpush.msra.mxu0 0.0
    %3014 = vmatpush.msra.mxu0 0.0
    %3015 = vmatpush.msra.mxu0 0.0
    %3016 = vmatpush.msra.mxu0 0.0
    %3017 = vmatpush.msra.mxu0 %v3000
    %3018 = vmatmul.f32.gmra.mxu0 %v2998
    %v3019 = vpop.f32.mrf.mxu0
    %v3020 = vadd.f32 0.0, %v3019
    %3021 = vdwg.mxu0
    %3023 = vrot.lane.b32.xlu0 %v3020, 16
    %v3024 = vpop.permute.xlu0 %3023
    %v3026 = vadd.f32 %v2719, %v3024
    %3027 = vrot.lane.b32.xlu0 %v2719, 96
    %v3028 = vpop.permute.xlu0 %3027
    %3029 = vrot.lane.b32.xlu0 %v2806, 96
    %v3030 = vpop.permute.xlu0 %3029
    %v3031 = vsel %vm1124, %v3028, 0
    %v3033 = vsel %vm1124, %v3030, 0
    %3035 = vmatpush.xpose.msra.mxu0 0.0
    %3036 = vmatpush.xpose.msra.mxu0 0.0
    %3037 = vmatpush.xpose.msra.mxu0 0.0
    %3038 = vmatpush.xpose.msra.mxu0 0.0
    %3039 = vmatpush.xpose.msra.mxu0 0.0
    %3040 = vmatpush.xpose.msra.mxu0 0.0
    %3041 = vmatpush.xpose.msra.mxu0 0.0
    %3042 = vmatpush.xpose.msra.mxu0 0.0
    %3043 = vmatpush.xpose.msra.mxu0 0.0
    %3044 = vmatpush.xpose.msra.mxu0 0.0
    %3045 = vmatpush.xpose.msra.mxu0 0.0
    %3046 = vmatpush.xpose.msra.mxu0 0.0
    %3047 = vmatpush.xpose.msra.mxu0 0.0
    %3048 = vmatpush.xpose.msra.mxu0 0.0
    %3049 = vmatpush.xpose.msra.mxu0 0.0
    %3050 = vmatpush.xpose.msra.mxu0 %v3033
    %3051 = vmatmul.f32.gmra.mxu0 %v3031
    %v3052 = vpop.f32.mrf.mxu0
    %v3053 = vadd.f32 0.0, %v3052
    %3054 = vdwg.mxu0
    %v3055 = vmul.f32 %v3053, 0.17677669
    %v3056 = vsel %vm1152, %v3055, -inf
    %3057 = vmax.xlane.f32.xlu0 %v3056
    %v3058 = vpop.xlane.xlu0 %3057
    %v3059 = vsub.f32 %v3055, %v3058
    %v3060 = vmul.f32 %v3059, 1.442695
    %v3061 = vpow.pop %v3060
    %v3062 = vsel %vm1152, %v3061, 0.0
    %3063 = vadd.xlane.f32.xlu0 %v3062
    %v3064 = vpop.xlane.xlu0 %3063
    %v3065 = vrcp.pop %v3064
    %v3066 = vmul.f32 %v3061, %v3065
    %3067 = vrot.lane.b32.xlu0 %v2846, 32
    %v3068 = vpop.permute.xlu0 %3067
    %v3070 = vsel %vm1167, %v3066, 0
    %v3072 = vsel %vm1171, %v3068, 0
    %3074 = vmatpush.msra.mxu0 0.0
    %3075 = vmatpush.msra.mxu0 0.0
    %3076 = vmatpush.msra.mxu0 0.0
    %3077 = vmatpush.msra.mxu0 0.0
    %3078 = vmatpush.msra.mxu0 0.0
    %3079 = vmatpush.msra.mxu0 0.0
    %3080 = vmatpush.msra.mxu0 0.0
    %3081 = vmatpush.msra.mxu0 0.0
    %3082 = vmatpush.msra.mxu0 0.0
    %3083 = vmatpush.msra.mxu0 0.0
    %3084 = vmatpush.msra.mxu0 0.0
    %3085 = vmatpush.msra.mxu0 0.0
    %3086 = vmatpush.msra.mxu0 0.0
    %3087 = vmatpush.msra.mxu0 0.0
    %3088 = vmatpush.msra.mxu0 0.0
    %3089 = vmatpush.msra.mxu0 %v3072
    %3090 = vmatmul.f32.gmra.mxu0 %v3070
    %v3091 = vpop.f32.mrf.mxu0
    %v3092 = vadd.f32 0.0, %v3091
    %3093 = vdwg.mxu0
    %3095 = vrot.lane.b32.xlu0 %v3092, 32
    %v3096 = vpop.permute.xlu0 %3095
    %v3098 = vadd.f32 %v2719, %v3096
    %3099 = vrot.lane.b32.xlu0 %v2719, 80
    %v3100 = vpop.permute.xlu0 %3099
    %3101 = vrot.lane.b32.xlu0 %v2806, 80
    %v3102 = vpop.permute.xlu0 %3101
    %v3103 = vsel %vm1124, %v3100, 0
    %v3105 = vsel %vm1124, %v3102, 0
    %3107 = vmatpush.xpose.msra.mxu0 0.0
    %3108 = vmatpush.xpose.msra.mxu0 0.0
    %3109 = vmatpush.xpose.msra.mxu0 0.0
    %3110 = vmatpush.xpose.msra.mxu0 0.0
    %3111 = vmatpush.xpose.msra.mxu0 0.0
    %3112 = vmatpush.xpose.msra.mxu0 0.0
    %3113 = vmatpush.xpose.msra.mxu0 0.0
    %3114 = vmatpush.xpose.msra.mxu0 0.0
    %3115 = vmatpush.xpose.msra.mxu0 0.0
    %3116 = vmatpush.xpose.msra.mxu0 0.0
    %3117 = vmatpush.xpose.msra.mxu0 0.0
    %3118 = vmatpush.xpose.msra.mxu0 0.0
    %3119 = vmatpush.xpose.msra.mxu0 0.0
    %3120 = vmatpush.xpose.msra.mxu0 0.0
    %3121 = vmatpush.xpose.msra.mxu0 0.0
    %3122 = vmatpush.xpose.msra.mxu0 %v3105
    %3123 = vmatmul.f32.gmra.mxu0 %v3103
    %v3124 = vpop.f32.mrf.mxu0
    %v3125 = vadd.f32 0.0, %v3124
    %3126 = vdwg.mxu0
    %v3127 = vmul.f32 %v3125, 0.17677669
    %v3128 = vsel %vm1152, %v3127, -inf
    %3129 = vmax.xlane.f32.xlu0 %v3128
    %v3130 = vpop.xlane.xlu0 %3129
    %v3131 = vsub.f32 %v3127, %v3130
    %v3132 = vmul.f32 %v3131, 1.442695
    %v3133 = vpow.pop %v3132
    %v3134 = vsel %vm1152, %v3133, 0.0
    %3135 = vadd.xlane.f32.xlu0 %v3134
    %v3136 = vpop.xlane.xlu0 %3135
    %v3137 = vrcp.pop %v3136
    %v3138 = vmul.f32 %v3133, %v3137
    %3139 = vrot.lane.b32.xlu0 %v2846, 16
    %v3140 = vpop.permute.xlu0 %3139
    %v3142 = vsel %vm1167, %v3138, 0
    %v3144 = vsel %vm1171, %v3140, 0
    %3146 = vmatpush.msra.mxu0 0.0
    %3147 = vmatpush.msra.mxu0 0.0
    %3148 = vmatpush.msra.mxu0 0.0
    %3149 = vmatpush.msra.mxu0 0.0
    %3150 = vmatpush.msra.mxu0 0.0
    %3151 = vmatpush.msra.mxu0 0.0
    %3152 = vmatpush.msra.mxu0 0.0
    %3153 = vmatpush.msra.mxu0 0.0
    %3154 = vmatpush.msra.mxu0 0.0
    %3155 = vmatpush.msra.mxu0 0.0
    %3156 = vmatpush.msra.mxu0 0.0
    %3157 = vmatpush.msra.mxu0 0.0
    %3158 = vmatpush.msra.mxu0 0.0
    %3159 = vmatpush.msra.mxu0 0.0
    %3160 = vmatpush.msra.mxu0 0.0
    %3161 = vmatpush.msra.mxu0 %v3144
    %3162 = vmatmul.f32.gmra.mxu0 %v3142
    %v3163 = vpop.f32.mrf.mxu0
    %v3164 = vadd.f32 0.0, %v3163
    %3165 = vdwg.mxu0
    %3167 = vrot.lane.b32.xlu0 %v3164, 48
    %v3168 = vpop.permute.xlu0 %3167
    %v3170 = vadd.f32 %v2719, %v3168
    %3171 = vrot.lane.b32.xlu0 %v2719, 64
    %v3172 = vpop.permute.xlu0 %3171
    %3173 = vrot.lane.b32.xlu0 %v2806, 64
    %v3174 = vpop.permute.xlu0 %3173
    %v3175 = vsel %vm1124, %v3172, 0
    %v3177 = vsel %vm1124, %v3174, 0
    %3179 = vmatpush.xpose.msra.mxu0 0.0
    %3180 = vmatpush.xpose.msra.mxu0 0.0
    %3181 = vmatpush.xpose.msra.mxu0 0.0
    %3182 = vmatpush.xpose.msra.mxu0 0.0
    %3183 = vmatpush.xpose.msra.mxu0 0.0
    %3184 = vmatpush.xpose.msra.mxu0 0.0
    %3185 = vmatpush.xpose.msra.mxu0 0.0
    %3186 = vmatpush.xpose.msra.mxu0 0.0
    %3187 = vmatpush.xpose.msra.mxu0 0.0
    %3188 = vmatpush.xpose.msra.mxu0 0.0
    %3189 = vmatpush.xpose.msra.mxu0 0.0
    %3190 = vmatpush.xpose.msra.mxu0 0.0
    %3191 = vmatpush.xpose.msra.mxu0 0.0
    %3192 = vmatpush.xpose.msra.mxu0 0.0
    %3193 = vmatpush.xpose.msra.mxu0 0.0
    %3194 = vmatpush.xpose.msra.mxu0 %v3177
    %3195 = vmatmul.f32.gmra.mxu0 %v3175
    %v3196 = vpop.f32.mrf.mxu0
    %v3197 = vadd.f32 0.0, %v3196
    %3198 = vdwg.mxu0
    %v3199 = vmul.f32 %v3197, 0.17677669
    %v3200 = vsel %vm1152, %v3199, -inf
    %3201 = vmax.xlane.f32.xlu0 %v3200
    %v3202 = vpop.xlane.xlu0 %3201
    %v3203 = vsub.f32 %v3199, %v3202
    %v3204 = vmul.f32 %v3203, 1.442695
    %v3205 = vpow.pop %v3204
    %v3206 = vsel %vm1152, %v3205, 0.0
    %3207 = vadd.xlane.f32.xlu0 %v3206
    %v3208 = vpop.xlane.xlu0 %3207
    %v3209 = vrcp.pop %v3208
    %v3210 = vmul.f32 %v3205, %v3209
    %v3212 = vsel %vm1167, %v3210, 0
    %v3215 = vsel %vm1171, %v2886, 0
    %3217 = vmatpush.msra.mxu0 0.0
    %3218 = vmatpush.msra.mxu0 0.0
    %3219 = vmatpush.msra.mxu0 0.0
    %3220 = vmatpush.msra.mxu0 0.0
    %3221 = vmatpush.msra.mxu0 0.0
    %3222 = vmatpush.msra.mxu0 0.0
    %3223 = vmatpush.msra.mxu0 0.0
    %3224 = vmatpush.msra.mxu0 0.0
    %3225 = vmatpush.msra.mxu0 0.0
    %3226 = vmatpush.msra.mxu0 0.0
    %3227 = vmatpush.msra.mxu0 0.0
    %3228 = vmatpush.msra.mxu0 0.0
    %3229 = vmatpush.msra.mxu0 0.0
    %3230 = vmatpush.msra.mxu0 0.0
    %3231 = vmatpush.msra.mxu0 0.0
    %3232 = vmatpush.msra.mxu0 %v3215
    %3233 = vmatmul.f32.gmra.mxu0 %v3212
    %v3234 = vpop.f32.mrf.mxu0
    %v3235 = vadd.f32 0.0, %v3234
    %3236 = vdwg.mxu0
    %3238 = vrot.lane.b32.xlu0 %v3235, 64
    %v3239 = vpop.permute.xlu0 %3238
    %v3241 = vadd.f32 %v2719, %v3239
    %3242 = vrot.lane.b32.xlu0 %v2719, 48
    %v3243 = vpop.permute.xlu0 %3242
    %3244 = vrot.lane.b32.xlu0 %v2806, 48
    %v3245 = vpop.permute.xlu0 %3244
    %v3246 = vsel %vm1124, %v3243, 0
    %v3248 = vsel %vm1124, %v3245, 0
    %3250 = vmatpush.xpose.msra.mxu0 0.0
    %3251 = vmatpush.xpose.msra.mxu0 0.0
    %3252 = vmatpush.xpose.msra.mxu0 0.0
    %3253 = vmatpush.xpose.msra.mxu0 0.0
    %3254 = vmatpush.xpose.msra.mxu0 0.0
    %3255 = vmatpush.xpose.msra.mxu0 0.0
    %3256 = vmatpush.xpose.msra.mxu0 0.0
    %3257 = vmatpush.xpose.msra.mxu0 0.0
    %3258 = vmatpush.xpose.msra.mxu0 0.0
    %3259 = vmatpush.xpose.msra.mxu0 0.0
    %3260 = vmatpush.xpose.msra.mxu0 0.0
    %3261 = vmatpush.xpose.msra.mxu0 0.0
    %3262 = vmatpush.xpose.msra.mxu0 0.0
    %3263 = vmatpush.xpose.msra.mxu0 0.0
    %3264 = vmatpush.xpose.msra.mxu0 0.0
    %3265 = vmatpush.xpose.msra.mxu0 %v3248
    %3266 = vmatmul.f32.gmra.mxu0 %v3246
    %v3267 = vpop.f32.mrf.mxu0
    %v3268 = vadd.f32 0.0, %v3267
    %3269 = vdwg.mxu0
    %v3270 = vmul.f32 %v3268, 0.17677669
    %v3271 = vsel %vm1152, %v3270, -inf
    %3272 = vmax.xlane.f32.xlu0 %v3271
    %v3273 = vpop.xlane.xlu0 %3272
    %v3274 = vsub.f32 %v3270, %v3273
    %v3275 = vmul.f32 %v3274, 1.442695
    %v3276 = vpow.pop %v3275
    %v3277 = vsel %vm1152, %v3276, 0.0
    %3278 = vadd.xlane.f32.xlu0 %v3277
    %v3279 = vpop.xlane.xlu0 %3278
    %v3280 = vrcp.pop %v3279
    %v3281 = vmul.f32 %v3276, %v3280
    %3282 = vrot.lane.b32.xlu0 %v2886, 112
    %v3283 = vpop.permute.xlu0 %3282
    %v3285 = vsel %vm1167, %v3281, 0
    %v3287 = vsel %vm1171, %v3283, 0
    %3289 = vmatpush.msra.mxu0 0.0
    %3290 = vmatpush.msra.mxu0 0.0
    %3291 = vmatpush.msra.mxu0 0.0
    %3292 = vmatpush.msra.mxu0 0.0
    %3293 = vmatpush.msra.mxu0 0.0
    %3294 = vmatpush.msra.mxu0 0.0
    %3295 = vmatpush.msra.mxu0 0.0
    %3296 = vmatpush.msra.mxu0 0.0
    %3297 = vmatpush.msra.mxu0 0.0
    %3298 = vmatpush.msra.mxu0 0.0
    %3299 = vmatpush.msra.mxu0 0.0
    %3300 = vmatpush.msra.mxu0 0.0
    %3301 = vmatpush.msra.mxu0 0.0
    %3302 = vmatpush.msra.mxu0 0.0
    %3303 = vmatpush.msra.mxu0 0.0
    %3304 = vmatpush.msra.mxu0 %v3287
    %3305 = vmatmul.f32.gmra.mxu0 %v3285
    %v3306 = vpop.f32.mrf.mxu0
    %v3307 = vadd.f32 0.0, %v3306
    %3308 = vdwg.mxu0
    %3310 = vrot.lane.b32.xlu0 %v3307, 80
    %v3311 = vpop.permute.xlu0 %3310
    %v3313 = vadd.f32 %v2719, %v3311
    %3314 = vrot.lane.b32.xlu0 %v2719, 32
    %v3315 = vpop.permute.xlu0 %3314
    %3316 = vrot.lane.b32.xlu0 %v2806, 32
    %v3317 = vpop.permute.xlu0 %3316
    %v3318 = vsel %vm1124, %v3315, 0
    %v3320 = vsel %vm1124, %v3317, 0
    %3322 = vmatpush.xpose.msra.mxu0 0.0
    %3323 = vmatpush.xpose.msra.mxu0 0.0
    %3324 = vmatpush.xpose.msra.mxu0 0.0
    %3325 = vmatpush.xpose.msra.mxu0 0.0
    %3326 = vmatpush.xpose.msra.mxu0 0.0
    %3327 = vmatpush.xpose.msra.mxu0 0.0
    %3328 = vmatpush.xpose.msra.mxu0 0.0
    %3329 = vmatpush.xpose.msra.mxu0 0.0
    %3330 = vmatpush.xpose.msra.mxu0 0.0
    %3331 = vmatpush.xpose.msra.mxu0 0.0
    %3332 = vmatpush.xpose.msra.mxu0 0.0
    %3333 = vmatpush.xpose.msra.mxu0 0.0
    %3334 = vmatpush.xpose.msra.mxu0 0.0
    %3335 = vmatpush.xpose.msra.mxu0 0.0
    %3336 = vmatpush.xpose.msra.mxu0 0.0
    %3337 = vmatpush.xpose.msra.mxu0 %v3320
    %3338 = vmatmul.f32.gmra.mxu0 %v3318
    %v3339 = vpop.f32.mrf.mxu0
    %v3340 = vadd.f32 0.0, %v3339
    %3341 = vdwg.mxu0
    %v3342 = vmul.f32 %v3340, 0.17677669
    %v3343 = vsel %vm1152, %v3342, -inf
    %3344 = vmax.xlane.f32.xlu0 %v3343
    %v3345 = vpop.xlane.xlu0 %3344
    %v3346 = vsub.f32 %v3342, %v3345
    %v3347 = vmul.f32 %v3346, 1.442695
    %v3348 = vpow.pop %v3347
    %v3349 = vsel %vm1152, %v3348, 0.0
    %3350 = vadd.xlane.f32.xlu0 %v3349
    %v3351 = vpop.xlane.xlu0 %3350
    %v3352 = vrcp.pop %v3351
    %v3353 = vmul.f32 %v3348, %v3352
    %3354 = vrot.lane.b32.xlu0 %v2886, 96
    %v3355 = vpop.permute.xlu0 %3354
    %v3357 = vsel %vm1167, %v3353, 0
    %v3359 = vsel %vm1171, %v3355, 0
    %3361 = vmatpush.msra.mxu0 0.0
    %3362 = vmatpush.msra.mxu0 0.0
    %3363 = vmatpush.msra.mxu0 0.0
    %3364 = vmatpush.msra.mxu0 0.0
    %3365 = vmatpush.msra.mxu0 0.0
    %3366 = vmatpush.msra.mxu0 0.0
    %3367 = vmatpush.msra.mxu0 0.0
    %3368 = vmatpush.msra.mxu0 0.0
    %3369 = vmatpush.msra.mxu0 0.0
    %3370 = vmatpush.msra.mxu0 0.0
    %3371 = vmatpush.msra.mxu0 0.0
    %3372 = vmatpush.msra.mxu0 0.0
    %3373 = vmatpush.msra.mxu0 0.0
    %3374 = vmatpush.msra.mxu0 0.0
    %3375 = vmatpush.msra.mxu0 0.0
    %3376 = vmatpush.msra.mxu0 %v3359
    %3377 = vmatmul.f32.gmra.mxu0 %v3357
    %v3378 = vpop.f32.mrf.mxu0
    %v3379 = vadd.f32 0.0, %v3378
    %3380 = vdwg.mxu0
    %3382 = vrot.lane.b32.xlu0 %v3379, 96
    %v3383 = vpop.permute.xlu0 %3382
    %v3385 = vadd.f32 %v2719, %v3383
    %3386 = vrot.lane.b32.xlu0 %v2719, 16
    %v3387 = vpop.permute.xlu0 %3386
    %3388 = vrot.lane.b32.xlu0 %v2806, 16
    %v3389 = vpop.permute.xlu0 %3388
    %v3390 = vsel %vm1124, %v3387, 0
    %v3392 = vsel %vm1124, %v3389, 0
    %3394 = vmatpush.xpose.msra.mxu0 0.0
    %3395 = vmatpush.xpose.msra.mxu0 0.0
    %3396 = vmatpush.xpose.msra.mxu0 0.0
    %3397 = vmatpush.xpose.msra.mxu0 0.0
    %3398 = vmatpush.xpose.msra.mxu0 0.0
    %3399 = vmatpush.xpose.msra.mxu0 0.0
    %3400 = vmatpush.xpose.msra.mxu0 0.0
    %3401 = vmatpush.xpose.msra.mxu0 0.0
    %3402 = vmatpush.xpose.msra.mxu0 0.0
    %3403 = vmatpush.xpose.msra.mxu0 0.0
    %3404 = vmatpush.xpose.msra.mxu0 0.0
    %3405 = vmatpush.xpose.msra.mxu0 0.0
    %3406 = vmatpush.xpose.msra.mxu0 0.0
    %3407 = vmatpush.xpose.msra.mxu0 0.0
    %3408 = vmatpush.xpose.msra.mxu0 0.0
    %3409 = vmatpush.xpose.msra.mxu0 %v3392
    %3410 = vmatmul.f32.gmra.mxu0 %v3390
    %v3411 = vpop.f32.mrf.mxu0
    %v3412 = vadd.f32 0.0, %v3411
    %3413 = vdwg.mxu0
    %v3414 = vmul.f32 %v3412, 0.17677669
    %v3415 = vsel %vm1152, %v3414, -inf
    %3416 = vmax.xlane.f32.xlu0 %v3415
    %v3417 = vpop.xlane.xlu0 %3416
    %v3418 = vsub.f32 %v3414, %v3417
    %v3419 = vmul.f32 %v3418, 1.442695
    %v3420 = vpow.pop %v3419
    %v3421 = vsel %vm1152, %v3420, 0.0
    %3422 = vadd.xlane.f32.xlu0 %v3421
    %v3423 = vpop.xlane.xlu0 %3422
    %v3424 = vrcp.pop %v3423
    %v3425 = vmul.f32 %v3420, %v3424
    %3426 = vrot.lane.b32.xlu0 %v2886, 80
    %v3427 = vpop.permute.xlu0 %3426
    %v3429 = vsel %vm1167, %v3425, 0
    %v3431 = vsel %vm1171, %v3427, 0
    %3433 = vmatpush.msra.mxu0 0.0
    %3434 = vmatpush.msra.mxu0 0.0
    %3435 = vmatpush.msra.mxu0 0.0
    %3436 = vmatpush.msra.mxu0 0.0
    %3437 = vmatpush.msra.mxu0 0.0
    %3438 = vmatpush.msra.mxu0 0.0
    %3439 = vmatpush.msra.mxu0 0.0
    %3440 = vmatpush.msra.mxu0 0.0
    %3441 = vmatpush.msra.mxu0 0.0
    %3442 = vmatpush.msra.mxu0 0.0
    %3443 = vmatpush.msra.mxu0 0.0
    %3444 = vmatpush.msra.mxu0 0.0
    %3445 = vmatpush.msra.mxu0 0.0
    %3446 = vmatpush.msra.mxu0 0.0
    %3447 = vmatpush.msra.mxu0 0.0
    %3448 = vmatpush.msra.mxu0 %v3431
    %3449 = vmatmul.f32.gmra.mxu0 %v3429
    %v3450 = vpop.f32.mrf.mxu0
    %v3451 = vadd.f32 0.0, %v3450
    %3452 = vdwg.mxu0
    %3454 = vrot.lane.b32.xlu0 %v3451, 112
    %v3455 = vpop.permute.xlu0 %3454
    %v3457 = vadd.f32 %v2719, %v3455
    %v3459 = vsel %vm1124, %v2759, 0
    %v3461 = vsel %vm1124, %v2846, 0
    %3463 = vmatpush.xpose.msra.mxu0 0.0
    %3464 = vmatpush.xpose.msra.mxu0 0.0
    %3465 = vmatpush.xpose.msra.mxu0 0.0
    %3466 = vmatpush.xpose.msra.mxu0 0.0
    %3467 = vmatpush.xpose.msra.mxu0 0.0
    %3468 = vmatpush.xpose.msra.mxu0 0.0
    %3469 = vmatpush.xpose.msra.mxu0 0.0
    %3470 = vmatpush.xpose.msra.mxu0 0.0
    %3471 = vmatpush.xpose.msra.mxu0 0.0
    %3472 = vmatpush.xpose.msra.mxu0 0.0
    %3473 = vmatpush.xpose.msra.mxu0 0.0
    %3474 = vmatpush.xpose.msra.mxu0 0.0
    %3475 = vmatpush.xpose.msra.mxu0 0.0
    %3476 = vmatpush.xpose.msra.mxu0 0.0
    %3477 = vmatpush.xpose.msra.mxu0 0.0
    %3478 = vmatpush.xpose.msra.mxu0 %v3461
    %3479 = vmatmul.f32.gmra.mxu0 %v3459
    %v3480 = vpop.f32.mrf.mxu0
    %v3481 = vadd.f32 0.0, %v3480
    %3482 = vdwg.mxu0
    %v3483 = vmul.f32 %v3481, 0.17677669
    %v3484 = vsel %vm1152, %v3483, -inf
    %3485 = vmax.xlane.f32.xlu0 %v3484
    %v3486 = vpop.xlane.xlu0 %3485
    %v3487 = vsub.f32 %v3483, %v3486
    %v3488 = vmul.f32 %v3487, 1.442695
    %v3489 = vpow.pop %v3488
    %v3490 = vsel %vm1152, %v3489, 0.0
    %3491 = vadd.xlane.f32.xlu0 %v3490
    %v3492 = vpop.xlane.xlu0 %3491
    %v3493 = vrcp.pop %v3492
    %v3494 = vmul.f32 %v3489, %v3493
    %3495 = vrot.lane.b32.xlu0 %v2886, 64
    %v3496 = vpop.permute.xlu0 %3495
    %v3498 = vsel %vm1167, %v3494, 0
    %v3500 = vsel %vm1171, %v3496, 0
    %3502 = vmatpush.msra.mxu0 0.0
    %3503 = vmatpush.msra.mxu0 0.0
    %3504 = vmatpush.msra.mxu0 0.0
    %3505 = vmatpush.msra.mxu0 0.0
    %3506 = vmatpush.msra.mxu0 0.0
    %3507 = vmatpush.msra.mxu0 0.0
    %3508 = vmatpush.msra.mxu0 0.0
    %3509 = vmatpush.msra.mxu0 0.0
    %3510 = vmatpush.msra.mxu0 0.0
    %3511 = vmatpush.msra.mxu0 0.0
    %3512 = vmatpush.msra.mxu0 0.0
    %3513 = vmatpush.msra.mxu0 0.0
    %3514 = vmatpush.msra.mxu0 0.0
    %3515 = vmatpush.msra.mxu0 0.0
    %3516 = vmatpush.msra.mxu0 0.0
    %3517 = vmatpush.msra.mxu0 %v3500
    %3518 = vmatmul.f32.gmra.mxu0 %v3498
    %v3519 = vpop.f32.mrf.mxu0
    %v3520 = vadd.f32 0.0, %v3519
    %3521 = vdwg.mxu0
    %v3522 = vadd.f32 %v2759, %v3520
    %3523 = vrot.lane.b32.xlu0 %v2759, 112
    %v3524 = vpop.permute.xlu0 %3523
    %3525 = vrot.lane.b32.xlu0 %v2846, 112
    %v3526 = vpop.permute.xlu0 %3525
    %v3527 = vsel %vm1124, %v3524, 0
    %v3529 = vsel %vm1124, %v3526, 0
    %3531 = vmatpush.xpose.msra.mxu0 0.0
    %3532 = vmatpush.xpose.msra.mxu0 0.0
    %3533 = vmatpush.xpose.msra.mxu0 0.0
    %3534 = vmatpush.xpose.msra.mxu0 0.0
    %3535 = vmatpush.xpose.msra.mxu0 0.0
    %3536 = vmatpush.xpose.msra.mxu0 0.0
    %3537 = vmatpush.xpose.msra.mxu0 0.0
    %3538 = vmatpush.xpose.msra.mxu0 0.0
    %3539 = vmatpush.xpose.msra.mxu0 0.0
    %3540 = vmatpush.xpose.msra.mxu0 0.0
    %3541 = vmatpush.xpose.msra.mxu0 0.0
    %3542 = vmatpush.xpose.msra.mxu0 0.0
    %3543 = vmatpush.xpose.msra.mxu0 0.0
    %3544 = vmatpush.xpose.msra.mxu0 0.0
    %3545 = vmatpush.xpose.msra.mxu0 0.0
    %3546 = vmatpush.xpose.msra.mxu0 %v3529
    %3547 = vmatmul.f32.gmra.mxu0 %v3527
    %v3548 = vpop.f32.mrf.mxu0
    %v3549 = vadd.f32 0.0, %v3548
    %3550 = vdwg.mxu0
    %v3551 = vmul.f32 %v3549, 0.17677669
    %v3552 = vsel %vm1152, %v3551, -inf
    %3553 = vmax.xlane.f32.xlu0 %v3552
    %v3554 = vpop.xlane.xlu0 %3553
    %v3555 = vsub.f32 %v3551, %v3554
    %v3556 = vmul.f32 %v3555, 1.442695
    %v3557 = vpow.pop %v3556
    %v3558 = vsel %vm1152, %v3557, 0.0
    %3559 = vadd.xlane.f32.xlu0 %v3558
    %v3560 = vpop.xlane.xlu0 %3559
    %v3561 = vrcp.pop %v3560
    %v3562 = vmul.f32 %v3557, %v3561
    %3563 = vrot.lane.b32.xlu0 %v2886, 48
    %v3564 = vpop.permute.xlu0 %3563
    %v3566 = vsel %vm1167, %v3562, 0
    %v3568 = vsel %vm1171, %v3564, 0
    %3570 = vmatpush.msra.mxu0 0.0
    %3571 = vmatpush.msra.mxu0 0.0
    %3572 = vmatpush.msra.mxu0 0.0
    %3573 = vmatpush.msra.mxu0 0.0
    %3574 = vmatpush.msra.mxu0 0.0
    %3575 = vmatpush.msra.mxu0 0.0
    %3576 = vmatpush.msra.mxu0 0.0
    %3577 = vmatpush.msra.mxu0 0.0
    %3578 = vmatpush.msra.mxu0 0.0
    %3579 = vmatpush.msra.mxu0 0.0
    %3580 = vmatpush.msra.mxu0 0.0
    %3581 = vmatpush.msra.mxu0 0.0
    %3582 = vmatpush.msra.mxu0 0.0
    %3583 = vmatpush.msra.mxu0 0.0
    %3584 = vmatpush.msra.mxu0 0.0
    %3585 = vmatpush.msra.mxu0 %v3568
    %3586 = vmatmul.f32.gmra.mxu0 %v3566
    %v3587 = vpop.f32.mrf.mxu0
    %v3588 = vadd.f32 0.0, %v3587
    %3589 = vdwg.mxu0
    %3591 = vrot.lane.b32.xlu0 %v3588, 16
    %v3592 = vpop.permute.xlu0 %3591
    %v3594 = vadd.f32 %v2759, %v3592
    %3595 = vrot.lane.b32.xlu0 %v2759, 96
    %v3596 = vpop.permute.xlu0 %3595
    %3597 = vrot.lane.b32.xlu0 %v2846, 96
    %v3598 = vpop.permute.xlu0 %3597
    %v3599 = vsel %vm1124, %v3596, 0
    %v3601 = vsel %vm1124, %v3598, 0
    %3603 = vmatpush.xpose.msra.mxu0 0.0
    %3604 = vmatpush.xpose.msra.mxu0 0.0
    %3605 = vmatpush.xpose.msra.mxu0 0.0
    %3606 = vmatpush.xpose.msra.mxu0 0.0
    %3607 = vmatpush.xpose.msra.mxu0 0.0
    %3608 = vmatpush.xpose.msra.mxu0 0.0
    %3609 = vmatpush.xpose.msra.mxu0 0.0
    %3610 = vmatpush.xpose.msra.mxu0 0.0
    %3611 = vmatpush.xpose.msra.mxu0 0.0
    %3612 = vmatpush.xpose.msra.mxu0 0.0
    %3613 = vmatpush.xpose.msra.mxu0 0.0
    %3614 = vmatpush.xpose.msra.mxu0 0.0
    %3615 = vmatpush.xpose.msra.mxu0 0.0
    %3616 = vmatpush.xpose.msra.mxu0 0.0
    %3617 = vmatpush.xpose.msra.mxu0 0.0
    %3618 = vmatpush.xpose.msra.mxu0 %v3601
    %3619 = vmatmul.f32.gmra.mxu0 %v3599
    %v3620 = vpop.f32.mrf.mxu0
    %v3621 = vadd.f32 0.0, %v3620
    %3622 = vdwg.mxu0
    %v3623 = vmul.f32 %v3621, 0.17677669
    %v3624 = vsel %vm1152, %v3623, -inf
    %3625 = vmax.xlane.f32.xlu0 %v3624
    %v3626 = vpop.xlane.xlu0 %3625
    %v3627 = vsub.f32 %v3623, %v3626
    %v3628 = vmul.f32 %v3627, 1.442695
    %v3629 = vpow.pop %v3628
    %v3630 = vsel %vm1152, %v3629, 0.0
    %3631 = vadd.xlane.f32.xlu0 %v3630
    %v3632 = vpop.xlane.xlu0 %3631
    %v3633 = vrcp.pop %v3632
    %v3634 = vmul.f32 %v3629, %v3633
    %3635 = vrot.lane.b32.xlu0 %v2886, 32
    %v3636 = vpop.permute.xlu0 %3635
    %v3638 = vsel %vm1167, %v3634, 0
    %v3640 = vsel %vm1171, %v3636, 0
    %3642 = vmatpush.msra.mxu0 0.0
    %3643 = vmatpush.msra.mxu0 0.0
    %3644 = vmatpush.msra.mxu0 0.0
    %3645 = vmatpush.msra.mxu0 0.0
    %3646 = vmatpush.msra.mxu0 0.0
    %3647 = vmatpush.msra.mxu0 0.0
    %3648 = vmatpush.msra.mxu0 0.0
    %3649 = vmatpush.msra.mxu0 0.0
    %3650 = vmatpush.msra.mxu0 0.0
    %3651 = vmatpush.msra.mxu0 0.0
    %3652 = vmatpush.msra.mxu0 0.0
    %3653 = vmatpush.msra.mxu0 0.0
    %3654 = vmatpush.msra.mxu0 0.0
    %3655 = vmatpush.msra.mxu0 0.0
    %3656 = vmatpush.msra.mxu0 0.0
    %3657 = vmatpush.msra.mxu0 %v3640
    %3658 = vmatmul.f32.gmra.mxu0 %v3638
    %v3659 = vpop.f32.mrf.mxu0
    %v3660 = vadd.f32 0.0, %v3659
    %3661 = vdwg.mxu0
    %3663 = vrot.lane.b32.xlu0 %v3660, 32
    %v3664 = vpop.permute.xlu0 %3663
    %v3666 = vadd.f32 %v2759, %v3664
    %3667 = vrot.lane.b32.xlu0 %v2759, 80
    %v3668 = vpop.permute.xlu0 %3667
    %3669 = vrot.lane.b32.xlu0 %v2846, 80
    %v3670 = vpop.permute.xlu0 %3669
    %v3671 = vsel %vm1124, %v3668, 0
    %v3673 = vsel %vm1124, %v3670, 0
    %3675 = vmatpush.xpose.msra.mxu0 0.0
    %3676 = vmatpush.xpose.msra.mxu0 0.0
    %3677 = vmatpush.xpose.msra.mxu0 0.0
    %3678 = vmatpush.xpose.msra.mxu0 0.0
    %3679 = vmatpush.xpose.msra.mxu0 0.0
    %3680 = vmatpush.xpose.msra.mxu0 0.0
    %3681 = vmatpush.xpose.msra.mxu0 0.0
    %3682 = vmatpush.xpose.msra.mxu0 0.0
    %3683 = vmatpush.xpose.msra.mxu0 0.0
    %3684 = vmatpush.xpose.msra.mxu0 0.0
    %3685 = vmatpush.xpose.msra.mxu0 0.0
    %3686 = vmatpush.xpose.msra.mxu0 0.0
    %3687 = vmatpush.xpose.msra.mxu0 0.0
    %3688 = vmatpush.xpose.msra.mxu0 0.0
    %3689 = vmatpush.xpose.msra.mxu0 0.0
    %3690 = vmatpush.xpose.msra.mxu0 %v3673
    %3691 = vmatmul.f32.gmra.mxu0 %v3671
    %v3692 = vpop.f32.mrf.mxu0
    %v3693 = vadd.f32 0.0, %v3692
    %3694 = vdwg.mxu0
    %v3695 = vmul.f32 %v3693, 0.17677669
    %v3696 = vsel %vm1152, %v3695, -inf
    %3697 = vmax.xlane.f32.xlu0 %v3696
    %v3698 = vpop.xlane.xlu0 %3697
    %v3699 = vsub.f32 %v3695, %v3698
    %v3700 = vmul.f32 %v3699, 1.442695
    %v3701 = vpow.pop %v3700
    %v3702 = vsel %vm1152, %v3701, 0.0
    %3703 = vadd.xlane.f32.xlu0 %v3702
    %v3704 = vpop.xlane.xlu0 %3703
    %v3705 = vrcp.pop %v3704
    %v3706 = vmul.f32 %v3701, %v3705
    %3707 = vrot.lane.b32.xlu0 %v2886, 16
    %v3708 = vpop.permute.xlu0 %3707
    %v3710 = vsel %vm1167, %v3706, 0
    %v3712 = vsel %vm1171, %v3708, 0
    %3714 = vmatpush.msra.mxu0 0.0
    %3715 = vmatpush.msra.mxu0 0.0
    %3716 = vmatpush.msra.mxu0 0.0
    %3717 = vmatpush.msra.mxu0 0.0
    %3718 = vmatpush.msra.mxu0 0.0
    %3719 = vmatpush.msra.mxu0 0.0
    %3720 = vmatpush.msra.mxu0 0.0
    %3721 = vmatpush.msra.mxu0 0.0
    %3722 = vmatpush.msra.mxu0 0.0
    %3723 = vmatpush.msra.mxu0 0.0
    %3724 = vmatpush.msra.mxu0 0.0
    %3725 = vmatpush.msra.mxu0 0.0
    %3726 = vmatpush.msra.mxu0 0.0
    %3727 = vmatpush.msra.mxu0 0.0
    %3728 = vmatpush.msra.mxu0 0.0
    %3729 = vmatpush.msra.mxu0 %v3712
    %3730 = vmatmul.f32.gmra.mxu0 %v3710
    %v3731 = vpop.f32.mrf.mxu0
    %v3732 = vadd.f32 0.0, %v3731
    %3733 = vdwg.mxu0
    %3735 = vrot.lane.b32.xlu0 %v3732, 48
    %v3736 = vpop.permute.xlu0 %3735
    %v3738 = vadd.f32 %v2759, %v3736
    %v3739 = vsel %vm1124, %v2954, %v3026
    %v3740 = vsel %vm391, %v3739, %v3098
    %v3741 = vsel %vm1981, %v3740, %v3170
    %v3742 = vsel %vm828, %v3741, %v3241
    %v3743 = vsel %vm1984, %v3742, %v3313
    %v3744 = vsel %vm830, %v3743, %v3385
    %v3745 = vsel %vm1987, %v3744, %v3457
    %v3746 = vsel %vm1124, %v3522, %v3594
    %v3747 = vsel %vm391, %v3746, %v3666
    %v3748 = vsel %vm1981, %v3747, %v3738
    %v3750 = vsel %vm828, %v3748, 0
    %3752 = vmatpush.msra.mxu0 %v862
    %3753 = vmatpush.msra.mxu0 %v860
    %3754 = vmatpush.msra.mxu0 %v858
    %3755 = vmatpush.msra.mxu0 %v856
    %3756 = vmatpush.msra.mxu0 %v854
    %3757 = vmatpush.msra.mxu0 %v852
    %3758 = vmatpush.msra.mxu0 %v850
    %3759 = vmatpush.msra.mxu0 %v848
    %3760 = vmatpush.msra.mxu0 %v846
    %3761 = vmatpush.msra.mxu0 %v844
    %3762 = vmatpush.msra.mxu0 %v842
    %3763 = vmatpush.msra.mxu0 %v840
    %3764 = vmatpush.msra.mxu0 %v838
    %3765 = vmatpush.msra.mxu0 %v836
    %3766 = vmatpush.msra.mxu0 %v834
    %3767 = vmatpush.msra.mxu0 %v832
    %3768 = vmatmul.f32.gmra.mxu0 %v3745
    %v3769 = vpop.f32.mrf.mxu0
    %v3770 = vadd.f32 0.0, %v3769
    %3771 = vdwg.mxu0
    %3772 = vmatpush.msra.mxu0 0.0
    %3773 = vmatpush.msra.mxu0 0.0
    %3774 = vmatpush.msra.mxu0 0.0
    %3775 = vmatpush.msra.mxu0 0.0
    %3776 = vmatpush.msra.mxu0 0.0
    %3777 = vmatpush.msra.mxu0 0.0
    %3778 = vmatpush.msra.mxu0 0.0
    %3779 = vmatpush.msra.mxu0 0.0
    %3780 = vmatpush.msra.mxu0 %v878
    %3781 = vmatpush.msra.mxu0 %v876
    %3782 = vmatpush.msra.mxu0 %v874
    %3783 = vmatpush.msra.mxu0 %v872
    %3784 = vmatpush.msra.mxu0 %v870
    %3785 = vmatpush.msra.mxu0 %v868
    %3786 = vmatpush.msra.mxu0 %v866
    %3787 = vmatpush.msra.mxu0 %v864
    %3788 = vmatmul.f32.gmra.mxu0 %v3750
    %v3789 = vpop.f32.mrf.mxu0
    %v3790 = vadd.f32 %v3770, %v3789
    %3791 = vdwg.mxu0
    %3792 = vmatpush.msra.mxu0 %v863
    %3793 = vmatpush.msra.mxu0 %v861
    %3794 = vmatpush.msra.mxu0 %v859
    %3795 = vmatpush.msra.mxu0 %v857
    %3796 = vmatpush.msra.mxu0 %v855
    %3797 = vmatpush.msra.mxu0 %v853
    %3798 = vmatpush.msra.mxu0 %v851
    %3799 = vmatpush.msra.mxu0 %v849
    %3800 = vmatpush.msra.mxu0 %v847
    %3801 = vmatpush.msra.mxu0 %v845
    %3802 = vmatpush.msra.mxu0 %v843
    %3803 = vmatpush.msra.mxu0 %v841
    %3804 = vmatpush.msra.mxu0 %v839
    %3805 = vmatpush.msra.mxu0 %v837
    %3806 = vmatpush.msra.mxu0 %v835
    %3807 = vmatpush.msra.mxu0 %v833
    %3808 = vmatmul.f32.gmra.mxu0 %v3745
    %v3809 = vpop.f32.mrf.mxu0
    %v3810 = vadd.f32 0.0, %v3809
    %3811 = vdwg.mxu0
    %3812 = vmatpush.msra.mxu0 0.0
    %3813 = vmatpush.msra.mxu0 0.0
    %3814 = vmatpush.msra.mxu0 0.0
    %3815 = vmatpush.msra.mxu0 0.0
    %3816 = vmatpush.msra.mxu0 0.0
    %3817 = vmatpush.msra.mxu0 0.0
    %3818 = vmatpush.msra.mxu0 0.0
    %3819 = vmatpush.msra.mxu0 0.0
    %3820 = vmatpush.msra.mxu0 %v879
    %3821 = vmatpush.msra.mxu0 %v877
    %3822 = vmatpush.msra.mxu0 %v875
    %3823 = vmatpush.msra.mxu0 %v873
    %3824 = vmatpush.msra.mxu0 %v871
    %3825 = vmatpush.msra.mxu0 %v869
    %3826 = vmatpush.msra.mxu0 %v867
    %3827 = vmatpush.msra.mxu0 %v865
    %3828 = vmatmul.f32.gmra.mxu0 %v3750
    %v3829 = vpop.f32.mrf.mxu0
    %v3830 = vadd.f32 %v3810, %v3829
    %3831 = vdwg.mxu0
    %v3832 = vsub.f32 %v3745, %v3790
    %v3833 = vsub.f32 %v3748, %v3830
    %v3834 = vmul.f32 %v3832, %v3832
    %v3835 = vmul.f32 %v3833, %v3833
    %v3837 = vsel %vm828, %v3835, 0
    %3839 = vmatpush.msra.mxu0 %v862
    %3840 = vmatpush.msra.mxu0 %v860
    %3841 = vmatpush.msra.mxu0 %v858
    %3842 = vmatpush.msra.mxu0 %v856
    %3843 = vmatpush.msra.mxu0 %v854
    %3844 = vmatpush.msra.mxu0 %v852
    %3845 = vmatpush.msra.mxu0 %v850
    %3846 = vmatpush.msra.mxu0 %v848
    %3847 = vmatpush.msra.mxu0 %v846
    %3848 = vmatpush.msra.mxu0 %v844
    %3849 = vmatpush.msra.mxu0 %v842
    %3850 = vmatpush.msra.mxu0 %v840
    %3851 = vmatpush.msra.mxu0 %v838
    %3852 = vmatpush.msra.mxu0 %v836
    %3853 = vmatpush.msra.mxu0 %v834
    %3854 = vmatpush.msra.mxu0 %v832
    %3855 = vmatmul.f32.gmra.mxu0 %v3834
    %v3856 = vpop.f32.mrf.mxu0
    %v3857 = vadd.f32 1e-05, %v3856
    %3858 = vdwg.mxu0
    %3859 = vmatpush.msra.mxu0 0.0
    %3860 = vmatpush.msra.mxu0 0.0
    %3861 = vmatpush.msra.mxu0 0.0
    %3862 = vmatpush.msra.mxu0 0.0
    %3863 = vmatpush.msra.mxu0 0.0
    %3864 = vmatpush.msra.mxu0 0.0
    %3865 = vmatpush.msra.mxu0 0.0
    %3866 = vmatpush.msra.mxu0 0.0
    %3867 = vmatpush.msra.mxu0 %v878
    %3868 = vmatpush.msra.mxu0 %v876
    %3869 = vmatpush.msra.mxu0 %v874
    %3870 = vmatpush.msra.mxu0 %v872
    %3871 = vmatpush.msra.mxu0 %v870
    %3872 = vmatpush.msra.mxu0 %v868
    %3873 = vmatpush.msra.mxu0 %v866
    %3874 = vmatpush.msra.mxu0 %v864
    %3875 = vmatmul.f32.gmra.mxu0 %v3837
    %v3876 = vpop.f32.mrf.mxu0
    %v3877 = vadd.f32 %v3857, %v3876
    %3878 = vdwg.mxu0
    %3879 = vmatpush.msra.mxu0 %v863
    %3880 = vmatpush.msra.mxu0 %v861
    %3881 = vmatpush.msra.mxu0 %v859
    %3882 = vmatpush.msra.mxu0 %v857
    %3883 = vmatpush.msra.mxu0 %v855
    %3884 = vmatpush.msra.mxu0 %v853
    %3885 = vmatpush.msra.mxu0 %v851
    %3886 = vmatpush.msra.mxu0 %v849
    %3887 = vmatpush.msra.mxu0 %v847
    %3888 = vmatpush.msra.mxu0 %v845
    %3889 = vmatpush.msra.mxu0 %v843
    %3890 = vmatpush.msra.mxu0 %v841
    %3891 = vmatpush.msra.mxu0 %v839
    %3892 = vmatpush.msra.mxu0 %v837
    %3893 = vmatpush.msra.mxu0 %v835
    %3894 = vmatpush.msra.mxu0 %v833
    %3895 = vmatmul.f32.gmra.mxu0 %v3834
    %v3896 = vpop.f32.mrf.mxu0
    %v3897 = vadd.f32 1e-05, %v3896
    %3898 = vdwg.mxu0
    %3899 = vmatpush.msra.mxu0 0.0
    %3900 = vmatpush.msra.mxu0 0.0
    %3901 = vmatpush.msra.mxu0 0.0
    %3902 = vmatpush.msra.mxu0 0.0
    %3903 = vmatpush.msra.mxu0 0.0
    %3904 = vmatpush.msra.mxu0 0.0
    %3905 = vmatpush.msra.mxu0 0.0
    %3906 = vmatpush.msra.mxu0 0.0
    %3907 = vmatpush.msra.mxu0 %v879
    %3908 = vmatpush.msra.mxu0 %v877
    %3909 = vmatpush.msra.mxu0 %v875
    %3910 = vmatpush.msra.mxu0 %v873
    %3911 = vmatpush.msra.mxu0 %v871
    %3912 = vmatpush.msra.mxu0 %v869
    %3913 = vmatpush.msra.mxu0 %v867
    %3914 = vmatpush.msra.mxu0 %v865
    %3915 = vmatmul.f32.gmra.mxu0 %v3837
    %v3916 = vpop.f32.mrf.mxu0
    %v3917 = vadd.f32 %v3897, %v3916
    %3918 = vdwg.mxu0
    %v3919 = vrsqrt.pop %v3877
    %v3920 = vmul.f32 %v3919, %v3877
    %v3921 = vmul.f32 %v3920, %v3919
    %v3922 = vmul.f32 0.5, %v3921
    %v3923 = vsub.f32 1.5, %v3922
    %v3924 = vmul.f32 %v3919, %v3923
    %vm3925 = vweird.f32 %v3877
    %vm3926 = vweird.f32 %v3919
    %vm3927 = vmor %vm3925, %vm3926
    %v3928 = vsel %vm3927, %v3919, %v3924
    %v3929 = vrsqrt.pop %v3917
    %v3930 = vmul.f32 %v3929, %v3917
    %v3931 = vmul.f32 %v3930, %v3929
    %v3932 = vmul.f32 0.5, %v3931
    %v3933 = vsub.f32 1.5, %v3932
    %v3934 = vmul.f32 %v3929, %v3933
    %vm3935 = vweird.f32 %v3917
    %vm3936 = vweird.f32 %v3929
    %vm3937 = vmor %vm3935, %vm3936
    %v3938 = vsel %vm3937, %v3929, %v3934
    %v3939 = vmul.f32 %v3832, %v3928
    %v3940 = vmul.f32 %v3833, %v3938
    %v3942 = vperm.slane %v2672, 0
    %v3943 = vperm.slane %v2672, 4
    %v3946 = vperm.slane %v3942, 0
    %v3947 = vperm.slane %v3943, 0
    %v3948 = vmul.f32 %v3939, %v3946
    %v3949 = vmul.f32 %v3940, %v3947
    %v3950 = vperm.slane %v2672, 1
    %v3951 = vperm.slane %v2672, 5
    %v3954 = vperm.slane %v3950, 1
    %v3955 = vperm.slane %v3951, 1
    %v3956 = vadd.f32 %v3948, %v3954
    %v3957 = vadd.f32 %v3949, %v3955
    %v3959 = vperm.slane %v2671, 0
    %v3960 = vperm.slane %v2671, 1
    %v3964 = vsel %vm828, %v3957, 0
    %3966 = vmatpush.msra.mxu0 %v2653
    %3967 = vmatpush.msra.mxu0 %v2651
    %3968 = vmatpush.msra.mxu0 %v2649
    %3969 = vmatpush.msra.mxu0 %v2647
    %3970 = vmatpush.msra.mxu0 %v2645
    %3971 = vmatpush.msra.mxu0 %v2643
    %3972 = vmatpush.msra.mxu0 %v2641
    %3973 = vmatpush.msra.mxu0 %v2639
    %3974 = vmatpush.msra.mxu0 %v2637
    %3975 = vmatpush.msra.mxu0 %v2635
    %3976 = vmatpush.msra.mxu0 %v2633
    %3977 = vmatpush.msra.mxu0 %v2631
    %3978 = vmatpush.msra.mxu0 %v2629
    %3979 = vmatpush.msra.mxu0 %v2627
    %3980 = vmatpush.msra.mxu0 %v2625
    %3981 = vmatpush.msra.mxu0 %v2623
    %3982 = vmatmul.f32.gmra.mxu0 %v3956
    %v3983 = vpop.f32.mrf.mxu0
    %v3984 = vadd.f32 %v3959, %v3983
    %3985 = vdwg.mxu0
    %3986 = vmatpush.msra.mxu0 0.0
    %3987 = vmatpush.msra.mxu0 0.0
    %3988 = vmatpush.msra.mxu0 0.0
    %3989 = vmatpush.msra.mxu0 0.0
    %3990 = vmatpush.msra.mxu0 0.0
    %3991 = vmatpush.msra.mxu0 0.0
    %3992 = vmatpush.msra.mxu0 0.0
    %3993 = vmatpush.msra.mxu0 0.0
    %3994 = vmatpush.msra.mxu0 %v2669
    %3995 = vmatpush.msra.mxu0 %v2667
    %3996 = vmatpush.msra.mxu0 %v2665
    %3997 = vmatpush.msra.mxu0 %v2663
    %3998 = vmatpush.msra.mxu0 %v2661
    %3999 = vmatpush.msra.mxu0 %v2659
    %4000 = vmatpush.msra.mxu0 %v2657
    %4001 = vmatpush.msra.mxu0 %v2655
    %4002 = vmatmul.f32.gmra.mxu0 %v3964
    %v4003 = vpop.f32.mrf.mxu0
    %v4004 = vadd.f32 %v3984, %v4003
    %4005 = vdwg.mxu0
    %4006 = vmatpush.msra.mxu0 %v2654
    %4007 = vmatpush.msra.mxu0 %v2652
    %4008 = vmatpush.msra.mxu0 %v2650
    %4009 = vmatpush.msra.mxu0 %v2648
    %4010 = vmatpush.msra.mxu0 %v2646
    %4011 = vmatpush.msra.mxu0 %v2644
    %4012 = vmatpush.msra.mxu0 %v2642
    %4013 = vmatpush.msra.mxu0 %v2640
    %4014 = vmatpush.msra.mxu0 %v2638
    %4015 = vmatpush.msra.mxu0 %v2636
    %4016 = vmatpush.msra.mxu0 %v2634
    %4017 = vmatpush.msra.mxu0 %v2632
    %4018 = vmatpush.msra.mxu0 %v2630
    %4019 = vmatpush.msra.mxu0 %v2628
    %4020 = vmatpush.msra.mxu0 %v2626
    %4021 = vmatpush.msra.mxu0 %v2624
    %4022 = vmatmul.f32.gmra.mxu0 %v3956
    %v4023 = vpop.f32.mrf.mxu0
    %v4024 = vadd.f32 %v3960, %v4023
    %4025 = vdwg.mxu0
    %4026 = vmatpush.msra.mxu0 0.0
    %4027 = vmatpush.msra.mxu0 0.0
    %4028 = vmatpush.msra.mxu0 0.0
    %4029 = vmatpush.msra.mxu0 0.0
    %4030 = vmatpush.msra.mxu0 0.0
    %4031 = vmatpush.msra.mxu0 0.0
    %4032 = vmatpush.msra.mxu0 0.0
    %4033 = vmatpush.msra.mxu0 0.0
    %4034 = vmatpush.msra.mxu0 %v2670
    %4035 = vmatpush.msra.mxu0 %v2668
    %4036 = vmatpush.msra.mxu0 %v2666
    %4037 = vmatpush.msra.mxu0 %v2664
    %4038 = vmatpush.msra.mxu0 %v2662
    %4039 = vmatpush.msra.mxu0 %v2660
    %4040 = vmatpush.msra.mxu0 %v2658
    %4041 = vmatpush.msra.mxu0 %v2656
    %4042 = vmatmul.f32.gmra.mxu0 %v3964
    %v4043 = vpop.f32.mrf.mxu0
    %v4044 = vadd.f32 %v4024, %v4043
    %4045 = vdwg.mxu0
    %v4046 = vmax.f32 %v4004, 0.0
    %v4047 = vmax.f32 %v4044, 0.0
    %v4048 = vadd.f32 %v3956, %v4046
    %v4049 = vadd.f32 %v3957, %v4047
    %v4051 = vsel %vm828, %v4049, 0
    %4053 = vmatpush.msra.mxu0 %v862
    %4054 = vmatpush.msra.mxu0 %v860
    %4055 = vmatpush.msra.mxu0 %v858
    %4056 = vmatpush.msra.mxu0 %v856
    %4057 = vmatpush.msra.mxu0 %v854
    %4058 = vmatpush.msra.mxu0 %v852
    %4059 = vmatpush.msra.mxu0 %v850
    %4060 = vmatpush.msra.mxu0 %v848
    %4061 = vmatpush.msra.mxu0 %v846
    %4062 = vmatpush.msra.mxu0 %v844
    %4063 = vmatpush.msra.mxu0 %v842
    %4064 = vmatpush.msra.mxu0 %v840
    %4065 = vmatpush.msra.mxu0 %v838
    %4066 = vmatpush.msra.mxu0 %v836
    %4067 = vmatpush.msra.mxu0 %v834
    %4068 = vmatpush.msra.mxu0 %v832
    %4069 = vmatmul.f32.gmra.mxu0 %v4048
    %v4070 = vpop.f32.mrf.mxu0
    %v4071 = vadd.f32 0.0, %v4070
    %4072 = vdwg.mxu0
    %4073 = vmatpush.msra.mxu0 0.0
    %4074 = vmatpush.msra.mxu0 0.0
    %4075 = vmatpush.msra.mxu0 0.0
    %4076 = vmatpush.msra.mxu0 0.0
    %4077 = vmatpush.msra.mxu0 0.0
    %4078 = vmatpush.msra.mxu0 0.0
    %4079 = vmatpush.msra.mxu0 0.0
    %4080 = vmatpush.msra.mxu0 0.0
    %4081 = vmatpush.msra.mxu0 %v878
    %4082 = vmatpush.msra.mxu0 %v876
    %4083 = vmatpush.msra.mxu0 %v874
    %4084 = vmatpush.msra.mxu0 %v872
    %4085 = vmatpush.msra.mxu0 %v870
    %4086 = vmatpush.msra.mxu0 %v868
    %4087 = vmatpush.msra.mxu0 %v866
    %4088 = vmatpush.msra.mxu0 %v864
    %4089 = vmatmul.f32.gmra.mxu0 %v4051
    %v4090 = vpop.f32.mrf.mxu0
    %v4091 = vadd.f32 %v4071, %v4090
    %4092 = vdwg.mxu0
    %4093 = vmatpush.msra.mxu0 %v863
    %4094 = vmatpush.msra.mxu0 %v861
    %4095 = vmatpush.msra.mxu0 %v859
    %4096 = vmatpush.msra.mxu0 %v857
    %4097 = vmatpush.msra.mxu0 %v855
    %4098 = vmatpush.msra.mxu0 %v853
    %4099 = vmatpush.msra.mxu0 %v851
    %4100 = vmatpush.msra.mxu0 %v849
    %4101 = vmatpush.msra.mxu0 %v847
    %4102 = vmatpush.msra.mxu0 %v845
    %4103 = vmatpush.msra.mxu0 %v843
    %4104 = vmatpush.msra.mxu0 %v841
    %4105 = vmatpush.msra.mxu0 %v839
    %4106 = vmatpush.msra.mxu0 %v837
    %4107 = vmatpush.msra.mxu0 %v835
    %4108 = vmatpush.msra.mxu0 %v833
    %4109 = vmatmul.f32.gmra.mxu0 %v4048
    %v4110 = vpop.f32.mrf.mxu0
    %v4111 = vadd.f32 0.0, %v4110
    %4112 = vdwg.mxu0
    %4113 = vmatpush.msra.mxu0 0.0
    %4114 = vmatpush.msra.mxu0 0.0
    %4115 = vmatpush.msra.mxu0 0.0
    %4116 = vmatpush.msra.mxu0 0.0
    %4117 = vmatpush.msra.mxu0 0.0
    %4118 = vmatpush.msra.mxu0 0.0
    %4119 = vmatpush.msra.mxu0 0.0
    %4120 = vmatpush.msra.mxu0 0.0
    %4121 = vmatpush.msra.mxu0 %v879
    %4122 = vmatpush.msra.mxu0 %v877
    %4123 = vmatpush.msra.mxu0 %v875
    %4124 = vmatpush.msra.mxu0 %v873
    %4125 = vmatpush.msra.mxu0 %v871
    %4126 = vmatpush.msra.mxu0 %v869
    %4127 = vmatpush.msra.mxu0 %v867
    %4128 = vmatpush.msra.mxu0 %v865
    %4129 = vmatmul.f32.gmra.mxu0 %v4051
    %v4130 = vpop.f32.mrf.mxu0
    %v4131 = vadd.f32 %v4111, %v4130
    %4132 = vdwg.mxu0
    %v4133 = vsub.f32 %v4048, %v4091
    %v4134 = vsub.f32 %v4049, %v4131
    %v4135 = vmul.f32 %v4133, %v4133
    %v4136 = vmul.f32 %v4134, %v4134
    %v4138 = vsel %vm828, %v4136, 0
    %4140 = vmatpush.msra.mxu0 %v862
    %4141 = vmatpush.msra.mxu0 %v860
    %4142 = vmatpush.msra.mxu0 %v858
    %4143 = vmatpush.msra.mxu0 %v856
    %4144 = vmatpush.msra.mxu0 %v854
    %4145 = vmatpush.msra.mxu0 %v852
    %4146 = vmatpush.msra.mxu0 %v850
    %4147 = vmatpush.msra.mxu0 %v848
    %4148 = vmatpush.msra.mxu0 %v846
    %4149 = vmatpush.msra.mxu0 %v844
    %4150 = vmatpush.msra.mxu0 %v842
    %4151 = vmatpush.msra.mxu0 %v840
    %4152 = vmatpush.msra.mxu0 %v838
    %4153 = vmatpush.msra.mxu0 %v836
    %4154 = vmatpush.msra.mxu0 %v834
    %4155 = vmatpush.msra.mxu0 %v832
    %4156 = vmatmul.f32.gmra.mxu0 %v4135
    %v4157 = vpop.f32.mrf.mxu0
    %v4158 = vadd.f32 1e-05, %v4157
    %4159 = vdwg.mxu0
    %4160 = vmatpush.msra.mxu0 0.0
    %4161 = vmatpush.msra.mxu0 0.0
    %4162 = vmatpush.msra.mxu0 0.0
    %4163 = vmatpush.msra.mxu0 0.0
    %4164 = vmatpush.msra.mxu0 0.0
    %4165 = vmatpush.msra.mxu0 0.0
    %4166 = vmatpush.msra.mxu0 0.0
    %4167 = vmatpush.msra.mxu0 0.0
    %4168 = vmatpush.msra.mxu0 %v878
    %4169 = vmatpush.msra.mxu0 %v876
    %4170 = vmatpush.msra.mxu0 %v874
    %4171 = vmatpush.msra.mxu0 %v872
    %4172 = vmatpush.msra.mxu0 %v870
    %4173 = vmatpush.msra.mxu0 %v868
    %4174 = vmatpush.msra.mxu0 %v866
    %4175 = vmatpush.msra.mxu0 %v864
    %4176 = vmatmul.f32.gmra.mxu0 %v4138
    %v4177 = vpop.f32.mrf.mxu0
    %v4178 = vadd.f32 %v4158, %v4177
    %4179 = vdwg.mxu0
    %4180 = vmatpush.msra.mxu0 %v863
    %4181 = vmatpush.msra.mxu0 %v861
    %4182 = vmatpush.msra.mxu0 %v859
    %4183 = vmatpush.msra.mxu0 %v857
    %4184 = vmatpush.msra.mxu0 %v855
    %4185 = vmatpush.msra.mxu0 %v853
    %4186 = vmatpush.msra.mxu0 %v851
    %4187 = vmatpush.msra.mxu0 %v849
    %4188 = vmatpush.msra.mxu0 %v847
    %4189 = vmatpush.msra.mxu0 %v845
    %4190 = vmatpush.msra.mxu0 %v843
    %4191 = vmatpush.msra.mxu0 %v841
    %4192 = vmatpush.msra.mxu0 %v839
    %4193 = vmatpush.msra.mxu0 %v837
    %4194 = vmatpush.msra.mxu0 %v835
    %4195 = vmatpush.msra.mxu0 %v833
    %4196 = vmatmul.f32.gmra.mxu0 %v4135
    %v4197 = vpop.f32.mrf.mxu0
    %v4198 = vadd.f32 1e-05, %v4197
    %4199 = vdwg.mxu0
    %4200 = vmatpush.msra.mxu0 0.0
    %4201 = vmatpush.msra.mxu0 0.0
    %4202 = vmatpush.msra.mxu0 0.0
    %4203 = vmatpush.msra.mxu0 0.0
    %4204 = vmatpush.msra.mxu0 0.0
    %4205 = vmatpush.msra.mxu0 0.0
    %4206 = vmatpush.msra.mxu0 0.0
    %4207 = vmatpush.msra.mxu0 0.0
    %4208 = vmatpush.msra.mxu0 %v879
    %4209 = vmatpush.msra.mxu0 %v877
    %4210 = vmatpush.msra.mxu0 %v875
    %4211 = vmatpush.msra.mxu0 %v873
    %4212 = vmatpush.msra.mxu0 %v871
    %4213 = vmatpush.msra.mxu0 %v869
    %4214 = vmatpush.msra.mxu0 %v867
    %4215 = vmatpush.msra.mxu0 %v865
    %4216 = vmatmul.f32.gmra.mxu0 %v4138
    %v4217 = vpop.f32.mrf.mxu0
    %v4218 = vadd.f32 %v4198, %v4217
    %4219 = vdwg.mxu0
    %v4220 = vrsqrt.pop %v4178
    %v4221 = vmul.f32 %v4220, %v4178
    %v4222 = vmul.f32 %v4221, %v4220
    %v4223 = vmul.f32 0.5, %v4222
    %v4224 = vsub.f32 1.5, %v4223
    %v4225 = vmul.f32 %v4220, %v4224
    %vm4226 = vweird.f32 %v4178
    %vm4227 = vweird.f32 %v4220
    %vm4228 = vmor %vm4226, %vm4227
    %v4229 = vsel %vm4228, %v4220, %v4225
    %v4230 = vrsqrt.pop %v4218
    %v4231 = vmul.f32 %v4230, %v4218
    %v4232 = vmul.f32 %v4231, %v4230
    %v4233 = vmul.f32 0.5, %v4232
    %v4234 = vsub.f32 1.5, %v4233
    %v4235 = vmul.f32 %v4230, %v4234
    %vm4236 = vweird.f32 %v4218
    %vm4237 = vweird.f32 %v4230
    %vm4238 = vmor %vm4236, %vm4237
    %v4239 = vsel %vm4238, %v4230, %v4235
    %v4240 = vmul.f32 %v4133, %v4229
    %v4241 = vmul.f32 %v4134, %v4239
    %v4242 = vperm.slane %v2672, 2
    %v4243 = vperm.slane %v2672, 6
    %v4246 = vperm.slane %v4242, 2
    %v4247 = vperm.slane %v4243, 2
    %v4248 = vmul.f32 %v4240, %v4246
    %v4249 = vmul.f32 %v4241, %v4247
    %v4250 = vperm.slane %v2672, 3
    %v4251 = vperm.slane %v2672, 7
    %v4254 = vperm.slane %v4250, 3
    %v4255 = vperm.slane %v4251, 3
    %v4256 = vadd.f32 %v4248, %v4254
    %v4257 = vadd.f32 %v4249, %v4255
    %v4258 = vld [vmem:[%s20] sm:$0xff]
    %v4259 = vld [vmem:[%s20 + $0x8] sm:$0xff]
    %v4260 = vld [vmem:[%s20 + $0x10] sm:$0xff]
    %v4261 = vld [vmem:[%s20 + $0x18] sm:$0xff]
    %v4262 = vld [vmem:[%s20 + $0x20] sm:$0xff]
    %v4263 = vld [vmem:[%s20 + $0x28] sm:$0xff]
    %v4264 = vld [vmem:[%s20 + $0x30] sm:$0xff]
    %v4265 = vld [vmem:[%s20 + $0x38] sm:$0xff]
    %v4266 = vld [vmem:[%s20 + $0x40] sm:$0xff]
    %v4267 = vld [vmem:[%s20 + $0x48] sm:$0xff]
    %v4268 = vld [vmem:[%s20 + $0x50] sm:$0xff]
    %v4269 = vld [vmem:[%s20 + $0x58] sm:$0xff]
    %v4270 = vld [vmem:[%s20 + $0x60] sm:$0xff]
    %v4271 = vld [vmem:[%s20 + $0x68] sm:$0xff]
    %v4272 = vld [vmem:[%s20 + $0x70] sm:$0xff]
    %v4273 = vld [vmem:[%s20 + $0x78] sm:$0xff]
    %v4274 = vld [vmem:[%s20 + $0x80] sm:$0xff]
    %v4275 = vld [vmem:[%s20 + $0x88] sm:$0xff]
    %v4276 = vld [vmem:[%s20 + $0x90] sm:$0xff]
    %v4277 = vld [vmem:[%s20 + $0x98] sm:$0xff]
    %v4278 = vld [vmem:[%s20 + $0xa0] sm:$0xff]
    %v4279 = vld [vmem:[%s20 + $0xa8] sm:$0xff]
    %v4280 = vld [vmem:[%s20 + $0xb0] sm:$0xff]
    %v4281 = vld [vmem:[%s20 + $0xb8] sm:$0xff]
    %v4282 = vld [vmem:[#allocation24] sm:$0x1]
    %v4284 = vperm.slane %v4282, 0
    %v4287 = vsel %vm828, %v4257, 0
    %4289 = vmatpush.msra.mxu0 %v4273
    %4290 = vmatpush.msra.mxu0 %v4272
    %4291 = vmatpush.msra.mxu0 %v4271
    %4292 = vmatpush.msra.mxu0 %v4270
    %4293 = vmatpush.msra.mxu0 %v4269
    %4294 = vmatpush.msra.mxu0 %v4268
    %4295 = vmatpush.msra.mxu0 %v4267
    %4296 = vmatpush.msra.mxu0 %v4266
    %4297 = vmatpush.msra.mxu0 %v4265
    %4298 = vmatpush.msra.mxu0 %v4264
    %4299 = vmatpush.msra.mxu0 %v4263
    %4300 = vmatpush.msra.mxu0 %v4262
    %4301 = vmatpush.msra.mxu0 %v4261
    %4302 = vmatpush.msra.mxu0 %v4260
    %4303 = vmatpush.msra.mxu0 %v4259
    %4304 = vmatpush.msra.mxu0 %v4258
    %4305 = vmatmul.f32.gmra.mxu0 %v4256
    %v4306 = vpop.f32.mrf.mxu0
    %v4307 = vadd.f32 %v4284, %v4306
    %4308 = vdwg.mxu0
    %4309 = vmatpush.msra.mxu0 0.0
    %4310 = vmatpush.msra.mxu0 0.0
    %4311 = vmatpush.msra.mxu0 0.0
    %4312 = vmatpush.msra.mxu0 0.0
    %4313 = vmatpush.msra.mxu0 0.0
    %4314 = vmatpush.msra.mxu0 0.0
    %4315 = vmatpush.msra.mxu0 0.0
    %4316 = vmatpush.msra.mxu0 0.0
    %4317 = vmatpush.msra.mxu0 %v4281
    %4318 = vmatpush.msra.mxu0 %v4280
    %4319 = vmatpush.msra.mxu0 %v4279
    %4320 = vmatpush.msra.mxu0 %v4278
    %4321 = vmatpush.msra.mxu0 %v4277
    %4322 = vmatpush.msra.mxu0 %v4276
    %4323 = vmatpush.msra.mxu0 %v4275
    %4324 = vmatpush.msra.mxu0 %v4274
    %4325 = vmatmul.f32.gmra.mxu0 %v4287
    %v4326 = vpop.f32.mrf.mxu0
    %v4327 = vadd.f32 %v4307, %v4326
    %4328 = vdwg.mxu0
    %vm4329 = vcmask 259072
    %4330 = vst.msk [vmem:[%s27] sm:$0x3f] %vm4329, %v4327
    %v4331 = vld [vmem:[#allocation25] sm:$0xff]
    %v4332 = vld [vmem:[#allocation25 + $0x8] sm:$0xff]
    %v4333 = vld [vmem:[#allocation25 + $0x10] sm:$0xff]
    %v4334 = vld [vmem:[#allocation25 + $0x18] sm:$0xff]
    %v4335 = vld [vmem:[#allocation25 + $0x20] sm:$0xff]
    %v4336 = vld [vmem:[#allocation25 + $0x28] sm:$0xff]
    %v4337 = vld [vmem:[#allocation25 + $0x30] sm:$0xff]
    %v4338 = vld [vmem:[#allocation25 + $0x38] sm:$0xff]
    %v4339 = vld [vmem:[#allocation25 + $0x40] sm:$0xff]
    %v4340 = vld [vmem:[#allocation25 + $0x48] sm:$0xff]
    %v4341 = vld [vmem:[#allocation25 + $0x50] sm:$0xff]
    %v4342 = vld [vmem:[%s24] sm:$0xff]
    %v4343 = vld [vmem:[%s24 + $0x8] sm:$0xff]
    %v4344 = vld [vmem:[%s24 + $0x10] sm:$0xff]
    %v4345 = vld [vmem:[%s24 + $0x18] sm:$0xff]
    %v4346 = vld [vmem:[%s24 + $0x20] sm:$0xf]
    %vm4347 = vcmask 293888
    %v4349 = vsel %vm4347, %v4331, 0
    %v4352 = vsel %vm4347, %v4332, 0
    %v4355 = vsel %vm4347, %v4333, 0
    %v4358 = vsel %vm4347, %v4334, 0
    %v4361 = vsel %vm4347, %v4335, 0
    %v4364 = vsel %vm4347, %v4336, 0
    %v4367 = vsel %vm4347, %v4337, 0
    %v4370 = vsel %vm4347, %v4338, 0
    %v4373 = vsel %vm4347, %v4339, 0
    %v4376 = vsel %vm4347, %v4340, 0
    %v4379 = vsel %vm4347, %v4341, 0
    %vm4381 = vcmask 1043456
    %v4383 = vsel %vm4381, %v4346, 0
    %4385 = vmatpush.msra.mxu0 0.0
    %4386 = vmatpush.msra.mxu0 0.0
    %4387 = vmatpush.msra.mxu0 0.0
    %4388 = vmatpush.msra.mxu0 0.0
    %4389 = vmatpush.msra.mxu0 0.0
    %4390 = vmatpush.msra.mxu0 0.0
    %4391 = vmatpush.msra.mxu0 0.0
    %4392 = vmatpush.msra.mxu0 0.0
    %4393 = vmatpush.msra.mxu0 0.0
    %4394 = vmatpush.msra.mxu0 0.0
    %4395 = vmatpush.msra.mxu0 0.0
    %4396 = vmatpush.msra.mxu0 %v4383
    %4397 = vmatpush.msra.mxu0 %v4345
    %4398 = vmatpush.msra.mxu0 %v4344
    %4399 = vmatpush.msra.mxu0 %v4343
    %4400 = vmatpush.msra.mxu0 %v4342
    %4401 = vmatmul.f32.gmra.mxu0 %v4349
    %v4402 = vpop.f32.mrf.mxu0
    %v4403 = vadd.f32 0.0, %v4402
    %4404 = vmatmul.f32.gmra.mxu0 %v4352
    %v4405 = vpop.f32.mrf.mxu0
    %v4406 = vadd.f32 0.0, %v4405
    %4407 = vmatmul.f32.gmra.mxu0 %v4355
    %v4408 = vpop.f32.mrf.mxu0
    %v4409 = vadd.f32 0.0, %v4408
    %4410 = vmatmul.f32.gmra.mxu0 %v4358
    %v4411 = vpop.f32.mrf.mxu0
    %v4412 = vadd.f32 0.0, %v4411
    %4413 = vmatmul.f32.gmra.mxu0 %v4361
    %v4414 = vpop.f32.mrf.mxu0
    %v4415 = vadd.f32 0.0, %v4414
    %4416 = vmatmul.f32.gmra.mxu0 %v4364
    %v4417 = vpop.f32.mrf.mxu0
    %v4418 = vadd.f32 0.0, %v4417
    %4419 = vmatmul.f32.gmra.mxu0 %v4367
    %v4420 = vpop.f32.mrf.mxu0
    %v4421 = vadd.f32 0.0, %v4420
    %4422 = vmatmul.f32.gmra.mxu0 %v4370
    %v4423 = vpop.f32.mrf.mxu0
    %v4424 = vadd.f32 0.0, %v4423
    %4425 = vmatmul.f32.gmra.mxu0 %v4373
    %v4426 = vpop.f32.mrf.mxu0
    %v4427 = vadd.f32 0.0, %v4426
    %4428 = vmatmul.f32.gmra.mxu0 %v4376
    %v4429 = vpop.f32.mrf.mxu0
    %v4430 = vadd.f32 0.0, %v4429
    %4431 = vmatmul.f32.gmra.mxu0 %v4379
    %v4432 = vpop.f32.mrf.mxu0
    %v4433 = vadd.f32 0.0, %v4432
    %4434 = vdwg.mxu0
    %v4435 = vld [vmem:[#allocation27] sm:$0xff]
    %v4436 = vld [vmem:[#allocation27 + $0x8] sm:$0xff]
    %v4437 = vld [vmem:[#allocation27 + $0x10] sm:$0xff]
    %v4438 = vld [vmem:[#allocation27 + $0x18] sm:$0xff]
    %v4440 = vsel %vm391, %v4403, 0
    %4442 = vmatpush.msra.mxu0 0.0
    %4443 = vmatpush.msra.mxu0 0.0
    %4444 = vmatpush.msra.mxu0 0.0
    %4445 = vmatpush.msra.mxu0 0.0
    %4446 = vmatpush.msra.mxu0 0.0
    %4447 = vmatpush.msra.mxu0 0.0
    %4448 = vmatpush.msra.mxu0 0.0
    %4449 = vmatpush.msra.mxu0 0.0
    %4450 = vmatpush.msra.mxu0 0.0
    %4451 = vmatpush.msra.mxu0 0.0
    %4452 = vmatpush.msra.mxu0 0.0
    %4453 = vmatpush.msra.mxu0 0.0
    %4454 = vmatpush.msra.mxu0 %v4438
    %4455 = vmatpush.msra.mxu0 %v4437
    %4456 = vmatpush.msra.mxu0 %v4436
    %4457 = vmatpush.msra.mxu0 %v4435
    %4458 = vmatmul.f32.gmra.mxu0 %v4440
    %v4459 = vpop.f32.mrf.mxu0
    %v4460 = vadd.f32 0.0, %v4459
    %4461 = vdwg.mxu0
    %v4462 = vld [vmem:[%s22] sm:$0xff]
    %v4463 = vld [vmem:[%s26] sm:$0x1]
    %v4465 = vperm.slane %v4463, 0
    %vm4467 = vcmask 64512
    %v4469 = vsel %vm4467, %v4462, 0
    %4471 = vmatpush.msra.mxu0 0.0
    %4472 = vmatpush.msra.mxu0 0.0
    %4473 = vmatpush.msra.mxu0 0.0
    %4474 = vmatpush.msra.mxu0 0.0
    %4475 = vmatpush.msra.mxu0 0.0
    %4476 = vmatpush.msra.mxu0 0.0
    %4477 = vmatpush.msra.mxu0 0.0
    %4478 = vmatpush.msra.mxu0 0.0
    %4479 = vmatpush.msra.mxu0 0.0
    %4480 = vmatpush.msra.mxu0 0.0
    %4481 = vmatpush.msra.mxu0 0.0
    %4482 = vmatpush.msra.mxu0 0.0
    %4483 = vmatpush.msra.mxu0 0.0
    %4484 = vmatpush.msra.mxu0 0.0
    %4485 = vmatpush.msra.mxu0 0.0
    %4486 = vmatpush.msra.mxu0 %v4460
    %4487 = vmatmul.f32.gmra.mxu0 %v4469
    %v4488 = vpop.f32.mrf.mxu0
    %v4489 = vadd.f32 %v4465, %v4488
    %4490 = vdwg.mxu0
    %v4491 = vmax.f32 %v4489, 0.0
    %vm4492 = vcmask 256000
    %v4493 = vsel %vm4492, %v4491, 0.0
    %v4494 = vrot.slane %v4493, 4
    %v4495 = vadd.f32 %v4493, %v4494
    %v4496 = vrot.slane %v4495, 2
    %v4497 = vadd.f32 %v4495, %v4496
    %v4498 = vrot.slane %v4497, 1
    %v4499 = vadd.f32 %v4497, %v4498
    %s4500 = scalar_lea.vmem [#allocation27], 32
    %v4501 = vld [vmem:[%s4500] sm:$0xff]
    %v4502 = vld [vmem:[%s4500 + $0x8] sm:$0xff]
    %v4503 = vld [vmem:[%s4500 + $0x10] sm:$0xff]
    %v4504 = vld [vmem:[%s4500 + $0x18] sm:$0xff]
    %v4506 = vsel %vm391, %v4406, 0
    %4508 = vmatpush.msra.mxu0 0.0
    %4509 = vmatpush.msra.mxu0 0.0
    %4510 = vmatpush.msra.mxu0 0.0
    %4511 = vmatpush.msra.mxu0 0.0
    %4512 = vmatpush.msra.mxu0 0.0
    %4513 = vmatpush.msra.mxu0 0.0
    %4514 = vmatpush.msra.mxu0 0.0
    %4515 = vmatpush.msra.mxu0 0.0
    %4516 = vmatpush.msra.mxu0 0.0
    %4517 = vmatpush.msra.mxu0 0.0
    %4518 = vmatpush.msra.mxu0 0.0
    %4519 = vmatpush.msra.mxu0 0.0
    %4520 = vmatpush.msra.mxu0 %v4504
    %4521 = vmatpush.msra.mxu0 %v4503
    %4522 = vmatpush.msra.mxu0 %v4502
    %4523 = vmatpush.msra.mxu0 %v4501
    %4524 = vmatmul.f32.gmra.mxu0 %v4506
    %v4525 = vpop.f32.mrf.mxu0
    %v4526 = vadd.f32 0.0, %v4525
    %4527 = vdwg.mxu0
    %s4528 = scalar_lea.vmem %s22, 8
    %v4529 = vld [vmem:[%s4528] sm:$0xff]
    %s4530 = scalar_lea.vmem %s26, 1
    %v4531 = vld [vmem:[%s4530] sm:$0x1]
    %v4533 = vperm.slane %v4531, 0
    %v4536 = vsel %vm4467, %v4529, 0
    %4538 = vmatpush.msra.mxu0 0.0
    %4539 = vmatpush.msra.mxu0 0.0
    %4540 = vmatpush.msra.mxu0 0.0
    %4541 = vmatpush.msra.mxu0 0.0
    %4542 = vmatpush.msra.mxu0 0.0
    %4543 = vmatpush.msra.mxu0 0.0
    %4544 = vmatpush.msra.mxu0 0.0
    %4545 = vmatpush.msra.mxu0 0.0
    %4546 = vmatpush.msra.mxu0 0.0
    %4547 = vmatpush.msra.mxu0 0.0
    %4548 = vmatpush.msra.mxu0 0.0
    %4549 = vmatpush.msra.mxu0 0.0
    %4550 = vmatpush.msra.mxu0 0.0
    %4551 = vmatpush.msra.mxu0 0.0
    %4552 = vmatpush.msra.mxu0 0.0
    %4553 = vmatpush.msra.mxu0 %v4526
    %4554 = vmatmul.f32.gmra.mxu0 %v4536
    %v4555 = vpop.f32.mrf.mxu0
    %v4556 = vadd.f32 %v4533, %v4555
    %4557 = vdwg.mxu0
    %v4558 = vmax.f32 %v4556, 0.0
    %vm4559 = vcmask 254976
    %v4560 = vsel %vm4559, %v4558, 0.0
    %v4561 = vrot.slane %v4560, 4
    %v4562 = vadd.f32 %v4560, %v4561
    %v4563 = vrot.slane %v4562, 2
    %v4564 = vadd.f32 %v4562, %v4563
    %v4565 = vrot.slane %v4564, 1
    %v4566 = vadd.f32 %v4564, %v4565
    %s4567 = scalar_lea.vmem [#allocation27], 64
    %v4568 = vld [vmem:[%s4567] sm:$0xff]
    %v4569 = vld [vmem:[%s4567 + $0x8] sm:$0xff]
    %v4570 = vld [vmem:[%s4567 + $0x10] sm:$0xff]
    %v4571 = vld [vmem:[%s4567 + $0x18] sm:$0xff]
    %v4573 = vsel %vm391, %v4409, 0
    %4575 = vmatpush.msra.mxu0 0.0
    %4576 = vmatpush.msra.mxu0 0.0
    %4577 = vmatpush.msra.mxu0 0.0
    %4578 = vmatpush.msra.mxu0 0.0
    %4579 = vmatpush.msra.mxu0 0.0
    %4580 = vmatpush.msra.mxu0 0.0
    %4581 = vmatpush.msra.mxu0 0.0
    %4582 = vmatpush.msra.mxu0 0.0
    %4583 = vmatpush.msra.mxu0 0.0
    %4584 = vmatpush.msra.mxu0 0.0
    %4585 = vmatpush.msra.mxu0 0.0
    %4586 = vmatpush.msra.mxu0 0.0
    %4587 = vmatpush.msra.mxu0 %v4571
    %4588 = vmatpush.msra.mxu0 %v4570
    %4589 = vmatpush.msra.mxu0 %v4569
    %4590 = vmatpush.msra.mxu0 %v4568
    %4591 = vmatmul.f32.gmra.mxu0 %v4573
    %v4592 = vpop.f32.mrf.mxu0
    %v4593 = vadd.f32 0.0, %v4592
    %4594 = vdwg.mxu0
    %s4595 = scalar_lea.vmem %s22, 16
    %v4596 = vld [vmem:[%s4595] sm:$0xff]
    %s4597 = scalar_lea.vmem %s26, 2
    %v4598 = vld [vmem:[%s4597] sm:$0x1]
    %v4600 = vperm.slane %v4598, 0
    %v4603 = vsel %vm4467, %v4596, 0
    %4605 = vmatpush.msra.mxu0 0.0
    %4606 = vmatpush.msra.mxu0 0.0
    %4607 = vmatpush.msra.mxu0 0.0
    %4608 = vmatpush.msra.mxu0 0.0
    %4609 = vmatpush.msra.mxu0 0.0
    %4610 = vmatpush.msra.mxu0 0.0
    %4611 = vmatpush.msra.mxu0 0.0
    %4612 = vmatpush.msra.mxu0 0.0
    %4613 = vmatpush.msra.mxu0 0.0
    %4614 = vmatpush.msra.mxu0 0.0
    %4615 = vmatpush.msra.mxu0 0.0
    %4616 = vmatpush.msra.mxu0 0.0
    %4617 = vmatpush.msra.mxu0 0.0
    %4618 = vmatpush.msra.mxu0 0.0
    %4619 = vmatpush.msra.mxu0 0.0
    %4620 = vmatpush.msra.mxu0 %v4593
    %4621 = vmatmul.f32.gmra.mxu0 %v4603
    %v4622 = vpop.f32.mrf.mxu0
    %v4623 = vadd.f32 %v4600, %v4622
    %4624 = vdwg.mxu0
    %v4625 = vmax.f32 %v4623, 0.0
    %v4626 = vsel %vm4492, %v4625, 0.0
    %v4627 = vrot.slane %v4626, 4
    %v4628 = vadd.f32 %v4626, %v4627
    %v4629 = vrot.slane %v4628, 2
    %v4630 = vadd.f32 %v4628, %v4629
    %v4631 = vrot.slane %v4630, 1
    %v4632 = vadd.f32 %v4630, %v4631
    %s4633 = scalar_lea.vmem [#allocation27], 96
    %v4634 = vld [vmem:[%s4633] sm:$0xff]
    %v4635 = vld [vmem:[%s4633 + $0x8] sm:$0xff]
    %v4636 = vld [vmem:[%s4633 + $0x10] sm:$0xff]
    %v4637 = vld [vmem:[%s4633 + $0x18] sm:$0xff]
    %v4639 = vsel %vm391, %v4412, 0
    %4641 = vmatpush.msra.mxu0 0.0
    %4642 = vmatpush.msra.mxu0 0.0
    %4643 = vmatpush.msra.mxu0 0.0
    %4644 = vmatpush.msra.mxu0 0.0
    %4645 = vmatpush.msra.mxu0 0.0
    %4646 = vmatpush.msra.mxu0 0.0
    %4647 = vmatpush.msra.mxu0 0.0
    %4648 = vmatpush.msra.mxu0 0.0
    %4649 = vmatpush.msra.mxu0 0.0
    %4650 = vmatpush.msra.mxu0 0.0
    %4651 = vmatpush.msra.mxu0 0.0
    %4652 = vmatpush.msra.mxu0 0.0
    %4653 = vmatpush.msra.mxu0 %v4637
    %4654 = vmatpush.msra.mxu0 %v4636
    %4655 = vmatpush.msra.mxu0 %v4635
    %4656 = vmatpush.msra.mxu0 %v4634
    %4657 = vmatmul.f32.gmra.mxu0 %v4639
    %v4658 = vpop.f32.mrf.mxu0
    %v4659 = vadd.f32 0.0, %v4658
    %4660 = vdwg.mxu0
    %s4661 = scalar_lea.vmem %s22, 24
    %v4662 = vld [vmem:[%s4661] sm:$0xff]
    %s4663 = scalar_lea.vmem %s26, 3
    %v4664 = vld [vmem:[%s4663] sm:$0x1]
    %v4666 = vperm.slane %v4664, 0
    %v4669 = vsel %vm4467, %v4662, 0
    %4671 = vmatpush.msra.mxu0 0.0
    %4672 = vmatpush.msra.mxu0 0.0
    %4673 = vmatpush.msra.mxu0 0.0
    %4674 = vmatpush.msra.mxu0 0.0
    %4675 = vmatpush.msra.mxu0 0.0
    %4676 = vmatpush.msra.mxu0 0.0
    %4677 = vmatpush.msra.mxu0 0.0
    %4678 = vmatpush.msra.mxu0 0.0
    %4679 = vmatpush.msra.mxu0 0.0
    %4680 = vmatpush.msra.mxu0 0.0
    %4681 = vmatpush.msra.mxu0 0.0
    %4682 = vmatpush.msra.mxu0 0.0
    %4683 = vmatpush.msra.mxu0 0.0
    %4684 = vmatpush.msra.mxu0 0.0
    %4685 = vmatpush.msra.mxu0 0.0
    %4686 = vmatpush.msra.mxu0 %v4659
    %4687 = vmatmul.f32.gmra.mxu0 %v4669
    %v4688 = vpop.f32.mrf.mxu0
    %v4689 = vadd.f32 %v4666, %v4688
    %4690 = vdwg.mxu0
    %v4691 = vmax.f32 %v4689, 0.0
    %v4692 = vsel %vm4559, %v4691, 0.0
    %v4693 = vrot.slane %v4692, 4
    %v4694 = vadd.f32 %v4692, %v4693
    %v4695 = vrot.slane %v4694, 2
    %v4696 = vadd.f32 %v4694, %v4695
    %v4697 = vrot.slane %v4696, 1
    %v4698 = vadd.f32 %v4696, %v4697
    %s4699 = scalar_lea.vmem [#allocation27], 128
    %v4700 = vld [vmem:[%s4699] sm:$0xff]
    %v4701 = vld [vmem:[%s4699 + $0x8] sm:$0xff]
    %v4702 = vld [vmem:[%s4699 + $0x10] sm:$0xff]
    %v4703 = vld [vmem:[%s4699 + $0x18] sm:$0xff]
    %v4705 = vsel %vm391, %v4415, 0
    %4707 = vmatpush.msra.mxu0 0.0
    %4708 = vmatpush.msra.mxu0 0.0
    %4709 = vmatpush.msra.mxu0 0.0
    %4710 = vmatpush.msra.mxu0 0.0
    %4711 = vmatpush.msra.mxu0 0.0
    %4712 = vmatpush.msra.mxu0 0.0
    %4713 = vmatpush.msra.mxu0 0.0
    %4714 = vmatpush.msra.mxu0 0.0
    %4715 = vmatpush.msra.mxu0 0.0
    %4716 = vmatpush.msra.mxu0 0.0
    %4717 = vmatpush.msra.mxu0 0.0
    %4718 = vmatpush.msra.mxu0 0.0
    %4719 = vmatpush.msra.mxu0 %v4703
    %4720 = vmatpush.msra.mxu0 %v4702
    %4721 = vmatpush.msra.mxu0 %v4701
    %4722 = vmatpush.msra.mxu0 %v4700
    %4723 = vmatmul.f32.gmra.mxu0 %v4705
    %v4724 = vpop.f32.mrf.mxu0
    %v4725 = vadd.f32 0.0, %v4724
    %4726 = vdwg.mxu0
    %s4727 = scalar_lea.vmem %s22, 32
    %v4728 = vld [vmem:[%s4727] sm:$0xff]
    %s4729 = scalar_lea.vmem %s26, 4
    %v4730 = vld [vmem:[%s4729] sm:$0x1]
    %v4732 = vperm.slane %v4730, 0
    %v4735 = vsel %vm4467, %v4728, 0
    %4737 = vmatpush.msra.mxu0 0.0
    %4738 = vmatpush.msra.mxu0 0.0
    %4739 = vmatpush.msra.mxu0 0.0
    %4740 = vmatpush.msra.mxu0 0.0
    %4741 = vmatpush.msra.mxu0 0.0
    %4742 = vmatpush.msra.mxu0 0.0
    %4743 = vmatpush.msra.mxu0 0.0
    %4744 = vmatpush.msra.mxu0 0.0
    %4745 = vmatpush.msra.mxu0 0.0
    %4746 = vmatpush.msra.mxu0 0.0
    %4747 = vmatpush.msra.mxu0 0.0
    %4748 = vmatpush.msra.mxu0 0.0
    %4749 = vmatpush.msra.mxu0 0.0
    %4750 = vmatpush.msra.mxu0 0.0
    %4751 = vmatpush.msra.mxu0 0.0
    %4752 = vmatpush.msra.mxu0 %v4725
    %4753 = vmatmul.f32.gmra.mxu0 %v4735
    %v4754 = vpop.f32.mrf.mxu0
    %v4755 = vadd.f32 %v4732, %v4754
    %4756 = vdwg.mxu0
    %v4757 = vmax.f32 %v4755, 0.0
    %v4758 = vsel %vm4492, %v4757, 0.0
    %v4759 = vrot.slane %v4758, 4
    %v4760 = vadd.f32 %v4758, %v4759
    %v4761 = vrot.slane %v4760, 2
    %v4762 = vadd.f32 %v4760, %v4761
    %v4763 = vrot.slane %v4762, 1
    %v4764 = vadd.f32 %v4762, %v4763
    %s4765 = scalar_lea.vmem [#allocation27], 160
    %v4766 = vld [vmem:[%s4765] sm:$0xff]
    %v4767 = vld [vmem:[%s4765 + $0x8] sm:$0xff]
    %v4768 = vld [vmem:[%s4765 + $0x10] sm:$0xff]
    %v4769 = vld [vmem:[%s4765 + $0x18] sm:$0xff]
    %v4771 = vsel %vm391, %v4418, 0
    %4773 = vmatpush.msra.mxu0 0.0
    %4774 = vmatpush.msra.mxu0 0.0
    %4775 = vmatpush.msra.mxu0 0.0
    %4776 = vmatpush.msra.mxu0 0.0
    %4777 = vmatpush.msra.mxu0 0.0
    %4778 = vmatpush.msra.mxu0 0.0
    %4779 = vmatpush.msra.mxu0 0.0
    %4780 = vmatpush.msra.mxu0 0.0
    %4781 = vmatpush.msra.mxu0 0.0
    %4782 = vmatpush.msra.mxu0 0.0
    %4783 = vmatpush.msra.mxu0 0.0
    %4784 = vmatpush.msra.mxu0 0.0
    %4785 = vmatpush.msra.mxu0 %v4769
    %4786 = vmatpush.msra.mxu0 %v4768
    %4787 = vmatpush.msra.mxu0 %v4767
    %4788 = vmatpush.msra.mxu0 %v4766
    %4789 = vmatmul.f32.gmra.mxu0 %v4771
    %v4790 = vpop.f32.mrf.mxu0
    %v4791 = vadd.f32 0.0, %v4790
    %4792 = vdwg.mxu0
    %s4793 = scalar_lea.vmem %s22, 40
    %v4794 = vld [vmem:[%s4793] sm:$0xff]
    %s4795 = scalar_lea.vmem %s26, 5
    %v4796 = vld [vmem:[%s4795] sm:$0x1]
    %v4798 = vperm.slane %v4796, 0
    %v4801 = vsel %vm4467, %v4794, 0
    %4803 = vmatpush.msra.mxu0 0.0
    %4804 = vmatpush.msra.mxu0 0.0
    %4805 = vmatpush.msra.mxu0 0.0
    %4806 = vmatpush.msra.mxu0 0.0
    %4807 = vmatpush.msra.mxu0 0.0
    %4808 = vmatpush.msra.mxu0 0.0
    %4809 = vmatpush.msra.mxu0 0.0
    %4810 = vmatpush.msra.mxu0 0.0
    %4811 = vmatpush.msra.mxu0 0.0
    %4812 = vmatpush.msra.mxu0 0.0
    %4813 = vmatpush.msra.mxu0 0.0
    %4814 = vmatpush.msra.mxu0 0.0
    %4815 = vmatpush.msra.mxu0 0.0
    %4816 = vmatpush.msra.mxu0 0.0
    %4817 = vmatpush.msra.mxu0 0.0
    %4818 = vmatpush.msra.mxu0 %v4791
    %4819 = vmatmul.f32.gmra.mxu0 %v4801
    %v4820 = vpop.f32.mrf.mxu0
    %v4821 = vadd.f32 %v4798, %v4820
    %4822 = vdwg.mxu0
    %v4823 = vmax.f32 %v4821, 0.0
    %v4824 = vsel %vm4559, %v4823, 0.0
    %v4825 = vrot.slane %v4824, 4
    %v4826 = vadd.f32 %v4824, %v4825
    %v4827 = vrot.slane %v4826, 2
    %v4828 = vadd.f32 %v4826, %v4827
    %v4829 = vrot.slane %v4828, 1
    %v4830 = vadd.f32 %v4828, %v4829
    %s4831 = scalar_lea.vmem [#allocation27], 192
    %v4832 = vld [vmem:[%s4831] sm:$0xff]
    %v4833 = vld [vmem:[%s4831 + $0x8] sm:$0xff]
    %v4834 = vld [vmem:[%s4831 + $0x10] sm:$0xff]
    %v4835 = vld [vmem:[%s4831 + $0x18] sm:$0xff]
    %v4837 = vsel %vm391, %v4421, 0
    %4839 = vmatpush.msra.mxu0 0.0
    %4840 = vmatpush.msra.mxu0 0.0
    %4841 = vmatpush.msra.mxu0 0.0
    %4842 = vmatpush.msra.mxu0 0.0
    %4843 = vmatpush.msra.mxu0 0.0
    %4844 = vmatpush.msra.mxu0 0.0
    %4845 = vmatpush.msra.mxu0 0.0
    %4846 = vmatpush.msra.mxu0 0.0
    %4847 = vmatpush.msra.mxu0 0.0
    %4848 = vmatpush.msra.mxu0 0.0
    %4849 = vmatpush.msra.mxu0 0.0
    %4850 = vmatpush.msra.mxu0 0.0
    %4851 = vmatpush.msra.mxu0 %v4835
    %4852 = vmatpush.msra.mxu0 %v4834
    %4853 = vmatpush.msra.mxu0 %v4833
    %4854 = vmatpush.msra.mxu0 %v4832
    %4855 = vmatmul.f32.gmra.mxu0 %v4837
    %v4856 = vpop.f32.mrf.mxu0
    %v4857 = vadd.f32 0.0, %v4856
    %4858 = vdwg.mxu0
    %s4859 = scalar_lea.vmem %s22, 48
    %v4860 = vld [vmem:[%s4859] sm:$0xff]
    %s4861 = scalar_lea.vmem %s26, 6
    %v4862 = vld [vmem:[%s4861] sm:$0x1]
    %v4864 = vperm.slane %v4862, 0
    %v4867 = vsel %vm4467, %v4860, 0
    %4869 = vmatpush.msra.mxu0 0.0
    %4870 = vmatpush.msra.mxu0 0.0
    %4871 = vmatpush.msra.mxu0 0.0
    %4872 = vmatpush.msra.mxu0 0.0
    %4873 = vmatpush.msra.mxu0 0.0
    %4874 = vmatpush.msra.mxu0 0.0
    %4875 = vmatpush.msra.mxu0 0.0
    %4876 = vmatpush.msra.mxu0 0.0
    %4877 = vmatpush.msra.mxu0 0.0
    %4878 = vmatpush.msra.mxu0 0.0
    %4879 = vmatpush.msra.mxu0 0.0
    %4880 = vmatpush.msra.mxu0 0.0
    %4881 = vmatpush.msra.mxu0 0.0
    %4882 = vmatpush.msra.mxu0 0.0
    %4883 = vmatpush.msra.mxu0 0.0
    %4884 = vmatpush.msra.mxu0 %v4857
    %4885 = vmatmul.f32.gmra.mxu0 %v4867
    %v4886 = vpop.f32.mrf.mxu0
    %v4887 = vadd.f32 %v4864, %v4886
    %4888 = vdwg.mxu0
    %v4889 = vmax.f32 %v4887, 0.0
    %v4890 = vsel %vm4559, %v4889, 0.0
    %v4891 = vrot.slane %v4890, 4
    %v4892 = vadd.f32 %v4890, %v4891
    %v4893 = vrot.slane %v4892, 2
    %v4894 = vadd.f32 %v4892, %v4893
    %v4895 = vrot.slane %v4894, 1
    %v4896 = vadd.f32 %v4894, %v4895
    %s4897 = scalar_lea.vmem [#allocation27], 224
    %v4898 = vld [vmem:[%s4897] sm:$0xff]
    %v4899 = vld [vmem:[%s4897 + $0x8] sm:$0xff]
    %v4900 = vld [vmem:[%s4897 + $0x10] sm:$0xff]
    %v4901 = vld [vmem:[%s4897 + $0x18] sm:$0xff]
    %v4903 = vsel %vm391, %v4424, 0
    %4905 = vmatpush.msra.mxu0 0.0
    %4906 = vmatpush.msra.mxu0 0.0
    %4907 = vmatpush.msra.mxu0 0.0
    %4908 = vmatpush.msra.mxu0 0.0
    %4909 = vmatpush.msra.mxu0 0.0
    %4910 = vmatpush.msra.mxu0 0.0
    %4911 = vmatpush.msra.mxu0 0.0
    %4912 = vmatpush.msra.mxu0 0.0
    %4913 = vmatpush.msra.mxu0 0.0
    %4914 = vmatpush.msra.mxu0 0.0
    %4915 = vmatpush.msra.mxu0 0.0
    %4916 = vmatpush.msra.mxu0 0.0
    %4917 = vmatpush.msra.mxu0 %v4901
    %4918 = vmatpush.msra.mxu0 %v4900
    %4919 = vmatpush.msra.mxu0 %v4899
    %4920 = vmatpush.msra.mxu0 %v4898
    %4921 = vmatmul.f32.gmra.mxu0 %v4903
    %v4922 = vpop.f32.mrf.mxu0
    %v4923 = vadd.f32 0.0, %v4922
    %4924 = vdwg.mxu0
    %s4925 = scalar_lea.vmem %s22, 56
    %v4926 = vld [vmem:[%s4925] sm:$0xff]
    %s4927 = scalar_lea.vmem %s26, 7
    %v4928 = vld [vmem:[%s4927] sm:$0x1]
    %v4930 = vperm.slane %v4928, 0
    %v4933 = vsel %vm4467, %v4926, 0
    %4935 = vmatpush.msra.mxu0 0.0
    %4936 = vmatpush.msra.mxu0 0.0
    %4937 = vmatpush.msra.mxu0 0.0
    %4938 = vmatpush.msra.mxu0 0.0
    %4939 = vmatpush.msra.mxu0 0.0
    %4940 = vmatpush.msra.mxu0 0.0
    %4941 = vmatpush.msra.mxu0 0.0
    %4942 = vmatpush.msra.mxu0 0.0
    %4943 = vmatpush.msra.mxu0 0.0
    %4944 = vmatpush.msra.mxu0 0.0
    %4945 = vmatpush.msra.mxu0 0.0
    %4946 = vmatpush.msra.mxu0 0.0
    %4947 = vmatpush.msra.mxu0 0.0
    %4948 = vmatpush.msra.mxu0 0.0
    %4949 = vmatpush.msra.mxu0 0.0
    %4950 = vmatpush.msra.mxu0 %v4923
    %4951 = vmatmul.f32.gmra.mxu0 %v4933
    %v4952 = vpop.f32.mrf.mxu0
    %v4953 = vadd.f32 %v4930, %v4952
    %4954 = vdwg.mxu0
    %v4955 = vmax.f32 %v4953, 0.0
    %vm4956 = vcmask 257024
    %v4957 = vsel %vm4956, %v4955, 0.0
    %v4958 = vrot.slane %v4957, 4
    %v4959 = vadd.f32 %v4957, %v4958
    %v4960 = vrot.slane %v4959, 2
    %v4961 = vadd.f32 %v4959, %v4960
    %v4962 = vrot.slane %v4961, 1
    %v4963 = vadd.f32 %v4961, %v4962
    %s4964 = scalar_lea.vmem [#allocation27], 256
    %v4965 = vld [vmem:[%s4964] sm:$0xff]
    %v4966 = vld [vmem:[%s4964 + $0x8] sm:$0xff]
    %v4967 = vld [vmem:[%s4964 + $0x10] sm:$0xff]
    %v4968 = vld [vmem:[%s4964 + $0x18] sm:$0xff]
    %v4970 = vsel %vm391, %v4427, 0
    %4972 = vmatpush.msra.mxu0 0.0
    %4973 = vmatpush.msra.mxu0 0.0
    %4974 = vmatpush.msra.mxu0 0.0
    %4975 = vmatpush.msra.mxu0 0.0
    %4976 = vmatpush.msra.mxu0 0.0
    %4977 = vmatpush.msra.mxu0 0.0
    %4978 = vmatpush.msra.mxu0 0.0
    %4979 = vmatpush.msra.mxu0 0.0
    %4980 = vmatpush.msra.mxu0 0.0
    %4981 = vmatpush.msra.mxu0 0.0
    %4982 = vmatpush.msra.mxu0 0.0
    %4983 = vmatpush.msra.mxu0 0.0
    %4984 = vmatpush.msra.mxu0 %v4968
    %4985 = vmatpush.msra.mxu0 %v4967
    %4986 = vmatpush.msra.mxu0 %v4966
    %4987 = vmatpush.msra.mxu0 %v4965
    %4988 = vmatmul.f32.gmra.mxu0 %v4970
    %v4989 = vpop.f32.mrf.mxu0
    %v4990 = vadd.f32 0.0, %v4989
    %4991 = vdwg.mxu0
    %s4992 = scalar_lea.vmem %s22, 64
    %v4993 = vld [vmem:[%s4992] sm:$0xff]
    %s4994 = scalar_lea.vmem %s26, 8
    %v4995 = vld [vmem:[%s4994] sm:$0x1]
    %v4997 = vperm.slane %v4995, 0
    %v5000 = vsel %vm4467, %v4993, 0
    %5002 = vmatpush.msra.mxu0 0.0
    %5003 = vmatpush.msra.mxu0 0.0
    %5004 = vmatpush.msra.mxu0 0.0
    %5005 = vmatpush.msra.mxu0 0.0
    %5006 = vmatpush.msra.mxu0 0.0
    %5007 = vmatpush.msra.mxu0 0.0
    %5008 = vmatpush.msra.mxu0 0.0
    %5009 = vmatpush.msra.mxu0 0.0
    %5010 = vmatpush.msra.mxu0 0.0
    %5011 = vmatpush.msra.mxu0 0.0
    %5012 = vmatpush.msra.mxu0 0.0
    %5013 = vmatpush.msra.mxu0 0.0
    %5014 = vmatpush.msra.mxu0 0.0
    %5015 = vmatpush.msra.mxu0 0.0
    %5016 = vmatpush.msra.mxu0 0.0
    %5017 = vmatpush.msra.mxu0 %v4990
    %5018 = vmatmul.f32.gmra.mxu0 %v5000
    %v5019 = vpop.f32.mrf.mxu0
    %v5020 = vadd.f32 %v4997, %v5019
    %5021 = vdwg.mxu0
    %v5022 = vmax.f32 %v5020, 0.0
    %v5023 = vsel %vm4559, %v5022, 0.0
    %v5024 = vrot.slane %v5023, 4
    %v5025 = vadd.f32 %v5023, %v5024
    %v5026 = vrot.slane %v5025, 2
    %v5027 = vadd.f32 %v5025, %v5026
    %v5028 = vrot.slane %v5027, 1
    %v5029 = vadd.f32 %v5027, %v5028
    %s5030 = scalar_lea.vmem [#allocation27], 288
    %v5031 = vld [vmem:[%s5030] sm:$0xff]
    %v5032 = vld [vmem:[%s5030 + $0x8] sm:$0xff]
    %v5033 = vld [vmem:[%s5030 + $0x10] sm:$0xff]
    %v5034 = vld [vmem:[%s5030 + $0x18] sm:$0xff]
    %v5036 = vsel %vm391, %v4430, 0
    %5038 = vmatpush.msra.mxu0 0.0
    %5039 = vmatpush.msra.mxu0 0.0
    %5040 = vmatpush.msra.mxu0 0.0
    %5041 = vmatpush.msra.mxu0 0.0
    %5042 = vmatpush.msra.mxu0 0.0
    %5043 = vmatpush.msra.mxu0 0.0
    %5044 = vmatpush.msra.mxu0 0.0
    %5045 = vmatpush.msra.mxu0 0.0
    %5046 = vmatpush.msra.mxu0 0.0
    %5047 = vmatpush.msra.mxu0 0.0
    %5048 = vmatpush.msra.mxu0 0.0
    %5049 = vmatpush.msra.mxu0 0.0
    %5050 = vmatpush.msra.mxu0 %v5034
    %5051 = vmatpush.msra.mxu0 %v5033
    %5052 = vmatpush.msra.mxu0 %v5032
    %5053 = vmatpush.msra.mxu0 %v5031
    %5054 = vmatmul.f32.gmra.mxu0 %v5036
    %v5055 = vpop.f32.mrf.mxu0
    %v5056 = vadd.f32 0.0, %v5055
    %5057 = vdwg.mxu0
    %s5058 = scalar_lea.vmem %s22, 72
    %v5059 = vld [vmem:[%s5058] sm:$0xff]
    %s5060 = scalar_lea.vmem %s26, 9
    %v5061 = vld [vmem:[%s5060] sm:$0x1]
    %v5063 = vperm.slane %v5061, 0
    %v5066 = vsel %vm4467, %v5059, 0
    %5068 = vmatpush.msra.mxu0 0.0
    %5069 = vmatpush.msra.mxu0 0.0
    %5070 = vmatpush.msra.mxu0 0.0
    %5071 = vmatpush.msra.mxu0 0.0
    %5072 = vmatpush.msra.mxu0 0.0
    %5073 = vmatpush.msra.mxu0 0.0
    %5074 = vmatpush.msra.mxu0 0.0
    %5075 = vmatpush.msra.mxu0 0.0
    %5076 = vmatpush.msra.mxu0 0.0
    %5077 = vmatpush.msra.mxu0 0.0
    %5078 = vmatpush.msra.mxu0 0.0
    %5079 = vmatpush.msra.mxu0 0.0
    %5080 = vmatpush.msra.mxu0 0.0
    %5081 = vmatpush.msra.mxu0 0.0
    %5082 = vmatpush.msra.mxu0 0.0
    %5083 = vmatpush.msra.mxu0 %v5056
    %5084 = vmatmul.f32.gmra.mxu0 %v5066
    %v5085 = vpop.f32.mrf.mxu0
    %v5086 = vadd.f32 %v5063, %v5085
    %5087 = vdwg.mxu0
    %v5088 = vmax.f32 %v5086, 0.0
    %v5089 = vsel %vm4492, %v5088, 0.0
    %v5090 = vrot.slane %v5089, 4
    %v5091 = vadd.f32 %v5089, %v5090
    %v5092 = vrot.slane %v5091, 2
    %v5093 = vadd.f32 %v5091, %v5092
    %v5094 = vrot.slane %v5093, 1
    %v5095 = vadd.f32 %v5093, %v5094
    %s5096 = scalar_lea.vmem [#allocation27], 320
    %v5097 = vld [vmem:[%s5096] sm:$0xff]
    %v5098 = vld [vmem:[%s5096 + $0x8] sm:$0xff]
    %v5099 = vld [vmem:[%s5096 + $0x10] sm:$0xff]
    %v5100 = vld [vmem:[%s5096 + $0x18] sm:$0xff]
    %v5102 = vsel %vm391, %v4433, 0
    %5104 = vmatpush.msra.mxu0 0.0
    %5105 = vmatpush.msra.mxu0 0.0
    %5106 = vmatpush.msra.mxu0 0.0
    %5107 = vmatpush.msra.mxu0 0.0
    %5108 = vmatpush.msra.mxu0 0.0
    %5109 = vmatpush.msra.mxu0 0.0
    %5110 = vmatpush.msra.mxu0 0.0
    %5111 = vmatpush.msra.mxu0 0.0
    %5112 = vmatpush.msra.mxu0 0.0
    %5113 = vmatpush.msra.mxu0 0.0
    %5114 = vmatpush.msra.mxu0 0.0
    %5115 = vmatpush.msra.mxu0 0.0
    %5116 = vmatpush.msra.mxu0 %v5100
    %5117 = vmatpush.msra.mxu0 %v5099
    %5118 = vmatpush.msra.mxu0 %v5098
    %5119 = vmatpush.msra.mxu0 %v5097
    %5120 = vmatmul.f32.gmra.mxu0 %v5102
    %v5121 = vpop.f32.mrf.mxu0
    %v5122 = vadd.f32 0.0, %v5121
    %5123 = vdwg.mxu0
    %s5124 = scalar_lea.vmem %s22, 80
    %v5125 = vld [vmem:[%s5124] sm:$0xff]
    %s5126 = scalar_lea.vmem %s26, 10
    %v5127 = vld [vmem:[%s5126] sm:$0x1]
    %v5129 = vperm.slane %v5127, 0
    %v5132 = vsel %vm4467, %v5125, 0
    %5134 = vmatpush.msra.mxu0 0.0
    %5135 = vmatpush.msra.mxu0 0.0
    %5136 = vmatpush.msra.mxu0 0.0
    %5137 = vmatpush.msra.mxu0 0.0
    %5138 = vmatpush.msra.mxu0 0.0
    %5139 = vmatpush.msra.mxu0 0.0
    %5140 = vmatpush.msra.mxu0 0.0
    %5141 = vmatpush.msra.mxu0 0.0
    %5142 = vmatpush.msra.mxu0 0.0
    %5143 = vmatpush.msra.mxu0 0.0
    %5144 = vmatpush.msra.mxu0 0.0
    %5145 = vmatpush.msra.mxu0 0.0
    %5146 = vmatpush.msra.mxu0 0.0
    %5147 = vmatpush.msra.mxu0 0.0
    %5148 = vmatpush.msra.mxu0 0.0
    %5149 = vmatpush.msra.mxu0 %v5122
    %5150 = vmatmul.f32.gmra.mxu0 %v5132
    %v5151 = vpop.f32.mrf.mxu0
    %v5152 = vadd.f32 %v5129, %v5151
    %5153 = vdwg.mxu0
    %v5154 = vmax.f32 %v5152, 0.0
    %v5155 = vsel %vm4492, %v5154, 0.0
    %v5156 = vrot.slane %v5155, 4
    %v5157 = vadd.f32 %v5155, %v5156
    %v5158 = vrot.slane %v5157, 2
    %v5159 = vadd.f32 %v5157, %v5158
    %v5160 = vrot.slane %v5159, 1
    %v5161 = vadd.f32 %v5159, %v5160
    %5163 = vrot.lane.b32.xlu0 %v4566, 32
    %v5164 = vpop.permute.xlu0 %5163
    %5167 = vrot.lane.b32.xlu0 %v4632, 64
    %v5168 = vpop.permute.xlu0 %5167
    %v5170 = vsel %vm391, %v4499, %v5164
    %v5171 = vsel %vm828, %v5170, %v5168
    %v5172 = vsel %vm830, %v5171, 0.0
    %5174 = vrot.lane.b32.xlu0 %v4764, 32
    %v5175 = vpop.permute.xlu0 %5174
    %5178 = vrot.lane.b32.xlu0 %v4830, 64
    %v5179 = vpop.permute.xlu0 %5178
    %5182 = vrot.lane.b32.xlu0 %v4896, 96
    %v5183 = vpop.permute.xlu0 %5182
    %v5185 = vsel %vm391, %v4698, %v5175
    %v5186 = vsel %vm828, %v5185, %v5179
    %v5187 = vsel %vm830, %v5186, %v5183
    %5189 = vrot.lane.b32.xlu0 %v5029, 32
    %v5190 = vpop.permute.xlu0 %5189
    %5193 = vrot.lane.b32.xlu0 %v5095, 64
    %v5194 = vpop.permute.xlu0 %5193
    %5197 = vrot.lane.b32.xlu0 %v5161, 96
    %v5198 = vpop.permute.xlu0 %5197
    %v5200 = vsel %vm391, %v4963, %v5190
    %v5201 = vsel %vm828, %v5200, %v5194
    %v5202 = vsel %vm830, %v5201, %v5198
    %v5204 = vrot.slane %v5187, 7
    %v5207 = vrot.slane %v5202, 6
    %vm5209 = vcmask 1040384
    %v5210 = vsel %vm5209, %v5172, %v5204
    %vm5211 = vcmask 1041408
    %v5212 = vsel %vm5211, %v5210, %v5207
    %5213 = vst [vmem:[%s28] sm:$0x7] %v5212
    // Predicated region
    $region178: #{_lambda_.1} parent=1 // pred_check
      _
    $region179: #{_lambda_.1} parent=1 // pred_check_branch
      %5215 = sbr.rel (0) target = $region181
    $region180: #{_lambda_.1} parent=1 // pred_region
      _
    $region181: #{_lambda_.1} parent=1 // pred_fallthru
      _
    // Predicated region
    $region182: #{_lambda_.1} parent=1 // pred_check
      _
    $region183: #{_lambda_.1} parent=1 // pred_check_branch
      %5217 = sbr.rel (0) target = $region185
    $region184: #{_lambda_.1} parent=1 // pred_region
      _
    $region185: #{_lambda_.1} parent=1 // pred_fallthru
      _
    // Predicated region
    $region186: #{_lambda_.1} parent=1 // pred_check
      _
    $region187: #{_lambda_.1} parent=1 // pred_check_branch
      %5219 = sbr.rel (0) target = $region189
    $region188: #{_lambda_.1} parent=1 // pred_region
      _
    $region189: #{_lambda_.1} parent=1 // pred_fallthru
      _
    // Predicated region
    $region190: #{_lambda_.1} parent=1 // pred_check
      _
    $region191: #{_lambda_.1} parent=1 // pred_check_branch
      %5221 = sbr.rel (0) target = $region193
    $region192: #{_lambda_.1} parent=1 // pred_region
      _
    $region193: #{_lambda_.1} parent=1 // pred_fallthru
      _
    %5222 = vsyncpa [#allocation3], 1
    %5223 = vsyncpa [#allocation5], 1
    %5224 = vsyncpa [#allocation8], 1
    %5225 = vsyncpa [#allocation11], 1
    %5226 = vsyncpa [#allocation14], 1
    %5227 = vsyncpa [#allocation17], 1
    %5228 = vsyncpa [#allocation20], 1
    %5229 = vsyncpa [#allocation23], 1
    %5230 = vsyncpa [#allocation26], 1

</llo_original>
